<compile_context>
chip_gen: v7x
topology: tpu7x:2x2x1
jax: 0.10.0
libtpu: 0.0.40
codegen_flags: <defaults>
</compile_context>

<pallas_src>
import functools

import numpy as np
import jax
import jax.numpy as jnp
from jax.experimental import pallas as pl
from jax.experimental.pallas import tpu as pltpu


# ----------------------------------------------------------------------------
# In-kernel lane shift: np.roll(v, s, axis=-1) semantics.
# Prefer the XLU rotate (pltpu.roll); a one-off probe kernel pins its sign
# convention against np.roll, and we fall back to jnp.roll (slice+concat
# lowering) if the rotate path is unavailable on this toolchain.
# ----------------------------------------------------------------------------
@functools.lru_cache(maxsize=None)
def _lane_roll_impl():
    probe = np.arange(8 * 128, dtype=np.float32).reshape(8, 128)

    def _probe_kernel(x_ref, o_ref):
        o_ref[...] = pltpu.roll(x_ref[...], 3, 1)

    try:
        out = pl.pallas_call(
            _probe_kernel,
            out_shape=jax.ShapeDtypeStruct(probe.shape, jnp.float32),
        )(jnp.asarray(probe))
        out = np.asarray(jax.block_until_ready(out))
        if np.array_equal(out, np.roll(probe, 3, axis=1)):
            return lambda v, s: pltpu.roll(v, s, 1)
        if np.array_equal(out, np.roll(probe, -3, axis=1)):
            return lambda v, s: pltpu.roll(v, (-s) % v.shape[-1], 1)
    except Exception:
        pass
    return lambda v, s: jnp.roll(v, s, axis=-1)


# ----------------------------------------------------------------------------
# Fused kernel: all encoder + decoder layers, whole (sub)batch, VMEM resident.
# ----------------------------------------------------------------------------
def _fused_forward_kernel(*refs, n_enc, n_dec, ksize, nb, sg, gw, shift_fn):
    """refs = [x (nb, Cin, Sg)]
              + [taps (K*K, Cout, Cin), bias (Cout, 1)] * (n_enc + n_dec)
              + [mask (1, nb*Sg)] * n_dec
              + [out (nb, Cf, Sg)]"""
    n_layers = n_enc + n_dec
    x_ref = refs[0]
    layer_refs = refs[1:1 + 2 * n_layers]
    mask_refs = refs[1 + 2 * n_layers:1 + 2 * n_layers + n_dec]
    o_ref = refs[1 + 2 * n_layers + n_dec]

    K = ksize
    L = nb * sg                      # flat spatial length (lane axis)

    # --- in-kernel relayout: (nb, C, Sg) flat-NCHW -> lane-dense (C, nb*Sg) --
    parts = [x_ref[n] for n in range(nb)]
    x = parts[0] if nb == 1 else jnp.concatenate(parts, axis=-1)

    def tap(v, d):
        """result[:, s] = v[:, (s + d) mod L] (wrap only hits invalid pos.)."""
        s = (-d) % L
        return v if s == 0 else shift_fn(v, s)

    def conv_layer(v, w_ref, b_ref, tap_offset, relu):
        acc = None
        for kh in range(K):
            for kw in range(K):
                term = jnp.dot(w_ref[kh * K + kw], tap(v, tap_offset(kh, kw)),
                               preferred_element_type=jnp.float32)
                acc = term if acc is None else acc + term
        acc = acc + b_ref[...]                     # (Cout, 1) lane-broadcast
        return jnp.maximum(acc, 0.0) if relu else acc

    # --- encoder: Conv2d(k, s=1, p=0) + ReLU ---------------------------------
    for i in range(n_enc):
        x = conv_layer(x, layer_refs[2 * i], layer_refs[2 * i + 1],
                       lambda kh, kw: kh * gw + kw, relu=True)

    # --- decoder: ConvTranspose2d(k, s=1, p=0), ReLU except on last ----------
    for j in range(n_dec):
        # Zero everything outside the current valid region: this realizes the
        # transpose-conv zero padding and kills accumulated garbage without
        # any pad-buffer zero-fill stores.
        x = jnp.where(mask_refs[j][...] > 0.0, x, 0.0)
        x = conv_layer(x, layer_refs[2 * (n_enc + j)],
                       layer_refs[2 * (n_enc + j) + 1],
                       lambda kh, kw: (kh - (K - 1)) * gw + (kw - (K - 1)),
                       relu=(j < n_dec - 1))

    # --- emit flat NCHW (nb, Cf, Sg): Sg lanes per store, unmasked -----------
    for n in range(nb):
        o_ref[n] = x[:, n * sg:(n + 1) * sg].astype(o_ref.dtype)


# ----------------------------------------------------------------------------
# Module
# ----------------------------------------------------------------------------
class EncoderForecasterBase:
    """Pallas port.

    enc_params: list of (w, b), w = nn.Conv2d weight (Cout, Cin, K, K)
    dec_params: list of (w, b), w = nn.ConvTranspose2d weight (Cin, Cout, K, K)
    batch_blocks: grid size over the batch; 1 = whole batch in one step
                  (best on v5e/v6e); set 2 on v7x to use both TensorCores.
    """

    def __init__(self, enc_params, dec_params, ksize=3, batch_blocks=1):
        self.ksize = K = ksize
        self.batch_blocks = max(int(batch_blocks), 1)

        def enc_taps(w_pt):                       # (Cout, Cin, K, K)
            w = jnp.asarray(w_pt, jnp.float32)
            co, ci = w.shape[0], w.shape[1]
            return jnp.transpose(w, (2, 3, 0, 1)).reshape(K * K, co, ci)

        def dec_taps(w_pt):                       # (Cin, Cout, K, K)
            w = jnp.asarray(w_pt, jnp.float32)
            ci, co = w.shape[0], w.shape[1]
            w = w[:, :, ::-1, ::-1]               # spatial flip
            return jnp.transpose(w, (2, 3, 1, 0)).reshape(K * K, co, ci)

        self.enc = [(enc_taps(w), jnp.asarray(b, jnp.float32).reshape(-1, 1))
                    for w, b in enc_params]
        self.dec = [(dec_taps(w), jnp.asarray(b, jnp.float32).reshape(-1, 1))
                    for w, b in dec_params]

        self._shift_fn = _lane_roll_impl()        # resolved once, outside jit
        self._jit_forward = jax.jit(self._forward_impl)

    # ------------------------------------------------------------------ call
    def _fused_call(self, x_flat, gh, gw, he, we):
        N, C, sg = x_flat.shape
        K = self.ksize
        n_enc, n_dec = len(self.enc), len(self.dec)
        bb = self.batch_blocks if (N % self.batch_blocks == 0) else 1
        nb = N // bb

        in_specs = [pl.BlockSpec((nb, C, sg), lambda b: (b, 0, 0))]
        operands = [x_flat]
        for taps, bias in self.enc + self.dec:
            in_specs.append(pl.BlockSpec(taps.shape, lambda b: (0, 0, 0)))
            in_specs.append(pl.BlockSpec(bias.shape, lambda b: (0, 0)))
            operands += [taps, bias]

        # Validity masks for the decoder layers (compile-time constants).
        rows = np.arange(gh)[:, None]
        cols = np.arange(gw)[None, :]
        for j in range(n_dec):
            h = he + j * (K - 1)
            w = we + j * (K - 1)
            m2d = ((rows < h) & (cols < w)).astype(np.float32)   # (gh, gw)
            m = np.tile(m2d.reshape(-1), nb)[None, :]            # (1, nb*sg)
            operands.append(jnp.asarray(m))
            in_specs.append(pl.BlockSpec((1, nb * sg), lambda b: (0, 0)))

        cf = (self.dec[-1][0].shape[1] if n_dec else self.enc[-1][0].shape[1])
        out_shape = jax.ShapeDtypeStruct((N, cf, sg), jnp.float32)
        out_spec = pl.BlockSpec((nb, cf, sg), lambda b: (b, 0, 0))

        kernel = functools.partial(
            _fused_forward_kernel, n_enc=n_enc, n_dec=n_dec, ksize=K,
            nb=nb, sg=sg, gw=gw, shift_fn=self._shift_fn)

        fn = pl.pallas_call(
            kernel,
            out_shape=out_shape,
            grid_spec=pltpu.PrefetchScalarGridSpec(
                num_scalar_prefetch=0,
                grid=(bb,),
                in_specs=in_specs,
                out_specs=out_spec),
            compiler_params=pltpu.CompilerParams(
                dimension_semantics=("parallel",)),
        )
        return fn(*operands)

    def _forward_impl(self, x, x1):
        K = self.ksize
        n_enc, n_dec = len(self.enc), len(self.dec)
        if x1 is not None:
            # Conv layers are per-sample, so convolve(cat(x, x1, 0)) equals
            # cat(convolve(x), convolve(x1), 0): merge branches up front and
            # run ONE fused kernel for the whole forward.
            x = jnp.concatenate((x, x1), axis=0)
        x = x.astype(jnp.float32)
        N, C, H, W = x.shape
        he, we = H - n_enc * (K - 1), W - n_enc * (K - 1)
        hf, wf = he + n_dec * (K - 1), we + n_dec * (K - 1)
        gh, gw = max(H, hf), max(W, wf)           # fixed working grid
        if (gh, gw) != (H, W):
            x = jnp.pad(x, ((0, 0), (0, 0), (0, gh - H), (0, gw - W)))
        x_flat = x.reshape(N, C, gh * gw)          # row-major: free reshape
        y = self._fused_call(x_flat, gh, gw, he, we)    # (N, Cf, gh*gw)
        y = y.reshape(N, -1, gh, gw)               # row-major: free reshape
        if (gh, gw) != (hf, wf):
            y = y[:, :, :hf, :wf]
        return y

    def forward(self, x, x1=None):
        return self._jit_forward(x, x1)

    __call__ = forward


# ----------------------------------------------------------------------------
# Pure-JAX reference (lax.conv) for correctness check
# ----------------------------------------------------------------------------
def _ref_forward(enc_params, dec_params, x_nchw, x1_nchw=None, ksize=3):
    def conv_nhwc(x, w_hwio, b, relu):
        y = jax.lax.conv_general_dilated(
            x, w_hwio, window_strides=(1, 1), padding="VALID",
            dimension_numbers=("NHWC", "HWIO", "NHWC")) + b.reshape(1, 1, 1, -1)
        return jnp.maximum(y, 0.0) if relu else y

    def encode(x_):
        y = jnp.transpose(x_, (0, 2, 3, 1))
        for w_pt, b in enc_params:
            w = jnp.transpose(w_pt, (2, 3, 1, 0))              # OIHW -> HWIO
            y = conv_nhwc(y, w, b, True)
        return y

    y = encode(x_nchw)
    if x1_nchw is not None:
        y = jnp.concatenate((y, encode(x1_nchw)), axis=0)
    n = len(dec_params)
    p = ksize - 1
    for i, (w_pt, b) in enumerate(dec_params):
        w = jnp.transpose(w_pt[:, :, ::-1, ::-1], (2, 3, 0, 1))  # eff. HWIO
        yp = jnp.pad(y, ((0, 0), (p, p), (p, p), (0, 0)))
        y = conv_nhwc(yp, w, b, i < n - 1)
    return jnp.transpose(y, (0, 3, 1, 2))


# ----------------------------------------------------------------------------
if __name__ == "__main__":
    key = jax.random.PRNGKey(0)

    # init_encoder(input_size=[16,16], n_layers=2, in_channels=4,
    #              out_channels=4, finish_activation_function=None, add_branch=1)
    K = 3
    enc_channels = [4, 8, 16]    # encoder: 4 -> 8 -> 16
    dec_channels = [16, 8, 4]    # decoder: 16 -> 8 -> 4

    keys = iter(jax.random.split(key, 16))

    enc_params = []
    for cin, cout in zip(enc_channels[:-1], enc_channels[1:]):
        w = 0.1 * jax.random.normal(next(keys), (cout, cin, K, K), jnp.float32)
        b = 0.1 * jax.random.normal(next(keys), (cout,), jnp.float32)
        enc_params.append((w, b))

    dec_params = []
    for cin, cout in zip(dec_channels[:-1], dec_channels[1:]):
        w = 0.1 * jax.random.normal(next(keys), (cin, cout, K, K), jnp.float32)
        b = 0.1 * jax.random.normal(next(keys), (cout,), jnp.float32)
        dec_params.append((w, b))

    model = EncoderForecasterBase(enc_params, dec_params, ksize=K)

    x = jax.random.normal(next(keys), (2, 4, 16, 16), jnp.float32)    # NCHW
    x1 = jax.random.normal(next(keys), (2, 4, 16, 16), jnp.float32)   # NCHW

    # Single-branch forward
    out = jax.block_until_ready(model.forward(x))
    ref = _ref_forward(enc_params, dec_params, x, ksize=K)
    assert out.shape == (2, 4, 16, 16), out.shape
    assert jnp.allclose(out, ref, atol=5e-4, rtol=5e-4), "mismatch (x only)"

    # Two-branch forward (x1 path: cat along batch dim before decoder)
    out2 = jax.block_until_ready(model.forward(x, x1))
    ref2 = _ref_forward(enc_params, dec_params, x, x1, ksize=K)
    assert out2.shape == (4, 4, 16, 16), out2.shape
    assert jnp.allclose(out2, ref2, atol=5e-4, rtol=5e-4), "mismatch (x, x1)"

    print("KERNEL_OK")
</pallas_src>

<mosaic_0001>
module attributes {stable_mosaic.version = 11 : i64} {
  func.func @_probe_kernel(%arg0: memref<8x128xf32, #tpu.memory_space<vmem>>, %arg1: memref<8x128xf32, #tpu.memory_space<vmem>>) attributes {dimension_semantics = [], scalar_prefetch = 0 : i64, scratch_operands = 0 : i64, tpu.core_type = #tpu.core_type<tc>} {
    %c0 = arith.constant 0 : index
    %c0_0 = arith.constant 0 : index
    %0 = vector.load %arg0[%c0, %c0_0] : memref<8x128xf32, #tpu.memory_space<vmem>>, vector<8x128xf32>
    %c3_i32 = arith.constant 3 : i32
    %1 = tpu.dynamic_rotate %0 by %c3_i32 dim 1 : vector<8x128xf32>, i32 -> vector<8x128xf32>
    %c0_1 = arith.constant 0 : index
    %c0_2 = arith.constant 0 : index
    %2 = vector.load %arg1[%c0_1, %c0_2] : memref<8x128xf32, #tpu.memory_space<vmem>>, vector<8x128xf32>
    tpu.vector_store %arg1[%c0_1, %c0_2], %1 {strides = array<i32>} : memref<8x128xf32, #tpu.memory_space<vmem>>, vector<8x128xf32>,
    return
  }
}

module attributes {stable_mosaic.version = 11 : i64} {
  func.func @_fused_forward_kernel(%arg0: i32, %arg1: memref<2x4x256xf32, #tpu.memory_space<vmem>>, %arg2: memref<9x8x4xf32, #tpu.memory_space<vmem>>, %arg3: memref<8x1xf32, #tpu.memory_space<vmem>>, %arg4: memref<9x16x8xf32, #tpu.memory_space<vmem>>, %arg5: memref<16x1xf32, #tpu.memory_space<vmem>>, %arg6: memref<9x8x16xf32, #tpu.memory_space<vmem>>, %arg7: memref<8x1xf32, #tpu.memory_space<vmem>>, %arg8: memref<9x4x8xf32, #tpu.memory_space<vmem>>, %arg9: memref<4x1xf32, #tpu.memory_space<vmem>>, %arg10: memref<1x512xf32, #tpu.memory_space<vmem>>, %arg11: memref<1x512xf32, #tpu.memory_space<vmem>>, %arg12: memref<2x4x256xf32, #tpu.memory_space<vmem>>) attributes {dimension_semantics = [#tpu.dimension_semantics<parallel>], iteration_bounds = array<i64: 1>, scalar_prefetch = 0 : i64, scratch_operands = 0 : i64, tpu.core_type = #tpu.core_type<tc>, window_params = [{transform_indices = @transform_0, window_bounds = array<i64: 2, 4, 256>}, {pipeline_mode = #tpu.pipeline_mode<synchronous>, transform_indices = @transform_1, window_bounds = array<i64: 9, 8, 4>}, {pipeline_mode = #tpu.pipeline_mode<synchronous>, transform_indices = @transform_2, window_bounds = array<i64: 8, 1>}, {pipeline_mode = #tpu.pipeline_mode<synchronous>, transform_indices = @transform_3, window_bounds = array<i64: 9, 16, 8>}, {pipeline_mode = #tpu.pipeline_mode<synchronous>, transform_indices = @transform_4, window_bounds = array<i64: 16, 1>}, {pipeline_mode = #tpu.pipeline_mode<synchronous>, transform_indices = @transform_5, window_bounds = array<i64: 9, 8, 16>}, {pipeline_mode = #tpu.pipeline_mode<synchronous>, transform_indices = @transform_6, window_bounds = array<i64: 8, 1>}, {pipeline_mode = #tpu.pipeline_mode<synchronous>, transform_indices = @transform_7, window_bounds = array<i64: 9, 4, 8>}, {pipeline_mode = #tpu.pipeline_mode<synchronous>, transform_indices = @transform_8, window_bounds = array<i64: 4, 1>}, {pipeline_mode = #tpu.pipeline_mode<synchronous>, transform_indices = @transform_9, window_bounds = array<i64: 1, 512>}, {pipeline_mode = #tpu.pipeline_mode<synchronous>, transform_indices = @transform_10, window_bounds = array<i64: 1, 512>}, {transform_indices = @transform_11, window_bounds = array<i64: 2, 4, 256>}]} {
    %c0 = arith.constant 0 : index
    %c0_0 = arith.constant 0 : index
    %c0_1 = arith.constant 0 : index
    %0 = vector.load %arg1[%c0, %c0_0, %c0_1] : memref<2x4x256xf32, #tpu.memory_space<vmem>>, vector<1x4x256xf32>
    %1 = vector.shape_cast %0 : vector<1x4x256xf32> to vector<4x256xf32>
    %c1 = arith.constant 1 : index
    %c0_2 = arith.constant 0 : index
    %c0_3 = arith.constant 0 : index
    %2 = vector.load %arg1[%c1, %c0_2, %c0_3] : memref<2x4x256xf32, #tpu.memory_space<vmem>>, vector<1x4x256xf32>
    %3 = vector.shape_cast %2 : vector<1x4x256xf32> to vector<4x256xf32>
    %4 = tpu.concatenate %1, %3 in 1 : vector<4x256xf32>, vector<4x256xf32> -> vector<4x512xf32>
    %c0_4 = arith.constant 0 : index
    %c0_5 = arith.constant 0 : index
    %c0_6 = arith.constant 0 : index
    %5 = vector.load %arg2[%c0_4, %c0_5, %c0_6] : memref<9x8x4xf32, #tpu.memory_space<vmem>>, vector<1x8x4xf32>
    %6 = vector.shape_cast %5 : vector<1x8x4xf32> to vector<8x4xf32>
    %cst = arith.constant dense<0.000000e+00> : vector<8x512xf32>
    %7 = tpu.matmul %6, %4, %cst {dimension_numbers = #tpu.dot_dimension_numbers<[1], [0], [0], [1], [0, 0, 1, 1], [], []>} : vector<8x4xf32>, vector<4x512xf32>, vector<8x512xf32> -> vector<8x512xf32>
    %c1_7 = arith.constant 1 : index
    %c0_8 = arith.constant 0 : index
    %c0_9 = arith.constant 0 : index
    %8 = vector.load %arg2[%c1_7, %c0_8, %c0_9] : memref<9x8x4xf32, #tpu.memory_space<vmem>>, vector<1x8x4xf32>
    %9 = vector.shape_cast %8 : vector<1x8x4xf32> to vector<8x4xf32>
    %10 = vector.extract_strided_slice %4 {offsets = [0, 1], sizes = [4, 511], strides = [1, 1]} : vector<4x512xf32> to vector<4x511xf32>
    %11 = vector.extract_strided_slice %4 {offsets = [0, 0], sizes = [4, 1], strides = [1, 1]} : vector<4x512xf32> to vector<4x1xf32>
    %12 = tpu.concatenate %10, %11 in 1 : vector<4x511xf32>, vector<4x1xf32> -> vector<4x512xf32>
    %cst_10 = arith.constant dense<0.000000e+00> : vector<8x512xf32>
    %13 = tpu.matmul %9, %12, %cst_10 {dimension_numbers = #tpu.dot_dimension_numbers<[1], [0], [0], [1], [0, 0, 1, 1], [], []>} : vector<8x4xf32>, vector<4x512xf32>, vector<8x512xf32> -> vector<8x512xf32>
    %14 = arith.addf %7, %13 : vector<8x512xf32>
    %c2 = arith.constant 2 : index
    %c0_11 = arith.constant 0 : index
    %c0_12 = arith.constant 0 : index
    %15 = vector.load %arg2[%c2, %c0_11, %c0_12] : memref<9x8x4xf32, #tpu.memory_space<vmem>>, vector<1x8x4xf32>
    %16 = vector.shape_cast %15 : vector<1x8x4xf32> to vector<8x4xf32>
    %17 = vector.extract_strided_slice %4 {offsets = [0, 2], sizes = [4, 510], strides = [1, 1]} : vector<4x512xf32> to vector<4x510xf32>
    %18 = vector.extract_strided_slice %4 {offsets = [0, 0], sizes = [4, 2], strides = [1, 1]} : vector<4x512xf32> to vector<4x2xf32>
    %19 = tpu.concatenate %17, %18 in 1 : vector<4x510xf32>, vector<4x2xf32> -> vector<4x512xf32>
    %cst_13 = arith.constant dense<0.000000e+00> : vector<8x512xf32>
    %20 = tpu.matmul %16, %19, %cst_13 {dimension_numbers = #tpu.dot_dimension_numbers<[1], [0], [0], [1], [0, 0, 1, 1], [], []>} : vector<8x4xf32>, vector<4x512xf32>, vector<8x512xf32> -> vector<8x512xf32>
    %21 = arith.addf %14, %20 : vector<8x512xf32>
    %c3 = arith.constant 3 : index
    %c0_14 = arith.constant 0 : index
    %c0_15 = arith.constant 0 : index
    %22 = vector.load %arg2[%c3, %c0_14, %c0_15] : memref<9x8x4xf32, #tpu.memory_space<vmem>>, vector<1x8x4xf32>
    %23 = vector.shape_cast %22 : vector<1x8x4xf32> to vector<8x4xf32>
    %24 = vector.extract_strided_slice %4 {offsets = [0, 16], sizes = [4, 496], strides = [1, 1]} : vector<4x512xf32> to vector<4x496xf32>
    %25 = vector.extract_strided_slice %4 {offsets = [0, 0], sizes = [4, 16], strides = [1, 1]} : vector<4x512xf32> to vector<4x16xf32>
    %26 = tpu.concatenate %24, %25 in 1 : vector<4x496xf32>, vector<4x16xf32> -> vector<4x512xf32>
    %cst_16 = arith.constant dense<0.000000e+00> : vector<8x512xf32>
    %27 = tpu.matmul %23, %26, %cst_16 {dimension_numbers = #tpu.dot_dimension_numbers<[1], [0], [0], [1], [0, 0, 1, 1], [], []>} : vector<8x4xf32>, vector<4x512xf32>, vector<8x512xf32> -> vector<8x512xf32>
    %28 = arith.addf %21, %27 : vector<8x512xf32>
    %c4 = arith.constant 4 : index
    %c0_17 = arith.constant 0 : index
    %c0_18 = arith.constant 0 : index
    %29 = vector.load %arg2[%c4, %c0_17, %c0_18] : memref<9x8x4xf32, #tpu.memory_space<vmem>>, vector<1x8x4xf32>
    %30 = vector.shape_cast %29 : vector<1x8x4xf32> to vector<8x4xf32>
    %31 = vector.extract_strided_slice %4 {offsets = [0, 17], sizes = [4, 495], strides = [1, 1]} : vector<4x512xf32> to vector<4x495xf32>
    %32 = vector.extract_strided_slice %4 {offsets = [0, 0], sizes = [4, 17], strides = [1, 1]} : vector<4x512xf32> to vector<4x17xf32>
    %33 = tpu.concatenate %31, %32 in 1 : vector<4x495xf32>, vector<4x17xf32> -> vector<4x512xf32>
    %cst_19 = arith.constant dense<0.000000e+00> : vector<8x512xf32>
    %34 = tpu.matmul %30, %33, %cst_19 {dimension_numbers = #tpu.dot_dimension_numbers<[1], [0], [0], [1], [0, 0, 1, 1], [], []>} : vector<8x4xf32>, vector<4x512xf32>, vector<8x512xf32> -> vector<8x512xf32>
    %35 = arith.addf %28, %34 : vector<8x512xf32>
    %c5 = arith.constant 5 : index
    %c0_20 = arith.constant 0 : index
    %c0_21 = arith.constant 0 : index
    %36 = vector.load %arg2[%c5, %c0_20, %c0_21] : memref<9x8x4xf32, #tpu.memory_space<vmem>>, vector<1x8x4xf32>
    %37 = vector.shape_cast %36 : vector<1x8x4xf32> to vector<8x4xf32>
    %38 = vector.extract_strided_slice %4 {offsets = [0, 18], sizes = [4, 494], strides = [1, 1]} : vector<4x512xf32> to vector<4x494xf32>
    %39 = vector.extract_strided_slice %4 {offsets = [0, 0], sizes = [4, 18], strides = [1, 1]} : vector<4x512xf32> to vector<4x18xf32>
    %40 = tpu.concatenate %38, %39 in 1 : vector<4x494xf32>, vector<4x18xf32> -> vector<4x512xf32>
    %cst_22 = arith.constant dense<0.000000e+00> : vector<8x512xf32>
    %41 = tpu.matmul %37, %40, %cst_22 {dimension_numbers = #tpu.dot_dimension_numbers<[1], [0], [0], [1], [0, 0, 1, 1], [], []>} : vector<8x4xf32>, vector<4x512xf32>, vector<8x512xf32> -> vector<8x512xf32>
    %42 = arith.addf %35, %41 : vector<8x512xf32>
    %c6 = arith.constant 6 : index
    %c0_23 = arith.constant 0 : index
    %c0_24 = arith.constant 0 : index
    %43 = vector.load %arg2[%c6, %c0_23, %c0_24] : memref<9x8x4xf32, #tpu.memory_space<vmem>>, vector<1x8x4xf32>
    %44 = vector.shape_cast %43 : vector<1x8x4xf32> to vector<8x4xf32>
    %45 = vector.extract_strided_slice %4 {offsets = [0, 32], sizes = [4, 480], strides = [1, 1]} : vector<4x512xf32> to vector<4x480xf32>
    %46 = vector.extract_strided_slice %4 {offsets = [0, 0], sizes = [4, 32], strides = [1, 1]} : vector<4x512xf32> to vector<4x32xf32>
    %47 = tpu.concatenate %45, %46 in 1 : vector<4x480xf32>, vector<4x32xf32> -> vector<4x512xf32>
    %cst_25 = arith.constant dense<0.000000e+00> : vector<8x512xf32>
    %48 = tpu.matmul %44, %47, %cst_25 {dimension_numbers = #tpu.dot_dimension_numbers<[1], [0], [0], [1], [0, 0, 1, 1], [], []>} : vector<8x4xf32>, vector<4x512xf32>, vector<8x512xf32> -> vector<8x512xf32>
    %49 = arith.addf %42, %48 : vector<8x512xf32>
    %c7 = arith.constant 7 : index
    %c0_26 = arith.constant 0 : index
    %c0_27 = arith.constant 0 : index
    %50 = vector.load %arg2[%c7, %c0_26, %c0_27] : memref<9x8x4xf32, #tpu.memory_space<vmem>>, vector<1x8x4xf32>
    %51 = vector.shape_cast %50 : vector<1x8x4xf32> to vector<8x4xf32>
    %52 = vector.extract_strided_slice %4 {offsets = [0, 33], sizes = [4, 479], strides = [1, 1]} : vector<4x512xf32> to vector<4x479xf32>
    %53 = vector.extract_strided_slice %4 {offsets = [0, 0], sizes = [4, 33], strides = [1, 1]} : vector<4x512xf32> to vector<4x33xf32>
    %54 = tpu.concatenate %52, %53 in 1 : vector<4x479xf32>, vector<4x33xf32> -> vector<4x512xf32>
    %cst_28 = arith.constant dense<0.000000e+00> : vector<8x512xf32>
    %55 = tpu.matmul %51, %54, %cst_28 {dimension_numbers = #tpu.dot_dimension_numbers<[1], [0], [0], [1], [0, 0, 1, 1], [], []>} : vector<8x4xf32>, vector<4x512xf32>, vector<8x512xf32> -> vector<8x512xf32>
    %56 = arith.addf %49, %55 : vector<8x512xf32>
    %c8 = arith.constant 8 : index
    %c0_29 = arith.constant 0 : index
    %c0_30 = arith.constant 0 : index
    %57 = vector.load %arg2[%c8, %c0_29, %c0_30] : memref<9x8x4xf32, #tpu.memory_space<vmem>>, vector<1x8x4xf32>
    %58 = vector.shape_cast %57 : vector<1x8x4xf32> to vector<8x4xf32>
    %59 = vector.extract_strided_slice %4 {offsets = [0, 34], sizes = [4, 478], strides = [1, 1]} : vector<4x512xf32> to vector<4x478xf32>
    %60 = vector.extract_strided_slice %4 {offsets = [0, 0], sizes = [4, 34], strides = [1, 1]} : vector<4x512xf32> to vector<4x34xf32>
    %61 = tpu.concatenate %59, %60 in 1 : vector<4x478xf32>, vector<4x34xf32> -> vector<4x512xf32>
    %cst_31 = arith.constant dense<0.000000e+00> : vector<8x512xf32>
    %62 = tpu.matmul %58, %61, %cst_31 {dimension_numbers = #tpu.dot_dimension_numbers<[1], [0], [0], [1], [0, 0, 1, 1], [], []>} : vector<8x4xf32>, vector<4x512xf32>, vector<8x512xf32> -> vector<8x512xf32>
    %63 = arith.addf %56, %62 : vector<8x512xf32>
    %c0_32 = arith.constant 0 : index
    %c0_33 = arith.constant 0 : index
    %64 = vector.load %arg3[%c0_32, %c0_33] : memref<8x1xf32, #tpu.memory_space<vmem>>, vector<8x1xf32>
    %65 = vector.broadcast %64 : vector<8x1xf32> to vector<8x512xf32>
    %66 = arith.addf %63, %65 : vector<8x512xf32>
    %cst_34 = arith.constant 0.000000e+00 : f32
    %67 = vector.broadcast %cst_34 : f32 to vector<8x512xf32>
    %68 = arith.maximumf %66, %67 : vector<8x512xf32>
    %c0_35 = arith.constant 0 : index
    %c0_36 = arith.constant 0 : index
    %c0_37 = arith.constant 0 : index
    %69 = vector.load %arg4[%c0_35, %c0_36, %c0_37] : memref<9x16x8xf32, #tpu.memory_space<vmem>>, vector<1x16x8xf32>
    %70 = vector.shape_cast %69 : vector<1x16x8xf32> to vector<16x8xf32>
    %cst_38 = arith.constant dense<0.000000e+00> : vector<16x512xf32>
    %71 = tpu.matmul %70, %68, %cst_38 {dimension_numbers = #tpu.dot_dimension_numbers<[1], [0], [0], [1], [0, 0, 1, 1], [], []>} : vector<16x8xf32>, vector<8x512xf32>, vector<16x512xf32> -> vector<16x512xf32>
    %c1_39 = arith.constant 1 : index
    %c0_40 = arith.constant 0 : index
    %c0_41 = arith.constant 0 : index
    %72 = vector.load %arg4[%c1_39, %c0_40, %c0_41] : memref<9x16x8xf32, #tpu.memory_space<vmem>>, vector<1x16x8xf32>
    %73 = vector.shape_cast %72 : vector<1x16x8xf32> to vector<16x8xf32>
    %74 = vector.extract_strided_slice %68 {offsets = [0, 1], sizes = [8, 511], strides = [1, 1]} : vector<8x512xf32> to vector<8x511xf32>
    %75 = vector.extract_strided_slice %68 {offsets = [0, 0], sizes = [8, 1], strides = [1, 1]} : vector<8x512xf32> to vector<8x1xf32>
    %76 = tpu.concatenate %74, %75 in 1 : vector<8x511xf32>, vector<8x1xf32> -> vector<8x512xf32>
    %cst_42 = arith.constant dense<0.000000e+00> : vector<16x512xf32>
    %77 = tpu.matmul %73, %76, %cst_42 {dimension_numbers = #tpu.dot_dimension_numbers<[1], [0], [0], [1], [0, 0, 1, 1], [], []>} : vector<16x8xf32>, vector<8x512xf32>, vector<16x512xf32> -> vector<16x512xf32>
    %78 = arith.addf %71, %77 : vector<16x512xf32>
    %c2_43 = arith.constant 2 : index
    %c0_44 = arith.constant 0 : index
    %c0_45 = arith.constant 0 : index
    %79 = vector.load %arg4[%c2_43, %c0_44, %c0_45] : memref<9x16x8xf32, #tpu.memory_space<vmem>>, vector<1x16x8xf32>
    %80 = vector.shape_cast %79 : vector<1x16x8xf32> to vector<16x8xf32>
    %81 = vector.extract_strided_slice %68 {offsets = [0, 2], sizes = [8, 510], strides = [1, 1]} : vector<8x512xf32> to vector<8x510xf32>
    %82 = vector.extract_strided_slice %68 {offsets = [0, 0], sizes = [8, 2], strides = [1, 1]} : vector<8x512xf32> to vector<8x2xf32>
    %83 = tpu.concatenate %81, %82 in 1 : vector<8x510xf32>, vector<8x2xf32> -> vector<8x512xf32>
    %cst_46 = arith.constant dense<0.000000e+00> : vector<16x512xf32>
    %84 = tpu.matmul %80, %83, %cst_46 {dimension_numbers = #tpu.dot_dimension_numbers<[1], [0], [0], [1], [0, 0, 1, 1], [], []>} : vector<16x8xf32>, vector<8x512xf32>, vector<16x512xf32> -> vector<16x512xf32>
    %85 = arith.addf %78, %84 : vector<16x512xf32>
    %c3_47 = arith.constant 3 : index
    %c0_48 = arith.constant 0 : index
    %c0_49 = arith.constant 0 : index
    %86 = vector.load %arg4[%c3_47, %c0_48, %c0_49] : memref<9x16x8xf32, #tpu.memory_space<vmem>>, vector<1x16x8xf32>
    %87 = vector.shape_cast %86 : vector<1x16x8xf32> to vector<16x8xf32>
    %88 = vector.extract_strided_slice %68 {offsets = [0, 16], sizes = [8, 496], strides = [1, 1]} : vector<8x512xf32> to vector<8x496xf32>
    %89 = vector.extract_strided_slice %68 {offsets = [0, 0], sizes = [8, 16], strides = [1, 1]} : vector<8x512xf32> to vector<8x16xf32>
    %90 = tpu.concatenate %88, %89 in 1 : vector<8x496xf32>, vector<8x16xf32> -> vector<8x512xf32>
    %cst_50 = arith.constant dense<0.000000e+00> : vector<16x512xf32>
    %91 = tpu.matmul %87, %90, %cst_50 {dimension_numbers = #tpu.dot_dimension_numbers<[1], [0], [0], [1], [0, 0, 1, 1], [], []>} : vector<16x8xf32>, vector<8x512xf32>, vector<16x512xf32> -> vector<16x512xf32>
    %92 = arith.addf %85, %91 : vector<16x512xf32>
    %c4_51 = arith.constant 4 : index
    %c0_52 = arith.constant 0 : index
    %c0_53 = arith.constant 0 : index
    %93 = vector.load %arg4[%c4_51, %c0_52, %c0_53] : memref<9x16x8xf32, #tpu.memory_space<vmem>>, vector<1x16x8xf32>
    %94 = vector.shape_cast %93 : vector<1x16x8xf32> to vector<16x8xf32>
    %95 = vector.extract_strided_slice %68 {offsets = [0, 17], sizes = [8, 495], strides = [1, 1]} : vector<8x512xf32> to vector<8x495xf32>
    %96 = vector.extract_strided_slice %68 {offsets = [0, 0], sizes = [8, 17], strides = [1, 1]} : vector<8x512xf32> to vector<8x17xf32>
    %97 = tpu.concatenate %95, %96 in 1 : vector<8x495xf32>, vector<8x17xf32> -> vector<8x512xf32>
    %cst_54 = arith.constant dense<0.000000e+00> : vector<16x512xf32>
    %98 = tpu.matmul %94, %97, %cst_54 {dimension_numbers = #tpu.dot_dimension_numbers<[1], [0], [0], [1], [0, 0, 1, 1], [], []>} : vector<16x8xf32>, vector<8x512xf32>, vector<16x512xf32> -> vector<16x512xf32>
    %99 = arith.addf %92, %98 : vector<16x512xf32>
    %c5_55 = arith.constant 5 : index
    %c0_56 = arith.constant 0 : index
    %c0_57 = arith.constant 0 : index
    %100 = vector.load %arg4[%c5_55, %c0_56, %c0_57] : memref<9x16x8xf32, #tpu.memory_space<vmem>>, vector<1x16x8xf32>
    %101 = vector.shape_cast %100 : vector<1x16x8xf32> to vector<16x8xf32>
    %102 = vector.extract_strided_slice %68 {offsets = [0, 18], sizes = [8, 494], strides = [1, 1]} : vector<8x512xf32> to vector<8x494xf32>
    %103 = vector.extract_strided_slice %68 {offsets = [0, 0], sizes = [8, 18], strides = [1, 1]} : vector<8x512xf32> to vector<8x18xf32>
    %104 = tpu.concatenate %102, %103 in 1 : vector<8x494xf32>, vector<8x18xf32> -> vector<8x512xf32>
    %cst_58 = arith.constant dense<0.000000e+00> : vector<16x512xf32>
    %105 = tpu.matmul %101, %104, %cst_58 {dimension_numbers = #tpu.dot_dimension_numbers<[1], [0], [0], [1], [0, 0, 1, 1], [], []>} : vector<16x8xf32>, vector<8x512xf32>, vector<16x512xf32> -> vector<16x512xf32>
    %106 = arith.addf %99, %105 : vector<16x512xf32>
    %c6_59 = arith.constant 6 : index
    %c0_60 = arith.constant 0 : index
    %c0_61 = arith.constant 0 : index
    %107 = vector.load %arg4[%c6_59, %c0_60, %c0_61] : memref<9x16x8xf32, #tpu.memory_space<vmem>>, vector<1x16x8xf32>
    %108 = vector.shape_cast %107 : vector<1x16x8xf32> to vector<16x8xf32>
    %109 = vector.extract_strided_slice %68 {offsets = [0, 32], sizes = [8, 480], strides = [1, 1]} : vector<8x512xf32> to vector<8x480xf32>
    %110 = vector.extract_strided_slice %68 {offsets = [0, 0], sizes = [8, 32], strides = [1, 1]} : vector<8x512xf32> to vector<8x32xf32>
    %111 = tpu.concatenate %109, %110 in 1 : vector<8x480xf32>, vector<8x32xf32> -> vector<8x512xf32>
    %cst_62 = arith.constant dense<0.000000e+00> : vector<16x512xf32>
    %112 = tpu.matmul %108, %111, %cst_62 {dimension_numbers = #tpu.dot_dimension_numbers<[1], [0], [0], [1], [0, 0, 1, 1], [], []>} : vector<16x8xf32>, vector<8x512xf32>, vector<16x512xf32> -> vector<16x512xf32>
    %113 = arith.addf %106, %112 : vector<16x512xf32>
    %c7_63 = arith.constant 7 : index
    %c0_64 = arith.constant 0 : index
    %c0_65 = arith.constant 0 : index
    %114 = vector.load %arg4[%c7_63, %c0_64, %c0_65] : memref<9x16x8xf32, #tpu.memory_space<vmem>>, vector<1x16x8xf32>
    %115 = vector.shape_cast %114 : vector<1x16x8xf32> to vector<16x8xf32>
    %116 = vector.extract_strided_slice %68 {offsets = [0, 33], sizes = [8, 479], strides = [1, 1]} : vector<8x512xf32> to vector<8x479xf32>
    %117 = vector.extract_strided_slice %68 {offsets = [0, 0], sizes = [8, 33], strides = [1, 1]} : vector<8x512xf32> to vector<8x33xf32>
    %118 = tpu.concatenate %116, %117 in 1 : vector<8x479xf32>, vector<8x33xf32> -> vector<8x512xf32>
    %cst_66 = arith.constant dense<0.000000e+00> : vector<16x512xf32>
    %119 = tpu.matmul %115, %118, %cst_66 {dimension_numbers = #tpu.dot_dimension_numbers<[1], [0], [0], [1], [0, 0, 1, 1], [], []>} : vector<16x8xf32>, vector<8x512xf32>, vector<16x512xf32> -> vector<16x512xf32>
    %120 = arith.addf %113, %119 : vector<16x512xf32>
    %c8_67 = arith.constant 8 : index
    %c0_68 = arith.constant 0 : index
    %c0_69 = arith.constant 0 : index
    %121 = vector.load %arg4[%c8_67, %c0_68, %c0_69] : memref<9x16x8xf32, #tpu.memory_space<vmem>>, vector<1x16x8xf32>
    %122 = vector.shape_cast %121 : vector<1x16x8xf32> to vector<16x8xf32>
    %123 = vector.extract_strided_slice %68 {offsets = [0, 34], sizes = [8, 478], strides = [1, 1]} : vector<8x512xf32> to vector<8x478xf32>
    %124 = vector.extract_strided_slice %68 {offsets = [0, 0], sizes = [8, 34], strides = [1, 1]} : vector<8x512xf32> to vector<8x34xf32>
    %125 = tpu.concatenate %123, %124 in 1 : vector<8x478xf32>, vector<8x34xf32> -> vector<8x512xf32>
    %cst_70 = arith.constant dense<0.000000e+00> : vector<16x512xf32>
    %126 = tpu.matmul %122, %125, %cst_70 {dimension_numbers = #tpu.dot_dimension_numbers<[1], [0], [0], [1], [0, 0, 1, 1], [], []>} : vector<16x8xf32>, vector<8x512xf32>, vector<16x512xf32> -> vector<16x512xf32>
    %127 = arith.addf %120, %126 : vector<16x512xf32>
    %c0_71 = arith.constant 0 : index
    %c0_72 = arith.constant 0 : index
    %128 = vector.load %arg5[%c0_71, %c0_72] : memref<16x1xf32, #tpu.memory_space<vmem>>, vector<16x1xf32>
    %129 = vector.broadcast %128 : vector<16x1xf32> to vector<16x512xf32>
    %130 = arith.addf %127, %129 : vector<16x512xf32>
    %cst_73 = arith.constant 0.000000e+00 : f32
    %131 = vector.broadcast %cst_73 : f32 to vector<16x512xf32>
    %132 = arith.maximumf %130, %131 : vector<16x512xf32>
    %c0_74 = arith.constant 0 : index
    %c0_75 = arith.constant 0 : index
    %133 = vector.load %arg10[%c0_74, %c0_75] : memref<1x512xf32, #tpu.memory_space<vmem>>, vector<1x512xf32>
    %cst_76 = arith.constant 0.000000e+00 : f32
    %134 = vector.broadcast %cst_76 : f32 to vector<1x512xf32>
    %135 = arith.cmpf ogt, %133, %134 : vector<1x512xf32>
    %cst_77 = arith.constant 0.000000e+00 : f32
    %136 = vector.shape_cast %135 : vector<1x512xi1> to vector<1x512xi1>
    %137 = vector.broadcast %136 : vector<1x512xi1> to vector<16x512xi1>
    %138 = vector.broadcast %cst_77 : f32 to vector<16x512xf32>
    %139 = arith.select %137, %132, %138 : vector<16x512xi1>, vector<16x512xf32>
    %c0_78 = arith.constant 0 : index
    %c0_79 = arith.constant 0 : index
    %c0_80 = arith.constant 0 : index
    %140 = vector.load %arg6[%c0_78, %c0_79, %c0_80] : memref<9x8x16xf32, #tpu.memory_space<vmem>>, vector<1x8x16xf32>
    %141 = vector.shape_cast %140 : vector<1x8x16xf32> to vector<8x16xf32>
    %142 = vector.extract_strided_slice %139 {offsets = [0, 478], sizes = [16, 34], strides = [1, 1]} : vector<16x512xf32> to vector<16x34xf32>
    %143 = vector.extract_strided_slice %139 {offsets = [0, 0], sizes = [16, 478], strides = [1, 1]} : vector<16x512xf32> to vector<16x478xf32>
    %144 = tpu.concatenate %142, %143 in 1 : vector<16x34xf32>, vector<16x478xf32> -> vector<16x512xf32>
    %cst_81 = arith.constant dense<0.000000e+00> : vector<8x512xf32>
    %145 = tpu.matmul %141, %144, %cst_81 {dimension_numbers = #tpu.dot_dimension_numbers<[1], [0], [0], [1], [0, 0, 1, 1], [], []>} : vector<8x16xf32>, vector<16x512xf32>, vector<8x512xf32> -> vector<8x512xf32>
    %c1_82 = arith.constant 1 : index
    %c0_83 = arith.constant 0 : index
    %c0_84 = arith.constant 0 : index
    %146 = vector.load %arg6[%c1_82, %c0_83, %c0_84] : memref<9x8x16xf32, #tpu.memory_space<vmem>>, vector<1x8x16xf32>
    %147 = vector.shape_cast %146 : vector<1x8x16xf32> to vector<8x16xf32>
    %148 = vector.extract_strided_slice %139 {offsets = [0, 479], sizes = [16, 33], strides = [1, 1]} : vector<16x512xf32> to vector<16x33xf32>
    %149 = vector.extract_strided_slice %139 {offsets = [0, 0], sizes = [16, 479], strides = [1, 1]} : vector<16x512xf32> to vector<16x479xf32>
    %150 = tpu.concatenate %148, %149 in 1 : vector<16x33xf32>, vector<16x479xf32> -> vector<16x512xf32>
    %cst_85 = arith.constant dense<0.000000e+00> : vector<8x512xf32>
    %151 = tpu.matmul %147, %150, %cst_85 {dimension_numbers = #tpu.dot_dimension_numbers<[1], [0], [0], [1], [0, 0, 1, 1], [], []>} : vector<8x16xf32>, vector<16x512xf32>, vector<8x512xf32> -> vector<8x512xf32>
    %152 = arith.addf %145, %151 : vector<8x512xf32>
    %c2_86 = arith.constant 2 : index
    %c0_87 = arith.constant 0 : index
    %c0_88 = arith.constant 0 : index
    %153 = vector.load %arg6[%c2_86, %c0_87, %c0_88] : memref<9x8x16xf32, #tpu.memory_space<vmem>>, vector<1x8x16xf32>
    %154 = vector.shape_cast %153 : vector<1x8x16xf32> to vector<8x16xf32>
    %155 = vector.extract_strided_slice %139 {offsets = [0, 480], sizes = [16, 32], strides = [1, 1]} : vector<16x512xf32> to vector<16x32xf32>
    %156 = vector.extract_strided_slice %139 {offsets = [0, 0], sizes = [16, 480], strides = [1, 1]} : vector<16x512xf32> to vector<16x480xf32>
    %157 = tpu.concatenate %155, %156 in 1 : vector<16x32xf32>, vector<16x480xf32> -> vector<16x512xf32>
    %cst_89 = arith.constant dense<0.000000e+00> : vector<8x512xf32>
    %158 = tpu.matmul %154, %157, %cst_89 {dimension_numbers = #tpu.dot_dimension_numbers<[1], [0], [0], [1], [0, 0, 1, 1], [], []>} : vector<8x16xf32>, vector<16x512xf32>, vector<8x512xf32> -> vector<8x512xf32>
    %159 = arith.addf %152, %158 : vector<8x512xf32>
    %c3_90 = arith.constant 3 : index
    %c0_91 = arith.constant 0 : index
    %c0_92 = arith.constant 0 : index
    %160 = vector.load %arg6[%c3_90, %c0_91, %c0_92] : memref<9x8x16xf32, #tpu.memory_space<vmem>>, vector<1x8x16xf32>
    %161 = vector.shape_cast %160 : vector<1x8x16xf32> to vector<8x16xf32>
    %162 = vector.extract_strided_slice %139 {offsets = [0, 494], sizes = [16, 18], strides = [1, 1]} : vector<16x512xf32> to vector<16x18xf32>
    %163 = vector.extract_strided_slice %139 {offsets = [0, 0], sizes = [16, 494], strides = [1, 1]} : vector<16x512xf32> to vector<16x494xf32>
    %164 = tpu.concatenate %162, %163 in 1 : vector<16x18xf32>, vector<16x494xf32> -> vector<16x512xf32>
    %cst_93 = arith.constant dense<0.000000e+00> : vector<8x512xf32>
    %165 = tpu.matmul %161, %164, %cst_93 {dimension_numbers = #tpu.dot_dimension_numbers<[1], [0], [0], [1], [0, 0, 1, 1], [], []>} : vector<8x16xf32>, vector<16x512xf32>, vector<8x512xf32> -> vector<8x512xf32>
    %166 = arith.addf %159, %165 : vector<8x512xf32>
    %c4_94 = arith.constant 4 : index
    %c0_95 = arith.constant 0 : index
    %c0_96 = arith.constant 0 : index
    %167 = vector.load %arg6[%c4_94, %c0_95, %c0_96] : memref<9x8x16xf32, #tpu.memory_space<vmem>>, vector<1x8x16xf32>
    %168 = vector.shape_cast %167 : vector<1x8x16xf32> to vector<8x16xf32>
    %169 = vector.extract_strided_slice %139 {offsets = [0, 495], sizes = [16, 17], strides = [1, 1]} : vector<16x512xf32> to vector<16x17xf32>
    %170 = vector.extract_strided_slice %139 {offsets = [0, 0], sizes = [16, 495], strides = [1, 1]} : vector<16x512xf32> to vector<16x495xf32>
    %171 = tpu.concatenate %169, %170 in 1 : vector<16x17xf32>, vector<16x495xf32> -> vector<16x512xf32>
    %cst_97 = arith.constant dense<0.000000e+00> : vector<8x512xf32>
    %172 = tpu.matmul %168, %171, %cst_97 {dimension_numbers = #tpu.dot_dimension_numbers<[1], [0], [0], [1], [0, 0, 1, 1], [], []>} : vector<8x16xf32>, vector<16x512xf32>, vector<8x512xf32> -> vector<8x512xf32>
    %173 = arith.addf %166, %172 : vector<8x512xf32>
    %c5_98 = arith.constant 5 : index
    %c0_99 = arith.constant 0 : index
    %c0_100 = arith.constant 0 : index
    %174 = vector.load %arg6[%c5_98, %c0_99, %c0_100] : memref<9x8x16xf32, #tpu.memory_space<vmem>>, vector<1x8x16xf32>
    %175 = vector.shape_cast %174 : vector<1x8x16xf32> to vector<8x16xf32>
    %176 = vector.extract_strided_slice %139 {offsets = [0, 496], sizes = [16, 16], strides = [1, 1]} : vector<16x512xf32> to vector<16x16xf32>
    %177 = vector.extract_strided_slice %139 {offsets = [0, 0], sizes = [16, 496], strides = [1, 1]} : vector<16x512xf32> to vector<16x496xf32>
    %178 = tpu.concatenate %176, %177 in 1 : vector<16x16xf32>, vector<16x496xf32> -> vector<16x512xf32>
    %cst_101 = arith.constant dense<0.000000e+00> : vector<8x512xf32>
    %179 = tpu.matmul %175, %178, %cst_101 {dimension_numbers = #tpu.dot_dimension_numbers<[1], [0], [0], [1], [0, 0, 1, 1], [], []>} : vector<8x16xf32>, vector<16x512xf32>, vector<8x512xf32> -> vector<8x512xf32>
    %180 = arith.addf %173, %179 : vector<8x512xf32>
    %c6_102 = arith.constant 6 : index
    %c0_103 = arith.constant 0 : index
    %c0_104 = arith.constant 0 : index
    %181 = vector.load %arg6[%c6_102, %c0_103, %c0_104] : memref<9x8x16xf32, #tpu.memory_space<vmem>>, vector<1x8x16xf32>
    %182 = vector.shape_cast %181 : vector<1x8x16xf32> to vector<8x16xf32>
    %183 = vector.extract_strided_slice %139 {offsets = [0, 510], sizes = [16, 2], strides = [1, 1]} : vector<16x512xf32> to vector<16x2xf32>
    %184 = vector.extract_strided_slice %139 {offsets = [0, 0], sizes = [16, 510], strides = [1, 1]} : vector<16x512xf32> to vector<16x510xf32>
    %185 = tpu.concatenate %183, %184 in 1 : vector<16x2xf32>, vector<16x510xf32> -> vector<16x512xf32>
    %cst_105 = arith.constant dense<0.000000e+00> : vector<8x512xf32>
    %186 = tpu.matmul %182, %185, %cst_105 {dimension_numbers = #tpu.dot_dimension_numbers<[1], [0], [0], [1], [0, 0, 1, 1], [], []>} : vector<8x16xf32>, vector<16x512xf32>, vector<8x512xf32> -> vector<8x512xf32>
    %187 = arith.addf %180, %186 : vector<8x512xf32>
    %c7_106 = arith.constant 7 : index
    %c0_107 = arith.constant 0 : index
    %c0_108 = arith.constant 0 : index
    %188 = vector.load %arg6[%c7_106, %c0_107, %c0_108] : memref<9x8x16xf32, #tpu.memory_space<vmem>>, vector<1x8x16xf32>
    %189 = vector.shape_cast %188 : vector<1x8x16xf32> to vector<8x16xf32>
    %190 = vector.extract_strided_slice %139 {offsets = [0, 511], sizes = [16, 1], strides = [1, 1]} : vector<16x512xf32> to vector<16x1xf32>
    %191 = vector.extract_strided_slice %139 {offsets = [0, 0], sizes = [16, 511], strides = [1, 1]} : vector<16x512xf32> to vector<16x511xf32>
    %192 = tpu.concatenate %190, %191 in 1 : vector<16x1xf32>, vector<16x511xf32> -> vector<16x512xf32>
    %cst_109 = arith.constant dense<0.000000e+00> : vector<8x512xf32>
    %193 = tpu.matmul %189, %192, %cst_109 {dimension_numbers = #tpu.dot_dimension_numbers<[1], [0], [0], [1], [0, 0, 1, 1], [], []>} : vector<8x16xf32>, vector<16x512xf32>, vector<8x512xf32> -> vector<8x512xf32>
    %194 = arith.addf %187, %193 : vector<8x512xf32>
    %c8_110 = arith.constant 8 : index
    %c0_111 = arith.constant 0 : index
    %c0_112 = arith.constant 0 : index
    %195 = vector.load %arg6[%c8_110, %c0_111, %c0_112] : memref<9x8x16xf32, #tpu.memory_space<vmem>>, vector<1x8x16xf32>
    %196 = vector.shape_cast %195 : vector<1x8x16xf32> to vector<8x16xf32>
    %cst_113 = arith.constant dense<0.000000e+00> : vector<8x512xf32>
    %197 = tpu.matmul %196, %139, %cst_113 {dimension_numbers = #tpu.dot_dimension_numbers<[1], [0], [0], [1], [0, 0, 1, 1], [], []>} : vector<8x16xf32>, vector<16x512xf32>, vector<8x512xf32> -> vector<8x512xf32>
    %198 = arith.addf %194, %197 : vector<8x512xf32>
    %c0_114 = arith.constant 0 : index
    %c0_115 = arith.constant 0 : index
    %199 = vector.load %arg7[%c0_114, %c0_115] : memref<8x1xf32, #tpu.memory_space<vmem>>, vector<8x1xf32>
    %200 = vector.broadcast %199 : vector<8x1xf32> to vector<8x512xf32>
    %201 = arith.addf %198, %200 : vector<8x512xf32>
    %cst_116 = arith.constant 0.000000e+00 : f32
    %202 = vector.broadcast %cst_116 : f32 to vector<8x512xf32>
    %203 = arith.maximumf %201, %202 : vector<8x512xf32>
    %c0_117 = arith.constant 0 : index
    %c0_118 = arith.constant 0 : index
    %204 = vector.load %arg11[%c0_117, %c0_118] : memref<1x512xf32, #tpu.memory_space<vmem>>, vector<1x512xf32>
    %cst_119 = arith.constant 0.000000e+00 : f32
    %205 = vector.broadcast %cst_119 : f32 to vector<1x512xf32>
    %206 = arith.cmpf ogt, %204, %205 : vector<1x512xf32>
    %cst_120 = arith.constant 0.000000e+00 : f32
    %207 = vector.shape_cast %206 : vector<1x512xi1> to vector<1x512xi1>
    %208 = vector.broadcast %207 : vector<1x512xi1> to vector<8x512xi1>
    %209 = vector.broadcast %cst_120 : f32 to vector<8x512xf32>
    %210 = arith.select %208, %203, %209 : vector<8x512xi1>, vector<8x512xf32>
    %c0_121 = arith.constant 0 : index
    %c0_122 = arith.constant 0 : index
    %c0_123 = arith.constant 0 : index
    %211 = vector.load %arg8[%c0_121, %c0_122, %c0_123] : memref<9x4x8xf32, #tpu.memory_space<vmem>>, vector<1x4x8xf32>
    %212 = vector.shape_cast %211 : vector<1x4x8xf32> to vector<4x8xf32>
    %213 = vector.extract_strided_slice %210 {offsets = [0, 478], sizes = [8, 34], strides = [1, 1]} : vector<8x512xf32> to vector<8x34xf32>
    %214 = vector.extract_strided_slice %210 {offsets = [0, 0], sizes = [8, 478], strides = [1, 1]} : vector<8x512xf32> to vector<8x478xf32>
    %215 = tpu.concatenate %213, %214 in 1 : vector<8x34xf32>, vector<8x478xf32> -> vector<8x512xf32>
    %cst_124 = arith.constant dense<0.000000e+00> : vector<4x512xf32>
    %216 = tpu.matmul %212, %215, %cst_124 {dimension_numbers = #tpu.dot_dimension_numbers<[1], [0], [0], [1], [0, 0, 1, 1], [], []>} : vector<4x8xf32>, vector<8x512xf32>, vector<4x512xf32> -> vector<4x512xf32>
    %c1_125 = arith.constant 1 : index
    %c0_126 = arith.constant 0 : index
    %c0_127 = arith.constant 0 : index
    %217 = vector.load %arg8[%c1_125, %c0_126, %c0_127] : memref<9x4x8xf32, #tpu.memory_space<vmem>>, vector<1x4x8xf32>
    %218 = vector.shape_cast %217 : vector<1x4x8xf32> to vector<4x8xf32>
    %219 = vector.extract_strided_slice %210 {offsets = [0, 479], sizes = [8, 33], strides = [1, 1]} : vector<8x512xf32> to vector<8x33xf32>
    %220 = vector.extract_strided_slice %210 {offsets = [0, 0], sizes = [8, 479], strides = [1, 1]} : vector<8x512xf32> to vector<8x479xf32>
    %221 = tpu.concatenate %219, %220 in 1 : vector<8x33xf32>, vector<8x479xf32> -> vector<8x512xf32>
    %cst_128 = arith.constant dense<0.000000e+00> : vector<4x512xf32>
    %222 = tpu.matmul %218, %221, %cst_128 {dimension_numbers = #tpu.dot_dimension_numbers<[1], [0], [0], [1], [0, 0, 1, 1], [], []>} : vector<4x8xf32>, vector<8x512xf32>, vector<4x512xf32> -> vector<4x512xf32>
    %223 = arith.addf %216, %222 : vector<4x512xf32>
    %c2_129 = arith.constant 2 : index
    %c0_130 = arith.constant 0 : index
    %c0_131 = arith.constant 0 : index
    %224 = vector.load %arg8[%c2_129, %c0_130, %c0_131] : memref<9x4x8xf32, #tpu.memory_space<vmem>>, vector<1x4x8xf32>
    %225 = vector.shape_cast %224 : vector<1x4x8xf32> to vector<4x8xf32>
    %226 = vector.extract_strided_slice %210 {offsets = [0, 480], sizes = [8, 32], strides = [1, 1]} : vector<8x512xf32> to vector<8x32xf32>
    %227 = vector.extract_strided_slice %210 {offsets = [0, 0], sizes = [8, 480], strides = [1, 1]} : vector<8x512xf32> to vector<8x480xf32>
    %228 = tpu.concatenate %226, %227 in 1 : vector<8x32xf32>, vector<8x480xf32> -> vector<8x512xf32>
    %cst_132 = arith.constant dense<0.000000e+00> : vector<4x512xf32>
    %229 = tpu.matmul %225, %228, %cst_132 {dimension_numbers = #tpu.dot_dimension_numbers<[1], [0], [0], [1], [0, 0, 1, 1], [], []>} : vector<4x8xf32>, vector<8x512xf32>, vector<4x512xf32> -> vector<4x512xf32>
    %230 = arith.addf %223, %229 : vector<4x512xf32>
    %c3_133 = arith.constant 3 : index
    %c0_134 = arith.constant 0 : index
    %c0_135 = arith.constant 0 : index
    %231 = vector.load %arg8[%c3_133, %c0_134, %c0_135] : memref<9x4x8xf32, #tpu.memory_space<vmem>>, vector<1x4x8xf32>
    %232 = vector.shape_cast %231 : vector<1x4x8xf32> to vector<4x8xf32>
    %233 = vector.extract_strided_slice %210 {offsets = [0, 494], sizes = [8, 18], strides = [1, 1]} : vector<8x512xf32> to vector<8x18xf32>
    %234 = vector.extract_strided_slice %210 {offsets = [0, 0], sizes = [8, 494], strides = [1, 1]} : vector<8x512xf32> to vector<8x494xf32>
    %235 = tpu.concatenate %233, %234 in 1 : vector<8x18xf32>, vector<8x494xf32> -> vector<8x512xf32>
    %cst_136 = arith.constant dense<0.000000e+00> : vector<4x512xf32>
    %236 = tpu.matmul %232, %235, %cst_136 {dimension_numbers = #tpu.dot_dimension_numbers<[1], [0], [0], [1], [0, 0, 1, 1], [], []>} : vector<4x8xf32>, vector<8x512xf32>, vector<4x512xf32> -> vector<4x512xf32>
    %237 = arith.addf %230, %236 : vector<4x512xf32>
    %c4_137 = arith.constant 4 : index
    %c0_138 = arith.constant 0 : index
    %c0_139 = arith.constant 0 : index
    %238 = vector.load %arg8[%c4_137, %c0_138, %c0_139] : memref<9x4x8xf32, #tpu.memory_space<vmem>>, vector<1x4x8xf32>
    %239 = vector.shape_cast %238 : vector<1x4x8xf32> to vector<4x8xf32>
    %240 = vector.extract_strided_slice %210 {offsets = [0, 495], sizes = [8, 17], strides = [1, 1]} : vector<8x512xf32> to vector<8x17xf32>
    %241 = vector.extract_strided_slice %210 {offsets = [0, 0], sizes = [8, 495], strides = [1, 1]} : vector<8x512xf32> to vector<8x495xf32>
    %242 = tpu.concatenate %240, %241 in 1 : vector<8x17xf32>, vector<8x495xf32> -> vector<8x512xf32>
    %cst_140 = arith.constant dense<0.000000e+00> : vector<4x512xf32>
    %243 = tpu.matmul %239, %242, %cst_140 {dimension_numbers = #tpu.dot_dimension_numbers<[1], [0], [0], [1], [0, 0, 1, 1], [], []>} : vector<4x8xf32>, vector<8x512xf32>, vector<4x512xf32> -> vector<4x512xf32>
    %244 = arith.addf %237, %243 : vector<4x512xf32>
    %c5_141 = arith.constant 5 : index
    %c0_142 = arith.constant 0 : index
    %c0_143 = arith.constant 0 : index
    %245 = vector.load %arg8[%c5_141, %c0_142, %c0_143] : memref<9x4x8xf32, #tpu.memory_space<vmem>>, vector<1x4x8xf32>
    %246 = vector.shape_cast %245 : vector<1x4x8xf32> to vector<4x8xf32>
    %247 = vector.extract_strided_slice %210 {offsets = [0, 496], sizes = [8, 16], strides = [1, 1]} : vector<8x512xf32> to vector<8x16xf32>
    %248 = vector.extract_strided_slice %210 {offsets = [0, 0], sizes = [8, 496], strides = [1, 1]} : vector<8x512xf32> to vector<8x496xf32>
    %249 = tpu.concatenate %247, %248 in 1 : vector<8x16xf32>, vector<8x496xf32> -> vector<8x512xf32>
    %cst_144 = arith.constant dense<0.000000e+00> : vector<4x512xf32>
    %250 = tpu.matmul %246, %249, %cst_144 {dimension_numbers = #tpu.dot_dimension_numbers<[1], [0], [0], [1], [0, 0, 1, 1], [], []>} : vector<4x8xf32>, vector<8x512xf32>, vector<4x512xf32> -> vector<4x512xf32>
    %251 = arith.addf %244, %250 : vector<4x512xf32>
    %c6_145 = arith.constant 6 : index
    %c0_146 = arith.constant 0 : index
    %c0_147 = arith.constant 0 : index
    %252 = vector.load %arg8[%c6_145, %c0_146, %c0_147] : memref<9x4x8xf32, #tpu.memory_space<vmem>>, vector<1x4x8xf32>
    %253 = vector.shape_cast %252 : vector<1x4x8xf32> to vector<4x8xf32>
    %254 = vector.extract_strided_slice %210 {offsets = [0, 510], sizes = [8, 2], strides = [1, 1]} : vector<8x512xf32> to vector<8x2xf32>
    %255 = vector.extract_strided_slice %210 {offsets = [0, 0], sizes = [8, 510], strides = [1, 1]} : vector<8x512xf32> to vector<8x510xf32>
    %256 = tpu.concatenate %254, %255 in 1 : vector<8x2xf32>, vector<8x510xf32> -> vector<8x512xf32>
    %cst_148 = arith.constant dense<0.000000e+00> : vector<4x512xf32>
    %257 = tpu.matmul %253, %256, %cst_148 {dimension_numbers = #tpu.dot_dimension_numbers<[1], [0], [0], [1], [0, 0, 1, 1], [], []>} : vector<4x8xf32>, vector<8x512xf32>, vector<4x512xf32> -> vector<4x512xf32>
    %258 = arith.addf %251, %257 : vector<4x512xf32>
    %c7_149 = arith.constant 7 : index
    %c0_150 = arith.constant 0 : index
    %c0_151 = arith.constant 0 : index
    %259 = vector.load %arg8[%c7_149, %c0_150, %c0_151] : memref<9x4x8xf32, #tpu.memory_space<vmem>>, vector<1x4x8xf32>
    %260 = vector.shape_cast %259 : vector<1x4x8xf32> to vector<4x8xf32>
    %261 = vector.extract_strided_slice %210 {offsets = [0, 511], sizes = [8, 1], strides = [1, 1]} : vector<8x512xf32> to vector<8x1xf32>
    %262 = vector.extract_strided_slice %210 {offsets = [0, 0], sizes = [8, 511], strides = [1, 1]} : vector<8x512xf32> to vector<8x511xf32>
    %263 = tpu.concatenate %261, %262 in 1 : vector<8x1xf32>, vector<8x511xf32> -> vector<8x512xf32>
    %cst_152 = arith.constant dense<0.000000e+00> : vector<4x512xf32>
    %264 = tpu.matmul %260, %263, %cst_152 {dimension_numbers = #tpu.dot_dimension_numbers<[1], [0], [0], [1], [0, 0, 1, 1], [], []>} : vector<4x8xf32>, vector<8x512xf32>, vector<4x512xf32> -> vector<4x512xf32>
    %265 = arith.addf %258, %264 : vector<4x512xf32>
    %c8_153 = arith.constant 8 : index
    %c0_154 = arith.constant 0 : index
    %c0_155 = arith.constant 0 : index
    %266 = vector.load %arg8[%c8_153, %c0_154, %c0_155] : memref<9x4x8xf32, #tpu.memory_space<vmem>>, vector<1x4x8xf32>
    %267 = vector.shape_cast %266 : vector<1x4x8xf32> to vector<4x8xf32>
    %cst_156 = arith.constant dense<0.000000e+00> : vector<4x512xf32>
    %268 = tpu.matmul %267, %210, %cst_156 {dimension_numbers = #tpu.dot_dimension_numbers<[1], [0], [0], [1], [0, 0, 1, 1], [], []>} : vector<4x8xf32>, vector<8x512xf32>, vector<4x512xf32> -> vector<4x512xf32>
    %269 = arith.addf %265, %268 : vector<4x512xf32>
    %c0_157 = arith.constant 0 : index
    %c0_158 = arith.constant 0 : index
    %270 = vector.load %arg9[%c0_157, %c0_158] : memref<4x1xf32, #tpu.memory_space<vmem>>, vector<4x1xf32>
    %271 = vector.broadcast %270 : vector<4x1xf32> to vector<4x512xf32>
    %272 = arith.addf %269, %271 : vector<4x512xf32>
    %273 = vector.extract_strided_slice %272 {offsets = [0, 0], sizes = [4, 256], strides = [1, 1]} : vector<4x512xf32> to vector<4x256xf32>
    %c0_159 = arith.constant 0 : index
    %c0_160 = arith.constant 0 : index
    %c0_161 = arith.constant 0 : index
    %274 = vector.load %arg12[%c0_159, %c0_160, %c0_161] : memref<2x4x256xf32, #tpu.memory_space<vmem>>, vector<1x4x256xf32>
    %275 = vector.shape_cast %274 : vector<1x4x256xf32> to vector<4x256xf32>
    %276 = vector.shape_cast %273 : vector<4x256xf32> to vector<1x4x256xf32>
    tpu.vector_store %arg12[%c0_159, %c0_160, %c0_161], %276 {strides = array<i32>} : memref<2x4x256xf32, #tpu.memory_space<vmem>>, vector<1x4x256xf32>,
    %277 = vector.extract_strided_slice %272 {offsets = [0, 256], sizes = [4, 256], strides = [1, 1]} : vector<4x512xf32> to vector<4x256xf32>
    %c1_162 = arith.constant 1 : index
    %c0_163 = arith.constant 0 : index
    %c0_164 = arith.constant 0 : index
    %278 = vector.load %arg12[%c1_162, %c0_163, %c0_164] : memref<2x4x256xf32, #tpu.memory_space<vmem>>, vector<1x4x256xf32>
    %279 = vector.shape_cast %278 : vector<1x4x256xf32> to vector<4x256xf32>
    %280 = vector.shape_cast %277 : vector<4x256xf32> to vector<1x4x256xf32>
    tpu.vector_store %arg12[%c1_162, %c0_163, %c0_164], %280 {strides = array<i32>} : memref<2x4x256xf32, #tpu.memory_space<vmem>>, vector<1x4x256xf32>,
    return
  }
  func.func @transform_0(%arg0: i32) -> (i32, i32, i32) {
    %c0_i32 = arith.constant 0 : i32
    %c0_i32_0 = arith.constant 0 : i32
    %c0_i32_1 = arith.constant 0 : i32
    return %arg0, %c0_i32, %c0_i32_0 : i32, i32, i32
  }
  func.func @transform_1(%arg0: i32) -> (i32, i32, i32) {
    %c0_i32 = arith.constant 0 : i32
    %c0_i32_0 = arith.constant 0 : i32
    %c0_i32_1 = arith.constant 0 : i32
    %c0_i32_2 = arith.constant 0 : i32
    return %c0_i32, %c0_i32_0, %c0_i32_1 : i32, i32, i32
  }
  func.func @transform_2(%arg0: i32) -> (i32, i32) {
    %c0_i32 = arith.constant 0 : i32
    %c0_i32_0 = arith.constant 0 : i32
    %c0_i32_1 = arith.constant 0 : i32
    return %c0_i32, %c0_i32_0 : i32, i32
  }
  func.func @transform_3(%arg0: i32) -> (i32, i32, i32) {
    %c0_i32 = arith.constant 0 : i32
    %c0_i32_0 = arith.constant 0 : i32
    %c0_i32_1 = arith.constant 0 : i32
    %c0_i32_2 = arith.constant 0 : i32
    return %c0_i32, %c0_i32_0, %c0_i32_1 : i32, i32, i32
  }
  func.func @transform_4(%arg0: i32) -> (i32, i32) {
    %c0_i32 = arith.constant 0 : i32
    %c0_i32_0 = arith.constant 0 : i32
    %c0_i32_1 = arith.constant 0 : i32
    return %c0_i32, %c0_i32_0 : i32, i32
  }
  func.func @transform_5(%arg0: i32) -> (i32, i32, i32) {
    %c0_i32 = arith.constant 0 : i32
    %c0_i32_0 = arith.constant 0 : i32
    %c0_i32_1 = arith.constant 0 : i32
    %c0_i32_2 = arith.constant 0 : i32
    return %c0_i32, %c0_i32_0, %c0_i32_1 : i32, i32, i32
  }
  func.func @transform_6(%arg0: i32) -> (i32, i32) {
    %c0_i32 = arith.constant 0 : i32
    %c0_i32_0 = arith.constant 0 : i32
    %c0_i32_1 = arith.constant 0 : i32
    return %c0_i32, %c0_i32_0 : i32, i32
  }
  func.func @transform_7(%arg0: i32) -> (i32, i32, i32) {
    %c0_i32 = arith.constant 0 : i32
    %c0_i32_0 = arith.constant 0 : i32
    %c0_i32_1 = arith.constant 0 : i32
    %c0_i32_2 = arith.constant 0 : i32
    return %c0_i32, %c0_i32_0, %c0_i32_1 : i32, i32, i32
  }
  func.func @transform_8(%arg0: i32) -> (i32, i32) {
    %c0_i32 = arith.constant 0 : i32
    %c0_i32_0 = arith.constant 0 : i32
    %c0_i32_1 = arith.constant 0 : i32
    return %c0_i32, %c0_i32_0 : i32, i32
  }
  func.func @transform_9(%arg0: i32) -> (i32, i32) {
    %c0_i32 = arith.constant 0 : i32
    %c0_i32_0 = arith.constant 0 : i32
    %c0_i32_1 = arith.constant 0 : i32
    return %c0_i32, %c0_i32_0 : i32, i32
  }
  func.func @transform_10(%arg0: i32) -> (i32, i32) {
    %c0_i32 = arith.constant 0 : i32
    %c0_i32_0 = arith.constant 0 : i32
    %c0_i32_1 = arith.constant 0 : i32
    return %c0_i32, %c0_i32_0 : i32, i32
  }
  func.func @transform_11(%arg0: i32) -> (i32, i32, i32) {
    %c0_i32 = arith.constant 0 : i32
    %c0_i32_0 = arith.constant 0 : i32
    %c0_i32_1 = arith.constant 0 : i32
    return %arg0, %c0_i32, %c0_i32_0 : i32, i32, i32
  }
}

</mosaic_0001>

<llo_original>
// kernel: tpu_custom_call.1
$region0: #{tpu_custom_call.1}
  #allocation0 [shape = 'u32[]', space=smem, size = 0x4, offset = 0x4, fixed_abs, tag = 'smem constant byte address 0x4 - core index']
  #allocation1 [shape = 'u32[144,128]{1,0:T(1,128)}', space=vmem, size = 0x12000, scoped, tag = 'internal scratch']
  %s0 = inlined_call_operand.hbm [shape: f32[8,128], index: 0, kind: input, shape index: {}]
  %s1 = inlined_call_operand.hbm [shape: f32[8,128], index: 1, kind: output, shape index: {}]
  %s2 = sld [smem:[#allocation0]]
  $region18: #{tpu_custom_call.1} parent=0
    _
  %s4 = ssub.s32 1, %s2
  %s5 = scalar_select 0, %s4, %s2
  $region1: #{tpu_custom_call.1} parent=0
    #allocation2 [shape = 'u8[4096]{0}', space=vmem, size = 0x1000, scoped, tag = 'input window, operand 0, single buffered']
    #allocation3 [shape = 's32[1]{0}', space=sflag, size = 0x4, scoped, tag = 'scoped memory for tpu_custom_call.1']
    #allocation4 [shape = 's32[1]{0}', space=sflag, size = 0x4, scoped, tag = 'scoped memory for tpu_custom_call.1']
    #allocation5 [shape = 'u8[4096]{0}', space=vmem, size = 0x1000, scoped, tag = 'output window, operand 0, single buffered']
    %6 = vsyncpa [#allocation3], 0
    %7 = vsyncpa [#allocation4], 0
    // Predicated region
    $region2: #{tpu_custom_call.1} parent=1 // pred_check
      _
    $region3: #{tpu_custom_call.1} parent=1 // pred_check_branch
      %9 = sbr.rel (0) target = $region5
    $region4: #{tpu_custom_call.1} parent=1 // pred_region
      %s11 = ssub.s32 128, 128
      %12 = vsyncadd [#allocation3], %s11
      %s14 = sshll.u32 [#allocation2], 4
      %s15 = int_to_ptr.vmem [resolvable:$true] %s14
      %17 = dma.hbm_to_vmem [thread:$0]  %s0, 128, %s15, [#allocation3]
    $region5: #{tpu_custom_call.1} parent=1 // pred_fallthru
      _
    // Predicated region
    $region6: #{tpu_custom_call.1} parent=1 // pred_check
      _
    $region7: #{tpu_custom_call.1} parent=1 // pred_check_branch
      %19 = sbr.rel (0) target = $region9
    $region8: #{tpu_custom_call.1} parent=1 // pred_region
      %20 = dma.done [#allocation3], 128
    $region9: #{tpu_custom_call.1} parent=1 // pred_fallthru
      _
    %v21 = vld [vmem:[#allocation2] sm:$0xff]
    %22 = vrot.lane.b32.xlu0 %v21, 3
    %v23 = vpop.permute.xlu0 %22
    %24 = vst [vmem:[#allocation5] sm:$0xff] %v23
    // Predicated region
    $region10: #{tpu_custom_call.1} parent=1 // pred_check
      _
    $region11: #{tpu_custom_call.1} parent=1 // pred_check_branch
      %26 = sbr.rel (0) target = $region13
    $region12: #{tpu_custom_call.1} parent=1 // pred_region
      %s28 = ssub.s32 128, 128
      %29 = vsyncadd [#allocation4], %s28
      %s31 = sshll.u32 [#allocation5], 4
      %s32 = int_to_ptr.vmem [resolvable:$true] %s31
      %34 = dma.vmem_to_hbm [thread:$0]  %s32, 128, %s1, [#allocation4]
    $region13: #{tpu_custom_call.1} parent=1 // pred_fallthru
      _
    // Predicated region
    $region14: #{tpu_custom_call.1} parent=1 // pred_check
      _
    $region15: #{tpu_custom_call.1} parent=1 // pred_check_branch
      %36 = sbr.rel (0) target = $region17
    $region16: #{tpu_custom_call.1} parent=1 // pred_region
      %37 = dma.done [#allocation4], 128
    $region17: #{tpu_custom_call.1} parent=1 // pred_fallthru
      _
    %38 = vsyncpa [#allocation3], 1
    %39 = vsyncpa [#allocation4], 1

// kernel: _forward_impl.1
$region0: #{_forward_impl.1}
  #allocation0 [shape = 'u32[]', space=smem, size = 0x4, offset = 0x4, fixed_abs, tag = 'smem constant byte address 0x4 - core index']
  #allocation1 [shape = 'u32[144,128]{1,0:T(1,128)}', space=vmem, size = 0x12000, scoped, tag = 'internal scratch']
  %s0 = inlined_call_operand.vmem [shape: f32[2,4,256], index: 0, kind: input, shape index: {}]
  %s1 = inlined_call_operand.hbm [shape: f32[9,8,4], index: 1, kind: input, shape index: {}]
  %s2 = inlined_call_operand.vmem [shape: f32[8,1], index: 2, kind: input, shape index: {}]
  %s3 = inlined_call_operand.vmem [shape: f32[9,16,8], index: 3, kind: input, shape index: {}]
  %s4 = inlined_call_operand.vmem [shape: f32[16,1], index: 4, kind: input, shape index: {}]
  %s5 = inlined_call_operand.hbm [shape: f32[9,8,16], index: 5, kind: input, shape index: {}]
  %s6 = inlined_call_operand.hbm [shape: f32[8,1], index: 6, kind: input, shape index: {}]
  %s7 = inlined_call_operand.hbm [shape: f32[9,4,8], index: 7, kind: input, shape index: {}]
  %s8 = inlined_call_operand.hbm [shape: f32[4,1], index: 8, kind: input, shape index: {}]
  %s9 = inlined_call_operand.vmem [shape: f32[1,512], index: 9, kind: input, shape index: {}]
  %s10 = inlined_call_operand.vmem [shape: f32[1,512], index: 10, kind: input, shape index: {}]
  %s11 = inlined_call_operand.vmem [shape: f32[2,4,256], index: 11, kind: output, shape index: {}]
  %s12 = sld [smem:[#allocation0]]
  $region74: #{_forward_impl.1} parent=0
    _
  %s14 = ssub.s32 1, %s12
  %s15 = scalar_select 0, %s14, %s12
  $region1: #{_forward_impl.1} parent=0
    #allocation2 [shape = 'u8[36864]{0}', space=vmem, size = 0x9000, scoped, tag = 'input window, operand 1, single buffered']
    #allocation3 [shape = 's32[1]{0}', space=sflag, size = 0x4, scoped, tag = 'scoped memory for _forward_impl.1']
    #allocation4 [shape = 'u8[36864]{0}', space=vmem, size = 0x9000, scoped, tag = 'input window, operand 5, single buffered']
    #allocation5 [shape = 's32[1]{0}', space=sflag, size = 0x4, scoped, tag = 'scoped memory for _forward_impl.1']
    #allocation6 [shape = 'u8[4096]{0}', space=vmem, size = 0x1000, scoped, tag = 'input window, operand 6, single buffered']
    #allocation7 [shape = 'u8[18432]{0}', space=vmem, size = 0x4800, scoped, tag = 'input window, operand 7, single buffered']
    #allocation8 [shape = 's32[1]{0}', space=sflag, size = 0x4, scoped, tag = 'scoped memory for _forward_impl.1']
    #allocation9 [shape = 'u8[2048]{0}', space=vmem, size = 0x800, scoped, tag = 'input window, operand 8, single buffered']
    %16 = vsyncpa [#allocation3], 0
    %17 = vsyncpa [#allocation5], 0
    %18 = vsyncpa [#allocation8], 0
    // Predicated region
    $region2: #{_forward_impl.1} parent=1 // pred_check
      _
    $region3: #{_forward_impl.1} parent=1 // pred_check_branch
      %20 = sbr.rel (0) target = $region5
    $region4: #{_forward_impl.1} parent=1 // pred_region
      _
    $region5: #{_forward_impl.1} parent=1 // pred_fallthru
      _
    // Predicated region
    $region6: #{_forward_impl.1} parent=1 // pred_check
      _
    $region7: #{_forward_impl.1} parent=1 // pred_check_branch
      %22 = sbr.rel (0) target = $region9
    $region8: #{_forward_impl.1} parent=1 // pred_region
      %s24 = ssub.s32 1152, 1152
      %25 = vsyncadd [#allocation3], %s24
      %s26 = sshll.u32 [#allocation2], 4
      %s27 = int_to_ptr.vmem [resolvable:$true] %s26
      %32 = dma.hbm_to_vmem [thread:$0]  %s1, 1152, %s27, [#allocation3], 128, 128, 8
    $region9: #{_forward_impl.1} parent=1 // pred_fallthru
      _
    // Predicated region
    $region10: #{_forward_impl.1} parent=1 // pred_check
      _
    $region11: #{_forward_impl.1} parent=1 // pred_check_branch
      %34 = sbr.rel (0) target = $region13
    $region12: #{_forward_impl.1} parent=1 // pred_region
      _
    $region13: #{_forward_impl.1} parent=1 // pred_fallthru
      _
    // Predicated region
    $region14: #{_forward_impl.1} parent=1 // pred_check
      _
    $region15: #{_forward_impl.1} parent=1 // pred_check_branch
      %36 = sbr.rel (0) target = $region17
    $region16: #{_forward_impl.1} parent=1 // pred_region
      _
    $region17: #{_forward_impl.1} parent=1 // pred_fallthru
      _
    // Predicated region
    $region18: #{_forward_impl.1} parent=1 // pred_check
      _
    $region19: #{_forward_impl.1} parent=1 // pred_check_branch
      %38 = sbr.rel (0) target = $region21
    $region20: #{_forward_impl.1} parent=1 // pred_region
      _
    $region21: #{_forward_impl.1} parent=1 // pred_fallthru
      _
    // Predicated region
    $region22: #{_forward_impl.1} parent=1 // pred_check
      _
    $region23: #{_forward_impl.1} parent=1 // pred_check_branch
      %40 = sbr.rel (0) target = $region25
    $region24: #{_forward_impl.1} parent=1 // pred_region
      %s42 = ssub.s32 1152, 1152
      %43 = vsyncadd [#allocation5], %s42
      %s44 = sshll.u32 [#allocation4], 4
      %s45 = int_to_ptr.vmem [resolvable:$true] %s44
      %50 = dma.hbm_to_vmem [thread:$0]  %s5, 1152, %s45, [#allocation5], 128, 128, 8
    $region25: #{_forward_impl.1} parent=1 // pred_fallthru
      _
    // Predicated region
    $region26: #{_forward_impl.1} parent=1 // pred_check
      _
    $region27: #{_forward_impl.1} parent=1 // pred_check_branch
      %52 = sbr.rel (0) target = $region29
    $region28: #{_forward_impl.1} parent=1 // pred_region
      %s54 = ssub.s32 128, 128
      %55 = vsyncadd [#allocation5], %s54
      %s57 = sshll.u32 [#allocation6], 4
      %s58 = int_to_ptr.vmem [resolvable:$true] %s57
      %60 = dma.hbm_to_vmem [thread:$0]  %s6, 128, %s58, [#allocation5]
    $region29: #{_forward_impl.1} parent=1 // pred_fallthru
      _
    // Predicated region
    $region30: #{_forward_impl.1} parent=1 // pred_check
      _
    $region31: #{_forward_impl.1} parent=1 // pred_check_branch
      %62 = sbr.rel (0) target = $region33
    $region32: #{_forward_impl.1} parent=1 // pred_region
      %s64 = ssub.s32 576, 576
      %65 = vsyncadd [#allocation8], %s64
      %s66 = sshll.u32 [#allocation7], 4
      %s67 = int_to_ptr.vmem [resolvable:$true] %s66
      %72 = dma.hbm_to_vmem [thread:$0]  %s7, 576, %s67, [#allocation8], 64, 64, 4
    $region33: #{_forward_impl.1} parent=1 // pred_fallthru
      _
    // Predicated region
    $region34: #{_forward_impl.1} parent=1 // pred_check
      _
    $region35: #{_forward_impl.1} parent=1 // pred_check_branch
      %74 = sbr.rel (0) target = $region37
    $region36: #{_forward_impl.1} parent=1 // pred_region
      %s76 = ssub.s32 64, 64
      %77 = vsyncadd [#allocation8], %s76
      %s79 = sshll.u32 [#allocation9], 4
      %s80 = int_to_ptr.vmem [resolvable:$true] %s79
      %82 = dma.hbm_to_vmem [thread:$0]  %s8, 64, %s80, [#allocation8]
    $region37: #{_forward_impl.1} parent=1 // pred_fallthru
      _
    // Predicated region
    $region38: #{_forward_impl.1} parent=1 // pred_check
      _
    $region39: #{_forward_impl.1} parent=1 // pred_check_branch
      %84 = sbr.rel (0) target = $region41
    $region40: #{_forward_impl.1} parent=1 // pred_region
      _
    $region41: #{_forward_impl.1} parent=1 // pred_fallthru
      _
    // Predicated region
    $region42: #{_forward_impl.1} parent=1 // pred_check
      _
    $region43: #{_forward_impl.1} parent=1 // pred_check_branch
      %86 = sbr.rel (0) target = $region45
    $region44: #{_forward_impl.1} parent=1 // pred_region
      _
    $region45: #{_forward_impl.1} parent=1 // pred_fallthru
      _
    // Predicated region
    $region46: #{_forward_impl.1} parent=1 // pred_check
      _
    $region47: #{_forward_impl.1} parent=1 // pred_check_branch
      %88 = sbr.rel (0) target = $region49
    $region48: #{_forward_impl.1} parent=1 // pred_region
      %89 = dma.done [#allocation3], 1152
    $region49: #{_forward_impl.1} parent=1 // pred_fallthru
      _
    // Predicated region
    $region50: #{_forward_impl.1} parent=1 // pred_check
      _
    $region51: #{_forward_impl.1} parent=1 // pred_check_branch
      %91 = sbr.rel (0) target = $region53
    $region52: #{_forward_impl.1} parent=1 // pred_region
      %92 = dma.done [#allocation5], 1152
    $region53: #{_forward_impl.1} parent=1 // pred_fallthru
      _
    // Predicated region
    $region54: #{_forward_impl.1} parent=1 // pred_check
      _
    $region55: #{_forward_impl.1} parent=1 // pred_check_branch
      %94 = sbr.rel (0) target = $region57
    $region56: #{_forward_impl.1} parent=1 // pred_region
      %95 = dma.done [#allocation5], 128
    $region57: #{_forward_impl.1} parent=1 // pred_fallthru
      _
    // Predicated region
    $region58: #{_forward_impl.1} parent=1 // pred_check
      _
    $region59: #{_forward_impl.1} parent=1 // pred_check_branch
      %97 = sbr.rel (0) target = $region61
    $region60: #{_forward_impl.1} parent=1 // pred_region
      %98 = dma.done [#allocation8], 576
    $region61: #{_forward_impl.1} parent=1 // pred_fallthru
      _
    // Predicated region
    $region62: #{_forward_impl.1} parent=1 // pred_check
      _
    $region63: #{_forward_impl.1} parent=1 // pred_check_branch
      %100 = sbr.rel (0) target = $region65
    $region64: #{_forward_impl.1} parent=1 // pred_region
      %101 = dma.done [#allocation8], 64
    $region65: #{_forward_impl.1} parent=1 // pred_fallthru
      _
    %v102 = vld [vmem:[%s0] sm:$0xff]
    %s103 = scalar_lea.vmem %s0, 8
    %v104 = vld [vmem:[%s103] sm:$0xff]
    %v106 = vcombine.high %v102, %v102
    %v108 = vcombine.high %v104, %v104
    %v109 = vld [vmem:[#allocation2] sm:$0xff]
    %s110 = scalar_lea.vmem [#allocation2], 8
    %v111 = vld [vmem:[%s110] sm:$0xff]
    %112 = vrot.lane.b32.xlu0 %v102, 127
    %v113 = vpop.permute.xlu0 %112
    %114 = vrot.lane.b32.xlu0 %v106, 127
    %v115 = vpop.permute.xlu0 %114
    %116 = vrot.lane.b32.xlu0 %v104, 127
    %v117 = vpop.permute.xlu0 %116
    %118 = vrot.lane.b32.xlu0 %v108, 127
    %v119 = vpop.permute.xlu0 %118
    %vm120 = vcmask 1039360
    %v121 = vsel %vm120, %v113, %v115
    %v122 = vsel %vm120, %v115, %v117
    %v123 = vsel %vm120, %v117, %v119
    %v126 = vsel %vm120, %v119, %v113
    %vm127 = vcmask 31744
    %v129 = vsel %vm127, %v111, 0
    %vm131 = vcmask 1043456
    %v132 = vsel %vm131, %v121, 0
    %v134 = vsel %vm131, %v122, 0
    %v136 = vsel %vm131, %v123, 0
    %v139 = vsel %vm131, %v126, 0
    %141 = vmatprep.subr.mxu0 %v134
    %142 = vmatpush1.msra.mxu0 %v132
    %143 = vmatprep.subr.mxu0 0.0
    %144 = vmatpush1.msra.mxu0 0.0
    %145 = vmatprep.subr.mxu0 0.0
    %146 = vmatpush1.msra.mxu0 0.0
    %147 = vmatprep.subr.mxu0 0.0
    %148 = vmatpush1.msra.mxu0 0.0
    %149 = vmatprep.subr.mxu0 0.0
    %150 = vmatpush1.msra.mxu0 0.0
    %151 = vmatprep.subr.mxu0 0.0
    %152 = vmatpush1.msra.mxu0 0.0
    %153 = vmatprep.subr.mxu0 0.0
    %154 = vmatpush1.msra.mxu0 0.0
    %155 = vmatprep.subr.mxu0 0.0
    %156 = vmatpush1.msra.mxu0 0.0
    %157 = vmatprep.subr.mxu0 0.0
    %158 = vmatpush1.msra.mxu0 0.0
    %159 = vmatprep.subr.mxu0 0.0
    %160 = vmatpush1.msra.mxu0 0.0
    %161 = vmatprep.subr.mxu0 0.0
    %162 = vmatpush1.msra.mxu0 0.0
    %163 = vmatprep.subr.mxu0 0.0
    %164 = vmatpush1.msra.mxu0 0.0
    %165 = vmatprep.subr.mxu0 0.0
    %166 = vmatpush1.msra.mxu0 0.0
    %167 = vmatprep.subr.mxu0 0.0
    %168 = vmatpush1.msra.mxu0 0.0
    %169 = vmatprep.subr.mxu0 0.0
    %170 = vmatpush1.msra.mxu0 0.0
    %171 = vmatprep.subr.mxu0 0.0
    %172 = vmatpush1.msra.mxu0 0.0
    %173 = vmatprep.subr.mxu0 0.0
    %174 = vmatpush1.msra.mxu0 0.0
    %175 = vmatprep.subr.mxu0 0.0
    %176 = vmatpush1.msra.mxu0 0.0
    %177 = vmatprep.subr.mxu0 0.0
    %178 = vmatpush1.msra.mxu0 0.0
    %179 = vmatprep.subr.mxu0 0.0
    %180 = vmatpush1.msra.mxu0 0.0
    %181 = vmatprep.subr.mxu0 0.0
    %182 = vmatpush1.msra.mxu0 0.0
    %183 = vmatprep.subr.mxu0 0.0
    %184 = vmatpush1.msra.mxu0 0.0
    %185 = vmatprep.subr.mxu0 0.0
    %186 = vmatpush1.msra.mxu0 0.0
    %187 = vmatprep.subr.mxu0 0.0
    %188 = vmatpush1.msra.mxu0 0.0
    %189 = vmatprep.subr.mxu0 0.0
    %190 = vmatpush1.msra.mxu0 0.0
    %191 = vmatprep.subr.mxu0 0.0
    %192 = vmatpush1.msra.mxu0 0.0
    %193 = vmatprep.subr.mxu0 0.0
    %194 = vmatpush1.msra.mxu0 0.0
    %195 = vmatprep.subr.mxu0 0.0
    %196 = vmatpush1.msra.mxu0 0.0
    %197 = vmatprep.subr.mxu0 0.0
    %198 = vmatpush1.msra.mxu0 0.0
    %199 = vmatprep.subr.mxu0 0.0
    %200 = vmatpush1.msra.mxu0 0.0
    %201 = vmatprep.subr.mxu0 0.0
    %202 = vmatpush1.msra.mxu0 0.0
    %203 = vmatprep.subr.mxu0 0.0
    %204 = vmatpush1.msra.mxu0 0.0
    %205 = vmatprep.mubr.f32.mxu0 0.0
    %206 = vmatmul.mubr.f32.gmra.mrb[0].mxu0 %v129
    %v207 = vpop.f32.mrb[0].mxu0
    %v208 = vadd.f32 0.0, %v207
    %v209 = vpop.f32.mrb[0].mxu0
    %v210 = vadd.f32 0.0, %v209
    %211 = vdwg.mxu0
    %212 = vmatprep.subr.mxu0 %v139
    %213 = vmatpush1.msra.mxu0 %v136
    %214 = vmatprep.subr.mxu0 0.0
    %215 = vmatpush1.msra.mxu0 0.0
    %216 = vmatprep.subr.mxu0 0.0
    %217 = vmatpush1.msra.mxu0 0.0
    %218 = vmatprep.subr.mxu0 0.0
    %219 = vmatpush1.msra.mxu0 0.0
    %220 = vmatprep.subr.mxu0 0.0
    %221 = vmatpush1.msra.mxu0 0.0
    %222 = vmatprep.subr.mxu0 0.0
    %223 = vmatpush1.msra.mxu0 0.0
    %224 = vmatprep.subr.mxu0 0.0
    %225 = vmatpush1.msra.mxu0 0.0
    %226 = vmatprep.subr.mxu0 0.0
    %227 = vmatpush1.msra.mxu0 0.0
    %228 = vmatprep.subr.mxu0 0.0
    %229 = vmatpush1.msra.mxu0 0.0
    %230 = vmatprep.subr.mxu0 0.0
    %231 = vmatpush1.msra.mxu0 0.0
    %232 = vmatprep.subr.mxu0 0.0
    %233 = vmatpush1.msra.mxu0 0.0
    %234 = vmatprep.subr.mxu0 0.0
    %235 = vmatpush1.msra.mxu0 0.0
    %236 = vmatprep.subr.mxu0 0.0
    %237 = vmatpush1.msra.mxu0 0.0
    %238 = vmatprep.subr.mxu0 0.0
    %239 = vmatpush1.msra.mxu0 0.0
    %240 = vmatprep.subr.mxu0 0.0
    %241 = vmatpush1.msra.mxu0 0.0
    %242 = vmatprep.subr.mxu0 0.0
    %243 = vmatpush1.msra.mxu0 0.0
    %244 = vmatprep.subr.mxu0 0.0
    %245 = vmatpush1.msra.mxu0 0.0
    %246 = vmatprep.subr.mxu0 0.0
    %247 = vmatpush1.msra.mxu0 0.0
    %248 = vmatprep.subr.mxu0 0.0
    %249 = vmatpush1.msra.mxu0 0.0
    %250 = vmatprep.subr.mxu0 0.0
    %251 = vmatpush1.msra.mxu0 0.0
    %252 = vmatprep.subr.mxu0 0.0
    %253 = vmatpush1.msra.mxu0 0.0
    %254 = vmatprep.subr.mxu0 0.0
    %255 = vmatpush1.msra.mxu0 0.0
    %256 = vmatprep.subr.mxu0 0.0
    %257 = vmatpush1.msra.mxu0 0.0
    %258 = vmatprep.subr.mxu0 0.0
    %259 = vmatpush1.msra.mxu0 0.0
    %260 = vmatprep.subr.mxu0 0.0
    %261 = vmatpush1.msra.mxu0 0.0
    %262 = vmatprep.subr.mxu0 0.0
    %263 = vmatpush1.msra.mxu0 0.0
    %264 = vmatprep.subr.mxu0 0.0
    %265 = vmatpush1.msra.mxu0 0.0
    %266 = vmatprep.subr.mxu0 0.0
    %267 = vmatpush1.msra.mxu0 0.0
    %268 = vmatprep.subr.mxu0 0.0
    %269 = vmatpush1.msra.mxu0 0.0
    %270 = vmatprep.subr.mxu0 0.0
    %271 = vmatpush1.msra.mxu0 0.0
    %272 = vmatprep.subr.mxu0 0.0
    %273 = vmatpush1.msra.mxu0 0.0
    %274 = vmatprep.subr.mxu0 0.0
    %275 = vmatpush1.msra.mxu0 0.0
    %276 = vmatprep.mubr.f32.mxu0 0.0
    %277 = vmatmul.mubr.f32.gmra.mrb[0].mxu0 %v129
    %v278 = vpop.f32.mrb[0].mxu0
    %v279 = vadd.f32 0.0, %v278
    %v280 = vpop.f32.mrb[0].mxu0
    %v281 = vadd.f32 0.0, %v280
    %282 = vdwg.mxu0
    %v284 = vsel %vm127, %v109, 0
    %v286 = vsel %vm131, %v102, 0
    %v288 = vsel %vm131, %v106, 0
    %v290 = vsel %vm131, %v104, 0
    %v292 = vsel %vm131, %v108, 0
    %294 = vmatprep.subr.mxu0 %v288
    %295 = vmatpush1.msra.mxu0 %v286
    %296 = vmatprep.subr.mxu0 0.0
    %297 = vmatpush1.msra.mxu0 0.0
    %298 = vmatprep.subr.mxu0 0.0
    %299 = vmatpush1.msra.mxu0 0.0
    %300 = vmatprep.subr.mxu0 0.0
    %301 = vmatpush1.msra.mxu0 0.0
    %302 = vmatprep.subr.mxu0 0.0
    %303 = vmatpush1.msra.mxu0 0.0
    %304 = vmatprep.subr.mxu0 0.0
    %305 = vmatpush1.msra.mxu0 0.0
    %306 = vmatprep.subr.mxu0 0.0
    %307 = vmatpush1.msra.mxu0 0.0
    %308 = vmatprep.subr.mxu0 0.0
    %309 = vmatpush1.msra.mxu0 0.0
    %310 = vmatprep.subr.mxu0 0.0
    %311 = vmatpush1.msra.mxu0 0.0
    %312 = vmatprep.subr.mxu0 0.0
    %313 = vmatpush1.msra.mxu0 0.0
    %314 = vmatprep.subr.mxu0 0.0
    %315 = vmatpush1.msra.mxu0 0.0
    %316 = vmatprep.subr.mxu0 0.0
    %317 = vmatpush1.msra.mxu0 0.0
    %318 = vmatprep.subr.mxu0 0.0
    %319 = vmatpush1.msra.mxu0 0.0
    %320 = vmatprep.subr.mxu0 0.0
    %321 = vmatpush1.msra.mxu0 0.0
    %322 = vmatprep.subr.mxu0 0.0
    %323 = vmatpush1.msra.mxu0 0.0
    %324 = vmatprep.subr.mxu0 0.0
    %325 = vmatpush1.msra.mxu0 0.0
    %326 = vmatprep.subr.mxu0 0.0
    %327 = vmatpush1.msra.mxu0 0.0
    %328 = vmatprep.subr.mxu0 0.0
    %329 = vmatpush1.msra.mxu0 0.0
    %330 = vmatprep.subr.mxu0 0.0
    %331 = vmatpush1.msra.mxu0 0.0
    %332 = vmatprep.subr.mxu0 0.0
    %333 = vmatpush1.msra.mxu0 0.0
    %334 = vmatprep.subr.mxu0 0.0
    %335 = vmatpush1.msra.mxu0 0.0
    %336 = vmatprep.subr.mxu0 0.0
    %337 = vmatpush1.msra.mxu0 0.0
    %338 = vmatprep.subr.mxu0 0.0
    %339 = vmatpush1.msra.mxu0 0.0
    %340 = vmatprep.subr.mxu0 0.0
    %341 = vmatpush1.msra.mxu0 0.0
    %342 = vmatprep.subr.mxu0 0.0
    %343 = vmatpush1.msra.mxu0 0.0
    %344 = vmatprep.subr.mxu0 0.0
    %345 = vmatpush1.msra.mxu0 0.0
    %346 = vmatprep.subr.mxu0 0.0
    %347 = vmatpush1.msra.mxu0 0.0
    %348 = vmatprep.subr.mxu0 0.0
    %349 = vmatpush1.msra.mxu0 0.0
    %350 = vmatprep.subr.mxu0 0.0
    %351 = vmatpush1.msra.mxu0 0.0
    %352 = vmatprep.subr.mxu0 0.0
    %353 = vmatpush1.msra.mxu0 0.0
    %354 = vmatprep.subr.mxu0 0.0
    %355 = vmatpush1.msra.mxu0 0.0
    %356 = vmatprep.subr.mxu0 0.0
    %357 = vmatpush1.msra.mxu0 0.0
    %358 = vmatprep.mubr.f32.mxu0 0.0
    %359 = vmatmul.mubr.f32.gmra.mrb[0].mxu0 %v284
    %v360 = vpop.f32.mrb[0].mxu0
    %v361 = vadd.f32 %v208, %v360
    %v362 = vpop.f32.mrb[0].mxu0
    %v363 = vadd.f32 %v210, %v362
    %364 = vdwg.mxu0
    %365 = vmatprep.subr.mxu0 %v292
    %366 = vmatpush1.msra.mxu0 %v290
    %367 = vmatprep.subr.mxu0 0.0
    %368 = vmatpush1.msra.mxu0 0.0
    %369 = vmatprep.subr.mxu0 0.0
    %370 = vmatpush1.msra.mxu0 0.0
    %371 = vmatprep.subr.mxu0 0.0
    %372 = vmatpush1.msra.mxu0 0.0
    %373 = vmatprep.subr.mxu0 0.0
    %374 = vmatpush1.msra.mxu0 0.0
    %375 = vmatprep.subr.mxu0 0.0
    %376 = vmatpush1.msra.mxu0 0.0
    %377 = vmatprep.subr.mxu0 0.0
    %378 = vmatpush1.msra.mxu0 0.0
    %379 = vmatprep.subr.mxu0 0.0
    %380 = vmatpush1.msra.mxu0 0.0
    %381 = vmatprep.subr.mxu0 0.0
    %382 = vmatpush1.msra.mxu0 0.0
    %383 = vmatprep.subr.mxu0 0.0
    %384 = vmatpush1.msra.mxu0 0.0
    %385 = vmatprep.subr.mxu0 0.0
    %386 = vmatpush1.msra.mxu0 0.0
    %387 = vmatprep.subr.mxu0 0.0
    %388 = vmatpush1.msra.mxu0 0.0
    %389 = vmatprep.subr.mxu0 0.0
    %390 = vmatpush1.msra.mxu0 0.0
    %391 = vmatprep.subr.mxu0 0.0
    %392 = vmatpush1.msra.mxu0 0.0
    %393 = vmatprep.subr.mxu0 0.0
    %394 = vmatpush1.msra.mxu0 0.0
    %395 = vmatprep.subr.mxu0 0.0
    %396 = vmatpush1.msra.mxu0 0.0
    %397 = vmatprep.subr.mxu0 0.0
    %398 = vmatpush1.msra.mxu0 0.0
    %399 = vmatprep.subr.mxu0 0.0
    %400 = vmatpush1.msra.mxu0 0.0
    %401 = vmatprep.subr.mxu0 0.0
    %402 = vmatpush1.msra.mxu0 0.0
    %403 = vmatprep.subr.mxu0 0.0
    %404 = vmatpush1.msra.mxu0 0.0
    %405 = vmatprep.subr.mxu0 0.0
    %406 = vmatpush1.msra.mxu0 0.0
    %407 = vmatprep.subr.mxu0 0.0
    %408 = vmatpush1.msra.mxu0 0.0
    %409 = vmatprep.subr.mxu0 0.0
    %410 = vmatpush1.msra.mxu0 0.0
    %411 = vmatprep.subr.mxu0 0.0
    %412 = vmatpush1.msra.mxu0 0.0
    %413 = vmatprep.subr.mxu0 0.0
    %414 = vmatpush1.msra.mxu0 0.0
    %415 = vmatprep.subr.mxu0 0.0
    %416 = vmatpush1.msra.mxu0 0.0
    %417 = vmatprep.subr.mxu0 0.0
    %418 = vmatpush1.msra.mxu0 0.0
    %419 = vmatprep.subr.mxu0 0.0
    %420 = vmatpush1.msra.mxu0 0.0
    %421 = vmatprep.subr.mxu0 0.0
    %422 = vmatpush1.msra.mxu0 0.0
    %423 = vmatprep.subr.mxu0 0.0
    %424 = vmatpush1.msra.mxu0 0.0
    %425 = vmatprep.subr.mxu0 0.0
    %426 = vmatpush1.msra.mxu0 0.0
    %427 = vmatprep.subr.mxu0 0.0
    %428 = vmatpush1.msra.mxu0 0.0
    %429 = vmatprep.mubr.f32.mxu0 0.0
    %430 = vmatmul.mubr.f32.gmra.mrb[0].mxu0 %v284
    %v431 = vpop.f32.mrb[0].mxu0
    %v432 = vadd.f32 %v279, %v431
    %v433 = vpop.f32.mrb[0].mxu0
    %v434 = vadd.f32 %v281, %v433
    %435 = vdwg.mxu0
    %s436 = scalar_lea.vmem [#allocation2], 16
    %v437 = vld [vmem:[%s436] sm:$0xff]
    %438 = vrot.lane.b32.xlu0 %v102, 126
    %v439 = vpop.permute.xlu0 %438
    %440 = vrot.lane.b32.xlu0 %v106, 126
    %v441 = vpop.permute.xlu0 %440
    %442 = vrot.lane.b32.xlu0 %v104, 126
    %v443 = vpop.permute.xlu0 %442
    %444 = vrot.lane.b32.xlu0 %v108, 126
    %v445 = vpop.permute.xlu0 %444
    %vm446 = vcmask 1031168
    %v447 = vsel %vm446, %v439, %v441
    %v448 = vsel %vm446, %v441, %v443
    %v449 = vsel %vm446, %v443, %v445
    %v452 = vsel %vm446, %v445, %v439
    %v454 = vsel %vm127, %v437, 0
    %v456 = vsel %vm131, %v447, 0
    %v458 = vsel %vm131, %v448, 0
    %v460 = vsel %vm131, %v449, 0
    %v463 = vsel %vm131, %v452, 0
    %465 = vmatprep.subr.mxu0 %v458
    %466 = vmatpush1.msra.mxu0 %v456
    %467 = vmatprep.subr.mxu0 0.0
    %468 = vmatpush1.msra.mxu0 0.0
    %469 = vmatprep.subr.mxu0 0.0
    %470 = vmatpush1.msra.mxu0 0.0
    %471 = vmatprep.subr.mxu0 0.0
    %472 = vmatpush1.msra.mxu0 0.0
    %473 = vmatprep.subr.mxu0 0.0
    %474 = vmatpush1.msra.mxu0 0.0
    %475 = vmatprep.subr.mxu0 0.0
    %476 = vmatpush1.msra.mxu0 0.0
    %477 = vmatprep.subr.mxu0 0.0
    %478 = vmatpush1.msra.mxu0 0.0
    %479 = vmatprep.subr.mxu0 0.0
    %480 = vmatpush1.msra.mxu0 0.0
    %481 = vmatprep.subr.mxu0 0.0
    %482 = vmatpush1.msra.mxu0 0.0
    %483 = vmatprep.subr.mxu0 0.0
    %484 = vmatpush1.msra.mxu0 0.0
    %485 = vmatprep.subr.mxu0 0.0
    %486 = vmatpush1.msra.mxu0 0.0
    %487 = vmatprep.subr.mxu0 0.0
    %488 = vmatpush1.msra.mxu0 0.0
    %489 = vmatprep.subr.mxu0 0.0
    %490 = vmatpush1.msra.mxu0 0.0
    %491 = vmatprep.subr.mxu0 0.0
    %492 = vmatpush1.msra.mxu0 0.0
    %493 = vmatprep.subr.mxu0 0.0
    %494 = vmatpush1.msra.mxu0 0.0
    %495 = vmatprep.subr.mxu0 0.0
    %496 = vmatpush1.msra.mxu0 0.0
    %497 = vmatprep.subr.mxu0 0.0
    %498 = vmatpush1.msra.mxu0 0.0
    %499 = vmatprep.subr.mxu0 0.0
    %500 = vmatpush1.msra.mxu0 0.0
    %501 = vmatprep.subr.mxu0 0.0
    %502 = vmatpush1.msra.mxu0 0.0
    %503 = vmatprep.subr.mxu0 0.0
    %504 = vmatpush1.msra.mxu0 0.0
    %505 = vmatprep.subr.mxu0 0.0
    %506 = vmatpush1.msra.mxu0 0.0
    %507 = vmatprep.subr.mxu0 0.0
    %508 = vmatpush1.msra.mxu0 0.0
    %509 = vmatprep.subr.mxu0 0.0
    %510 = vmatpush1.msra.mxu0 0.0
    %511 = vmatprep.subr.mxu0 0.0
    %512 = vmatpush1.msra.mxu0 0.0
    %513 = vmatprep.subr.mxu0 0.0
    %514 = vmatpush1.msra.mxu0 0.0
    %515 = vmatprep.subr.mxu0 0.0
    %516 = vmatpush1.msra.mxu0 0.0
    %517 = vmatprep.subr.mxu0 0.0
    %518 = vmatpush1.msra.mxu0 0.0
    %519 = vmatprep.subr.mxu0 0.0
    %520 = vmatpush1.msra.mxu0 0.0
    %521 = vmatprep.subr.mxu0 0.0
    %522 = vmatpush1.msra.mxu0 0.0
    %523 = vmatprep.subr.mxu0 0.0
    %524 = vmatpush1.msra.mxu0 0.0
    %525 = vmatprep.subr.mxu0 0.0
    %526 = vmatpush1.msra.mxu0 0.0
    %527 = vmatprep.subr.mxu0 0.0
    %528 = vmatpush1.msra.mxu0 0.0
    %529 = vmatprep.mubr.f32.mxu0 0.0
    %530 = vmatmul.mubr.f32.gmra.mrb[0].mxu0 %v454
    %v531 = vpop.f32.mrb[0].mxu0
    %v532 = vadd.f32 0.0, %v531
    %v533 = vpop.f32.mrb[0].mxu0
    %v534 = vadd.f32 0.0, %v533
    %535 = vdwg.mxu0
    %536 = vmatprep.subr.mxu0 %v463
    %537 = vmatpush1.msra.mxu0 %v460
    %538 = vmatprep.subr.mxu0 0.0
    %539 = vmatpush1.msra.mxu0 0.0
    %540 = vmatprep.subr.mxu0 0.0
    %541 = vmatpush1.msra.mxu0 0.0
    %542 = vmatprep.subr.mxu0 0.0
    %543 = vmatpush1.msra.mxu0 0.0
    %544 = vmatprep.subr.mxu0 0.0
    %545 = vmatpush1.msra.mxu0 0.0
    %546 = vmatprep.subr.mxu0 0.0
    %547 = vmatpush1.msra.mxu0 0.0
    %548 = vmatprep.subr.mxu0 0.0
    %549 = vmatpush1.msra.mxu0 0.0
    %550 = vmatprep.subr.mxu0 0.0
    %551 = vmatpush1.msra.mxu0 0.0
    %552 = vmatprep.subr.mxu0 0.0
    %553 = vmatpush1.msra.mxu0 0.0
    %554 = vmatprep.subr.mxu0 0.0
    %555 = vmatpush1.msra.mxu0 0.0
    %556 = vmatprep.subr.mxu0 0.0
    %557 = vmatpush1.msra.mxu0 0.0
    %558 = vmatprep.subr.mxu0 0.0
    %559 = vmatpush1.msra.mxu0 0.0
    %560 = vmatprep.subr.mxu0 0.0
    %561 = vmatpush1.msra.mxu0 0.0
    %562 = vmatprep.subr.mxu0 0.0
    %563 = vmatpush1.msra.mxu0 0.0
    %564 = vmatprep.subr.mxu0 0.0
    %565 = vmatpush1.msra.mxu0 0.0
    %566 = vmatprep.subr.mxu0 0.0
    %567 = vmatpush1.msra.mxu0 0.0
    %568 = vmatprep.subr.mxu0 0.0
    %569 = vmatpush1.msra.mxu0 0.0
    %570 = vmatprep.subr.mxu0 0.0
    %571 = vmatpush1.msra.mxu0 0.0
    %572 = vmatprep.subr.mxu0 0.0
    %573 = vmatpush1.msra.mxu0 0.0
    %574 = vmatprep.subr.mxu0 0.0
    %575 = vmatpush1.msra.mxu0 0.0
    %576 = vmatprep.subr.mxu0 0.0
    %577 = vmatpush1.msra.mxu0 0.0
    %578 = vmatprep.subr.mxu0 0.0
    %579 = vmatpush1.msra.mxu0 0.0
    %580 = vmatprep.subr.mxu0 0.0
    %581 = vmatpush1.msra.mxu0 0.0
    %582 = vmatprep.subr.mxu0 0.0
    %583 = vmatpush1.msra.mxu0 0.0
    %584 = vmatprep.subr.mxu0 0.0
    %585 = vmatpush1.msra.mxu0 0.0
    %586 = vmatprep.subr.mxu0 0.0
    %587 = vmatpush1.msra.mxu0 0.0
    %588 = vmatprep.subr.mxu0 0.0
    %589 = vmatpush1.msra.mxu0 0.0
    %590 = vmatprep.subr.mxu0 0.0
    %591 = vmatpush1.msra.mxu0 0.0
    %592 = vmatprep.subr.mxu0 0.0
    %593 = vmatpush1.msra.mxu0 0.0
    %594 = vmatprep.subr.mxu0 0.0
    %595 = vmatpush1.msra.mxu0 0.0
    %596 = vmatprep.subr.mxu0 0.0
    %597 = vmatpush1.msra.mxu0 0.0
    %598 = vmatprep.subr.mxu0 0.0
    %599 = vmatpush1.msra.mxu0 0.0
    %600 = vmatprep.mubr.f32.mxu0 0.0
    %601 = vmatmul.mubr.f32.gmra.mrb[0].mxu0 %v454
    %v602 = vpop.f32.mrb[0].mxu0
    %v603 = vadd.f32 0.0, %v602
    %v604 = vpop.f32.mrb[0].mxu0
    %v605 = vadd.f32 0.0, %v604
    %606 = vdwg.mxu0
    %v607 = vadd.f32 %v361, %v532
    %v608 = vadd.f32 %v363, %v534
    %v609 = vadd.f32 %v432, %v603
    %v610 = vadd.f32 %v434, %v605
    %s611 = scalar_lea.vmem [#allocation2], 24
    %v612 = vld [vmem:[%s611] sm:$0xff]
    %613 = vrot.lane.b32.xlu0 %v102, 112
    %v614 = vpop.permute.xlu0 %613
    %615 = vrot.lane.b32.xlu0 %v106, 112
    %v616 = vpop.permute.xlu0 %615
    %617 = vrot.lane.b32.xlu0 %v104, 112
    %v618 = vpop.permute.xlu0 %617
    %619 = vrot.lane.b32.xlu0 %v108, 112
    %v620 = vpop.permute.xlu0 %619
    %vm621 = vcmask 916480
    %v622 = vsel %vm621, %v614, %v616
    %v623 = vsel %vm621, %v616, %v618
    %v624 = vsel %vm621, %v618, %v620
    %v627 = vsel %vm621, %v620, %v614
    %v629 = vsel %vm127, %v612, 0
    %v631 = vsel %vm131, %v622, 0
    %v633 = vsel %vm131, %v623, 0
    %v635 = vsel %vm131, %v624, 0
    %v638 = vsel %vm131, %v627, 0
    %640 = vmatprep.subr.mxu0 %v633
    %641 = vmatpush1.msra.mxu0 %v631
    %642 = vmatprep.subr.mxu0 0.0
    %643 = vmatpush1.msra.mxu0 0.0
    %644 = vmatprep.subr.mxu0 0.0
    %645 = vmatpush1.msra.mxu0 0.0
    %646 = vmatprep.subr.mxu0 0.0
    %647 = vmatpush1.msra.mxu0 0.0
    %648 = vmatprep.subr.mxu0 0.0
    %649 = vmatpush1.msra.mxu0 0.0
    %650 = vmatprep.subr.mxu0 0.0
    %651 = vmatpush1.msra.mxu0 0.0
    %652 = vmatprep.subr.mxu0 0.0
    %653 = vmatpush1.msra.mxu0 0.0
    %654 = vmatprep.subr.mxu0 0.0
    %655 = vmatpush1.msra.mxu0 0.0
    %656 = vmatprep.subr.mxu0 0.0
    %657 = vmatpush1.msra.mxu0 0.0
    %658 = vmatprep.subr.mxu0 0.0
    %659 = vmatpush1.msra.mxu0 0.0
    %660 = vmatprep.subr.mxu0 0.0
    %661 = vmatpush1.msra.mxu0 0.0
    %662 = vmatprep.subr.mxu0 0.0
    %663 = vmatpush1.msra.mxu0 0.0
    %664 = vmatprep.subr.mxu0 0.0
    %665 = vmatpush1.msra.mxu0 0.0
    %666 = vmatprep.subr.mxu0 0.0
    %667 = vmatpush1.msra.mxu0 0.0
    %668 = vmatprep.subr.mxu0 0.0
    %669 = vmatpush1.msra.mxu0 0.0
    %670 = vmatprep.subr.mxu0 0.0
    %671 = vmatpush1.msra.mxu0 0.0
    %672 = vmatprep.subr.mxu0 0.0
    %673 = vmatpush1.msra.mxu0 0.0
    %674 = vmatprep.subr.mxu0 0.0
    %675 = vmatpush1.msra.mxu0 0.0
    %676 = vmatprep.subr.mxu0 0.0
    %677 = vmatpush1.msra.mxu0 0.0
    %678 = vmatprep.subr.mxu0 0.0
    %679 = vmatpush1.msra.mxu0 0.0
    %680 = vmatprep.subr.mxu0 0.0
    %681 = vmatpush1.msra.mxu0 0.0
    %682 = vmatprep.subr.mxu0 0.0
    %683 = vmatpush1.msra.mxu0 0.0
    %684 = vmatprep.subr.mxu0 0.0
    %685 = vmatpush1.msra.mxu0 0.0
    %686 = vmatprep.subr.mxu0 0.0
    %687 = vmatpush1.msra.mxu0 0.0
    %688 = vmatprep.subr.mxu0 0.0
    %689 = vmatpush1.msra.mxu0 0.0
    %690 = vmatprep.subr.mxu0 0.0
    %691 = vmatpush1.msra.mxu0 0.0
    %692 = vmatprep.subr.mxu0 0.0
    %693 = vmatpush1.msra.mxu0 0.0
    %694 = vmatprep.subr.mxu0 0.0
    %695 = vmatpush1.msra.mxu0 0.0
    %696 = vmatprep.subr.mxu0 0.0
    %697 = vmatpush1.msra.mxu0 0.0
    %698 = vmatprep.subr.mxu0 0.0
    %699 = vmatpush1.msra.mxu0 0.0
    %700 = vmatprep.subr.mxu0 0.0
    %701 = vmatpush1.msra.mxu0 0.0
    %702 = vmatprep.subr.mxu0 0.0
    %703 = vmatpush1.msra.mxu0 0.0
    %704 = vmatprep.mubr.f32.mxu0 0.0
    %705 = vmatmul.mubr.f32.gmra.mrb[0].mxu0 %v629
    %v706 = vpop.f32.mrb[0].mxu0
    %v707 = vadd.f32 0.0, %v706
    %v708 = vpop.f32.mrb[0].mxu0
    %v709 = vadd.f32 0.0, %v708
    %710 = vdwg.mxu0
    %711 = vmatprep.subr.mxu0 %v638
    %712 = vmatpush1.msra.mxu0 %v635
    %713 = vmatprep.subr.mxu0 0.0
    %714 = vmatpush1.msra.mxu0 0.0
    %715 = vmatprep.subr.mxu0 0.0
    %716 = vmatpush1.msra.mxu0 0.0
    %717 = vmatprep.subr.mxu0 0.0
    %718 = vmatpush1.msra.mxu0 0.0
    %719 = vmatprep.subr.mxu0 0.0
    %720 = vmatpush1.msra.mxu0 0.0
    %721 = vmatprep.subr.mxu0 0.0
    %722 = vmatpush1.msra.mxu0 0.0
    %723 = vmatprep.subr.mxu0 0.0
    %724 = vmatpush1.msra.mxu0 0.0
    %725 = vmatprep.subr.mxu0 0.0
    %726 = vmatpush1.msra.mxu0 0.0
    %727 = vmatprep.subr.mxu0 0.0
    %728 = vmatpush1.msra.mxu0 0.0
    %729 = vmatprep.subr.mxu0 0.0
    %730 = vmatpush1.msra.mxu0 0.0
    %731 = vmatprep.subr.mxu0 0.0
    %732 = vmatpush1.msra.mxu0 0.0
    %733 = vmatprep.subr.mxu0 0.0
    %734 = vmatpush1.msra.mxu0 0.0
    %735 = vmatprep.subr.mxu0 0.0
    %736 = vmatpush1.msra.mxu0 0.0
    %737 = vmatprep.subr.mxu0 0.0
    %738 = vmatpush1.msra.mxu0 0.0
    %739 = vmatprep.subr.mxu0 0.0
    %740 = vmatpush1.msra.mxu0 0.0
    %741 = vmatprep.subr.mxu0 0.0
    %742 = vmatpush1.msra.mxu0 0.0
    %743 = vmatprep.subr.mxu0 0.0
    %744 = vmatpush1.msra.mxu0 0.0
    %745 = vmatprep.subr.mxu0 0.0
    %746 = vmatpush1.msra.mxu0 0.0
    %747 = vmatprep.subr.mxu0 0.0
    %748 = vmatpush1.msra.mxu0 0.0
    %749 = vmatprep.subr.mxu0 0.0
    %750 = vmatpush1.msra.mxu0 0.0
    %751 = vmatprep.subr.mxu0 0.0
    %752 = vmatpush1.msra.mxu0 0.0
    %753 = vmatprep.subr.mxu0 0.0
    %754 = vmatpush1.msra.mxu0 0.0
    %755 = vmatprep.subr.mxu0 0.0
    %756 = vmatpush1.msra.mxu0 0.0
    %757 = vmatprep.subr.mxu0 0.0
    %758 = vmatpush1.msra.mxu0 0.0
    %759 = vmatprep.subr.mxu0 0.0
    %760 = vmatpush1.msra.mxu0 0.0
    %761 = vmatprep.subr.mxu0 0.0
    %762 = vmatpush1.msra.mxu0 0.0
    %763 = vmatprep.subr.mxu0 0.0
    %764 = vmatpush1.msra.mxu0 0.0
    %765 = vmatprep.subr.mxu0 0.0
    %766 = vmatpush1.msra.mxu0 0.0
    %767 = vmatprep.subr.mxu0 0.0
    %768 = vmatpush1.msra.mxu0 0.0
    %769 = vmatprep.subr.mxu0 0.0
    %770 = vmatpush1.msra.mxu0 0.0
    %771 = vmatprep.subr.mxu0 0.0
    %772 = vmatpush1.msra.mxu0 0.0
    %773 = vmatprep.subr.mxu0 0.0
    %774 = vmatpush1.msra.mxu0 0.0
    %775 = vmatprep.mubr.f32.mxu0 0.0
    %776 = vmatmul.mubr.f32.gmra.mrb[0].mxu0 %v629
    %v777 = vpop.f32.mrb[0].mxu0
    %v778 = vadd.f32 0.0, %v777
    %v779 = vpop.f32.mrb[0].mxu0
    %v780 = vadd.f32 0.0, %v779
    %781 = vdwg.mxu0
    %v782 = vadd.f32 %v607, %v707
    %v783 = vadd.f32 %v608, %v709
    %v784 = vadd.f32 %v609, %v778
    %v785 = vadd.f32 %v610, %v780
    %s786 = scalar_lea.vmem [#allocation2], 32
    %v787 = vld [vmem:[%s786] sm:$0xff]
    %788 = vrot.lane.b32.xlu0 %v102, 111
    %v789 = vpop.permute.xlu0 %788
    %790 = vrot.lane.b32.xlu0 %v106, 111
    %v791 = vpop.permute.xlu0 %790
    %792 = vrot.lane.b32.xlu0 %v104, 111
    %v793 = vpop.permute.xlu0 %792
    %794 = vrot.lane.b32.xlu0 %v108, 111
    %v795 = vpop.permute.xlu0 %794
    %vm796 = vcmask 908288
    %v797 = vsel %vm796, %v789, %v791
    %v798 = vsel %vm796, %v791, %v793
    %v799 = vsel %vm796, %v793, %v795
    %v802 = vsel %vm796, %v795, %v789
    %v804 = vsel %vm127, %v787, 0
    %v806 = vsel %vm131, %v797, 0
    %v808 = vsel %vm131, %v798, 0
    %v810 = vsel %vm131, %v799, 0
    %v813 = vsel %vm131, %v802, 0
    %815 = vmatprep.subr.mxu0 %v808
    %816 = vmatpush1.msra.mxu0 %v806
    %817 = vmatprep.subr.mxu0 0.0
    %818 = vmatpush1.msra.mxu0 0.0
    %819 = vmatprep.subr.mxu0 0.0
    %820 = vmatpush1.msra.mxu0 0.0
    %821 = vmatprep.subr.mxu0 0.0
    %822 = vmatpush1.msra.mxu0 0.0
    %823 = vmatprep.subr.mxu0 0.0
    %824 = vmatpush1.msra.mxu0 0.0
    %825 = vmatprep.subr.mxu0 0.0
    %826 = vmatpush1.msra.mxu0 0.0
    %827 = vmatprep.subr.mxu0 0.0
    %828 = vmatpush1.msra.mxu0 0.0
    %829 = vmatprep.subr.mxu0 0.0
    %830 = vmatpush1.msra.mxu0 0.0
    %831 = vmatprep.subr.mxu0 0.0
    %832 = vmatpush1.msra.mxu0 0.0
    %833 = vmatprep.subr.mxu0 0.0
    %834 = vmatpush1.msra.mxu0 0.0
    %835 = vmatprep.subr.mxu0 0.0
    %836 = vmatpush1.msra.mxu0 0.0
    %837 = vmatprep.subr.mxu0 0.0
    %838 = vmatpush1.msra.mxu0 0.0
    %839 = vmatprep.subr.mxu0 0.0
    %840 = vmatpush1.msra.mxu0 0.0
    %841 = vmatprep.subr.mxu0 0.0
    %842 = vmatpush1.msra.mxu0 0.0
    %843 = vmatprep.subr.mxu0 0.0
    %844 = vmatpush1.msra.mxu0 0.0
    %845 = vmatprep.subr.mxu0 0.0
    %846 = vmatpush1.msra.mxu0 0.0
    %847 = vmatprep.subr.mxu0 0.0
    %848 = vmatpush1.msra.mxu0 0.0
    %849 = vmatprep.subr.mxu0 0.0
    %850 = vmatpush1.msra.mxu0 0.0
    %851 = vmatprep.subr.mxu0 0.0
    %852 = vmatpush1.msra.mxu0 0.0
    %853 = vmatprep.subr.mxu0 0.0
    %854 = vmatpush1.msra.mxu0 0.0
    %855 = vmatprep.subr.mxu0 0.0
    %856 = vmatpush1.msra.mxu0 0.0
    %857 = vmatprep.subr.mxu0 0.0
    %858 = vmatpush1.msra.mxu0 0.0
    %859 = vmatprep.subr.mxu0 0.0
    %860 = vmatpush1.msra.mxu0 0.0
    %861 = vmatprep.subr.mxu0 0.0
    %862 = vmatpush1.msra.mxu0 0.0
    %863 = vmatprep.subr.mxu0 0.0
    %864 = vmatpush1.msra.mxu0 0.0
    %865 = vmatprep.subr.mxu0 0.0
    %866 = vmatpush1.msra.mxu0 0.0
    %867 = vmatprep.subr.mxu0 0.0
    %868 = vmatpush1.msra.mxu0 0.0
    %869 = vmatprep.subr.mxu0 0.0
    %870 = vmatpush1.msra.mxu0 0.0
    %871 = vmatprep.subr.mxu0 0.0
    %872 = vmatpush1.msra.mxu0 0.0
    %873 = vmatprep.subr.mxu0 0.0
    %874 = vmatpush1.msra.mxu0 0.0
    %875 = vmatprep.subr.mxu0 0.0
    %876 = vmatpush1.msra.mxu0 0.0
    %877 = vmatprep.subr.mxu0 0.0
    %878 = vmatpush1.msra.mxu0 0.0
    %879 = vmatprep.mubr.f32.mxu0 0.0
    %880 = vmatmul.mubr.f32.gmra.mrb[0].mxu0 %v804
    %v881 = vpop.f32.mrb[0].mxu0
    %v882 = vadd.f32 0.0, %v881
    %v883 = vpop.f32.mrb[0].mxu0
    %v884 = vadd.f32 0.0, %v883
    %885 = vdwg.mxu0
    %886 = vmatprep.subr.mxu0 %v813
    %887 = vmatpush1.msra.mxu0 %v810
    %888 = vmatprep.subr.mxu0 0.0
    %889 = vmatpush1.msra.mxu0 0.0
    %890 = vmatprep.subr.mxu0 0.0
    %891 = vmatpush1.msra.mxu0 0.0
    %892 = vmatprep.subr.mxu0 0.0
    %893 = vmatpush1.msra.mxu0 0.0
    %894 = vmatprep.subr.mxu0 0.0
    %895 = vmatpush1.msra.mxu0 0.0
    %896 = vmatprep.subr.mxu0 0.0
    %897 = vmatpush1.msra.mxu0 0.0
    %898 = vmatprep.subr.mxu0 0.0
    %899 = vmatpush1.msra.mxu0 0.0
    %900 = vmatprep.subr.mxu0 0.0
    %901 = vmatpush1.msra.mxu0 0.0
    %902 = vmatprep.subr.mxu0 0.0
    %903 = vmatpush1.msra.mxu0 0.0
    %904 = vmatprep.subr.mxu0 0.0
    %905 = vmatpush1.msra.mxu0 0.0
    %906 = vmatprep.subr.mxu0 0.0
    %907 = vmatpush1.msra.mxu0 0.0
    %908 = vmatprep.subr.mxu0 0.0
    %909 = vmatpush1.msra.mxu0 0.0
    %910 = vmatprep.subr.mxu0 0.0
    %911 = vmatpush1.msra.mxu0 0.0
    %912 = vmatprep.subr.mxu0 0.0
    %913 = vmatpush1.msra.mxu0 0.0
    %914 = vmatprep.subr.mxu0 0.0
    %915 = vmatpush1.msra.mxu0 0.0
    %916 = vmatprep.subr.mxu0 0.0
    %917 = vmatpush1.msra.mxu0 0.0
    %918 = vmatprep.subr.mxu0 0.0
    %919 = vmatpush1.msra.mxu0 0.0
    %920 = vmatprep.subr.mxu0 0.0
    %921 = vmatpush1.msra.mxu0 0.0
    %922 = vmatprep.subr.mxu0 0.0
    %923 = vmatpush1.msra.mxu0 0.0
    %924 = vmatprep.subr.mxu0 0.0
    %925 = vmatpush1.msra.mxu0 0.0
    %926 = vmatprep.subr.mxu0 0.0
    %927 = vmatpush1.msra.mxu0 0.0
    %928 = vmatprep.subr.mxu0 0.0
    %929 = vmatpush1.msra.mxu0 0.0
    %930 = vmatprep.subr.mxu0 0.0
    %931 = vmatpush1.msra.mxu0 0.0
    %932 = vmatprep.subr.mxu0 0.0
    %933 = vmatpush1.msra.mxu0 0.0
    %934 = vmatprep.subr.mxu0 0.0
    %935 = vmatpush1.msra.mxu0 0.0
    %936 = vmatprep.subr.mxu0 0.0
    %937 = vmatpush1.msra.mxu0 0.0
    %938 = vmatprep.subr.mxu0 0.0
    %939 = vmatpush1.msra.mxu0 0.0
    %940 = vmatprep.subr.mxu0 0.0
    %941 = vmatpush1.msra.mxu0 0.0
    %942 = vmatprep.subr.mxu0 0.0
    %943 = vmatpush1.msra.mxu0 0.0
    %944 = vmatprep.subr.mxu0 0.0
    %945 = vmatpush1.msra.mxu0 0.0
    %946 = vmatprep.subr.mxu0 0.0
    %947 = vmatpush1.msra.mxu0 0.0
    %948 = vmatprep.subr.mxu0 0.0
    %949 = vmatpush1.msra.mxu0 0.0
    %950 = vmatprep.mubr.f32.mxu0 0.0
    %951 = vmatmul.mubr.f32.gmra.mrb[0].mxu0 %v804
    %v952 = vpop.f32.mrb[0].mxu0
    %v953 = vadd.f32 0.0, %v952
    %v954 = vpop.f32.mrb[0].mxu0
    %v955 = vadd.f32 0.0, %v954
    %956 = vdwg.mxu0
    %v957 = vadd.f32 %v782, %v882
    %v958 = vadd.f32 %v783, %v884
    %v959 = vadd.f32 %v784, %v953
    %v960 = vadd.f32 %v785, %v955
    %s961 = scalar_lea.vmem [#allocation2], 40
    %v962 = vld [vmem:[%s961] sm:$0xff]
    %963 = vrot.lane.b32.xlu0 %v102, 110
    %v964 = vpop.permute.xlu0 %963
    %965 = vrot.lane.b32.xlu0 %v106, 110
    %v966 = vpop.permute.xlu0 %965
    %967 = vrot.lane.b32.xlu0 %v104, 110
    %v968 = vpop.permute.xlu0 %967
    %969 = vrot.lane.b32.xlu0 %v108, 110
    %v970 = vpop.permute.xlu0 %969
    %vm971 = vcmask 900096
    %v972 = vsel %vm971, %v964, %v966
    %v973 = vsel %vm971, %v966, %v968
    %v974 = vsel %vm971, %v968, %v970
    %v977 = vsel %vm971, %v970, %v964
    %v979 = vsel %vm127, %v962, 0
    %v981 = vsel %vm131, %v972, 0
    %v983 = vsel %vm131, %v973, 0
    %v985 = vsel %vm131, %v974, 0
    %v988 = vsel %vm131, %v977, 0
    %990 = vmatprep.subr.mxu0 %v983
    %991 = vmatpush1.msra.mxu0 %v981
    %992 = vmatprep.subr.mxu0 0.0
    %993 = vmatpush1.msra.mxu0 0.0
    %994 = vmatprep.subr.mxu0 0.0
    %995 = vmatpush1.msra.mxu0 0.0
    %996 = vmatprep.subr.mxu0 0.0
    %997 = vmatpush1.msra.mxu0 0.0
    %998 = vmatprep.subr.mxu0 0.0
    %999 = vmatpush1.msra.mxu0 0.0
    %1000 = vmatprep.subr.mxu0 0.0
    %1001 = vmatpush1.msra.mxu0 0.0
    %1002 = vmatprep.subr.mxu0 0.0
    %1003 = vmatpush1.msra.mxu0 0.0
    %1004 = vmatprep.subr.mxu0 0.0
    %1005 = vmatpush1.msra.mxu0 0.0
    %1006 = vmatprep.subr.mxu0 0.0
    %1007 = vmatpush1.msra.mxu0 0.0
    %1008 = vmatprep.subr.mxu0 0.0
    %1009 = vmatpush1.msra.mxu0 0.0
    %1010 = vmatprep.subr.mxu0 0.0
    %1011 = vmatpush1.msra.mxu0 0.0
    %1012 = vmatprep.subr.mxu0 0.0
    %1013 = vmatpush1.msra.mxu0 0.0
    %1014 = vmatprep.subr.mxu0 0.0
    %1015 = vmatpush1.msra.mxu0 0.0
    %1016 = vmatprep.subr.mxu0 0.0
    %1017 = vmatpush1.msra.mxu0 0.0
    %1018 = vmatprep.subr.mxu0 0.0
    %1019 = vmatpush1.msra.mxu0 0.0
    %1020 = vmatprep.subr.mxu0 0.0
    %1021 = vmatpush1.msra.mxu0 0.0
    %1022 = vmatprep.subr.mxu0 0.0
    %1023 = vmatpush1.msra.mxu0 0.0
    %1024 = vmatprep.subr.mxu0 0.0
    %1025 = vmatpush1.msra.mxu0 0.0
    %1026 = vmatprep.subr.mxu0 0.0
    %1027 = vmatpush1.msra.mxu0 0.0
    %1028 = vmatprep.subr.mxu0 0.0
    %1029 = vmatpush1.msra.mxu0 0.0
    %1030 = vmatprep.subr.mxu0 0.0
    %1031 = vmatpush1.msra.mxu0 0.0
    %1032 = vmatprep.subr.mxu0 0.0
    %1033 = vmatpush1.msra.mxu0 0.0
    %1034 = vmatprep.subr.mxu0 0.0
    %1035 = vmatpush1.msra.mxu0 0.0
    %1036 = vmatprep.subr.mxu0 0.0
    %1037 = vmatpush1.msra.mxu0 0.0
    %1038 = vmatprep.subr.mxu0 0.0
    %1039 = vmatpush1.msra.mxu0 0.0
    %1040 = vmatprep.subr.mxu0 0.0
    %1041 = vmatpush1.msra.mxu0 0.0
    %1042 = vmatprep.subr.mxu0 0.0
    %1043 = vmatpush1.msra.mxu0 0.0
    %1044 = vmatprep.subr.mxu0 0.0
    %1045 = vmatpush1.msra.mxu0 0.0
    %1046 = vmatprep.subr.mxu0 0.0
    %1047 = vmatpush1.msra.mxu0 0.0
    %1048 = vmatprep.subr.mxu0 0.0
    %1049 = vmatpush1.msra.mxu0 0.0
    %1050 = vmatprep.subr.mxu0 0.0
    %1051 = vmatpush1.msra.mxu0 0.0
    %1052 = vmatprep.subr.mxu0 0.0
    %1053 = vmatpush1.msra.mxu0 0.0
    %1054 = vmatprep.mubr.f32.mxu0 0.0
    %1055 = vmatmul.mubr.f32.gmra.mrb[0].mxu0 %v979
    %v1056 = vpop.f32.mrb[0].mxu0
    %v1057 = vadd.f32 0.0, %v1056
    %v1058 = vpop.f32.mrb[0].mxu0
    %v1059 = vadd.f32 0.0, %v1058
    %1060 = vdwg.mxu0
    %1061 = vmatprep.subr.mxu0 %v988
    %1062 = vmatpush1.msra.mxu0 %v985
    %1063 = vmatprep.subr.mxu0 0.0
    %1064 = vmatpush1.msra.mxu0 0.0
    %1065 = vmatprep.subr.mxu0 0.0
    %1066 = vmatpush1.msra.mxu0 0.0
    %1067 = vmatprep.subr.mxu0 0.0
    %1068 = vmatpush1.msra.mxu0 0.0
    %1069 = vmatprep.subr.mxu0 0.0
    %1070 = vmatpush1.msra.mxu0 0.0
    %1071 = vmatprep.subr.mxu0 0.0
    %1072 = vmatpush1.msra.mxu0 0.0
    %1073 = vmatprep.subr.mxu0 0.0
    %1074 = vmatpush1.msra.mxu0 0.0
    %1075 = vmatprep.subr.mxu0 0.0
    %1076 = vmatpush1.msra.mxu0 0.0
    %1077 = vmatprep.subr.mxu0 0.0
    %1078 = vmatpush1.msra.mxu0 0.0
    %1079 = vmatprep.subr.mxu0 0.0
    %1080 = vmatpush1.msra.mxu0 0.0
    %1081 = vmatprep.subr.mxu0 0.0
    %1082 = vmatpush1.msra.mxu0 0.0
    %1083 = vmatprep.subr.mxu0 0.0
    %1084 = vmatpush1.msra.mxu0 0.0
    %1085 = vmatprep.subr.mxu0 0.0
    %1086 = vmatpush1.msra.mxu0 0.0
    %1087 = vmatprep.subr.mxu0 0.0
    %1088 = vmatpush1.msra.mxu0 0.0
    %1089 = vmatprep.subr.mxu0 0.0
    %1090 = vmatpush1.msra.mxu0 0.0
    %1091 = vmatprep.subr.mxu0 0.0
    %1092 = vmatpush1.msra.mxu0 0.0
    %1093 = vmatprep.subr.mxu0 0.0
    %1094 = vmatpush1.msra.mxu0 0.0
    %1095 = vmatprep.subr.mxu0 0.0
    %1096 = vmatpush1.msra.mxu0 0.0
    %1097 = vmatprep.subr.mxu0 0.0
    %1098 = vmatpush1.msra.mxu0 0.0
    %1099 = vmatprep.subr.mxu0 0.0
    %1100 = vmatpush1.msra.mxu0 0.0
    %1101 = vmatprep.subr.mxu0 0.0
    %1102 = vmatpush1.msra.mxu0 0.0
    %1103 = vmatprep.subr.mxu0 0.0
    %1104 = vmatpush1.msra.mxu0 0.0
    %1105 = vmatprep.subr.mxu0 0.0
    %1106 = vmatpush1.msra.mxu0 0.0
    %1107 = vmatprep.subr.mxu0 0.0
    %1108 = vmatpush1.msra.mxu0 0.0
    %1109 = vmatprep.subr.mxu0 0.0
    %1110 = vmatpush1.msra.mxu0 0.0
    %1111 = vmatprep.subr.mxu0 0.0
    %1112 = vmatpush1.msra.mxu0 0.0
    %1113 = vmatprep.subr.mxu0 0.0
    %1114 = vmatpush1.msra.mxu0 0.0
    %1115 = vmatprep.subr.mxu0 0.0
    %1116 = vmatpush1.msra.mxu0 0.0
    %1117 = vmatprep.subr.mxu0 0.0
    %1118 = vmatpush1.msra.mxu0 0.0
    %1119 = vmatprep.subr.mxu0 0.0
    %1120 = vmatpush1.msra.mxu0 0.0
    %1121 = vmatprep.subr.mxu0 0.0
    %1122 = vmatpush1.msra.mxu0 0.0
    %1123 = vmatprep.subr.mxu0 0.0
    %1124 = vmatpush1.msra.mxu0 0.0
    %1125 = vmatprep.mubr.f32.mxu0 0.0
    %1126 = vmatmul.mubr.f32.gmra.mrb[0].mxu0 %v979
    %v1127 = vpop.f32.mrb[0].mxu0
    %v1128 = vadd.f32 0.0, %v1127
    %v1129 = vpop.f32.mrb[0].mxu0
    %v1130 = vadd.f32 0.0, %v1129
    %1131 = vdwg.mxu0
    %v1132 = vadd.f32 %v957, %v1057
    %v1133 = vadd.f32 %v958, %v1059
    %v1134 = vadd.f32 %v959, %v1128
    %v1135 = vadd.f32 %v960, %v1130
    %s1136 = scalar_lea.vmem [#allocation2], 48
    %v1137 = vld [vmem:[%s1136] sm:$0xff]
    %1138 = vrot.lane.b32.xlu0 %v102, 96
    %v1139 = vpop.permute.xlu0 %1138
    %1140 = vrot.lane.b32.xlu0 %v106, 96
    %v1141 = vpop.permute.xlu0 %1140
    %1142 = vrot.lane.b32.xlu0 %v104, 96
    %v1143 = vpop.permute.xlu0 %1142
    %1144 = vrot.lane.b32.xlu0 %v108, 96
    %v1145 = vpop.permute.xlu0 %1144
    %vm1146 = vcmask 785408
    %v1147 = vsel %vm1146, %v1139, %v1141
    %v1148 = vsel %vm1146, %v1141, %v1143
    %v1149 = vsel %vm1146, %v1143, %v1145
    %v1152 = vsel %vm1146, %v1145, %v1139
    %v1154 = vsel %vm127, %v1137, 0
    %v1156 = vsel %vm131, %v1147, 0
    %v1158 = vsel %vm131, %v1148, 0
    %v1160 = vsel %vm131, %v1149, 0
    %v1163 = vsel %vm131, %v1152, 0
    %1165 = vmatprep.subr.mxu0 %v1158
    %1166 = vmatpush1.msra.mxu0 %v1156
    %1167 = vmatprep.subr.mxu0 0.0
    %1168 = vmatpush1.msra.mxu0 0.0
    %1169 = vmatprep.subr.mxu0 0.0
    %1170 = vmatpush1.msra.mxu0 0.0
    %1171 = vmatprep.subr.mxu0 0.0
    %1172 = vmatpush1.msra.mxu0 0.0
    %1173 = vmatprep.subr.mxu0 0.0
    %1174 = vmatpush1.msra.mxu0 0.0
    %1175 = vmatprep.subr.mxu0 0.0
    %1176 = vmatpush1.msra.mxu0 0.0
    %1177 = vmatprep.subr.mxu0 0.0
    %1178 = vmatpush1.msra.mxu0 0.0
    %1179 = vmatprep.subr.mxu0 0.0
    %1180 = vmatpush1.msra.mxu0 0.0
    %1181 = vmatprep.subr.mxu0 0.0
    %1182 = vmatpush1.msra.mxu0 0.0
    %1183 = vmatprep.subr.mxu0 0.0
    %1184 = vmatpush1.msra.mxu0 0.0
    %1185 = vmatprep.subr.mxu0 0.0
    %1186 = vmatpush1.msra.mxu0 0.0
    %1187 = vmatprep.subr.mxu0 0.0
    %1188 = vmatpush1.msra.mxu0 0.0
    %1189 = vmatprep.subr.mxu0 0.0
    %1190 = vmatpush1.msra.mxu0 0.0
    %1191 = vmatprep.subr.mxu0 0.0
    %1192 = vmatpush1.msra.mxu0 0.0
    %1193 = vmatprep.subr.mxu0 0.0
    %1194 = vmatpush1.msra.mxu0 0.0
    %1195 = vmatprep.subr.mxu0 0.0
    %1196 = vmatpush1.msra.mxu0 0.0
    %1197 = vmatprep.subr.mxu0 0.0
    %1198 = vmatpush1.msra.mxu0 0.0
    %1199 = vmatprep.subr.mxu0 0.0
    %1200 = vmatpush1.msra.mxu0 0.0
    %1201 = vmatprep.subr.mxu0 0.0
    %1202 = vmatpush1.msra.mxu0 0.0
    %1203 = vmatprep.subr.mxu0 0.0
    %1204 = vmatpush1.msra.mxu0 0.0
    %1205 = vmatprep.subr.mxu0 0.0
    %1206 = vmatpush1.msra.mxu0 0.0
    %1207 = vmatprep.subr.mxu0 0.0
    %1208 = vmatpush1.msra.mxu0 0.0
    %1209 = vmatprep.subr.mxu0 0.0
    %1210 = vmatpush1.msra.mxu0 0.0
    %1211 = vmatprep.subr.mxu0 0.0
    %1212 = vmatpush1.msra.mxu0 0.0
    %1213 = vmatprep.subr.mxu0 0.0
    %1214 = vmatpush1.msra.mxu0 0.0
    %1215 = vmatprep.subr.mxu0 0.0
    %1216 = vmatpush1.msra.mxu0 0.0
    %1217 = vmatprep.subr.mxu0 0.0
    %1218 = vmatpush1.msra.mxu0 0.0
    %1219 = vmatprep.subr.mxu0 0.0
    %1220 = vmatpush1.msra.mxu0 0.0
    %1221 = vmatprep.subr.mxu0 0.0
    %1222 = vmatpush1.msra.mxu0 0.0
    %1223 = vmatprep.subr.mxu0 0.0
    %1224 = vmatpush1.msra.mxu0 0.0
    %1225 = vmatprep.subr.mxu0 0.0
    %1226 = vmatpush1.msra.mxu0 0.0
    %1227 = vmatprep.subr.mxu0 0.0
    %1228 = vmatpush1.msra.mxu0 0.0
    %1229 = vmatprep.mubr.f32.mxu0 0.0
    %1230 = vmatmul.mubr.f32.gmra.mrb[0].mxu0 %v1154
    %v1231 = vpop.f32.mrb[0].mxu0
    %v1232 = vadd.f32 0.0, %v1231
    %v1233 = vpop.f32.mrb[0].mxu0
    %v1234 = vadd.f32 0.0, %v1233
    %1235 = vdwg.mxu0
    %1236 = vmatprep.subr.mxu0 %v1163
    %1237 = vmatpush1.msra.mxu0 %v1160
    %1238 = vmatprep.subr.mxu0 0.0
    %1239 = vmatpush1.msra.mxu0 0.0
    %1240 = vmatprep.subr.mxu0 0.0
    %1241 = vmatpush1.msra.mxu0 0.0
    %1242 = vmatprep.subr.mxu0 0.0
    %1243 = vmatpush1.msra.mxu0 0.0
    %1244 = vmatprep.subr.mxu0 0.0
    %1245 = vmatpush1.msra.mxu0 0.0
    %1246 = vmatprep.subr.mxu0 0.0
    %1247 = vmatpush1.msra.mxu0 0.0
    %1248 = vmatprep.subr.mxu0 0.0
    %1249 = vmatpush1.msra.mxu0 0.0
    %1250 = vmatprep.subr.mxu0 0.0
    %1251 = vmatpush1.msra.mxu0 0.0
    %1252 = vmatprep.subr.mxu0 0.0
    %1253 = vmatpush1.msra.mxu0 0.0
    %1254 = vmatprep.subr.mxu0 0.0
    %1255 = vmatpush1.msra.mxu0 0.0
    %1256 = vmatprep.subr.mxu0 0.0
    %1257 = vmatpush1.msra.mxu0 0.0
    %1258 = vmatprep.subr.mxu0 0.0
    %1259 = vmatpush1.msra.mxu0 0.0
    %1260 = vmatprep.subr.mxu0 0.0
    %1261 = vmatpush1.msra.mxu0 0.0
    %1262 = vmatprep.subr.mxu0 0.0
    %1263 = vmatpush1.msra.mxu0 0.0
    %1264 = vmatprep.subr.mxu0 0.0
    %1265 = vmatpush1.msra.mxu0 0.0
    %1266 = vmatprep.subr.mxu0 0.0
    %1267 = vmatpush1.msra.mxu0 0.0
    %1268 = vmatprep.subr.mxu0 0.0
    %1269 = vmatpush1.msra.mxu0 0.0
    %1270 = vmatprep.subr.mxu0 0.0
    %1271 = vmatpush1.msra.mxu0 0.0
    %1272 = vmatprep.subr.mxu0 0.0
    %1273 = vmatpush1.msra.mxu0 0.0
    %1274 = vmatprep.subr.mxu0 0.0
    %1275 = vmatpush1.msra.mxu0 0.0
    %1276 = vmatprep.subr.mxu0 0.0
    %1277 = vmatpush1.msra.mxu0 0.0
    %1278 = vmatprep.subr.mxu0 0.0
    %1279 = vmatpush1.msra.mxu0 0.0
    %1280 = vmatprep.subr.mxu0 0.0
    %1281 = vmatpush1.msra.mxu0 0.0
    %1282 = vmatprep.subr.mxu0 0.0
    %1283 = vmatpush1.msra.mxu0 0.0
    %1284 = vmatprep.subr.mxu0 0.0
    %1285 = vmatpush1.msra.mxu0 0.0
    %1286 = vmatprep.subr.mxu0 0.0
    %1287 = vmatpush1.msra.mxu0 0.0
    %1288 = vmatprep.subr.mxu0 0.0
    %1289 = vmatpush1.msra.mxu0 0.0
    %1290 = vmatprep.subr.mxu0 0.0
    %1291 = vmatpush1.msra.mxu0 0.0
    %1292 = vmatprep.subr.mxu0 0.0
    %1293 = vmatpush1.msra.mxu0 0.0
    %1294 = vmatprep.subr.mxu0 0.0
    %1295 = vmatpush1.msra.mxu0 0.0
    %1296 = vmatprep.subr.mxu0 0.0
    %1297 = vmatpush1.msra.mxu0 0.0
    %1298 = vmatprep.subr.mxu0 0.0
    %1299 = vmatpush1.msra.mxu0 0.0
    %1300 = vmatprep.mubr.f32.mxu0 0.0
    %1301 = vmatmul.mubr.f32.gmra.mrb[0].mxu0 %v1154
    %v1302 = vpop.f32.mrb[0].mxu0
    %v1303 = vadd.f32 0.0, %v1302
    %v1304 = vpop.f32.mrb[0].mxu0
    %v1305 = vadd.f32 0.0, %v1304
    %1306 = vdwg.mxu0
    %v1307 = vadd.f32 %v1132, %v1232
    %v1308 = vadd.f32 %v1133, %v1234
    %v1309 = vadd.f32 %v1134, %v1303
    %v1310 = vadd.f32 %v1135, %v1305
    %s1311 = scalar_lea.vmem [#allocation2], 56
    %v1312 = vld [vmem:[%s1311] sm:$0xff]
    %1313 = vrot.lane.b32.xlu0 %v102, 95
    %v1314 = vpop.permute.xlu0 %1313
    %1315 = vrot.lane.b32.xlu0 %v106, 95
    %v1316 = vpop.permute.xlu0 %1315
    %1317 = vrot.lane.b32.xlu0 %v104, 95
    %v1318 = vpop.permute.xlu0 %1317
    %1319 = vrot.lane.b32.xlu0 %v108, 95
    %v1320 = vpop.permute.xlu0 %1319
    %vm1321 = vcmask 777216
    %v1322 = vsel %vm1321, %v1314, %v1316
    %v1323 = vsel %vm1321, %v1316, %v1318
    %v1324 = vsel %vm1321, %v1318, %v1320
    %v1327 = vsel %vm1321, %v1320, %v1314
    %v1329 = vsel %vm127, %v1312, 0
    %v1331 = vsel %vm131, %v1322, 0
    %v1333 = vsel %vm131, %v1323, 0
    %v1335 = vsel %vm131, %v1324, 0
    %v1338 = vsel %vm131, %v1327, 0
    %1340 = vmatprep.subr.mxu0 %v1333
    %1341 = vmatpush1.msra.mxu0 %v1331
    %1342 = vmatprep.subr.mxu0 0.0
    %1343 = vmatpush1.msra.mxu0 0.0
    %1344 = vmatprep.subr.mxu0 0.0
    %1345 = vmatpush1.msra.mxu0 0.0
    %1346 = vmatprep.subr.mxu0 0.0
    %1347 = vmatpush1.msra.mxu0 0.0
    %1348 = vmatprep.subr.mxu0 0.0
    %1349 = vmatpush1.msra.mxu0 0.0
    %1350 = vmatprep.subr.mxu0 0.0
    %1351 = vmatpush1.msra.mxu0 0.0
    %1352 = vmatprep.subr.mxu0 0.0
    %1353 = vmatpush1.msra.mxu0 0.0
    %1354 = vmatprep.subr.mxu0 0.0
    %1355 = vmatpush1.msra.mxu0 0.0
    %1356 = vmatprep.subr.mxu0 0.0
    %1357 = vmatpush1.msra.mxu0 0.0
    %1358 = vmatprep.subr.mxu0 0.0
    %1359 = vmatpush1.msra.mxu0 0.0
    %1360 = vmatprep.subr.mxu0 0.0
    %1361 = vmatpush1.msra.mxu0 0.0
    %1362 = vmatprep.subr.mxu0 0.0
    %1363 = vmatpush1.msra.mxu0 0.0
    %1364 = vmatprep.subr.mxu0 0.0
    %1365 = vmatpush1.msra.mxu0 0.0
    %1366 = vmatprep.subr.mxu0 0.0
    %1367 = vmatpush1.msra.mxu0 0.0
    %1368 = vmatprep.subr.mxu0 0.0
    %1369 = vmatpush1.msra.mxu0 0.0
    %1370 = vmatprep.subr.mxu0 0.0
    %1371 = vmatpush1.msra.mxu0 0.0
    %1372 = vmatprep.subr.mxu0 0.0
    %1373 = vmatpush1.msra.mxu0 0.0
    %1374 = vmatprep.subr.mxu0 0.0
    %1375 = vmatpush1.msra.mxu0 0.0
    %1376 = vmatprep.subr.mxu0 0.0
    %1377 = vmatpush1.msra.mxu0 0.0
    %1378 = vmatprep.subr.mxu0 0.0
    %1379 = vmatpush1.msra.mxu0 0.0
    %1380 = vmatprep.subr.mxu0 0.0
    %1381 = vmatpush1.msra.mxu0 0.0
    %1382 = vmatprep.subr.mxu0 0.0
    %1383 = vmatpush1.msra.mxu0 0.0
    %1384 = vmatprep.subr.mxu0 0.0
    %1385 = vmatpush1.msra.mxu0 0.0
    %1386 = vmatprep.subr.mxu0 0.0
    %1387 = vmatpush1.msra.mxu0 0.0
    %1388 = vmatprep.subr.mxu0 0.0
    %1389 = vmatpush1.msra.mxu0 0.0
    %1390 = vmatprep.subr.mxu0 0.0
    %1391 = vmatpush1.msra.mxu0 0.0
    %1392 = vmatprep.subr.mxu0 0.0
    %1393 = vmatpush1.msra.mxu0 0.0
    %1394 = vmatprep.subr.mxu0 0.0
    %1395 = vmatpush1.msra.mxu0 0.0
    %1396 = vmatprep.subr.mxu0 0.0
    %1397 = vmatpush1.msra.mxu0 0.0
    %1398 = vmatprep.subr.mxu0 0.0
    %1399 = vmatpush1.msra.mxu0 0.0
    %1400 = vmatprep.subr.mxu0 0.0
    %1401 = vmatpush1.msra.mxu0 0.0
    %1402 = vmatprep.subr.mxu0 0.0
    %1403 = vmatpush1.msra.mxu0 0.0
    %1404 = vmatprep.mubr.f32.mxu0 0.0
    %1405 = vmatmul.mubr.f32.gmra.mrb[0].mxu0 %v1329
    %v1406 = vpop.f32.mrb[0].mxu0
    %v1407 = vadd.f32 0.0, %v1406
    %v1408 = vpop.f32.mrb[0].mxu0
    %v1409 = vadd.f32 0.0, %v1408
    %1410 = vdwg.mxu0
    %1411 = vmatprep.subr.mxu0 %v1338
    %1412 = vmatpush1.msra.mxu0 %v1335
    %1413 = vmatprep.subr.mxu0 0.0
    %1414 = vmatpush1.msra.mxu0 0.0
    %1415 = vmatprep.subr.mxu0 0.0
    %1416 = vmatpush1.msra.mxu0 0.0
    %1417 = vmatprep.subr.mxu0 0.0
    %1418 = vmatpush1.msra.mxu0 0.0
    %1419 = vmatprep.subr.mxu0 0.0
    %1420 = vmatpush1.msra.mxu0 0.0
    %1421 = vmatprep.subr.mxu0 0.0
    %1422 = vmatpush1.msra.mxu0 0.0
    %1423 = vmatprep.subr.mxu0 0.0
    %1424 = vmatpush1.msra.mxu0 0.0
    %1425 = vmatprep.subr.mxu0 0.0
    %1426 = vmatpush1.msra.mxu0 0.0
    %1427 = vmatprep.subr.mxu0 0.0
    %1428 = vmatpush1.msra.mxu0 0.0
    %1429 = vmatprep.subr.mxu0 0.0
    %1430 = vmatpush1.msra.mxu0 0.0
    %1431 = vmatprep.subr.mxu0 0.0
    %1432 = vmatpush1.msra.mxu0 0.0
    %1433 = vmatprep.subr.mxu0 0.0
    %1434 = vmatpush1.msra.mxu0 0.0
    %1435 = vmatprep.subr.mxu0 0.0
    %1436 = vmatpush1.msra.mxu0 0.0
    %1437 = vmatprep.subr.mxu0 0.0
    %1438 = vmatpush1.msra.mxu0 0.0
    %1439 = vmatprep.subr.mxu0 0.0
    %1440 = vmatpush1.msra.mxu0 0.0
    %1441 = vmatprep.subr.mxu0 0.0
    %1442 = vmatpush1.msra.mxu0 0.0
    %1443 = vmatprep.subr.mxu0 0.0
    %1444 = vmatpush1.msra.mxu0 0.0
    %1445 = vmatprep.subr.mxu0 0.0
    %1446 = vmatpush1.msra.mxu0 0.0
    %1447 = vmatprep.subr.mxu0 0.0
    %1448 = vmatpush1.msra.mxu0 0.0
    %1449 = vmatprep.subr.mxu0 0.0
    %1450 = vmatpush1.msra.mxu0 0.0
    %1451 = vmatprep.subr.mxu0 0.0
    %1452 = vmatpush1.msra.mxu0 0.0
    %1453 = vmatprep.subr.mxu0 0.0
    %1454 = vmatpush1.msra.mxu0 0.0
    %1455 = vmatprep.subr.mxu0 0.0
    %1456 = vmatpush1.msra.mxu0 0.0
    %1457 = vmatprep.subr.mxu0 0.0
    %1458 = vmatpush1.msra.mxu0 0.0
    %1459 = vmatprep.subr.mxu0 0.0
    %1460 = vmatpush1.msra.mxu0 0.0
    %1461 = vmatprep.subr.mxu0 0.0
    %1462 = vmatpush1.msra.mxu0 0.0
    %1463 = vmatprep.subr.mxu0 0.0
    %1464 = vmatpush1.msra.mxu0 0.0
    %1465 = vmatprep.subr.mxu0 0.0
    %1466 = vmatpush1.msra.mxu0 0.0
    %1467 = vmatprep.subr.mxu0 0.0
    %1468 = vmatpush1.msra.mxu0 0.0
    %1469 = vmatprep.subr.mxu0 0.0
    %1470 = vmatpush1.msra.mxu0 0.0
    %1471 = vmatprep.subr.mxu0 0.0
    %1472 = vmatpush1.msra.mxu0 0.0
    %1473 = vmatprep.subr.mxu0 0.0
    %1474 = vmatpush1.msra.mxu0 0.0
    %1475 = vmatprep.mubr.f32.mxu0 0.0
    %1476 = vmatmul.mubr.f32.gmra.mrb[0].mxu0 %v1329
    %v1477 = vpop.f32.mrb[0].mxu0
    %v1478 = vadd.f32 0.0, %v1477
    %v1479 = vpop.f32.mrb[0].mxu0
    %v1480 = vadd.f32 0.0, %v1479
    %1481 = vdwg.mxu0
    %v1482 = vadd.f32 %v1307, %v1407
    %v1483 = vadd.f32 %v1308, %v1409
    %v1484 = vadd.f32 %v1309, %v1478
    %v1485 = vadd.f32 %v1310, %v1480
    %s1486 = scalar_lea.vmem [#allocation2], 64
    %v1487 = vld [vmem:[%s1486] sm:$0xff]
    %1488 = vrot.lane.b32.xlu0 %v102, 94
    %v1489 = vpop.permute.xlu0 %1488
    %1490 = vrot.lane.b32.xlu0 %v106, 94
    %v1491 = vpop.permute.xlu0 %1490
    %1492 = vrot.lane.b32.xlu0 %v104, 94
    %v1493 = vpop.permute.xlu0 %1492
    %1494 = vrot.lane.b32.xlu0 %v108, 94
    %v1495 = vpop.permute.xlu0 %1494
    %vm1496 = vcmask 769024
    %v1497 = vsel %vm1496, %v1489, %v1491
    %v1498 = vsel %vm1496, %v1491, %v1493
    %v1499 = vsel %vm1496, %v1493, %v1495
    %v1502 = vsel %vm1496, %v1495, %v1489
    %v1504 = vsel %vm127, %v1487, 0
    %v1506 = vsel %vm131, %v1497, 0
    %v1508 = vsel %vm131, %v1498, 0
    %v1510 = vsel %vm131, %v1499, 0
    %v1513 = vsel %vm131, %v1502, 0
    %1515 = vmatprep.subr.mxu0 %v1508
    %1516 = vmatpush1.msra.mxu0 %v1506
    %1517 = vmatprep.subr.mxu0 0.0
    %1518 = vmatpush1.msra.mxu0 0.0
    %1519 = vmatprep.subr.mxu0 0.0
    %1520 = vmatpush1.msra.mxu0 0.0
    %1521 = vmatprep.subr.mxu0 0.0
    %1522 = vmatpush1.msra.mxu0 0.0
    %1523 = vmatprep.subr.mxu0 0.0
    %1524 = vmatpush1.msra.mxu0 0.0
    %1525 = vmatprep.subr.mxu0 0.0
    %1526 = vmatpush1.msra.mxu0 0.0
    %1527 = vmatprep.subr.mxu0 0.0
    %1528 = vmatpush1.msra.mxu0 0.0
    %1529 = vmatprep.subr.mxu0 0.0
    %1530 = vmatpush1.msra.mxu0 0.0
    %1531 = vmatprep.subr.mxu0 0.0
    %1532 = vmatpush1.msra.mxu0 0.0
    %1533 = vmatprep.subr.mxu0 0.0
    %1534 = vmatpush1.msra.mxu0 0.0
    %1535 = vmatprep.subr.mxu0 0.0
    %1536 = vmatpush1.msra.mxu0 0.0
    %1537 = vmatprep.subr.mxu0 0.0
    %1538 = vmatpush1.msra.mxu0 0.0
    %1539 = vmatprep.subr.mxu0 0.0
    %1540 = vmatpush1.msra.mxu0 0.0
    %1541 = vmatprep.subr.mxu0 0.0
    %1542 = vmatpush1.msra.mxu0 0.0
    %1543 = vmatprep.subr.mxu0 0.0
    %1544 = vmatpush1.msra.mxu0 0.0
    %1545 = vmatprep.subr.mxu0 0.0
    %1546 = vmatpush1.msra.mxu0 0.0
    %1547 = vmatprep.subr.mxu0 0.0
    %1548 = vmatpush1.msra.mxu0 0.0
    %1549 = vmatprep.subr.mxu0 0.0
    %1550 = vmatpush1.msra.mxu0 0.0
    %1551 = vmatprep.subr.mxu0 0.0
    %1552 = vmatpush1.msra.mxu0 0.0
    %1553 = vmatprep.subr.mxu0 0.0
    %1554 = vmatpush1.msra.mxu0 0.0
    %1555 = vmatprep.subr.mxu0 0.0
    %1556 = vmatpush1.msra.mxu0 0.0
    %1557 = vmatprep.subr.mxu0 0.0
    %1558 = vmatpush1.msra.mxu0 0.0
    %1559 = vmatprep.subr.mxu0 0.0
    %1560 = vmatpush1.msra.mxu0 0.0
    %1561 = vmatprep.subr.mxu0 0.0
    %1562 = vmatpush1.msra.mxu0 0.0
    %1563 = vmatprep.subr.mxu0 0.0
    %1564 = vmatpush1.msra.mxu0 0.0
    %1565 = vmatprep.subr.mxu0 0.0
    %1566 = vmatpush1.msra.mxu0 0.0
    %1567 = vmatprep.subr.mxu0 0.0
    %1568 = vmatpush1.msra.mxu0 0.0
    %1569 = vmatprep.subr.mxu0 0.0
    %1570 = vmatpush1.msra.mxu0 0.0
    %1571 = vmatprep.subr.mxu0 0.0
    %1572 = vmatpush1.msra.mxu0 0.0
    %1573 = vmatprep.subr.mxu0 0.0
    %1574 = vmatpush1.msra.mxu0 0.0
    %1575 = vmatprep.subr.mxu0 0.0
    %1576 = vmatpush1.msra.mxu0 0.0
    %1577 = vmatprep.subr.mxu0 0.0
    %1578 = vmatpush1.msra.mxu0 0.0
    %1579 = vmatprep.mubr.f32.mxu0 0.0
    %1580 = vmatmul.mubr.f32.gmra.mrb[0].mxu0 %v1504
    %v1581 = vpop.f32.mrb[0].mxu0
    %v1582 = vadd.f32 0.0, %v1581
    %v1583 = vpop.f32.mrb[0].mxu0
    %v1584 = vadd.f32 0.0, %v1583
    %1585 = vdwg.mxu0
    %1586 = vmatprep.subr.mxu0 %v1513
    %1587 = vmatpush1.msra.mxu0 %v1510
    %1588 = vmatprep.subr.mxu0 0.0
    %1589 = vmatpush1.msra.mxu0 0.0
    %1590 = vmatprep.subr.mxu0 0.0
    %1591 = vmatpush1.msra.mxu0 0.0
    %1592 = vmatprep.subr.mxu0 0.0
    %1593 = vmatpush1.msra.mxu0 0.0
    %1594 = vmatprep.subr.mxu0 0.0
    %1595 = vmatpush1.msra.mxu0 0.0
    %1596 = vmatprep.subr.mxu0 0.0
    %1597 = vmatpush1.msra.mxu0 0.0
    %1598 = vmatprep.subr.mxu0 0.0
    %1599 = vmatpush1.msra.mxu0 0.0
    %1600 = vmatprep.subr.mxu0 0.0
    %1601 = vmatpush1.msra.mxu0 0.0
    %1602 = vmatprep.subr.mxu0 0.0
    %1603 = vmatpush1.msra.mxu0 0.0
    %1604 = vmatprep.subr.mxu0 0.0
    %1605 = vmatpush1.msra.mxu0 0.0
    %1606 = vmatprep.subr.mxu0 0.0
    %1607 = vmatpush1.msra.mxu0 0.0
    %1608 = vmatprep.subr.mxu0 0.0
    %1609 = vmatpush1.msra.mxu0 0.0
    %1610 = vmatprep.subr.mxu0 0.0
    %1611 = vmatpush1.msra.mxu0 0.0
    %1612 = vmatprep.subr.mxu0 0.0
    %1613 = vmatpush1.msra.mxu0 0.0
    %1614 = vmatprep.subr.mxu0 0.0
    %1615 = vmatpush1.msra.mxu0 0.0
    %1616 = vmatprep.subr.mxu0 0.0
    %1617 = vmatpush1.msra.mxu0 0.0
    %1618 = vmatprep.subr.mxu0 0.0
    %1619 = vmatpush1.msra.mxu0 0.0
    %1620 = vmatprep.subr.mxu0 0.0
    %1621 = vmatpush1.msra.mxu0 0.0
    %1622 = vmatprep.subr.mxu0 0.0
    %1623 = vmatpush1.msra.mxu0 0.0
    %1624 = vmatprep.subr.mxu0 0.0
    %1625 = vmatpush1.msra.mxu0 0.0
    %1626 = vmatprep.subr.mxu0 0.0
    %1627 = vmatpush1.msra.mxu0 0.0
    %1628 = vmatprep.subr.mxu0 0.0
    %1629 = vmatpush1.msra.mxu0 0.0
    %1630 = vmatprep.subr.mxu0 0.0
    %1631 = vmatpush1.msra.mxu0 0.0
    %1632 = vmatprep.subr.mxu0 0.0
    %1633 = vmatpush1.msra.mxu0 0.0
    %1634 = vmatprep.subr.mxu0 0.0
    %1635 = vmatpush1.msra.mxu0 0.0
    %1636 = vmatprep.subr.mxu0 0.0
    %1637 = vmatpush1.msra.mxu0 0.0
    %1638 = vmatprep.subr.mxu0 0.0
    %1639 = vmatpush1.msra.mxu0 0.0
    %1640 = vmatprep.subr.mxu0 0.0
    %1641 = vmatpush1.msra.mxu0 0.0
    %1642 = vmatprep.subr.mxu0 0.0
    %1643 = vmatpush1.msra.mxu0 0.0
    %1644 = vmatprep.subr.mxu0 0.0
    %1645 = vmatpush1.msra.mxu0 0.0
    %1646 = vmatprep.subr.mxu0 0.0
    %1647 = vmatpush1.msra.mxu0 0.0
    %1648 = vmatprep.subr.mxu0 0.0
    %1649 = vmatpush1.msra.mxu0 0.0
    %1650 = vmatprep.mubr.f32.mxu0 0.0
    %1651 = vmatmul.mubr.f32.gmra.mrb[0].mxu0 %v1504
    %v1652 = vpop.f32.mrb[0].mxu0
    %v1653 = vadd.f32 0.0, %v1652
    %v1654 = vpop.f32.mrb[0].mxu0
    %v1655 = vadd.f32 0.0, %v1654
    %1656 = vdwg.mxu0
    %v1657 = vadd.f32 %v1482, %v1582
    %v1658 = vadd.f32 %v1483, %v1584
    %v1659 = vadd.f32 %v1484, %v1653
    %v1660 = vadd.f32 %v1485, %v1655
    %v1661 = vld [vmem:[%s2] sm:$0xff]
    %1663 = vset.pattern.permute.xlu0 0
    %1664 = vperm.xlu0 %1663, %v1661
    %v1665 = vpop.permute.xlu0 %1664
    %v1667 = vadd.f32 %v1657, %v1665
    %v1668 = vadd.f32 %v1658, %v1665
    %v1669 = vadd.f32 %v1659, %v1665
    %v1670 = vadd.f32 %v1660, %v1665
    %v1671 = vmax.f32 %v1667, 0.0
    %v1672 = vmax.f32 %v1668, 0.0
    %v1673 = vmax.f32 %v1669, 0.0
    %v1674 = vmax.f32 %v1670, 0.0
    %v1675 = vld [vmem:[%s3] sm:$0xff]
    %v1676 = vld [vmem:[%s3 + $0x8] sm:$0xff]
    %s1677 = scalar_lea.vmem %s3, 16
    %v1678 = vld [vmem:[%s1677] sm:$0xff]
    %v1679 = vld [vmem:[%s1677 + $0x8] sm:$0xff]
    %1684 = vrot.lane.b32.xlu0 %v1671, 127
    %v1685 = vpop.permute.xlu0 %1684
    %1686 = vrot.lane.b32.xlu0 %v1672, 127
    %v1687 = vpop.permute.xlu0 %1686
    %1688 = vrot.lane.b32.xlu0 %v1673, 127
    %v1689 = vpop.permute.xlu0 %1688
    %1690 = vrot.lane.b32.xlu0 %v1674, 127
    %v1691 = vpop.permute.xlu0 %1690
    %v1692 = vsel %vm120, %v1685, %v1687
    %v1693 = vsel %vm120, %v1687, %v1689
    %v1694 = vsel %vm120, %v1689, %v1691
    %v1700 = vsel %vm120, %v1691, %v1685
    %vm1701 = vcmask 64512
    %v1703 = vsel %vm1701, %v1678, 0
    %v1706 = vsel %vm1701, %v1679, 0
    %1708 = vmatprep.subr.mxu0 %v1693
    %1709 = vmatpush1.msra.mxu0 %v1692
    %1710 = vmatprep.subr.mxu0 0.0
    %1711 = vmatpush1.msra.mxu0 0.0
    %1712 = vmatprep.subr.mxu0 0.0
    %1713 = vmatpush1.msra.mxu0 0.0
    %1714 = vmatprep.subr.mxu0 0.0
    %1715 = vmatpush1.msra.mxu0 0.0
    %1716 = vmatprep.subr.mxu0 0.0
    %1717 = vmatpush1.msra.mxu0 0.0
    %1718 = vmatprep.subr.mxu0 0.0
    %1719 = vmatpush1.msra.mxu0 0.0
    %1720 = vmatprep.subr.mxu0 0.0
    %1721 = vmatpush1.msra.mxu0 0.0
    %1722 = vmatprep.subr.mxu0 0.0
    %1723 = vmatpush1.msra.mxu0 0.0
    %1724 = vmatprep.subr.mxu0 0.0
    %1725 = vmatpush1.msra.mxu0 0.0
    %1726 = vmatprep.subr.mxu0 0.0
    %1727 = vmatpush1.msra.mxu0 0.0
    %1728 = vmatprep.subr.mxu0 0.0
    %1729 = vmatpush1.msra.mxu0 0.0
    %1730 = vmatprep.subr.mxu0 0.0
    %1731 = vmatpush1.msra.mxu0 0.0
    %1732 = vmatprep.subr.mxu0 0.0
    %1733 = vmatpush1.msra.mxu0 0.0
    %1734 = vmatprep.subr.mxu0 0.0
    %1735 = vmatpush1.msra.mxu0 0.0
    %1736 = vmatprep.subr.mxu0 0.0
    %1737 = vmatpush1.msra.mxu0 0.0
    %1738 = vmatprep.subr.mxu0 0.0
    %1739 = vmatpush1.msra.mxu0 0.0
    %1740 = vmatprep.subr.mxu0 0.0
    %1741 = vmatpush1.msra.mxu0 0.0
    %1742 = vmatprep.subr.mxu0 0.0
    %1743 = vmatpush1.msra.mxu0 0.0
    %1744 = vmatprep.subr.mxu0 0.0
    %1745 = vmatpush1.msra.mxu0 0.0
    %1746 = vmatprep.subr.mxu0 0.0
    %1747 = vmatpush1.msra.mxu0 0.0
    %1748 = vmatprep.subr.mxu0 0.0
    %1749 = vmatpush1.msra.mxu0 0.0
    %1750 = vmatprep.subr.mxu0 0.0
    %1751 = vmatpush1.msra.mxu0 0.0
    %1752 = vmatprep.subr.mxu0 0.0
    %1753 = vmatpush1.msra.mxu0 0.0
    %1754 = vmatprep.subr.mxu0 0.0
    %1755 = vmatpush1.msra.mxu0 0.0
    %1756 = vmatprep.subr.mxu0 0.0
    %1757 = vmatpush1.msra.mxu0 0.0
    %1758 = vmatprep.subr.mxu0 0.0
    %1759 = vmatpush1.msra.mxu0 0.0
    %1760 = vmatprep.subr.mxu0 0.0
    %1761 = vmatpush1.msra.mxu0 0.0
    %1762 = vmatprep.subr.mxu0 0.0
    %1763 = vmatpush1.msra.mxu0 0.0
    %1764 = vmatprep.subr.mxu0 0.0
    %1765 = vmatpush1.msra.mxu0 0.0
    %1766 = vmatprep.subr.mxu0 0.0
    %1767 = vmatpush1.msra.mxu0 0.0
    %1768 = vmatprep.subr.mxu0 0.0
    %1769 = vmatpush1.msra.mxu0 0.0
    %1770 = vmatprep.subr.mxu0 0.0
    %1771 = vmatpush1.msra.mxu0 0.0
    %1772 = vmatprep.mubr.f32.mxu0 0.0
    %1773 = vmatmul.mubr.f32.gmra.mrb[0].mxu0 %v1703
    %v1774 = vpop.f32.mrb[0].mxu0
    %v1775 = vadd.f32 0.0, %v1774
    %v1776 = vpop.f32.mrb[0].mxu0
    %v1777 = vadd.f32 0.0, %v1776
    %1778 = vmatprep.mubr.f32.mxu0 0.0
    %1779 = vmatmul.mubr.f32.gmra.mrb[0].mxu0 %v1706
    %v1780 = vpop.f32.mrb[0].mxu0
    %v1781 = vadd.f32 0.0, %v1780
    %v1782 = vpop.f32.mrb[0].mxu0
    %v1783 = vadd.f32 0.0, %v1782
    %1784 = vdwg.mxu0
    %1785 = vmatprep.subr.mxu0 %v1700
    %1786 = vmatpush1.msra.mxu0 %v1694
    %1787 = vmatprep.subr.mxu0 0.0
    %1788 = vmatpush1.msra.mxu0 0.0
    %1789 = vmatprep.subr.mxu0 0.0
    %1790 = vmatpush1.msra.mxu0 0.0
    %1791 = vmatprep.subr.mxu0 0.0
    %1792 = vmatpush1.msra.mxu0 0.0
    %1793 = vmatprep.subr.mxu0 0.0
    %1794 = vmatpush1.msra.mxu0 0.0
    %1795 = vmatprep.subr.mxu0 0.0
    %1796 = vmatpush1.msra.mxu0 0.0
    %1797 = vmatprep.subr.mxu0 0.0
    %1798 = vmatpush1.msra.mxu0 0.0
    %1799 = vmatprep.subr.mxu0 0.0
    %1800 = vmatpush1.msra.mxu0 0.0
    %1801 = vmatprep.subr.mxu0 0.0
    %1802 = vmatpush1.msra.mxu0 0.0
    %1803 = vmatprep.subr.mxu0 0.0
    %1804 = vmatpush1.msra.mxu0 0.0
    %1805 = vmatprep.subr.mxu0 0.0
    %1806 = vmatpush1.msra.mxu0 0.0
    %1807 = vmatprep.subr.mxu0 0.0
    %1808 = vmatpush1.msra.mxu0 0.0
    %1809 = vmatprep.subr.mxu0 0.0
    %1810 = vmatpush1.msra.mxu0 0.0
    %1811 = vmatprep.subr.mxu0 0.0
    %1812 = vmatpush1.msra.mxu0 0.0
    %1813 = vmatprep.subr.mxu0 0.0
    %1814 = vmatpush1.msra.mxu0 0.0
    %1815 = vmatprep.subr.mxu0 0.0
    %1816 = vmatpush1.msra.mxu0 0.0
    %1817 = vmatprep.subr.mxu0 0.0
    %1818 = vmatpush1.msra.mxu0 0.0
    %1819 = vmatprep.subr.mxu0 0.0
    %1820 = vmatpush1.msra.mxu0 0.0
    %1821 = vmatprep.subr.mxu0 0.0
    %1822 = vmatpush1.msra.mxu0 0.0
    %1823 = vmatprep.subr.mxu0 0.0
    %1824 = vmatpush1.msra.mxu0 0.0
    %1825 = vmatprep.subr.mxu0 0.0
    %1826 = vmatpush1.msra.mxu0 0.0
    %1827 = vmatprep.subr.mxu0 0.0
    %1828 = vmatpush1.msra.mxu0 0.0
    %1829 = vmatprep.subr.mxu0 0.0
    %1830 = vmatpush1.msra.mxu0 0.0
    %1831 = vmatprep.subr.mxu0 0.0
    %1832 = vmatpush1.msra.mxu0 0.0
    %1833 = vmatprep.subr.mxu0 0.0
    %1834 = vmatpush1.msra.mxu0 0.0
    %1835 = vmatprep.subr.mxu0 0.0
    %1836 = vmatpush1.msra.mxu0 0.0
    %1837 = vmatprep.subr.mxu0 0.0
    %1838 = vmatpush1.msra.mxu0 0.0
    %1839 = vmatprep.subr.mxu0 0.0
    %1840 = vmatpush1.msra.mxu0 0.0
    %1841 = vmatprep.subr.mxu0 0.0
    %1842 = vmatpush1.msra.mxu0 0.0
    %1843 = vmatprep.subr.mxu0 0.0
    %1844 = vmatpush1.msra.mxu0 0.0
    %1845 = vmatprep.subr.mxu0 0.0
    %1846 = vmatpush1.msra.mxu0 0.0
    %1847 = vmatprep.subr.mxu0 0.0
    %1848 = vmatpush1.msra.mxu0 0.0
    %1849 = vmatprep.mubr.f32.mxu0 0.0
    %1850 = vmatmul.mubr.f32.gmra.mrb[0].mxu0 %v1703
    %v1851 = vpop.f32.mrb[0].mxu0
    %v1852 = vadd.f32 0.0, %v1851
    %v1853 = vpop.f32.mrb[0].mxu0
    %v1854 = vadd.f32 0.0, %v1853
    %1855 = vmatprep.mubr.f32.mxu0 0.0
    %1856 = vmatmul.mubr.f32.gmra.mrb[0].mxu0 %v1706
    %v1857 = vpop.f32.mrb[0].mxu0
    %v1858 = vadd.f32 0.0, %v1857
    %v1859 = vpop.f32.mrb[0].mxu0
    %v1860 = vadd.f32 0.0, %v1859
    %1861 = vdwg.mxu0
    %v1863 = vsel %vm1701, %v1675, 0
    %v1866 = vsel %vm1701, %v1676, 0
    %1868 = vmatprep.subr.mxu0 %v1672
    %1869 = vmatpush1.msra.mxu0 %v1671
    %1870 = vmatprep.subr.mxu0 0.0
    %1871 = vmatpush1.msra.mxu0 0.0
    %1872 = vmatprep.subr.mxu0 0.0
    %1873 = vmatpush1.msra.mxu0 0.0
    %1874 = vmatprep.subr.mxu0 0.0
    %1875 = vmatpush1.msra.mxu0 0.0
    %1876 = vmatprep.subr.mxu0 0.0
    %1877 = vmatpush1.msra.mxu0 0.0
    %1878 = vmatprep.subr.mxu0 0.0
    %1879 = vmatpush1.msra.mxu0 0.0
    %1880 = vmatprep.subr.mxu0 0.0
    %1881 = vmatpush1.msra.mxu0 0.0
    %1882 = vmatprep.subr.mxu0 0.0
    %1883 = vmatpush1.msra.mxu0 0.0
    %1884 = vmatprep.subr.mxu0 0.0
    %1885 = vmatpush1.msra.mxu0 0.0
    %1886 = vmatprep.subr.mxu0 0.0
    %1887 = vmatpush1.msra.mxu0 0.0
    %1888 = vmatprep.subr.mxu0 0.0
    %1889 = vmatpush1.msra.mxu0 0.0
    %1890 = vmatprep.subr.mxu0 0.0
    %1891 = vmatpush1.msra.mxu0 0.0
    %1892 = vmatprep.subr.mxu0 0.0
    %1893 = vmatpush1.msra.mxu0 0.0
    %1894 = vmatprep.subr.mxu0 0.0
    %1895 = vmatpush1.msra.mxu0 0.0
    %1896 = vmatprep.subr.mxu0 0.0
    %1897 = vmatpush1.msra.mxu0 0.0
    %1898 = vmatprep.subr.mxu0 0.0
    %1899 = vmatpush1.msra.mxu0 0.0
    %1900 = vmatprep.subr.mxu0 0.0
    %1901 = vmatpush1.msra.mxu0 0.0
    %1902 = vmatprep.subr.mxu0 0.0
    %1903 = vmatpush1.msra.mxu0 0.0
    %1904 = vmatprep.subr.mxu0 0.0
    %1905 = vmatpush1.msra.mxu0 0.0
    %1906 = vmatprep.subr.mxu0 0.0
    %1907 = vmatpush1.msra.mxu0 0.0
    %1908 = vmatprep.subr.mxu0 0.0
    %1909 = vmatpush1.msra.mxu0 0.0
    %1910 = vmatprep.subr.mxu0 0.0
    %1911 = vmatpush1.msra.mxu0 0.0
    %1912 = vmatprep.subr.mxu0 0.0
    %1913 = vmatpush1.msra.mxu0 0.0
    %1914 = vmatprep.subr.mxu0 0.0
    %1915 = vmatpush1.msra.mxu0 0.0
    %1916 = vmatprep.subr.mxu0 0.0
    %1917 = vmatpush1.msra.mxu0 0.0
    %1918 = vmatprep.subr.mxu0 0.0
    %1919 = vmatpush1.msra.mxu0 0.0
    %1920 = vmatprep.subr.mxu0 0.0
    %1921 = vmatpush1.msra.mxu0 0.0
    %1922 = vmatprep.subr.mxu0 0.0
    %1923 = vmatpush1.msra.mxu0 0.0
    %1924 = vmatprep.subr.mxu0 0.0
    %1925 = vmatpush1.msra.mxu0 0.0
    %1926 = vmatprep.subr.mxu0 0.0
    %1927 = vmatpush1.msra.mxu0 0.0
    %1928 = vmatprep.subr.mxu0 0.0
    %1929 = vmatpush1.msra.mxu0 0.0
    %1930 = vmatprep.subr.mxu0 0.0
    %1931 = vmatpush1.msra.mxu0 0.0
    %1932 = vmatprep.mubr.f32.mxu0 0.0
    %1933 = vmatmul.mubr.f32.gmra.mrb[0].mxu0 %v1863
    %v1934 = vpop.f32.mrb[0].mxu0
    %v1935 = vadd.f32 %v1775, %v1934
    %v1936 = vpop.f32.mrb[0].mxu0
    %v1937 = vadd.f32 %v1777, %v1936
    %1938 = vmatprep.mubr.f32.mxu0 0.0
    %1939 = vmatmul.mubr.f32.gmra.mrb[0].mxu0 %v1866
    %v1940 = vpop.f32.mrb[0].mxu0
    %v1941 = vadd.f32 %v1781, %v1940
    %v1942 = vpop.f32.mrb[0].mxu0
    %v1943 = vadd.f32 %v1783, %v1942
    %1944 = vdwg.mxu0
    %1945 = vmatprep.subr.mxu0 %v1674
    %1946 = vmatpush1.msra.mxu0 %v1673
    %1947 = vmatprep.subr.mxu0 0.0
    %1948 = vmatpush1.msra.mxu0 0.0
    %1949 = vmatprep.subr.mxu0 0.0
    %1950 = vmatpush1.msra.mxu0 0.0
    %1951 = vmatprep.subr.mxu0 0.0
    %1952 = vmatpush1.msra.mxu0 0.0
    %1953 = vmatprep.subr.mxu0 0.0
    %1954 = vmatpush1.msra.mxu0 0.0
    %1955 = vmatprep.subr.mxu0 0.0
    %1956 = vmatpush1.msra.mxu0 0.0
    %1957 = vmatprep.subr.mxu0 0.0
    %1958 = vmatpush1.msra.mxu0 0.0
    %1959 = vmatprep.subr.mxu0 0.0
    %1960 = vmatpush1.msra.mxu0 0.0
    %1961 = vmatprep.subr.mxu0 0.0
    %1962 = vmatpush1.msra.mxu0 0.0
    %1963 = vmatprep.subr.mxu0 0.0
    %1964 = vmatpush1.msra.mxu0 0.0
    %1965 = vmatprep.subr.mxu0 0.0
    %1966 = vmatpush1.msra.mxu0 0.0
    %1967 = vmatprep.subr.mxu0 0.0
    %1968 = vmatpush1.msra.mxu0 0.0
    %1969 = vmatprep.subr.mxu0 0.0
    %1970 = vmatpush1.msra.mxu0 0.0
    %1971 = vmatprep.subr.mxu0 0.0
    %1972 = vmatpush1.msra.mxu0 0.0
    %1973 = vmatprep.subr.mxu0 0.0
    %1974 = vmatpush1.msra.mxu0 0.0
    %1975 = vmatprep.subr.mxu0 0.0
    %1976 = vmatpush1.msra.mxu0 0.0
    %1977 = vmatprep.subr.mxu0 0.0
    %1978 = vmatpush1.msra.mxu0 0.0
    %1979 = vmatprep.subr.mxu0 0.0
    %1980 = vmatpush1.msra.mxu0 0.0
    %1981 = vmatprep.subr.mxu0 0.0
    %1982 = vmatpush1.msra.mxu0 0.0
    %1983 = vmatprep.subr.mxu0 0.0
    %1984 = vmatpush1.msra.mxu0 0.0
    %1985 = vmatprep.subr.mxu0 0.0
    %1986 = vmatpush1.msra.mxu0 0.0
    %1987 = vmatprep.subr.mxu0 0.0
    %1988 = vmatpush1.msra.mxu0 0.0
    %1989 = vmatprep.subr.mxu0 0.0
    %1990 = vmatpush1.msra.mxu0 0.0
    %1991 = vmatprep.subr.mxu0 0.0
    %1992 = vmatpush1.msra.mxu0 0.0
    %1993 = vmatprep.subr.mxu0 0.0
    %1994 = vmatpush1.msra.mxu0 0.0
    %1995 = vmatprep.subr.mxu0 0.0
    %1996 = vmatpush1.msra.mxu0 0.0
    %1997 = vmatprep.subr.mxu0 0.0
    %1998 = vmatpush1.msra.mxu0 0.0
    %1999 = vmatprep.subr.mxu0 0.0
    %2000 = vmatpush1.msra.mxu0 0.0
    %2001 = vmatprep.subr.mxu0 0.0
    %2002 = vmatpush1.msra.mxu0 0.0
    %2003 = vmatprep.subr.mxu0 0.0
    %2004 = vmatpush1.msra.mxu0 0.0
    %2005 = vmatprep.subr.mxu0 0.0
    %2006 = vmatpush1.msra.mxu0 0.0
    %2007 = vmatprep.subr.mxu0 0.0
    %2008 = vmatpush1.msra.mxu0 0.0
    %2009 = vmatprep.mubr.f32.mxu0 0.0
    %2010 = vmatmul.mubr.f32.gmra.mrb[0].mxu0 %v1863
    %v2011 = vpop.f32.mrb[0].mxu0
    %v2012 = vadd.f32 %v1852, %v2011
    %v2013 = vpop.f32.mrb[0].mxu0
    %v2014 = vadd.f32 %v1854, %v2013
    %2015 = vmatprep.mubr.f32.mxu0 0.0
    %2016 = vmatmul.mubr.f32.gmra.mrb[0].mxu0 %v1866
    %v2017 = vpop.f32.mrb[0].mxu0
    %v2018 = vadd.f32 %v1858, %v2017
    %v2019 = vpop.f32.mrb[0].mxu0
    %v2020 = vadd.f32 %v1860, %v2019
    %2021 = vdwg.mxu0
    %s2022 = scalar_lea.vmem %s3, 32
    %v2023 = vld [vmem:[%s2022] sm:$0xff]
    %v2024 = vld [vmem:[%s2022 + $0x8] sm:$0xff]
    %2025 = vrot.lane.b32.xlu0 %v1671, 126
    %v2026 = vpop.permute.xlu0 %2025
    %2027 = vrot.lane.b32.xlu0 %v1672, 126
    %v2028 = vpop.permute.xlu0 %2027
    %2029 = vrot.lane.b32.xlu0 %v1673, 126
    %v2030 = vpop.permute.xlu0 %2029
    %2031 = vrot.lane.b32.xlu0 %v1674, 126
    %v2032 = vpop.permute.xlu0 %2031
    %v2033 = vsel %vm446, %v2026, %v2028
    %v2034 = vsel %vm446, %v2028, %v2030
    %v2035 = vsel %vm446, %v2030, %v2032
    %v2041 = vsel %vm446, %v2032, %v2026
    %v2043 = vsel %vm1701, %v2023, 0
    %v2046 = vsel %vm1701, %v2024, 0
    %2048 = vmatprep.subr.mxu0 %v2034
    %2049 = vmatpush1.msra.mxu0 %v2033
    %2050 = vmatprep.subr.mxu0 0.0
    %2051 = vmatpush1.msra.mxu0 0.0
    %2052 = vmatprep.subr.mxu0 0.0
    %2053 = vmatpush1.msra.mxu0 0.0
    %2054 = vmatprep.subr.mxu0 0.0
    %2055 = vmatpush1.msra.mxu0 0.0
    %2056 = vmatprep.subr.mxu0 0.0
    %2057 = vmatpush1.msra.mxu0 0.0
    %2058 = vmatprep.subr.mxu0 0.0
    %2059 = vmatpush1.msra.mxu0 0.0
    %2060 = vmatprep.subr.mxu0 0.0
    %2061 = vmatpush1.msra.mxu0 0.0
    %2062 = vmatprep.subr.mxu0 0.0
    %2063 = vmatpush1.msra.mxu0 0.0
    %2064 = vmatprep.subr.mxu0 0.0
    %2065 = vmatpush1.msra.mxu0 0.0
    %2066 = vmatprep.subr.mxu0 0.0
    %2067 = vmatpush1.msra.mxu0 0.0
    %2068 = vmatprep.subr.mxu0 0.0
    %2069 = vmatpush1.msra.mxu0 0.0
    %2070 = vmatprep.subr.mxu0 0.0
    %2071 = vmatpush1.msra.mxu0 0.0
    %2072 = vmatprep.subr.mxu0 0.0
    %2073 = vmatpush1.msra.mxu0 0.0
    %2074 = vmatprep.subr.mxu0 0.0
    %2075 = vmatpush1.msra.mxu0 0.0
    %2076 = vmatprep.subr.mxu0 0.0
    %2077 = vmatpush1.msra.mxu0 0.0
    %2078 = vmatprep.subr.mxu0 0.0
    %2079 = vmatpush1.msra.mxu0 0.0
    %2080 = vmatprep.subr.mxu0 0.0
    %2081 = vmatpush1.msra.mxu0 0.0
    %2082 = vmatprep.subr.mxu0 0.0
    %2083 = vmatpush1.msra.mxu0 0.0
    %2084 = vmatprep.subr.mxu0 0.0
    %2085 = vmatpush1.msra.mxu0 0.0
    %2086 = vmatprep.subr.mxu0 0.0
    %2087 = vmatpush1.msra.mxu0 0.0
    %2088 = vmatprep.subr.mxu0 0.0
    %2089 = vmatpush1.msra.mxu0 0.0
    %2090 = vmatprep.subr.mxu0 0.0
    %2091 = vmatpush1.msra.mxu0 0.0
    %2092 = vmatprep.subr.mxu0 0.0
    %2093 = vmatpush1.msra.mxu0 0.0
    %2094 = vmatprep.subr.mxu0 0.0
    %2095 = vmatpush1.msra.mxu0 0.0
    %2096 = vmatprep.subr.mxu0 0.0
    %2097 = vmatpush1.msra.mxu0 0.0
    %2098 = vmatprep.subr.mxu0 0.0
    %2099 = vmatpush1.msra.mxu0 0.0
    %2100 = vmatprep.subr.mxu0 0.0
    %2101 = vmatpush1.msra.mxu0 0.0
    %2102 = vmatprep.subr.mxu0 0.0
    %2103 = vmatpush1.msra.mxu0 0.0
    %2104 = vmatprep.subr.mxu0 0.0
    %2105 = vmatpush1.msra.mxu0 0.0
    %2106 = vmatprep.subr.mxu0 0.0
    %2107 = vmatpush1.msra.mxu0 0.0
    %2108 = vmatprep.subr.mxu0 0.0
    %2109 = vmatpush1.msra.mxu0 0.0
    %2110 = vmatprep.subr.mxu0 0.0
    %2111 = vmatpush1.msra.mxu0 0.0
    %2112 = vmatprep.mubr.f32.mxu0 0.0
    %2113 = vmatmul.mubr.f32.gmra.mrb[0].mxu0 %v2043
    %v2114 = vpop.f32.mrb[0].mxu0
    %v2115 = vadd.f32 0.0, %v2114
    %v2116 = vpop.f32.mrb[0].mxu0
    %v2117 = vadd.f32 0.0, %v2116
    %2118 = vmatprep.mubr.f32.mxu0 0.0
    %2119 = vmatmul.mubr.f32.gmra.mrb[0].mxu0 %v2046
    %v2120 = vpop.f32.mrb[0].mxu0
    %v2121 = vadd.f32 0.0, %v2120
    %v2122 = vpop.f32.mrb[0].mxu0
    %v2123 = vadd.f32 0.0, %v2122
    %2124 = vdwg.mxu0
    %2125 = vmatprep.subr.mxu0 %v2041
    %2126 = vmatpush1.msra.mxu0 %v2035
    %2127 = vmatprep.subr.mxu0 0.0
    %2128 = vmatpush1.msra.mxu0 0.0
    %2129 = vmatprep.subr.mxu0 0.0
    %2130 = vmatpush1.msra.mxu0 0.0
    %2131 = vmatprep.subr.mxu0 0.0
    %2132 = vmatpush1.msra.mxu0 0.0
    %2133 = vmatprep.subr.mxu0 0.0
    %2134 = vmatpush1.msra.mxu0 0.0
    %2135 = vmatprep.subr.mxu0 0.0
    %2136 = vmatpush1.msra.mxu0 0.0
    %2137 = vmatprep.subr.mxu0 0.0
    %2138 = vmatpush1.msra.mxu0 0.0
    %2139 = vmatprep.subr.mxu0 0.0
    %2140 = vmatpush1.msra.mxu0 0.0
    %2141 = vmatprep.subr.mxu0 0.0
    %2142 = vmatpush1.msra.mxu0 0.0
    %2143 = vmatprep.subr.mxu0 0.0
    %2144 = vmatpush1.msra.mxu0 0.0
    %2145 = vmatprep.subr.mxu0 0.0
    %2146 = vmatpush1.msra.mxu0 0.0
    %2147 = vmatprep.subr.mxu0 0.0
    %2148 = vmatpush1.msra.mxu0 0.0
    %2149 = vmatprep.subr.mxu0 0.0
    %2150 = vmatpush1.msra.mxu0 0.0
    %2151 = vmatprep.subr.mxu0 0.0
    %2152 = vmatpush1.msra.mxu0 0.0
    %2153 = vmatprep.subr.mxu0 0.0
    %2154 = vmatpush1.msra.mxu0 0.0
    %2155 = vmatprep.subr.mxu0 0.0
    %2156 = vmatpush1.msra.mxu0 0.0
    %2157 = vmatprep.subr.mxu0 0.0
    %2158 = vmatpush1.msra.mxu0 0.0
    %2159 = vmatprep.subr.mxu0 0.0
    %2160 = vmatpush1.msra.mxu0 0.0
    %2161 = vmatprep.subr.mxu0 0.0
    %2162 = vmatpush1.msra.mxu0 0.0
    %2163 = vmatprep.subr.mxu0 0.0
    %2164 = vmatpush1.msra.mxu0 0.0
    %2165 = vmatprep.subr.mxu0 0.0
    %2166 = vmatpush1.msra.mxu0 0.0
    %2167 = vmatprep.subr.mxu0 0.0
    %2168 = vmatpush1.msra.mxu0 0.0
    %2169 = vmatprep.subr.mxu0 0.0
    %2170 = vmatpush1.msra.mxu0 0.0
    %2171 = vmatprep.subr.mxu0 0.0
    %2172 = vmatpush1.msra.mxu0 0.0
    %2173 = vmatprep.subr.mxu0 0.0
    %2174 = vmatpush1.msra.mxu0 0.0
    %2175 = vmatprep.subr.mxu0 0.0
    %2176 = vmatpush1.msra.mxu0 0.0
    %2177 = vmatprep.subr.mxu0 0.0
    %2178 = vmatpush1.msra.mxu0 0.0
    %2179 = vmatprep.subr.mxu0 0.0
    %2180 = vmatpush1.msra.mxu0 0.0
    %2181 = vmatprep.subr.mxu0 0.0
    %2182 = vmatpush1.msra.mxu0 0.0
    %2183 = vmatprep.subr.mxu0 0.0
    %2184 = vmatpush1.msra.mxu0 0.0
    %2185 = vmatprep.subr.mxu0 0.0
    %2186 = vmatpush1.msra.mxu0 0.0
    %2187 = vmatprep.subr.mxu0 0.0
    %2188 = vmatpush1.msra.mxu0 0.0
    %2189 = vmatprep.mubr.f32.mxu0 0.0
    %2190 = vmatmul.mubr.f32.gmra.mrb[0].mxu0 %v2043
    %v2191 = vpop.f32.mrb[0].mxu0
    %v2192 = vadd.f32 0.0, %v2191
    %v2193 = vpop.f32.mrb[0].mxu0
    %v2194 = vadd.f32 0.0, %v2193
    %2195 = vmatprep.mubr.f32.mxu0 0.0
    %2196 = vmatmul.mubr.f32.gmra.mrb[0].mxu0 %v2046
    %v2197 = vpop.f32.mrb[0].mxu0
    %v2198 = vadd.f32 0.0, %v2197
    %v2199 = vpop.f32.mrb[0].mxu0
    %v2200 = vadd.f32 0.0, %v2199
    %2201 = vdwg.mxu0
    %v2202 = vadd.f32 %v1935, %v2115
    %v2203 = vadd.f32 %v1937, %v2117
    %v2204 = vadd.f32 %v2012, %v2192
    %v2205 = vadd.f32 %v2014, %v2194
    %v2206 = vadd.f32 %v1941, %v2121
    %v2207 = vadd.f32 %v1943, %v2123
    %v2208 = vadd.f32 %v2018, %v2198
    %v2209 = vadd.f32 %v2020, %v2200
    %s2210 = scalar_lea.vmem %s3, 48
    %v2211 = vld [vmem:[%s2210] sm:$0xff]
    %v2212 = vld [vmem:[%s2210 + $0x8] sm:$0xff]
    %2213 = vrot.lane.b32.xlu0 %v1671, 112
    %v2214 = vpop.permute.xlu0 %2213
    %2215 = vrot.lane.b32.xlu0 %v1672, 112
    %v2216 = vpop.permute.xlu0 %2215
    %2217 = vrot.lane.b32.xlu0 %v1673, 112
    %v2218 = vpop.permute.xlu0 %2217
    %2219 = vrot.lane.b32.xlu0 %v1674, 112
    %v2220 = vpop.permute.xlu0 %2219
    %v2221 = vsel %vm621, %v2214, %v2216
    %v2222 = vsel %vm621, %v2216, %v2218
    %v2223 = vsel %vm621, %v2218, %v2220
    %v2229 = vsel %vm621, %v2220, %v2214
    %v2231 = vsel %vm1701, %v2211, 0
    %v2234 = vsel %vm1701, %v2212, 0
    %2236 = vmatprep.subr.mxu0 %v2222
    %2237 = vmatpush1.msra.mxu0 %v2221
    %2238 = vmatprep.subr.mxu0 0.0
    %2239 = vmatpush1.msra.mxu0 0.0
    %2240 = vmatprep.subr.mxu0 0.0
    %2241 = vmatpush1.msra.mxu0 0.0
    %2242 = vmatprep.subr.mxu0 0.0
    %2243 = vmatpush1.msra.mxu0 0.0
    %2244 = vmatprep.subr.mxu0 0.0
    %2245 = vmatpush1.msra.mxu0 0.0
    %2246 = vmatprep.subr.mxu0 0.0
    %2247 = vmatpush1.msra.mxu0 0.0
    %2248 = vmatprep.subr.mxu0 0.0
    %2249 = vmatpush1.msra.mxu0 0.0
    %2250 = vmatprep.subr.mxu0 0.0
    %2251 = vmatpush1.msra.mxu0 0.0
    %2252 = vmatprep.subr.mxu0 0.0
    %2253 = vmatpush1.msra.mxu0 0.0
    %2254 = vmatprep.subr.mxu0 0.0
    %2255 = vmatpush1.msra.mxu0 0.0
    %2256 = vmatprep.subr.mxu0 0.0
    %2257 = vmatpush1.msra.mxu0 0.0
    %2258 = vmatprep.subr.mxu0 0.0
    %2259 = vmatpush1.msra.mxu0 0.0
    %2260 = vmatprep.subr.mxu0 0.0
    %2261 = vmatpush1.msra.mxu0 0.0
    %2262 = vmatprep.subr.mxu0 0.0
    %2263 = vmatpush1.msra.mxu0 0.0
    %2264 = vmatprep.subr.mxu0 0.0
    %2265 = vmatpush1.msra.mxu0 0.0
    %2266 = vmatprep.subr.mxu0 0.0
    %2267 = vmatpush1.msra.mxu0 0.0
    %2268 = vmatprep.subr.mxu0 0.0
    %2269 = vmatpush1.msra.mxu0 0.0
    %2270 = vmatprep.subr.mxu0 0.0
    %2271 = vmatpush1.msra.mxu0 0.0
    %2272 = vmatprep.subr.mxu0 0.0
    %2273 = vmatpush1.msra.mxu0 0.0
    %2274 = vmatprep.subr.mxu0 0.0
    %2275 = vmatpush1.msra.mxu0 0.0
    %2276 = vmatprep.subr.mxu0 0.0
    %2277 = vmatpush1.msra.mxu0 0.0
    %2278 = vmatprep.subr.mxu0 0.0
    %2279 = vmatpush1.msra.mxu0 0.0
    %2280 = vmatprep.subr.mxu0 0.0
    %2281 = vmatpush1.msra.mxu0 0.0
    %2282 = vmatprep.subr.mxu0 0.0
    %2283 = vmatpush1.msra.mxu0 0.0
    %2284 = vmatprep.subr.mxu0 0.0
    %2285 = vmatpush1.msra.mxu0 0.0
    %2286 = vmatprep.subr.mxu0 0.0
    %2287 = vmatpush1.msra.mxu0 0.0
    %2288 = vmatprep.subr.mxu0 0.0
    %2289 = vmatpush1.msra.mxu0 0.0
    %2290 = vmatprep.subr.mxu0 0.0
    %2291 = vmatpush1.msra.mxu0 0.0
    %2292 = vmatprep.subr.mxu0 0.0
    %2293 = vmatpush1.msra.mxu0 0.0
    %2294 = vmatprep.subr.mxu0 0.0
    %2295 = vmatpush1.msra.mxu0 0.0
    %2296 = vmatprep.subr.mxu0 0.0
    %2297 = vmatpush1.msra.mxu0 0.0
    %2298 = vmatprep.subr.mxu0 0.0
    %2299 = vmatpush1.msra.mxu0 0.0
    %2300 = vmatprep.mubr.f32.mxu0 0.0
    %2301 = vmatmul.mubr.f32.gmra.mrb[0].mxu0 %v2231
    %v2302 = vpop.f32.mrb[0].mxu0
    %v2303 = vadd.f32 0.0, %v2302
    %v2304 = vpop.f32.mrb[0].mxu0
    %v2305 = vadd.f32 0.0, %v2304
    %2306 = vmatprep.mubr.f32.mxu0 0.0
    %2307 = vmatmul.mubr.f32.gmra.mrb[0].mxu0 %v2234
    %v2308 = vpop.f32.mrb[0].mxu0
    %v2309 = vadd.f32 0.0, %v2308
    %v2310 = vpop.f32.mrb[0].mxu0
    %v2311 = vadd.f32 0.0, %v2310
    %2312 = vdwg.mxu0
    %2313 = vmatprep.subr.mxu0 %v2229
    %2314 = vmatpush1.msra.mxu0 %v2223
    %2315 = vmatprep.subr.mxu0 0.0
    %2316 = vmatpush1.msra.mxu0 0.0
    %2317 = vmatprep.subr.mxu0 0.0
    %2318 = vmatpush1.msra.mxu0 0.0
    %2319 = vmatprep.subr.mxu0 0.0
    %2320 = vmatpush1.msra.mxu0 0.0
    %2321 = vmatprep.subr.mxu0 0.0
    %2322 = vmatpush1.msra.mxu0 0.0
    %2323 = vmatprep.subr.mxu0 0.0
    %2324 = vmatpush1.msra.mxu0 0.0
    %2325 = vmatprep.subr.mxu0 0.0
    %2326 = vmatpush1.msra.mxu0 0.0
    %2327 = vmatprep.subr.mxu0 0.0
    %2328 = vmatpush1.msra.mxu0 0.0
    %2329 = vmatprep.subr.mxu0 0.0
    %2330 = vmatpush1.msra.mxu0 0.0
    %2331 = vmatprep.subr.mxu0 0.0
    %2332 = vmatpush1.msra.mxu0 0.0
    %2333 = vmatprep.subr.mxu0 0.0
    %2334 = vmatpush1.msra.mxu0 0.0
    %2335 = vmatprep.subr.mxu0 0.0
    %2336 = vmatpush1.msra.mxu0 0.0
    %2337 = vmatprep.subr.mxu0 0.0
    %2338 = vmatpush1.msra.mxu0 0.0
    %2339 = vmatprep.subr.mxu0 0.0
    %2340 = vmatpush1.msra.mxu0 0.0
    %2341 = vmatprep.subr.mxu0 0.0
    %2342 = vmatpush1.msra.mxu0 0.0
    %2343 = vmatprep.subr.mxu0 0.0
    %2344 = vmatpush1.msra.mxu0 0.0
    %2345 = vmatprep.subr.mxu0 0.0
    %2346 = vmatpush1.msra.mxu0 0.0
    %2347 = vmatprep.subr.mxu0 0.0
    %2348 = vmatpush1.msra.mxu0 0.0
    %2349 = vmatprep.subr.mxu0 0.0
    %2350 = vmatpush1.msra.mxu0 0.0
    %2351 = vmatprep.subr.mxu0 0.0
    %2352 = vmatpush1.msra.mxu0 0.0
    %2353 = vmatprep.subr.mxu0 0.0
    %2354 = vmatpush1.msra.mxu0 0.0
    %2355 = vmatprep.subr.mxu0 0.0
    %2356 = vmatpush1.msra.mxu0 0.0
    %2357 = vmatprep.subr.mxu0 0.0
    %2358 = vmatpush1.msra.mxu0 0.0
    %2359 = vmatprep.subr.mxu0 0.0
    %2360 = vmatpush1.msra.mxu0 0.0
    %2361 = vmatprep.subr.mxu0 0.0
    %2362 = vmatpush1.msra.mxu0 0.0
    %2363 = vmatprep.subr.mxu0 0.0
    %2364 = vmatpush1.msra.mxu0 0.0
    %2365 = vmatprep.subr.mxu0 0.0
    %2366 = vmatpush1.msra.mxu0 0.0
    %2367 = vmatprep.subr.mxu0 0.0
    %2368 = vmatpush1.msra.mxu0 0.0
    %2369 = vmatprep.subr.mxu0 0.0
    %2370 = vmatpush1.msra.mxu0 0.0
    %2371 = vmatprep.subr.mxu0 0.0
    %2372 = vmatpush1.msra.mxu0 0.0
    %2373 = vmatprep.subr.mxu0 0.0
    %2374 = vmatpush1.msra.mxu0 0.0
    %2375 = vmatprep.subr.mxu0 0.0
    %2376 = vmatpush1.msra.mxu0 0.0
    %2377 = vmatprep.mubr.f32.mxu0 0.0
    %2378 = vmatmul.mubr.f32.gmra.mrb[0].mxu0 %v2231
    %v2379 = vpop.f32.mrb[0].mxu0
    %v2380 = vadd.f32 0.0, %v2379
    %v2381 = vpop.f32.mrb[0].mxu0
    %v2382 = vadd.f32 0.0, %v2381
    %2383 = vmatprep.mubr.f32.mxu0 0.0
    %2384 = vmatmul.mubr.f32.gmra.mrb[0].mxu0 %v2234
    %v2385 = vpop.f32.mrb[0].mxu0
    %v2386 = vadd.f32 0.0, %v2385
    %v2387 = vpop.f32.mrb[0].mxu0
    %v2388 = vadd.f32 0.0, %v2387
    %2389 = vdwg.mxu0
    %v2390 = vadd.f32 %v2202, %v2303
    %v2391 = vadd.f32 %v2203, %v2305
    %v2392 = vadd.f32 %v2204, %v2380
    %v2393 = vadd.f32 %v2205, %v2382
    %v2394 = vadd.f32 %v2206, %v2309
    %v2395 = vadd.f32 %v2207, %v2311
    %v2396 = vadd.f32 %v2208, %v2386
    %v2397 = vadd.f32 %v2209, %v2388
    %s2398 = scalar_lea.vmem %s3, 64
    %v2399 = vld [vmem:[%s2398] sm:$0xff]
    %v2400 = vld [vmem:[%s2398 + $0x8] sm:$0xff]
    %2401 = vrot.lane.b32.xlu0 %v1671, 111
    %v2402 = vpop.permute.xlu0 %2401
    %2403 = vrot.lane.b32.xlu0 %v1672, 111
    %v2404 = vpop.permute.xlu0 %2403
    %2405 = vrot.lane.b32.xlu0 %v1673, 111
    %v2406 = vpop.permute.xlu0 %2405
    %2407 = vrot.lane.b32.xlu0 %v1674, 111
    %v2408 = vpop.permute.xlu0 %2407
    %v2409 = vsel %vm796, %v2402, %v2404
    %v2410 = vsel %vm796, %v2404, %v2406
    %v2411 = vsel %vm796, %v2406, %v2408
    %v2417 = vsel %vm796, %v2408, %v2402
    %v2419 = vsel %vm1701, %v2399, 0
    %v2422 = vsel %vm1701, %v2400, 0
    %2424 = vmatprep.subr.mxu0 %v2410
    %2425 = vmatpush1.msra.mxu0 %v2409
    %2426 = vmatprep.subr.mxu0 0.0
    %2427 = vmatpush1.msra.mxu0 0.0
    %2428 = vmatprep.subr.mxu0 0.0
    %2429 = vmatpush1.msra.mxu0 0.0
    %2430 = vmatprep.subr.mxu0 0.0
    %2431 = vmatpush1.msra.mxu0 0.0
    %2432 = vmatprep.subr.mxu0 0.0
    %2433 = vmatpush1.msra.mxu0 0.0
    %2434 = vmatprep.subr.mxu0 0.0
    %2435 = vmatpush1.msra.mxu0 0.0
    %2436 = vmatprep.subr.mxu0 0.0
    %2437 = vmatpush1.msra.mxu0 0.0
    %2438 = vmatprep.subr.mxu0 0.0
    %2439 = vmatpush1.msra.mxu0 0.0
    %2440 = vmatprep.subr.mxu0 0.0
    %2441 = vmatpush1.msra.mxu0 0.0
    %2442 = vmatprep.subr.mxu0 0.0
    %2443 = vmatpush1.msra.mxu0 0.0
    %2444 = vmatprep.subr.mxu0 0.0
    %2445 = vmatpush1.msra.mxu0 0.0
    %2446 = vmatprep.subr.mxu0 0.0
    %2447 = vmatpush1.msra.mxu0 0.0
    %2448 = vmatprep.subr.mxu0 0.0
    %2449 = vmatpush1.msra.mxu0 0.0
    %2450 = vmatprep.subr.mxu0 0.0
    %2451 = vmatpush1.msra.mxu0 0.0
    %2452 = vmatprep.subr.mxu0 0.0
    %2453 = vmatpush1.msra.mxu0 0.0
    %2454 = vmatprep.subr.mxu0 0.0
    %2455 = vmatpush1.msra.mxu0 0.0
    %2456 = vmatprep.subr.mxu0 0.0
    %2457 = vmatpush1.msra.mxu0 0.0
    %2458 = vmatprep.subr.mxu0 0.0
    %2459 = vmatpush1.msra.mxu0 0.0
    %2460 = vmatprep.subr.mxu0 0.0
    %2461 = vmatpush1.msra.mxu0 0.0
    %2462 = vmatprep.subr.mxu0 0.0
    %2463 = vmatpush1.msra.mxu0 0.0
    %2464 = vmatprep.subr.mxu0 0.0
    %2465 = vmatpush1.msra.mxu0 0.0
    %2466 = vmatprep.subr.mxu0 0.0
    %2467 = vmatpush1.msra.mxu0 0.0
    %2468 = vmatprep.subr.mxu0 0.0
    %2469 = vmatpush1.msra.mxu0 0.0
    %2470 = vmatprep.subr.mxu0 0.0
    %2471 = vmatpush1.msra.mxu0 0.0
    %2472 = vmatprep.subr.mxu0 0.0
    %2473 = vmatpush1.msra.mxu0 0.0
    %2474 = vmatprep.subr.mxu0 0.0
    %2475 = vmatpush1.msra.mxu0 0.0
    %2476 = vmatprep.subr.mxu0 0.0
    %2477 = vmatpush1.msra.mxu0 0.0
    %2478 = vmatprep.subr.mxu0 0.0
    %2479 = vmatpush1.msra.mxu0 0.0
    %2480 = vmatprep.subr.mxu0 0.0
    %2481 = vmatpush1.msra.mxu0 0.0
    %2482 = vmatprep.subr.mxu0 0.0
    %2483 = vmatpush1.msra.mxu0 0.0
    %2484 = vmatprep.subr.mxu0 0.0
    %2485 = vmatpush1.msra.mxu0 0.0
    %2486 = vmatprep.subr.mxu0 0.0
    %2487 = vmatpush1.msra.mxu0 0.0
    %2488 = vmatprep.mubr.f32.mxu0 0.0
    %2489 = vmatmul.mubr.f32.gmra.mrb[0].mxu0 %v2419
    %v2490 = vpop.f32.mrb[0].mxu0
    %v2491 = vadd.f32 0.0, %v2490
    %v2492 = vpop.f32.mrb[0].mxu0
    %v2493 = vadd.f32 0.0, %v2492
    %2494 = vmatprep.mubr.f32.mxu0 0.0
    %2495 = vmatmul.mubr.f32.gmra.mrb[0].mxu0 %v2422
    %v2496 = vpop.f32.mrb[0].mxu0
    %v2497 = vadd.f32 0.0, %v2496
    %v2498 = vpop.f32.mrb[0].mxu0
    %v2499 = vadd.f32 0.0, %v2498
    %2500 = vdwg.mxu0
    %2501 = vmatprep.subr.mxu0 %v2417
    %2502 = vmatpush1.msra.mxu0 %v2411
    %2503 = vmatprep.subr.mxu0 0.0
    %2504 = vmatpush1.msra.mxu0 0.0
    %2505 = vmatprep.subr.mxu0 0.0
    %2506 = vmatpush1.msra.mxu0 0.0
    %2507 = vmatprep.subr.mxu0 0.0
    %2508 = vmatpush1.msra.mxu0 0.0
    %2509 = vmatprep.subr.mxu0 0.0
    %2510 = vmatpush1.msra.mxu0 0.0
    %2511 = vmatprep.subr.mxu0 0.0
    %2512 = vmatpush1.msra.mxu0 0.0
    %2513 = vmatprep.subr.mxu0 0.0
    %2514 = vmatpush1.msra.mxu0 0.0
    %2515 = vmatprep.subr.mxu0 0.0
    %2516 = vmatpush1.msra.mxu0 0.0
    %2517 = vmatprep.subr.mxu0 0.0
    %2518 = vmatpush1.msra.mxu0 0.0
    %2519 = vmatprep.subr.mxu0 0.0
    %2520 = vmatpush1.msra.mxu0 0.0
    %2521 = vmatprep.subr.mxu0 0.0
    %2522 = vmatpush1.msra.mxu0 0.0
    %2523 = vmatprep.subr.mxu0 0.0
    %2524 = vmatpush1.msra.mxu0 0.0
    %2525 = vmatprep.subr.mxu0 0.0
    %2526 = vmatpush1.msra.mxu0 0.0
    %2527 = vmatprep.subr.mxu0 0.0
    %2528 = vmatpush1.msra.mxu0 0.0
    %2529 = vmatprep.subr.mxu0 0.0
    %2530 = vmatpush1.msra.mxu0 0.0
    %2531 = vmatprep.subr.mxu0 0.0
    %2532 = vmatpush1.msra.mxu0 0.0
    %2533 = vmatprep.subr.mxu0 0.0
    %2534 = vmatpush1.msra.mxu0 0.0
    %2535 = vmatprep.subr.mxu0 0.0
    %2536 = vmatpush1.msra.mxu0 0.0
    %2537 = vmatprep.subr.mxu0 0.0
    %2538 = vmatpush1.msra.mxu0 0.0
    %2539 = vmatprep.subr.mxu0 0.0
    %2540 = vmatpush1.msra.mxu0 0.0
    %2541 = vmatprep.subr.mxu0 0.0
    %2542 = vmatpush1.msra.mxu0 0.0
    %2543 = vmatprep.subr.mxu0 0.0
    %2544 = vmatpush1.msra.mxu0 0.0
    %2545 = vmatprep.subr.mxu0 0.0
    %2546 = vmatpush1.msra.mxu0 0.0
    %2547 = vmatprep.subr.mxu0 0.0
    %2548 = vmatpush1.msra.mxu0 0.0
    %2549 = vmatprep.subr.mxu0 0.0
    %2550 = vmatpush1.msra.mxu0 0.0
    %2551 = vmatprep.subr.mxu0 0.0
    %2552 = vmatpush1.msra.mxu0 0.0
    %2553 = vmatprep.subr.mxu0 0.0
    %2554 = vmatpush1.msra.mxu0 0.0
    %2555 = vmatprep.subr.mxu0 0.0
    %2556 = vmatpush1.msra.mxu0 0.0
    %2557 = vmatprep.subr.mxu0 0.0
    %2558 = vmatpush1.msra.mxu0 0.0
    %2559 = vmatprep.subr.mxu0 0.0
    %2560 = vmatpush1.msra.mxu0 0.0
    %2561 = vmatprep.subr.mxu0 0.0
    %2562 = vmatpush1.msra.mxu0 0.0
    %2563 = vmatprep.subr.mxu0 0.0
    %2564 = vmatpush1.msra.mxu0 0.0
    %2565 = vmatprep.mubr.f32.mxu0 0.0
    %2566 = vmatmul.mubr.f32.gmra.mrb[0].mxu0 %v2419
    %v2567 = vpop.f32.mrb[0].mxu0
    %v2568 = vadd.f32 0.0, %v2567
    %v2569 = vpop.f32.mrb[0].mxu0
    %v2570 = vadd.f32 0.0, %v2569
    %2571 = vmatprep.mubr.f32.mxu0 0.0
    %2572 = vmatmul.mubr.f32.gmra.mrb[0].mxu0 %v2422
    %v2573 = vpop.f32.mrb[0].mxu0
    %v2574 = vadd.f32 0.0, %v2573
    %v2575 = vpop.f32.mrb[0].mxu0
    %v2576 = vadd.f32 0.0, %v2575
    %2577 = vdwg.mxu0
    %v2578 = vadd.f32 %v2390, %v2491
    %v2579 = vadd.f32 %v2391, %v2493
    %v2580 = vadd.f32 %v2392, %v2568
    %v2581 = vadd.f32 %v2393, %v2570
    %v2582 = vadd.f32 %v2394, %v2497
    %v2583 = vadd.f32 %v2395, %v2499
    %v2584 = vadd.f32 %v2396, %v2574
    %v2585 = vadd.f32 %v2397, %v2576
    %s2586 = scalar_lea.vmem %s3, 80
    %v2587 = vld [vmem:[%s2586] sm:$0xff]
    %v2588 = vld [vmem:[%s2586 + $0x8] sm:$0xff]
    %2589 = vrot.lane.b32.xlu0 %v1671, 110
    %v2590 = vpop.permute.xlu0 %2589
    %2591 = vrot.lane.b32.xlu0 %v1672, 110
    %v2592 = vpop.permute.xlu0 %2591
    %2593 = vrot.lane.b32.xlu0 %v1673, 110
    %v2594 = vpop.permute.xlu0 %2593
    %2595 = vrot.lane.b32.xlu0 %v1674, 110
    %v2596 = vpop.permute.xlu0 %2595
    %v2597 = vsel %vm971, %v2590, %v2592
    %v2598 = vsel %vm971, %v2592, %v2594
    %v2599 = vsel %vm971, %v2594, %v2596
    %v2605 = vsel %vm971, %v2596, %v2590
    %v2607 = vsel %vm1701, %v2587, 0
    %v2610 = vsel %vm1701, %v2588, 0
    %2612 = vmatprep.subr.mxu0 %v2598
    %2613 = vmatpush1.msra.mxu0 %v2597
    %2614 = vmatprep.subr.mxu0 0.0
    %2615 = vmatpush1.msra.mxu0 0.0
    %2616 = vmatprep.subr.mxu0 0.0
    %2617 = vmatpush1.msra.mxu0 0.0
    %2618 = vmatprep.subr.mxu0 0.0
    %2619 = vmatpush1.msra.mxu0 0.0
    %2620 = vmatprep.subr.mxu0 0.0
    %2621 = vmatpush1.msra.mxu0 0.0
    %2622 = vmatprep.subr.mxu0 0.0
    %2623 = vmatpush1.msra.mxu0 0.0
    %2624 = vmatprep.subr.mxu0 0.0
    %2625 = vmatpush1.msra.mxu0 0.0
    %2626 = vmatprep.subr.mxu0 0.0
    %2627 = vmatpush1.msra.mxu0 0.0
    %2628 = vmatprep.subr.mxu0 0.0
    %2629 = vmatpush1.msra.mxu0 0.0
    %2630 = vmatprep.subr.mxu0 0.0
    %2631 = vmatpush1.msra.mxu0 0.0
    %2632 = vmatprep.subr.mxu0 0.0
    %2633 = vmatpush1.msra.mxu0 0.0
    %2634 = vmatprep.subr.mxu0 0.0
    %2635 = vmatpush1.msra.mxu0 0.0
    %2636 = vmatprep.subr.mxu0 0.0
    %2637 = vmatpush1.msra.mxu0 0.0
    %2638 = vmatprep.subr.mxu0 0.0
    %2639 = vmatpush1.msra.mxu0 0.0
    %2640 = vmatprep.subr.mxu0 0.0
    %2641 = vmatpush1.msra.mxu0 0.0
    %2642 = vmatprep.subr.mxu0 0.0
    %2643 = vmatpush1.msra.mxu0 0.0
    %2644 = vmatprep.subr.mxu0 0.0
    %2645 = vmatpush1.msra.mxu0 0.0
    %2646 = vmatprep.subr.mxu0 0.0
    %2647 = vmatpush1.msra.mxu0 0.0
    %2648 = vmatprep.subr.mxu0 0.0
    %2649 = vmatpush1.msra.mxu0 0.0
    %2650 = vmatprep.subr.mxu0 0.0
    %2651 = vmatpush1.msra.mxu0 0.0
    %2652 = vmatprep.subr.mxu0 0.0
    %2653 = vmatpush1.msra.mxu0 0.0
    %2654 = vmatprep.subr.mxu0 0.0
    %2655 = vmatpush1.msra.mxu0 0.0
    %2656 = vmatprep.subr.mxu0 0.0
    %2657 = vmatpush1.msra.mxu0 0.0
    %2658 = vmatprep.subr.mxu0 0.0
    %2659 = vmatpush1.msra.mxu0 0.0
    %2660 = vmatprep.subr.mxu0 0.0
    %2661 = vmatpush1.msra.mxu0 0.0
    %2662 = vmatprep.subr.mxu0 0.0
    %2663 = vmatpush1.msra.mxu0 0.0
    %2664 = vmatprep.subr.mxu0 0.0
    %2665 = vmatpush1.msra.mxu0 0.0
    %2666 = vmatprep.subr.mxu0 0.0
    %2667 = vmatpush1.msra.mxu0 0.0
    %2668 = vmatprep.subr.mxu0 0.0
    %2669 = vmatpush1.msra.mxu0 0.0
    %2670 = vmatprep.subr.mxu0 0.0
    %2671 = vmatpush1.msra.mxu0 0.0
    %2672 = vmatprep.subr.mxu0 0.0
    %2673 = vmatpush1.msra.mxu0 0.0
    %2674 = vmatprep.subr.mxu0 0.0
    %2675 = vmatpush1.msra.mxu0 0.0
    %2676 = vmatprep.mubr.f32.mxu0 0.0
    %2677 = vmatmul.mubr.f32.gmra.mrb[0].mxu0 %v2607
    %v2678 = vpop.f32.mrb[0].mxu0
    %v2679 = vadd.f32 0.0, %v2678
    %v2680 = vpop.f32.mrb[0].mxu0
    %v2681 = vadd.f32 0.0, %v2680
    %2682 = vmatprep.mubr.f32.mxu0 0.0
    %2683 = vmatmul.mubr.f32.gmra.mrb[0].mxu0 %v2610
    %v2684 = vpop.f32.mrb[0].mxu0
    %v2685 = vadd.f32 0.0, %v2684
    %v2686 = vpop.f32.mrb[0].mxu0
    %v2687 = vadd.f32 0.0, %v2686
    %2688 = vdwg.mxu0
    %2689 = vmatprep.subr.mxu0 %v2605
    %2690 = vmatpush1.msra.mxu0 %v2599
    %2691 = vmatprep.subr.mxu0 0.0
    %2692 = vmatpush1.msra.mxu0 0.0
    %2693 = vmatprep.subr.mxu0 0.0
    %2694 = vmatpush1.msra.mxu0 0.0
    %2695 = vmatprep.subr.mxu0 0.0
    %2696 = vmatpush1.msra.mxu0 0.0
    %2697 = vmatprep.subr.mxu0 0.0
    %2698 = vmatpush1.msra.mxu0 0.0
    %2699 = vmatprep.subr.mxu0 0.0
    %2700 = vmatpush1.msra.mxu0 0.0
    %2701 = vmatprep.subr.mxu0 0.0
    %2702 = vmatpush1.msra.mxu0 0.0
    %2703 = vmatprep.subr.mxu0 0.0
    %2704 = vmatpush1.msra.mxu0 0.0
    %2705 = vmatprep.subr.mxu0 0.0
    %2706 = vmatpush1.msra.mxu0 0.0
    %2707 = vmatprep.subr.mxu0 0.0
    %2708 = vmatpush1.msra.mxu0 0.0
    %2709 = vmatprep.subr.mxu0 0.0
    %2710 = vmatpush1.msra.mxu0 0.0
    %2711 = vmatprep.subr.mxu0 0.0
    %2712 = vmatpush1.msra.mxu0 0.0
    %2713 = vmatprep.subr.mxu0 0.0
    %2714 = vmatpush1.msra.mxu0 0.0
    %2715 = vmatprep.subr.mxu0 0.0
    %2716 = vmatpush1.msra.mxu0 0.0
    %2717 = vmatprep.subr.mxu0 0.0
    %2718 = vmatpush1.msra.mxu0 0.0
    %2719 = vmatprep.subr.mxu0 0.0
    %2720 = vmatpush1.msra.mxu0 0.0
    %2721 = vmatprep.subr.mxu0 0.0
    %2722 = vmatpush1.msra.mxu0 0.0
    %2723 = vmatprep.subr.mxu0 0.0
    %2724 = vmatpush1.msra.mxu0 0.0
    %2725 = vmatprep.subr.mxu0 0.0
    %2726 = vmatpush1.msra.mxu0 0.0
    %2727 = vmatprep.subr.mxu0 0.0
    %2728 = vmatpush1.msra.mxu0 0.0
    %2729 = vmatprep.subr.mxu0 0.0
    %2730 = vmatpush1.msra.mxu0 0.0
    %2731 = vmatprep.subr.mxu0 0.0
    %2732 = vmatpush1.msra.mxu0 0.0
    %2733 = vmatprep.subr.mxu0 0.0
    %2734 = vmatpush1.msra.mxu0 0.0
    %2735 = vmatprep.subr.mxu0 0.0
    %2736 = vmatpush1.msra.mxu0 0.0
    %2737 = vmatprep.subr.mxu0 0.0
    %2738 = vmatpush1.msra.mxu0 0.0
    %2739 = vmatprep.subr.mxu0 0.0
    %2740 = vmatpush1.msra.mxu0 0.0
    %2741 = vmatprep.subr.mxu0 0.0
    %2742 = vmatpush1.msra.mxu0 0.0
    %2743 = vmatprep.subr.mxu0 0.0
    %2744 = vmatpush1.msra.mxu0 0.0
    %2745 = vmatprep.subr.mxu0 0.0
    %2746 = vmatpush1.msra.mxu0 0.0
    %2747 = vmatprep.subr.mxu0 0.0
    %2748 = vmatpush1.msra.mxu0 0.0
    %2749 = vmatprep.subr.mxu0 0.0
    %2750 = vmatpush1.msra.mxu0 0.0
    %2751 = vmatprep.subr.mxu0 0.0
    %2752 = vmatpush1.msra.mxu0 0.0
    %2753 = vmatprep.mubr.f32.mxu0 0.0
    %2754 = vmatmul.mubr.f32.gmra.mrb[0].mxu0 %v2607
    %v2755 = vpop.f32.mrb[0].mxu0
    %v2756 = vadd.f32 0.0, %v2755
    %v2757 = vpop.f32.mrb[0].mxu0
    %v2758 = vadd.f32 0.0, %v2757
    %2759 = vmatprep.mubr.f32.mxu0 0.0
    %2760 = vmatmul.mubr.f32.gmra.mrb[0].mxu0 %v2610
    %v2761 = vpop.f32.mrb[0].mxu0
    %v2762 = vadd.f32 0.0, %v2761
    %v2763 = vpop.f32.mrb[0].mxu0
    %v2764 = vadd.f32 0.0, %v2763
    %2765 = vdwg.mxu0
    %v2766 = vadd.f32 %v2578, %v2679
    %v2767 = vadd.f32 %v2579, %v2681
    %v2768 = vadd.f32 %v2580, %v2756
    %v2769 = vadd.f32 %v2581, %v2758
    %v2770 = vadd.f32 %v2582, %v2685
    %v2771 = vadd.f32 %v2583, %v2687
    %v2772 = vadd.f32 %v2584, %v2762
    %v2773 = vadd.f32 %v2585, %v2764
    %s2774 = scalar_lea.vmem %s3, 96
    %v2775 = vld [vmem:[%s2774] sm:$0xff]
    %v2776 = vld [vmem:[%s2774 + $0x8] sm:$0xff]
    %2777 = vrot.lane.b32.xlu0 %v1671, 96
    %v2778 = vpop.permute.xlu0 %2777
    %2779 = vrot.lane.b32.xlu0 %v1672, 96
    %v2780 = vpop.permute.xlu0 %2779
    %2781 = vrot.lane.b32.xlu0 %v1673, 96
    %v2782 = vpop.permute.xlu0 %2781
    %2783 = vrot.lane.b32.xlu0 %v1674, 96
    %v2784 = vpop.permute.xlu0 %2783
    %v2785 = vsel %vm1146, %v2778, %v2780
    %v2786 = vsel %vm1146, %v2780, %v2782
    %v2787 = vsel %vm1146, %v2782, %v2784
    %v2793 = vsel %vm1146, %v2784, %v2778
    %v2795 = vsel %vm1701, %v2775, 0
    %v2798 = vsel %vm1701, %v2776, 0
    %2800 = vmatprep.subr.mxu0 %v2786
    %2801 = vmatpush1.msra.mxu0 %v2785
    %2802 = vmatprep.subr.mxu0 0.0
    %2803 = vmatpush1.msra.mxu0 0.0
    %2804 = vmatprep.subr.mxu0 0.0
    %2805 = vmatpush1.msra.mxu0 0.0
    %2806 = vmatprep.subr.mxu0 0.0
    %2807 = vmatpush1.msra.mxu0 0.0
    %2808 = vmatprep.subr.mxu0 0.0
    %2809 = vmatpush1.msra.mxu0 0.0
    %2810 = vmatprep.subr.mxu0 0.0
    %2811 = vmatpush1.msra.mxu0 0.0
    %2812 = vmatprep.subr.mxu0 0.0
    %2813 = vmatpush1.msra.mxu0 0.0
    %2814 = vmatprep.subr.mxu0 0.0
    %2815 = vmatpush1.msra.mxu0 0.0
    %2816 = vmatprep.subr.mxu0 0.0
    %2817 = vmatpush1.msra.mxu0 0.0
    %2818 = vmatprep.subr.mxu0 0.0
    %2819 = vmatpush1.msra.mxu0 0.0
    %2820 = vmatprep.subr.mxu0 0.0
    %2821 = vmatpush1.msra.mxu0 0.0
    %2822 = vmatprep.subr.mxu0 0.0
    %2823 = vmatpush1.msra.mxu0 0.0
    %2824 = vmatprep.subr.mxu0 0.0
    %2825 = vmatpush1.msra.mxu0 0.0
    %2826 = vmatprep.subr.mxu0 0.0
    %2827 = vmatpush1.msra.mxu0 0.0
    %2828 = vmatprep.subr.mxu0 0.0
    %2829 = vmatpush1.msra.mxu0 0.0
    %2830 = vmatprep.subr.mxu0 0.0
    %2831 = vmatpush1.msra.mxu0 0.0
    %2832 = vmatprep.subr.mxu0 0.0
    %2833 = vmatpush1.msra.mxu0 0.0
    %2834 = vmatprep.subr.mxu0 0.0
    %2835 = vmatpush1.msra.mxu0 0.0
    %2836 = vmatprep.subr.mxu0 0.0
    %2837 = vmatpush1.msra.mxu0 0.0
    %2838 = vmatprep.subr.mxu0 0.0
    %2839 = vmatpush1.msra.mxu0 0.0
    %2840 = vmatprep.subr.mxu0 0.0
    %2841 = vmatpush1.msra.mxu0 0.0
    %2842 = vmatprep.subr.mxu0 0.0
    %2843 = vmatpush1.msra.mxu0 0.0
    %2844 = vmatprep.subr.mxu0 0.0
    %2845 = vmatpush1.msra.mxu0 0.0
    %2846 = vmatprep.subr.mxu0 0.0
    %2847 = vmatpush1.msra.mxu0 0.0
    %2848 = vmatprep.subr.mxu0 0.0
    %2849 = vmatpush1.msra.mxu0 0.0
    %2850 = vmatprep.subr.mxu0 0.0
    %2851 = vmatpush1.msra.mxu0 0.0
    %2852 = vmatprep.subr.mxu0 0.0
    %2853 = vmatpush1.msra.mxu0 0.0
    %2854 = vmatprep.subr.mxu0 0.0
    %2855 = vmatpush1.msra.mxu0 0.0
    %2856 = vmatprep.subr.mxu0 0.0
    %2857 = vmatpush1.msra.mxu0 0.0
    %2858 = vmatprep.subr.mxu0 0.0
    %2859 = vmatpush1.msra.mxu0 0.0
    %2860 = vmatprep.subr.mxu0 0.0
    %2861 = vmatpush1.msra.mxu0 0.0
    %2862 = vmatprep.subr.mxu0 0.0
    %2863 = vmatpush1.msra.mxu0 0.0
    %2864 = vmatprep.mubr.f32.mxu0 0.0
    %2865 = vmatmul.mubr.f32.gmra.mrb[0].mxu0 %v2795
    %v2866 = vpop.f32.mrb[0].mxu0
    %v2867 = vadd.f32 0.0, %v2866
    %v2868 = vpop.f32.mrb[0].mxu0
    %v2869 = vadd.f32 0.0, %v2868
    %2870 = vmatprep.mubr.f32.mxu0 0.0
    %2871 = vmatmul.mubr.f32.gmra.mrb[0].mxu0 %v2798
    %v2872 = vpop.f32.mrb[0].mxu0
    %v2873 = vadd.f32 0.0, %v2872
    %v2874 = vpop.f32.mrb[0].mxu0
    %v2875 = vadd.f32 0.0, %v2874
    %2876 = vdwg.mxu0
    %2877 = vmatprep.subr.mxu0 %v2793
    %2878 = vmatpush1.msra.mxu0 %v2787
    %2879 = vmatprep.subr.mxu0 0.0
    %2880 = vmatpush1.msra.mxu0 0.0
    %2881 = vmatprep.subr.mxu0 0.0
    %2882 = vmatpush1.msra.mxu0 0.0
    %2883 = vmatprep.subr.mxu0 0.0
    %2884 = vmatpush1.msra.mxu0 0.0
    %2885 = vmatprep.subr.mxu0 0.0
    %2886 = vmatpush1.msra.mxu0 0.0
    %2887 = vmatprep.subr.mxu0 0.0
    %2888 = vmatpush1.msra.mxu0 0.0
    %2889 = vmatprep.subr.mxu0 0.0
    %2890 = vmatpush1.msra.mxu0 0.0
    %2891 = vmatprep.subr.mxu0 0.0
    %2892 = vmatpush1.msra.mxu0 0.0
    %2893 = vmatprep.subr.mxu0 0.0
    %2894 = vmatpush1.msra.mxu0 0.0
    %2895 = vmatprep.subr.mxu0 0.0
    %2896 = vmatpush1.msra.mxu0 0.0
    %2897 = vmatprep.subr.mxu0 0.0
    %2898 = vmatpush1.msra.mxu0 0.0
    %2899 = vmatprep.subr.mxu0 0.0
    %2900 = vmatpush1.msra.mxu0 0.0
    %2901 = vmatprep.subr.mxu0 0.0
    %2902 = vmatpush1.msra.mxu0 0.0
    %2903 = vmatprep.subr.mxu0 0.0
    %2904 = vmatpush1.msra.mxu0 0.0
    %2905 = vmatprep.subr.mxu0 0.0
    %2906 = vmatpush1.msra.mxu0 0.0
    %2907 = vmatprep.subr.mxu0 0.0
    %2908 = vmatpush1.msra.mxu0 0.0
    %2909 = vmatprep.subr.mxu0 0.0
    %2910 = vmatpush1.msra.mxu0 0.0
    %2911 = vmatprep.subr.mxu0 0.0
    %2912 = vmatpush1.msra.mxu0 0.0
    %2913 = vmatprep.subr.mxu0 0.0
    %2914 = vmatpush1.msra.mxu0 0.0
    %2915 = vmatprep.subr.mxu0 0.0
    %2916 = vmatpush1.msra.mxu0 0.0
    %2917 = vmatprep.subr.mxu0 0.0
    %2918 = vmatpush1.msra.mxu0 0.0
    %2919 = vmatprep.subr.mxu0 0.0
    %2920 = vmatpush1.msra.mxu0 0.0
    %2921 = vmatprep.subr.mxu0 0.0
    %2922 = vmatpush1.msra.mxu0 0.0
    %2923 = vmatprep.subr.mxu0 0.0
    %2924 = vmatpush1.msra.mxu0 0.0
    %2925 = vmatprep.subr.mxu0 0.0
    %2926 = vmatpush1.msra.mxu0 0.0
    %2927 = vmatprep.subr.mxu0 0.0
    %2928 = vmatpush1.msra.mxu0 0.0
    %2929 = vmatprep.subr.mxu0 0.0
    %2930 = vmatpush1.msra.mxu0 0.0
    %2931 = vmatprep.subr.mxu0 0.0
    %2932 = vmatpush1.msra.mxu0 0.0
    %2933 = vmatprep.subr.mxu0 0.0
    %2934 = vmatpush1.msra.mxu0 0.0
    %2935 = vmatprep.subr.mxu0 0.0
    %2936 = vmatpush1.msra.mxu0 0.0
    %2937 = vmatprep.subr.mxu0 0.0
    %2938 = vmatpush1.msra.mxu0 0.0
    %2939 = vmatprep.subr.mxu0 0.0
    %2940 = vmatpush1.msra.mxu0 0.0
    %2941 = vmatprep.mubr.f32.mxu0 0.0
    %2942 = vmatmul.mubr.f32.gmra.mrb[0].mxu0 %v2795
    %v2943 = vpop.f32.mrb[0].mxu0
    %v2944 = vadd.f32 0.0, %v2943
    %v2945 = vpop.f32.mrb[0].mxu0
    %v2946 = vadd.f32 0.0, %v2945
    %2947 = vmatprep.mubr.f32.mxu0 0.0
    %2948 = vmatmul.mubr.f32.gmra.mrb[0].mxu0 %v2798
    %v2949 = vpop.f32.mrb[0].mxu0
    %v2950 = vadd.f32 0.0, %v2949
    %v2951 = vpop.f32.mrb[0].mxu0
    %v2952 = vadd.f32 0.0, %v2951
    %2953 = vdwg.mxu0
    %v2954 = vadd.f32 %v2766, %v2867
    %v2955 = vadd.f32 %v2767, %v2869
    %v2956 = vadd.f32 %v2768, %v2944
    %v2957 = vadd.f32 %v2769, %v2946
    %v2958 = vadd.f32 %v2770, %v2873
    %v2959 = vadd.f32 %v2771, %v2875
    %v2960 = vadd.f32 %v2772, %v2950
    %v2961 = vadd.f32 %v2773, %v2952
    %s2962 = scalar_lea.vmem %s3, 112
    %v2963 = vld [vmem:[%s2962] sm:$0xff]
    %v2964 = vld [vmem:[%s2962 + $0x8] sm:$0xff]
    %2965 = vrot.lane.b32.xlu0 %v1671, 95
    %v2966 = vpop.permute.xlu0 %2965
    %2967 = vrot.lane.b32.xlu0 %v1672, 95
    %v2968 = vpop.permute.xlu0 %2967
    %2969 = vrot.lane.b32.xlu0 %v1673, 95
    %v2970 = vpop.permute.xlu0 %2969
    %2971 = vrot.lane.b32.xlu0 %v1674, 95
    %v2972 = vpop.permute.xlu0 %2971
    %v2973 = vsel %vm1321, %v2966, %v2968
    %v2974 = vsel %vm1321, %v2968, %v2970
    %v2975 = vsel %vm1321, %v2970, %v2972
    %v2981 = vsel %vm1321, %v2972, %v2966
    %v2983 = vsel %vm1701, %v2963, 0
    %v2986 = vsel %vm1701, %v2964, 0
    %2988 = vmatprep.subr.mxu0 %v2974
    %2989 = vmatpush1.msra.mxu0 %v2973
    %2990 = vmatprep.subr.mxu0 0.0
    %2991 = vmatpush1.msra.mxu0 0.0
    %2992 = vmatprep.subr.mxu0 0.0
    %2993 = vmatpush1.msra.mxu0 0.0
    %2994 = vmatprep.subr.mxu0 0.0
    %2995 = vmatpush1.msra.mxu0 0.0
    %2996 = vmatprep.subr.mxu0 0.0
    %2997 = vmatpush1.msra.mxu0 0.0
    %2998 = vmatprep.subr.mxu0 0.0
    %2999 = vmatpush1.msra.mxu0 0.0
    %3000 = vmatprep.subr.mxu0 0.0
    %3001 = vmatpush1.msra.mxu0 0.0
    %3002 = vmatprep.subr.mxu0 0.0
    %3003 = vmatpush1.msra.mxu0 0.0
    %3004 = vmatprep.subr.mxu0 0.0
    %3005 = vmatpush1.msra.mxu0 0.0
    %3006 = vmatprep.subr.mxu0 0.0
    %3007 = vmatpush1.msra.mxu0 0.0
    %3008 = vmatprep.subr.mxu0 0.0
    %3009 = vmatpush1.msra.mxu0 0.0
    %3010 = vmatprep.subr.mxu0 0.0
    %3011 = vmatpush1.msra.mxu0 0.0
    %3012 = vmatprep.subr.mxu0 0.0
    %3013 = vmatpush1.msra.mxu0 0.0
    %3014 = vmatprep.subr.mxu0 0.0
    %3015 = vmatpush1.msra.mxu0 0.0
    %3016 = vmatprep.subr.mxu0 0.0
    %3017 = vmatpush1.msra.mxu0 0.0
    %3018 = vmatprep.subr.mxu0 0.0
    %3019 = vmatpush1.msra.mxu0 0.0
    %3020 = vmatprep.subr.mxu0 0.0
    %3021 = vmatpush1.msra.mxu0 0.0
    %3022 = vmatprep.subr.mxu0 0.0
    %3023 = vmatpush1.msra.mxu0 0.0
    %3024 = vmatprep.subr.mxu0 0.0
    %3025 = vmatpush1.msra.mxu0 0.0
    %3026 = vmatprep.subr.mxu0 0.0
    %3027 = vmatpush1.msra.mxu0 0.0
    %3028 = vmatprep.subr.mxu0 0.0
    %3029 = vmatpush1.msra.mxu0 0.0
    %3030 = vmatprep.subr.mxu0 0.0
    %3031 = vmatpush1.msra.mxu0 0.0
    %3032 = vmatprep.subr.mxu0 0.0
    %3033 = vmatpush1.msra.mxu0 0.0
    %3034 = vmatprep.subr.mxu0 0.0
    %3035 = vmatpush1.msra.mxu0 0.0
    %3036 = vmatprep.subr.mxu0 0.0
    %3037 = vmatpush1.msra.mxu0 0.0
    %3038 = vmatprep.subr.mxu0 0.0
    %3039 = vmatpush1.msra.mxu0 0.0
    %3040 = vmatprep.subr.mxu0 0.0
    %3041 = vmatpush1.msra.mxu0 0.0
    %3042 = vmatprep.subr.mxu0 0.0
    %3043 = vmatpush1.msra.mxu0 0.0
    %3044 = vmatprep.subr.mxu0 0.0
    %3045 = vmatpush1.msra.mxu0 0.0
    %3046 = vmatprep.subr.mxu0 0.0
    %3047 = vmatpush1.msra.mxu0 0.0
    %3048 = vmatprep.subr.mxu0 0.0
    %3049 = vmatpush1.msra.mxu0 0.0
    %3050 = vmatprep.subr.mxu0 0.0
    %3051 = vmatpush1.msra.mxu0 0.0
    %3052 = vmatprep.mubr.f32.mxu0 0.0
    %3053 = vmatmul.mubr.f32.gmra.mrb[0].mxu0 %v2983
    %v3054 = vpop.f32.mrb[0].mxu0
    %v3055 = vadd.f32 0.0, %v3054
    %v3056 = vpop.f32.mrb[0].mxu0
    %v3057 = vadd.f32 0.0, %v3056
    %3058 = vmatprep.mubr.f32.mxu0 0.0
    %3059 = vmatmul.mubr.f32.gmra.mrb[0].mxu0 %v2986
    %v3060 = vpop.f32.mrb[0].mxu0
    %v3061 = vadd.f32 0.0, %v3060
    %v3062 = vpop.f32.mrb[0].mxu0
    %v3063 = vadd.f32 0.0, %v3062
    %3064 = vdwg.mxu0
    %3065 = vmatprep.subr.mxu0 %v2981
    %3066 = vmatpush1.msra.mxu0 %v2975
    %3067 = vmatprep.subr.mxu0 0.0
    %3068 = vmatpush1.msra.mxu0 0.0
    %3069 = vmatprep.subr.mxu0 0.0
    %3070 = vmatpush1.msra.mxu0 0.0
    %3071 = vmatprep.subr.mxu0 0.0
    %3072 = vmatpush1.msra.mxu0 0.0
    %3073 = vmatprep.subr.mxu0 0.0
    %3074 = vmatpush1.msra.mxu0 0.0
    %3075 = vmatprep.subr.mxu0 0.0
    %3076 = vmatpush1.msra.mxu0 0.0
    %3077 = vmatprep.subr.mxu0 0.0
    %3078 = vmatpush1.msra.mxu0 0.0
    %3079 = vmatprep.subr.mxu0 0.0
    %3080 = vmatpush1.msra.mxu0 0.0
    %3081 = vmatprep.subr.mxu0 0.0
    %3082 = vmatpush1.msra.mxu0 0.0
    %3083 = vmatprep.subr.mxu0 0.0
    %3084 = vmatpush1.msra.mxu0 0.0
    %3085 = vmatprep.subr.mxu0 0.0
    %3086 = vmatpush1.msra.mxu0 0.0
    %3087 = vmatprep.subr.mxu0 0.0
    %3088 = vmatpush1.msra.mxu0 0.0
    %3089 = vmatprep.subr.mxu0 0.0
    %3090 = vmatpush1.msra.mxu0 0.0
    %3091 = vmatprep.subr.mxu0 0.0
    %3092 = vmatpush1.msra.mxu0 0.0
    %3093 = vmatprep.subr.mxu0 0.0
    %3094 = vmatpush1.msra.mxu0 0.0
    %3095 = vmatprep.subr.mxu0 0.0
    %3096 = vmatpush1.msra.mxu0 0.0
    %3097 = vmatprep.subr.mxu0 0.0
    %3098 = vmatpush1.msra.mxu0 0.0
    %3099 = vmatprep.subr.mxu0 0.0
    %3100 = vmatpush1.msra.mxu0 0.0
    %3101 = vmatprep.subr.mxu0 0.0
    %3102 = vmatpush1.msra.mxu0 0.0
    %3103 = vmatprep.subr.mxu0 0.0
    %3104 = vmatpush1.msra.mxu0 0.0
    %3105 = vmatprep.subr.mxu0 0.0
    %3106 = vmatpush1.msra.mxu0 0.0
    %3107 = vmatprep.subr.mxu0 0.0
    %3108 = vmatpush1.msra.mxu0 0.0
    %3109 = vmatprep.subr.mxu0 0.0
    %3110 = vmatpush1.msra.mxu0 0.0
    %3111 = vmatprep.subr.mxu0 0.0
    %3112 = vmatpush1.msra.mxu0 0.0
    %3113 = vmatprep.subr.mxu0 0.0
    %3114 = vmatpush1.msra.mxu0 0.0
    %3115 = vmatprep.subr.mxu0 0.0
    %3116 = vmatpush1.msra.mxu0 0.0
    %3117 = vmatprep.subr.mxu0 0.0
    %3118 = vmatpush1.msra.mxu0 0.0
    %3119 = vmatprep.subr.mxu0 0.0
    %3120 = vmatpush1.msra.mxu0 0.0
    %3121 = vmatprep.subr.mxu0 0.0
    %3122 = vmatpush1.msra.mxu0 0.0
    %3123 = vmatprep.subr.mxu0 0.0
    %3124 = vmatpush1.msra.mxu0 0.0
    %3125 = vmatprep.subr.mxu0 0.0
    %3126 = vmatpush1.msra.mxu0 0.0
    %3127 = vmatprep.subr.mxu0 0.0
    %3128 = vmatpush1.msra.mxu0 0.0
    %3129 = vmatprep.mubr.f32.mxu0 0.0
    %3130 = vmatmul.mubr.f32.gmra.mrb[0].mxu0 %v2983
    %v3131 = vpop.f32.mrb[0].mxu0
    %v3132 = vadd.f32 0.0, %v3131
    %v3133 = vpop.f32.mrb[0].mxu0
    %v3134 = vadd.f32 0.0, %v3133
    %3135 = vmatprep.mubr.f32.mxu0 0.0
    %3136 = vmatmul.mubr.f32.gmra.mrb[0].mxu0 %v2986
    %v3137 = vpop.f32.mrb[0].mxu0
    %v3138 = vadd.f32 0.0, %v3137
    %v3139 = vpop.f32.mrb[0].mxu0
    %v3140 = vadd.f32 0.0, %v3139
    %3141 = vdwg.mxu0
    %v3142 = vadd.f32 %v2954, %v3055
    %v3143 = vadd.f32 %v2955, %v3057
    %v3144 = vadd.f32 %v2956, %v3132
    %v3145 = vadd.f32 %v2957, %v3134
    %v3146 = vadd.f32 %v2958, %v3061
    %v3147 = vadd.f32 %v2959, %v3063
    %v3148 = vadd.f32 %v2960, %v3138
    %v3149 = vadd.f32 %v2961, %v3140
    %s3150 = scalar_lea.vmem %s3, 128
    %v3151 = vld [vmem:[%s3150] sm:$0xff]
    %v3152 = vld [vmem:[%s3150 + $0x8] sm:$0xff]
    %3153 = vrot.lane.b32.xlu0 %v1671, 94
    %v3154 = vpop.permute.xlu0 %3153
    %3155 = vrot.lane.b32.xlu0 %v1672, 94
    %v3156 = vpop.permute.xlu0 %3155
    %3157 = vrot.lane.b32.xlu0 %v1673, 94
    %v3158 = vpop.permute.xlu0 %3157
    %3159 = vrot.lane.b32.xlu0 %v1674, 94
    %v3160 = vpop.permute.xlu0 %3159
    %v3161 = vsel %vm1496, %v3154, %v3156
    %v3162 = vsel %vm1496, %v3156, %v3158
    %v3163 = vsel %vm1496, %v3158, %v3160
    %v3169 = vsel %vm1496, %v3160, %v3154
    %v3171 = vsel %vm1701, %v3151, 0
    %v3174 = vsel %vm1701, %v3152, 0
    %3176 = vmatprep.subr.mxu0 %v3162
    %3177 = vmatpush1.msra.mxu0 %v3161
    %3178 = vmatprep.subr.mxu0 0.0
    %3179 = vmatpush1.msra.mxu0 0.0
    %3180 = vmatprep.subr.mxu0 0.0
    %3181 = vmatpush1.msra.mxu0 0.0
    %3182 = vmatprep.subr.mxu0 0.0
    %3183 = vmatpush1.msra.mxu0 0.0
    %3184 = vmatprep.subr.mxu0 0.0
    %3185 = vmatpush1.msra.mxu0 0.0
    %3186 = vmatprep.subr.mxu0 0.0
    %3187 = vmatpush1.msra.mxu0 0.0
    %3188 = vmatprep.subr.mxu0 0.0
    %3189 = vmatpush1.msra.mxu0 0.0
    %3190 = vmatprep.subr.mxu0 0.0
    %3191 = vmatpush1.msra.mxu0 0.0
    %3192 = vmatprep.subr.mxu0 0.0
    %3193 = vmatpush1.msra.mxu0 0.0
    %3194 = vmatprep.subr.mxu0 0.0
    %3195 = vmatpush1.msra.mxu0 0.0
    %3196 = vmatprep.subr.mxu0 0.0
    %3197 = vmatpush1.msra.mxu0 0.0
    %3198 = vmatprep.subr.mxu0 0.0
    %3199 = vmatpush1.msra.mxu0 0.0
    %3200 = vmatprep.subr.mxu0 0.0
    %3201 = vmatpush1.msra.mxu0 0.0
    %3202 = vmatprep.subr.mxu0 0.0
    %3203 = vmatpush1.msra.mxu0 0.0
    %3204 = vmatprep.subr.mxu0 0.0
    %3205 = vmatpush1.msra.mxu0 0.0
    %3206 = vmatprep.subr.mxu0 0.0
    %3207 = vmatpush1.msra.mxu0 0.0
    %3208 = vmatprep.subr.mxu0 0.0
    %3209 = vmatpush1.msra.mxu0 0.0
    %3210 = vmatprep.subr.mxu0 0.0
    %3211 = vmatpush1.msra.mxu0 0.0
    %3212 = vmatprep.subr.mxu0 0.0
    %3213 = vmatpush1.msra.mxu0 0.0
    %3214 = vmatprep.subr.mxu0 0.0
    %3215 = vmatpush1.msra.mxu0 0.0
    %3216 = vmatprep.subr.mxu0 0.0
    %3217 = vmatpush1.msra.mxu0 0.0
    %3218 = vmatprep.subr.mxu0 0.0
    %3219 = vmatpush1.msra.mxu0 0.0
    %3220 = vmatprep.subr.mxu0 0.0
    %3221 = vmatpush1.msra.mxu0 0.0
    %3222 = vmatprep.subr.mxu0 0.0
    %3223 = vmatpush1.msra.mxu0 0.0
    %3224 = vmatprep.subr.mxu0 0.0
    %3225 = vmatpush1.msra.mxu0 0.0
    %3226 = vmatprep.subr.mxu0 0.0
    %3227 = vmatpush1.msra.mxu0 0.0
    %3228 = vmatprep.subr.mxu0 0.0
    %3229 = vmatpush1.msra.mxu0 0.0
    %3230 = vmatprep.subr.mxu0 0.0
    %3231 = vmatpush1.msra.mxu0 0.0
    %3232 = vmatprep.subr.mxu0 0.0
    %3233 = vmatpush1.msra.mxu0 0.0
    %3234 = vmatprep.subr.mxu0 0.0
    %3235 = vmatpush1.msra.mxu0 0.0
    %3236 = vmatprep.subr.mxu0 0.0
    %3237 = vmatpush1.msra.mxu0 0.0
    %3238 = vmatprep.subr.mxu0 0.0
    %3239 = vmatpush1.msra.mxu0 0.0
    %3240 = vmatprep.mubr.f32.mxu0 0.0
    %3241 = vmatmul.mubr.f32.gmra.mrb[0].mxu0 %v3171
    %v3242 = vpop.f32.mrb[0].mxu0
    %v3243 = vadd.f32 0.0, %v3242
    %v3244 = vpop.f32.mrb[0].mxu0
    %v3245 = vadd.f32 0.0, %v3244
    %3246 = vmatprep.mubr.f32.mxu0 0.0
    %3247 = vmatmul.mubr.f32.gmra.mrb[0].mxu0 %v3174
    %v3248 = vpop.f32.mrb[0].mxu0
    %v3249 = vadd.f32 0.0, %v3248
    %v3250 = vpop.f32.mrb[0].mxu0
    %v3251 = vadd.f32 0.0, %v3250
    %3252 = vdwg.mxu0
    %3253 = vmatprep.subr.mxu0 %v3169
    %3254 = vmatpush1.msra.mxu0 %v3163
    %3255 = vmatprep.subr.mxu0 0.0
    %3256 = vmatpush1.msra.mxu0 0.0
    %3257 = vmatprep.subr.mxu0 0.0
    %3258 = vmatpush1.msra.mxu0 0.0
    %3259 = vmatprep.subr.mxu0 0.0
    %3260 = vmatpush1.msra.mxu0 0.0
    %3261 = vmatprep.subr.mxu0 0.0
    %3262 = vmatpush1.msra.mxu0 0.0
    %3263 = vmatprep.subr.mxu0 0.0
    %3264 = vmatpush1.msra.mxu0 0.0
    %3265 = vmatprep.subr.mxu0 0.0
    %3266 = vmatpush1.msra.mxu0 0.0
    %3267 = vmatprep.subr.mxu0 0.0
    %3268 = vmatpush1.msra.mxu0 0.0
    %3269 = vmatprep.subr.mxu0 0.0
    %3270 = vmatpush1.msra.mxu0 0.0
    %3271 = vmatprep.subr.mxu0 0.0
    %3272 = vmatpush1.msra.mxu0 0.0
    %3273 = vmatprep.subr.mxu0 0.0
    %3274 = vmatpush1.msra.mxu0 0.0
    %3275 = vmatprep.subr.mxu0 0.0
    %3276 = vmatpush1.msra.mxu0 0.0
    %3277 = vmatprep.subr.mxu0 0.0
    %3278 = vmatpush1.msra.mxu0 0.0
    %3279 = vmatprep.subr.mxu0 0.0
    %3280 = vmatpush1.msra.mxu0 0.0
    %3281 = vmatprep.subr.mxu0 0.0
    %3282 = vmatpush1.msra.mxu0 0.0
    %3283 = vmatprep.subr.mxu0 0.0
    %3284 = vmatpush1.msra.mxu0 0.0
    %3285 = vmatprep.subr.mxu0 0.0
    %3286 = vmatpush1.msra.mxu0 0.0
    %3287 = vmatprep.subr.mxu0 0.0
    %3288 = vmatpush1.msra.mxu0 0.0
    %3289 = vmatprep.subr.mxu0 0.0
    %3290 = vmatpush1.msra.mxu0 0.0
    %3291 = vmatprep.subr.mxu0 0.0
    %3292 = vmatpush1.msra.mxu0 0.0
    %3293 = vmatprep.subr.mxu0 0.0
    %3294 = vmatpush1.msra.mxu0 0.0
    %3295 = vmatprep.subr.mxu0 0.0
    %3296 = vmatpush1.msra.mxu0 0.0
    %3297 = vmatprep.subr.mxu0 0.0
    %3298 = vmatpush1.msra.mxu0 0.0
    %3299 = vmatprep.subr.mxu0 0.0
    %3300 = vmatpush1.msra.mxu0 0.0
    %3301 = vmatprep.subr.mxu0 0.0
    %3302 = vmatpush1.msra.mxu0 0.0
    %3303 = vmatprep.subr.mxu0 0.0
    %3304 = vmatpush1.msra.mxu0 0.0
    %3305 = vmatprep.subr.mxu0 0.0
    %3306 = vmatpush1.msra.mxu0 0.0
    %3307 = vmatprep.subr.mxu0 0.0
    %3308 = vmatpush1.msra.mxu0 0.0
    %3309 = vmatprep.subr.mxu0 0.0
    %3310 = vmatpush1.msra.mxu0 0.0
    %3311 = vmatprep.subr.mxu0 0.0
    %3312 = vmatpush1.msra.mxu0 0.0
    %3313 = vmatprep.subr.mxu0 0.0
    %3314 = vmatpush1.msra.mxu0 0.0
    %3315 = vmatprep.subr.mxu0 0.0
    %3316 = vmatpush1.msra.mxu0 0.0
    %3317 = vmatprep.mubr.f32.mxu0 0.0
    %3318 = vmatmul.mubr.f32.gmra.mrb[0].mxu0 %v3171
    %v3319 = vpop.f32.mrb[0].mxu0
    %v3320 = vadd.f32 0.0, %v3319
    %v3321 = vpop.f32.mrb[0].mxu0
    %v3322 = vadd.f32 0.0, %v3321
    %3323 = vmatprep.mubr.f32.mxu0 0.0
    %3324 = vmatmul.mubr.f32.gmra.mrb[0].mxu0 %v3174
    %v3325 = vpop.f32.mrb[0].mxu0
    %v3326 = vadd.f32 0.0, %v3325
    %v3327 = vpop.f32.mrb[0].mxu0
    %v3328 = vadd.f32 0.0, %v3327
    %3329 = vdwg.mxu0
    %v3330 = vadd.f32 %v3142, %v3243
    %v3331 = vadd.f32 %v3143, %v3245
    %v3332 = vadd.f32 %v3144, %v3320
    %v3333 = vadd.f32 %v3145, %v3322
    %v3334 = vadd.f32 %v3146, %v3249
    %v3335 = vadd.f32 %v3147, %v3251
    %v3336 = vadd.f32 %v3148, %v3326
    %v3337 = vadd.f32 %v3149, %v3328
    %v3338 = vld [vmem:[%s4] sm:$0xff]
    %v3339 = vld [vmem:[%s4 + $0x8] sm:$0xff]
    %3341 = vset.pattern.permute.xlu0 0
    %3342 = vperm.xlu0 %3341, %v3338
    %v3343 = vpop.permute.xlu0 %3342
    %3346 = vset.pattern.permute.xlu0 0
    %3347 = vperm.xlu0 %3346, %v3339
    %v3348 = vpop.permute.xlu0 %3347
    %v3350 = vadd.f32 %v3330, %v3343
    %v3351 = vadd.f32 %v3331, %v3343
    %v3352 = vadd.f32 %v3332, %v3343
    %v3353 = vadd.f32 %v3333, %v3343
    %v3354 = vadd.f32 %v3334, %v3348
    %v3355 = vadd.f32 %v3335, %v3348
    %v3356 = vadd.f32 %v3336, %v3348
    %v3357 = vadd.f32 %v3337, %v3348
    %v3358 = vmax.f32 %v3350, 0.0
    %v3359 = vmax.f32 %v3351, 0.0
    %v3360 = vmax.f32 %v3352, 0.0
    %v3361 = vmax.f32 %v3353, 0.0
    %v3362 = vmax.f32 %v3354, 0.0
    %v3363 = vmax.f32 %v3355, 0.0
    %v3364 = vmax.f32 %v3356, 0.0
    %v3365 = vmax.f32 %v3357, 0.0
    %v3366 = vld [vmem:[%s9] sm:$0xf]
    %vm3367 = vcmp.gt.f32.partialorder %v3366, 0.0
    %v3368 = vsel %vm3367, 1, 0
    %v3369 = vlaneseq
    %v3370 = vshrl.u32 %v3369, 7
    %v3371 = vsub.s32 0, %v3370
    %v3372 = vrot.slane %v3368, %v3371
    %v3373 = vlaneseq
    %v3374 = vshrl.u32 %v3373, 7
    %v3375 = vsub.s32 1, %v3374
    %v3376 = vrot.slane %v3368, %v3375
    %v3377 = vlaneseq
    %v3378 = vshrl.u32 %v3377, 7
    %v3379 = vsub.s32 2, %v3378
    %v3380 = vrot.slane %v3368, %v3379
    %v3381 = vlaneseq
    %v3382 = vshrl.u32 %v3381, 7
    %v3383 = vsub.s32 3, %v3382
    %v3384 = vrot.slane %v3368, %v3383
    %vm3385 = vcmp.eq.s32.totalorder %v3372, 1
    %vm3386 = vcmp.eq.s32.totalorder %v3376, 1
    %vm3387 = vcmp.eq.s32.totalorder %v3380, 1
    %vm3388 = vcmp.eq.s32.totalorder %v3384, 1
    %v3389 = vsel %vm3385, %v3358, 0.0
    %v3390 = vsel %vm3386, %v3359, 0.0
    %v3391 = vsel %vm3387, %v3360, 0.0
    %v3392 = vsel %vm3388, %v3361, 0.0
    %v3393 = vsel %vm3385, %v3362, 0.0
    %v3394 = vsel %vm3386, %v3363, 0.0
    %v3395 = vsel %vm3387, %v3364, 0.0
    %v3396 = vsel %vm3388, %v3365, 0.0
    %v3397 = vld [vmem:[#allocation4] sm:$0xff]
    %3400 = vrot.lane.b32.xlu0 %v3392, 34
    %v3401 = vpop.permute.xlu0 %3400
    %3402 = vrot.lane.b32.xlu0 %v3396, 34
    %v3403 = vpop.permute.xlu0 %3402
    %3412 = vrot.lane.b32.xlu0 %v3389, 34
    %v3413 = vpop.permute.xlu0 %3412
    %3414 = vrot.lane.b32.xlu0 %v3390, 34
    %v3415 = vpop.permute.xlu0 %3414
    %3416 = vrot.lane.b32.xlu0 %v3391, 34
    %v3417 = vpop.permute.xlu0 %3416
    %3418 = vrot.lane.b32.xlu0 %v3393, 34
    %v3419 = vpop.permute.xlu0 %3418
    %3420 = vrot.lane.b32.xlu0 %v3394, 34
    %v3421 = vpop.permute.xlu0 %3420
    %3422 = vrot.lane.b32.xlu0 %v3395, 34
    %v3423 = vpop.permute.xlu0 %3422
    %vm3424 = vcmask 277504
    %v3425 = vsel %vm3424, %v3413, %v3415
    %v3426 = vsel %vm3424, %v3415, %v3417
    %v3427 = vsel %vm3424, %v3417, %v3401
    %v3428 = vsel %vm3424, %v3419, %v3421
    %v3429 = vsel %vm3424, %v3421, %v3423
    %v3430 = vsel %vm3424, %v3423, %v3403
    %v3439 = vsel %vm3424, %v3401, %v3413
    %v3440 = vsel %vm3424, %v3403, %v3419
    %s3441 = scalar_lea.vmem [#allocation4], 8
    %v3442 = vld [vmem:[%s3441] sm:$0xff]
    %3443 = vrot.lane.b32.xlu0 %v3392, 33
    %v3444 = vpop.permute.xlu0 %3443
    %3445 = vrot.lane.b32.xlu0 %v3396, 33
    %v3446 = vpop.permute.xlu0 %3445
    %3449 = vrot.lane.b32.xlu0 %v3389, 33
    %v3450 = vpop.permute.xlu0 %3449
    %3451 = vrot.lane.b32.xlu0 %v3390, 33
    %v3452 = vpop.permute.xlu0 %3451
    %3453 = vrot.lane.b32.xlu0 %v3391, 33
    %v3454 = vpop.permute.xlu0 %3453
    %3455 = vrot.lane.b32.xlu0 %v3393, 33
    %v3456 = vpop.permute.xlu0 %3455
    %3457 = vrot.lane.b32.xlu0 %v3394, 33
    %v3458 = vpop.permute.xlu0 %3457
    %3459 = vrot.lane.b32.xlu0 %v3395, 33
    %v3460 = vpop.permute.xlu0 %3459
    %vm3461 = vcmask 269312
    %v3462 = vsel %vm3461, %v3450, %v3452
    %v3463 = vsel %vm3461, %v3452, %v3454
    %v3464 = vsel %vm3461, %v3454, %v3444
    %v3465 = vsel %vm3461, %v3456, %v3458
    %v3466 = vsel %vm3461, %v3458, %v3460
    %v3467 = vsel %vm3461, %v3460, %v3446
    %v3476 = vsel %vm3461, %v3444, %v3450
    %v3477 = vsel %vm3461, %v3446, %v3456
    %vm3478 = vcmask 130048
    %v3480 = vsel %vm3478, %v3442, 0
    %3482 = vmatprep.subr.mxu0 %v3462
    %3483 = vmatpush1.msra.mxu0 %v3476
    %3484 = vmatprep.subr.mxu0 %v3465
    %3485 = vmatpush1.msra.mxu0 %v3477
    %3486 = vmatprep.subr.mxu0 0.0
    %3487 = vmatpush1.msra.mxu0 0.0
    %3488 = vmatprep.subr.mxu0 0.0
    %3489 = vmatpush1.msra.mxu0 0.0
    %3490 = vmatprep.subr.mxu0 0.0
    %3491 = vmatpush1.msra.mxu0 0.0
    %3492 = vmatprep.subr.mxu0 0.0
    %3493 = vmatpush1.msra.mxu0 0.0
    %3494 = vmatprep.subr.mxu0 0.0
    %3495 = vmatpush1.msra.mxu0 0.0
    %3496 = vmatprep.subr.mxu0 0.0
    %3497 = vmatpush1.msra.mxu0 0.0
    %3498 = vmatprep.subr.mxu0 0.0
    %3499 = vmatpush1.msra.mxu0 0.0
    %3500 = vmatprep.subr.mxu0 0.0
    %3501 = vmatpush1.msra.mxu0 0.0
    %3502 = vmatprep.subr.mxu0 0.0
    %3503 = vmatpush1.msra.mxu0 0.0
    %3504 = vmatprep.subr.mxu0 0.0
    %3505 = vmatpush1.msra.mxu0 0.0
    %3506 = vmatprep.subr.mxu0 0.0
    %3507 = vmatpush1.msra.mxu0 0.0
    %3508 = vmatprep.subr.mxu0 0.0
    %3509 = vmatpush1.msra.mxu0 0.0
    %3510 = vmatprep.subr.mxu0 0.0
    %3511 = vmatpush1.msra.mxu0 0.0
    %3512 = vmatprep.subr.mxu0 0.0
    %3513 = vmatpush1.msra.mxu0 0.0
    %3514 = vmatprep.subr.mxu0 0.0
    %3515 = vmatpush1.msra.mxu0 0.0
    %3516 = vmatprep.subr.mxu0 0.0
    %3517 = vmatpush1.msra.mxu0 0.0
    %3518 = vmatprep.subr.mxu0 0.0
    %3519 = vmatpush1.msra.mxu0 0.0
    %3520 = vmatprep.subr.mxu0 0.0
    %3521 = vmatpush1.msra.mxu0 0.0
    %3522 = vmatprep.subr.mxu0 0.0
    %3523 = vmatpush1.msra.mxu0 0.0
    %3524 = vmatprep.subr.mxu0 0.0
    %3525 = vmatpush1.msra.mxu0 0.0
    %3526 = vmatprep.subr.mxu0 0.0
    %3527 = vmatpush1.msra.mxu0 0.0
    %3528 = vmatprep.subr.mxu0 0.0
    %3529 = vmatpush1.msra.mxu0 0.0
    %3530 = vmatprep.subr.mxu0 0.0
    %3531 = vmatpush1.msra.mxu0 0.0
    %3532 = vmatprep.subr.mxu0 0.0
    %3533 = vmatpush1.msra.mxu0 0.0
    %3534 = vmatprep.subr.mxu0 0.0
    %3535 = vmatpush1.msra.mxu0 0.0
    %3536 = vmatprep.subr.mxu0 0.0
    %3537 = vmatpush1.msra.mxu0 0.0
    %3538 = vmatprep.subr.mxu0 0.0
    %3539 = vmatpush1.msra.mxu0 0.0
    %3540 = vmatprep.subr.mxu0 0.0
    %3541 = vmatpush1.msra.mxu0 0.0
    %3542 = vmatprep.subr.mxu0 0.0
    %3543 = vmatpush1.msra.mxu0 0.0
    %3544 = vmatprep.subr.mxu0 0.0
    %3545 = vmatpush1.msra.mxu0 0.0
    %3546 = vmatprep.mubr.f32.mxu0 0.0
    %3547 = vmatmul.mubr.f32.gmra.mrb[0].mxu0 %v3480
    %v3548 = vpop.f32.mrb[0].mxu0
    %v3549 = vadd.f32 0.0, %v3548
    %v3550 = vpop.f32.mrb[0].mxu0
    %v3551 = vadd.f32 0.0, %v3550
    %3552 = vdwg.mxu0
    %3553 = vmatprep.subr.mxu0 %v3464
    %3554 = vmatpush1.msra.mxu0 %v3463
    %3555 = vmatprep.subr.mxu0 %v3467
    %3556 = vmatpush1.msra.mxu0 %v3466
    %3557 = vmatprep.subr.mxu0 0.0
    %3558 = vmatpush1.msra.mxu0 0.0
    %3559 = vmatprep.subr.mxu0 0.0
    %3560 = vmatpush1.msra.mxu0 0.0
    %3561 = vmatprep.subr.mxu0 0.0
    %3562 = vmatpush1.msra.mxu0 0.0
    %3563 = vmatprep.subr.mxu0 0.0
    %3564 = vmatpush1.msra.mxu0 0.0
    %3565 = vmatprep.subr.mxu0 0.0
    %3566 = vmatpush1.msra.mxu0 0.0
    %3567 = vmatprep.subr.mxu0 0.0
    %3568 = vmatpush1.msra.mxu0 0.0
    %3569 = vmatprep.subr.mxu0 0.0
    %3570 = vmatpush1.msra.mxu0 0.0
    %3571 = vmatprep.subr.mxu0 0.0
    %3572 = vmatpush1.msra.mxu0 0.0
    %3573 = vmatprep.subr.mxu0 0.0
    %3574 = vmatpush1.msra.mxu0 0.0
    %3575 = vmatprep.subr.mxu0 0.0
    %3576 = vmatpush1.msra.mxu0 0.0
    %3577 = vmatprep.subr.mxu0 0.0
    %3578 = vmatpush1.msra.mxu0 0.0
    %3579 = vmatprep.subr.mxu0 0.0
    %3580 = vmatpush1.msra.mxu0 0.0
    %3581 = vmatprep.subr.mxu0 0.0
    %3582 = vmatpush1.msra.mxu0 0.0
    %3583 = vmatprep.subr.mxu0 0.0
    %3584 = vmatpush1.msra.mxu0 0.0
    %3585 = vmatprep.subr.mxu0 0.0
    %3586 = vmatpush1.msra.mxu0 0.0
    %3587 = vmatprep.subr.mxu0 0.0
    %3588 = vmatpush1.msra.mxu0 0.0
    %3589 = vmatprep.subr.mxu0 0.0
    %3590 = vmatpush1.msra.mxu0 0.0
    %3591 = vmatprep.subr.mxu0 0.0
    %3592 = vmatpush1.msra.mxu0 0.0
    %3593 = vmatprep.subr.mxu0 0.0
    %3594 = vmatpush1.msra.mxu0 0.0
    %3595 = vmatprep.subr.mxu0 0.0
    %3596 = vmatpush1.msra.mxu0 0.0
    %3597 = vmatprep.subr.mxu0 0.0
    %3598 = vmatpush1.msra.mxu0 0.0
    %3599 = vmatprep.subr.mxu0 0.0
    %3600 = vmatpush1.msra.mxu0 0.0
    %3601 = vmatprep.subr.mxu0 0.0
    %3602 = vmatpush1.msra.mxu0 0.0
    %3603 = vmatprep.subr.mxu0 0.0
    %3604 = vmatpush1.msra.mxu0 0.0
    %3605 = vmatprep.subr.mxu0 0.0
    %3606 = vmatpush1.msra.mxu0 0.0
    %3607 = vmatprep.subr.mxu0 0.0
    %3608 = vmatpush1.msra.mxu0 0.0
    %3609 = vmatprep.subr.mxu0 0.0
    %3610 = vmatpush1.msra.mxu0 0.0
    %3611 = vmatprep.subr.mxu0 0.0
    %3612 = vmatpush1.msra.mxu0 0.0
    %3613 = vmatprep.subr.mxu0 0.0
    %3614 = vmatpush1.msra.mxu0 0.0
    %3615 = vmatprep.subr.mxu0 0.0
    %3616 = vmatpush1.msra.mxu0 0.0
    %3617 = vmatprep.mubr.f32.mxu0 0.0
    %3618 = vmatmul.mubr.f32.gmra.mrb[0].mxu0 %v3480
    %v3619 = vpop.f32.mrb[0].mxu0
    %v3620 = vadd.f32 0.0, %v3619
    %v3621 = vpop.f32.mrb[0].mxu0
    %v3622 = vadd.f32 0.0, %v3621
    %3623 = vdwg.mxu0
    %v3625 = vsel %vm3478, %v3397, 0
    %3627 = vmatprep.subr.mxu0 %v3425
    %3628 = vmatpush1.msra.mxu0 %v3439
    %3629 = vmatprep.subr.mxu0 %v3428
    %3630 = vmatpush1.msra.mxu0 %v3440
    %3631 = vmatprep.subr.mxu0 0.0
    %3632 = vmatpush1.msra.mxu0 0.0
    %3633 = vmatprep.subr.mxu0 0.0
    %3634 = vmatpush1.msra.mxu0 0.0
    %3635 = vmatprep.subr.mxu0 0.0
    %3636 = vmatpush1.msra.mxu0 0.0
    %3637 = vmatprep.subr.mxu0 0.0
    %3638 = vmatpush1.msra.mxu0 0.0
    %3639 = vmatprep.subr.mxu0 0.0
    %3640 = vmatpush1.msra.mxu0 0.0
    %3641 = vmatprep.subr.mxu0 0.0
    %3642 = vmatpush1.msra.mxu0 0.0
    %3643 = vmatprep.subr.mxu0 0.0
    %3644 = vmatpush1.msra.mxu0 0.0
    %3645 = vmatprep.subr.mxu0 0.0
    %3646 = vmatpush1.msra.mxu0 0.0
    %3647 = vmatprep.subr.mxu0 0.0
    %3648 = vmatpush1.msra.mxu0 0.0
    %3649 = vmatprep.subr.mxu0 0.0
    %3650 = vmatpush1.msra.mxu0 0.0
    %3651 = vmatprep.subr.mxu0 0.0
    %3652 = vmatpush1.msra.mxu0 0.0
    %3653 = vmatprep.subr.mxu0 0.0
    %3654 = vmatpush1.msra.mxu0 0.0
    %3655 = vmatprep.subr.mxu0 0.0
    %3656 = vmatpush1.msra.mxu0 0.0
    %3657 = vmatprep.subr.mxu0 0.0
    %3658 = vmatpush1.msra.mxu0 0.0
    %3659 = vmatprep.subr.mxu0 0.0
    %3660 = vmatpush1.msra.mxu0 0.0
    %3661 = vmatprep.subr.mxu0 0.0
    %3662 = vmatpush1.msra.mxu0 0.0
    %3663 = vmatprep.subr.mxu0 0.0
    %3664 = vmatpush1.msra.mxu0 0.0
    %3665 = vmatprep.subr.mxu0 0.0
    %3666 = vmatpush1.msra.mxu0 0.0
    %3667 = vmatprep.subr.mxu0 0.0
    %3668 = vmatpush1.msra.mxu0 0.0
    %3669 = vmatprep.subr.mxu0 0.0
    %3670 = vmatpush1.msra.mxu0 0.0
    %3671 = vmatprep.subr.mxu0 0.0
    %3672 = vmatpush1.msra.mxu0 0.0
    %3673 = vmatprep.subr.mxu0 0.0
    %3674 = vmatpush1.msra.mxu0 0.0
    %3675 = vmatprep.subr.mxu0 0.0
    %3676 = vmatpush1.msra.mxu0 0.0
    %3677 = vmatprep.subr.mxu0 0.0
    %3678 = vmatpush1.msra.mxu0 0.0
    %3679 = vmatprep.subr.mxu0 0.0
    %3680 = vmatpush1.msra.mxu0 0.0
    %3681 = vmatprep.subr.mxu0 0.0
    %3682 = vmatpush1.msra.mxu0 0.0
    %3683 = vmatprep.subr.mxu0 0.0
    %3684 = vmatpush1.msra.mxu0 0.0
    %3685 = vmatprep.subr.mxu0 0.0
    %3686 = vmatpush1.msra.mxu0 0.0
    %3687 = vmatprep.subr.mxu0 0.0
    %3688 = vmatpush1.msra.mxu0 0.0
    %3689 = vmatprep.subr.mxu0 0.0
    %3690 = vmatpush1.msra.mxu0 0.0
    %3691 = vmatprep.mubr.f32.mxu0 0.0
    %3692 = vmatmul.mubr.f32.gmra.mrb[0].mxu0 %v3625
    %v3693 = vpop.f32.mrb[0].mxu0
    %v3694 = vadd.f32 %v3549, %v3693
    %v3695 = vpop.f32.mrb[0].mxu0
    %v3696 = vadd.f32 %v3551, %v3695
    %3697 = vdwg.mxu0
    %3698 = vmatprep.subr.mxu0 %v3427
    %3699 = vmatpush1.msra.mxu0 %v3426
    %3700 = vmatprep.subr.mxu0 %v3430
    %3701 = vmatpush1.msra.mxu0 %v3429
    %3702 = vmatprep.subr.mxu0 0.0
    %3703 = vmatpush1.msra.mxu0 0.0
    %3704 = vmatprep.subr.mxu0 0.0
    %3705 = vmatpush1.msra.mxu0 0.0
    %3706 = vmatprep.subr.mxu0 0.0
    %3707 = vmatpush1.msra.mxu0 0.0
    %3708 = vmatprep.subr.mxu0 0.0
    %3709 = vmatpush1.msra.mxu0 0.0
    %3710 = vmatprep.subr.mxu0 0.0
    %3711 = vmatpush1.msra.mxu0 0.0
    %3712 = vmatprep.subr.mxu0 0.0
    %3713 = vmatpush1.msra.mxu0 0.0
    %3714 = vmatprep.subr.mxu0 0.0
    %3715 = vmatpush1.msra.mxu0 0.0
    %3716 = vmatprep.subr.mxu0 0.0
    %3717 = vmatpush1.msra.mxu0 0.0
    %3718 = vmatprep.subr.mxu0 0.0
    %3719 = vmatpush1.msra.mxu0 0.0
    %3720 = vmatprep.subr.mxu0 0.0
    %3721 = vmatpush1.msra.mxu0 0.0
    %3722 = vmatprep.subr.mxu0 0.0
    %3723 = vmatpush1.msra.mxu0 0.0
    %3724 = vmatprep.subr.mxu0 0.0
    %3725 = vmatpush1.msra.mxu0 0.0
    %3726 = vmatprep.subr.mxu0 0.0
    %3727 = vmatpush1.msra.mxu0 0.0
    %3728 = vmatprep.subr.mxu0 0.0
    %3729 = vmatpush1.msra.mxu0 0.0
    %3730 = vmatprep.subr.mxu0 0.0
    %3731 = vmatpush1.msra.mxu0 0.0
    %3732 = vmatprep.subr.mxu0 0.0
    %3733 = vmatpush1.msra.mxu0 0.0
    %3734 = vmatprep.subr.mxu0 0.0
    %3735 = vmatpush1.msra.mxu0 0.0
    %3736 = vmatprep.subr.mxu0 0.0
    %3737 = vmatpush1.msra.mxu0 0.0
    %3738 = vmatprep.subr.mxu0 0.0
    %3739 = vmatpush1.msra.mxu0 0.0
    %3740 = vmatprep.subr.mxu0 0.0
    %3741 = vmatpush1.msra.mxu0 0.0
    %3742 = vmatprep.subr.mxu0 0.0
    %3743 = vmatpush1.msra.mxu0 0.0
    %3744 = vmatprep.subr.mxu0 0.0
    %3745 = vmatpush1.msra.mxu0 0.0
    %3746 = vmatprep.subr.mxu0 0.0
    %3747 = vmatpush1.msra.mxu0 0.0
    %3748 = vmatprep.subr.mxu0 0.0
    %3749 = vmatpush1.msra.mxu0 0.0
    %3750 = vmatprep.subr.mxu0 0.0
    %3751 = vmatpush1.msra.mxu0 0.0
    %3752 = vmatprep.subr.mxu0 0.0
    %3753 = vmatpush1.msra.mxu0 0.0
    %3754 = vmatprep.subr.mxu0 0.0
    %3755 = vmatpush1.msra.mxu0 0.0
    %3756 = vmatprep.subr.mxu0 0.0
    %3757 = vmatpush1.msra.mxu0 0.0
    %3758 = vmatprep.subr.mxu0 0.0
    %3759 = vmatpush1.msra.mxu0 0.0
    %3760 = vmatprep.subr.mxu0 0.0
    %3761 = vmatpush1.msra.mxu0 0.0
    %3762 = vmatprep.mubr.f32.mxu0 0.0
    %3763 = vmatmul.mubr.f32.gmra.mrb[0].mxu0 %v3625
    %v3764 = vpop.f32.mrb[0].mxu0
    %v3765 = vadd.f32 %v3620, %v3764
    %v3766 = vpop.f32.mrb[0].mxu0
    %v3767 = vadd.f32 %v3622, %v3766
    %3768 = vdwg.mxu0
    %s3769 = scalar_lea.vmem [#allocation4], 16
    %v3770 = vld [vmem:[%s3769] sm:$0xff]
    %3771 = vrot.lane.b32.xlu0 %v3392, 32
    %v3772 = vpop.permute.xlu0 %3771
    %3773 = vrot.lane.b32.xlu0 %v3396, 32
    %v3774 = vpop.permute.xlu0 %3773
    %3777 = vrot.lane.b32.xlu0 %v3389, 32
    %v3778 = vpop.permute.xlu0 %3777
    %3779 = vrot.lane.b32.xlu0 %v3390, 32
    %v3780 = vpop.permute.xlu0 %3779
    %3781 = vrot.lane.b32.xlu0 %v3391, 32
    %v3782 = vpop.permute.xlu0 %3781
    %3783 = vrot.lane.b32.xlu0 %v3393, 32
    %v3784 = vpop.permute.xlu0 %3783
    %3785 = vrot.lane.b32.xlu0 %v3394, 32
    %v3786 = vpop.permute.xlu0 %3785
    %3787 = vrot.lane.b32.xlu0 %v3395, 32
    %v3788 = vpop.permute.xlu0 %3787
    %vm3789 = vcmask 261120
    %v3790 = vsel %vm3789, %v3778, %v3780
    %v3791 = vsel %vm3789, %v3780, %v3782
    %v3792 = vsel %vm3789, %v3782, %v3772
    %v3793 = vsel %vm3789, %v3784, %v3786
    %v3794 = vsel %vm3789, %v3786, %v3788
    %v3795 = vsel %vm3789, %v3788, %v3774
    %v3804 = vsel %vm3789, %v3772, %v3778
    %v3805 = vsel %vm3789, %v3774, %v3784
    %v3807 = vsel %vm3478, %v3770, 0
    %3809 = vmatprep.subr.mxu0 %v3790
    %3810 = vmatpush1.msra.mxu0 %v3804
    %3811 = vmatprep.subr.mxu0 %v3793
    %3812 = vmatpush1.msra.mxu0 %v3805
    %3813 = vmatprep.subr.mxu0 0.0
    %3814 = vmatpush1.msra.mxu0 0.0
    %3815 = vmatprep.subr.mxu0 0.0
    %3816 = vmatpush1.msra.mxu0 0.0
    %3817 = vmatprep.subr.mxu0 0.0
    %3818 = vmatpush1.msra.mxu0 0.0
    %3819 = vmatprep.subr.mxu0 0.0
    %3820 = vmatpush1.msra.mxu0 0.0
    %3821 = vmatprep.subr.mxu0 0.0
    %3822 = vmatpush1.msra.mxu0 0.0
    %3823 = vmatprep.subr.mxu0 0.0
    %3824 = vmatpush1.msra.mxu0 0.0
    %3825 = vmatprep.subr.mxu0 0.0
    %3826 = vmatpush1.msra.mxu0 0.0
    %3827 = vmatprep.subr.mxu0 0.0
    %3828 = vmatpush1.msra.mxu0 0.0
    %3829 = vmatprep.subr.mxu0 0.0
    %3830 = vmatpush1.msra.mxu0 0.0
    %3831 = vmatprep.subr.mxu0 0.0
    %3832 = vmatpush1.msra.mxu0 0.0
    %3833 = vmatprep.subr.mxu0 0.0
    %3834 = vmatpush1.msra.mxu0 0.0
    %3835 = vmatprep.subr.mxu0 0.0
    %3836 = vmatpush1.msra.mxu0 0.0
    %3837 = vmatprep.subr.mxu0 0.0
    %3838 = vmatpush1.msra.mxu0 0.0
    %3839 = vmatprep.subr.mxu0 0.0
    %3840 = vmatpush1.msra.mxu0 0.0
    %3841 = vmatprep.subr.mxu0 0.0
    %3842 = vmatpush1.msra.mxu0 0.0
    %3843 = vmatprep.subr.mxu0 0.0
    %3844 = vmatpush1.msra.mxu0 0.0
    %3845 = vmatprep.subr.mxu0 0.0
    %3846 = vmatpush1.msra.mxu0 0.0
    %3847 = vmatprep.subr.mxu0 0.0
    %3848 = vmatpush1.msra.mxu0 0.0
    %3849 = vmatprep.subr.mxu0 0.0
    %3850 = vmatpush1.msra.mxu0 0.0
    %3851 = vmatprep.subr.mxu0 0.0
    %3852 = vmatpush1.msra.mxu0 0.0
    %3853 = vmatprep.subr.mxu0 0.0
    %3854 = vmatpush1.msra.mxu0 0.0
    %3855 = vmatprep.subr.mxu0 0.0
    %3856 = vmatpush1.msra.mxu0 0.0
    %3857 = vmatprep.subr.mxu0 0.0
    %3858 = vmatpush1.msra.mxu0 0.0
    %3859 = vmatprep.subr.mxu0 0.0
    %3860 = vmatpush1.msra.mxu0 0.0
    %3861 = vmatprep.subr.mxu0 0.0
    %3862 = vmatpush1.msra.mxu0 0.0
    %3863 = vmatprep.subr.mxu0 0.0
    %3864 = vmatpush1.msra.mxu0 0.0
    %3865 = vmatprep.subr.mxu0 0.0
    %3866 = vmatpush1.msra.mxu0 0.0
    %3867 = vmatprep.subr.mxu0 0.0
    %3868 = vmatpush1.msra.mxu0 0.0
    %3869 = vmatprep.subr.mxu0 0.0
    %3870 = vmatpush1.msra.mxu0 0.0
    %3871 = vmatprep.subr.mxu0 0.0
    %3872 = vmatpush1.msra.mxu0 0.0
    %3873 = vmatprep.mubr.f32.mxu0 0.0
    %3874 = vmatmul.mubr.f32.gmra.mrb[0].mxu0 %v3807
    %v3875 = vpop.f32.mrb[0].mxu0
    %v3876 = vadd.f32 0.0, %v3875
    %v3877 = vpop.f32.mrb[0].mxu0
    %v3878 = vadd.f32 0.0, %v3877
    %3879 = vdwg.mxu0
    %3880 = vmatprep.subr.mxu0 %v3792
    %3881 = vmatpush1.msra.mxu0 %v3791
    %3882 = vmatprep.subr.mxu0 %v3795
    %3883 = vmatpush1.msra.mxu0 %v3794
    %3884 = vmatprep.subr.mxu0 0.0
    %3885 = vmatpush1.msra.mxu0 0.0
    %3886 = vmatprep.subr.mxu0 0.0
    %3887 = vmatpush1.msra.mxu0 0.0
    %3888 = vmatprep.subr.mxu0 0.0
    %3889 = vmatpush1.msra.mxu0 0.0
    %3890 = vmatprep.subr.mxu0 0.0
    %3891 = vmatpush1.msra.mxu0 0.0
    %3892 = vmatprep.subr.mxu0 0.0
    %3893 = vmatpush1.msra.mxu0 0.0
    %3894 = vmatprep.subr.mxu0 0.0
    %3895 = vmatpush1.msra.mxu0 0.0
    %3896 = vmatprep.subr.mxu0 0.0
    %3897 = vmatpush1.msra.mxu0 0.0
    %3898 = vmatprep.subr.mxu0 0.0
    %3899 = vmatpush1.msra.mxu0 0.0
    %3900 = vmatprep.subr.mxu0 0.0
    %3901 = vmatpush1.msra.mxu0 0.0
    %3902 = vmatprep.subr.mxu0 0.0
    %3903 = vmatpush1.msra.mxu0 0.0
    %3904 = vmatprep.subr.mxu0 0.0
    %3905 = vmatpush1.msra.mxu0 0.0
    %3906 = vmatprep.subr.mxu0 0.0
    %3907 = vmatpush1.msra.mxu0 0.0
    %3908 = vmatprep.subr.mxu0 0.0
    %3909 = vmatpush1.msra.mxu0 0.0
    %3910 = vmatprep.subr.mxu0 0.0
    %3911 = vmatpush1.msra.mxu0 0.0
    %3912 = vmatprep.subr.mxu0 0.0
    %3913 = vmatpush1.msra.mxu0 0.0
    %3914 = vmatprep.subr.mxu0 0.0
    %3915 = vmatpush1.msra.mxu0 0.0
    %3916 = vmatprep.subr.mxu0 0.0
    %3917 = vmatpush1.msra.mxu0 0.0
    %3918 = vmatprep.subr.mxu0 0.0
    %3919 = vmatpush1.msra.mxu0 0.0
    %3920 = vmatprep.subr.mxu0 0.0
    %3921 = vmatpush1.msra.mxu0 0.0
    %3922 = vmatprep.subr.mxu0 0.0
    %3923 = vmatpush1.msra.mxu0 0.0
    %3924 = vmatprep.subr.mxu0 0.0
    %3925 = vmatpush1.msra.mxu0 0.0
    %3926 = vmatprep.subr.mxu0 0.0
    %3927 = vmatpush1.msra.mxu0 0.0
    %3928 = vmatprep.subr.mxu0 0.0
    %3929 = vmatpush1.msra.mxu0 0.0
    %3930 = vmatprep.subr.mxu0 0.0
    %3931 = vmatpush1.msra.mxu0 0.0
    %3932 = vmatprep.subr.mxu0 0.0
    %3933 = vmatpush1.msra.mxu0 0.0
    %3934 = vmatprep.subr.mxu0 0.0
    %3935 = vmatpush1.msra.mxu0 0.0
    %3936 = vmatprep.subr.mxu0 0.0
    %3937 = vmatpush1.msra.mxu0 0.0
    %3938 = vmatprep.subr.mxu0 0.0
    %3939 = vmatpush1.msra.mxu0 0.0
    %3940 = vmatprep.subr.mxu0 0.0
    %3941 = vmatpush1.msra.mxu0 0.0
    %3942 = vmatprep.subr.mxu0 0.0
    %3943 = vmatpush1.msra.mxu0 0.0
    %3944 = vmatprep.mubr.f32.mxu0 0.0
    %3945 = vmatmul.mubr.f32.gmra.mrb[0].mxu0 %v3807
    %v3946 = vpop.f32.mrb[0].mxu0
    %v3947 = vadd.f32 0.0, %v3946
    %v3948 = vpop.f32.mrb[0].mxu0
    %v3949 = vadd.f32 0.0, %v3948
    %3950 = vdwg.mxu0
    %v3951 = vadd.f32 %v3694, %v3876
    %v3952 = vadd.f32 %v3696, %v3878
    %v3953 = vadd.f32 %v3765, %v3947
    %v3954 = vadd.f32 %v3767, %v3949
    %s3955 = scalar_lea.vmem [#allocation4], 24
    %v3956 = vld [vmem:[%s3955] sm:$0xff]
    %3957 = vrot.lane.b32.xlu0 %v3392, 18
    %v3958 = vpop.permute.xlu0 %3957
    %3959 = vrot.lane.b32.xlu0 %v3396, 18
    %v3960 = vpop.permute.xlu0 %3959
    %3963 = vrot.lane.b32.xlu0 %v3389, 18
    %v3964 = vpop.permute.xlu0 %3963
    %3965 = vrot.lane.b32.xlu0 %v3390, 18
    %v3966 = vpop.permute.xlu0 %3965
    %3967 = vrot.lane.b32.xlu0 %v3391, 18
    %v3968 = vpop.permute.xlu0 %3967
    %3969 = vrot.lane.b32.xlu0 %v3393, 18
    %v3970 = vpop.permute.xlu0 %3969
    %3971 = vrot.lane.b32.xlu0 %v3394, 18
    %v3972 = vpop.permute.xlu0 %3971
    %3973 = vrot.lane.b32.xlu0 %v3395, 18
    %v3974 = vpop.permute.xlu0 %3973
    %vm3975 = vcmask 146432
    %v3976 = vsel %vm3975, %v3964, %v3966
    %v3977 = vsel %vm3975, %v3966, %v3968
    %v3978 = vsel %vm3975, %v3968, %v3958
    %v3979 = vsel %vm3975, %v3970, %v3972
    %v3980 = vsel %vm3975, %v3972, %v3974
    %v3981 = vsel %vm3975, %v3974, %v3960
    %v3990 = vsel %vm3975, %v3958, %v3964
    %v3991 = vsel %vm3975, %v3960, %v3970
    %v3993 = vsel %vm3478, %v3956, 0
    %3995 = vmatprep.subr.mxu0 %v3976
    %3996 = vmatpush1.msra.mxu0 %v3990
    %3997 = vmatprep.subr.mxu0 %v3979
    %3998 = vmatpush1.msra.mxu0 %v3991
    %3999 = vmatprep.subr.mxu0 0.0
    %4000 = vmatpush1.msra.mxu0 0.0
    %4001 = vmatprep.subr.mxu0 0.0
    %4002 = vmatpush1.msra.mxu0 0.0
    %4003 = vmatprep.subr.mxu0 0.0
    %4004 = vmatpush1.msra.mxu0 0.0
    %4005 = vmatprep.subr.mxu0 0.0
    %4006 = vmatpush1.msra.mxu0 0.0
    %4007 = vmatprep.subr.mxu0 0.0
    %4008 = vmatpush1.msra.mxu0 0.0
    %4009 = vmatprep.subr.mxu0 0.0
    %4010 = vmatpush1.msra.mxu0 0.0
    %4011 = vmatprep.subr.mxu0 0.0
    %4012 = vmatpush1.msra.mxu0 0.0
    %4013 = vmatprep.subr.mxu0 0.0
    %4014 = vmatpush1.msra.mxu0 0.0
    %4015 = vmatprep.subr.mxu0 0.0
    %4016 = vmatpush1.msra.mxu0 0.0
    %4017 = vmatprep.subr.mxu0 0.0
    %4018 = vmatpush1.msra.mxu0 0.0
    %4019 = vmatprep.subr.mxu0 0.0
    %4020 = vmatpush1.msra.mxu0 0.0
    %4021 = vmatprep.subr.mxu0 0.0
    %4022 = vmatpush1.msra.mxu0 0.0
    %4023 = vmatprep.subr.mxu0 0.0
    %4024 = vmatpush1.msra.mxu0 0.0
    %4025 = vmatprep.subr.mxu0 0.0
    %4026 = vmatpush1.msra.mxu0 0.0
    %4027 = vmatprep.subr.mxu0 0.0
    %4028 = vmatpush1.msra.mxu0 0.0
    %4029 = vmatprep.subr.mxu0 0.0
    %4030 = vmatpush1.msra.mxu0 0.0
    %4031 = vmatprep.subr.mxu0 0.0
    %4032 = vmatpush1.msra.mxu0 0.0
    %4033 = vmatprep.subr.mxu0 0.0
    %4034 = vmatpush1.msra.mxu0 0.0
    %4035 = vmatprep.subr.mxu0 0.0
    %4036 = vmatpush1.msra.mxu0 0.0
    %4037 = vmatprep.subr.mxu0 0.0
    %4038 = vmatpush1.msra.mxu0 0.0
    %4039 = vmatprep.subr.mxu0 0.0
    %4040 = vmatpush1.msra.mxu0 0.0
    %4041 = vmatprep.subr.mxu0 0.0
    %4042 = vmatpush1.msra.mxu0 0.0
    %4043 = vmatprep.subr.mxu0 0.0
    %4044 = vmatpush1.msra.mxu0 0.0
    %4045 = vmatprep.subr.mxu0 0.0
    %4046 = vmatpush1.msra.mxu0 0.0
    %4047 = vmatprep.subr.mxu0 0.0
    %4048 = vmatpush1.msra.mxu0 0.0
    %4049 = vmatprep.subr.mxu0 0.0
    %4050 = vmatpush1.msra.mxu0 0.0
    %4051 = vmatprep.subr.mxu0 0.0
    %4052 = vmatpush1.msra.mxu0 0.0
    %4053 = vmatprep.subr.mxu0 0.0
    %4054 = vmatpush1.msra.mxu0 0.0
    %4055 = vmatprep.subr.mxu0 0.0
    %4056 = vmatpush1.msra.mxu0 0.0
    %4057 = vmatprep.subr.mxu0 0.0
    %4058 = vmatpush1.msra.mxu0 0.0
    %4059 = vmatprep.mubr.f32.mxu0 0.0
    %4060 = vmatmul.mubr.f32.gmra.mrb[0].mxu0 %v3993
    %v4061 = vpop.f32.mrb[0].mxu0
    %v4062 = vadd.f32 0.0, %v4061
    %v4063 = vpop.f32.mrb[0].mxu0
    %v4064 = vadd.f32 0.0, %v4063
    %4065 = vdwg.mxu0
    %4066 = vmatprep.subr.mxu0 %v3978
    %4067 = vmatpush1.msra.mxu0 %v3977
    %4068 = vmatprep.subr.mxu0 %v3981
    %4069 = vmatpush1.msra.mxu0 %v3980
    %4070 = vmatprep.subr.mxu0 0.0
    %4071 = vmatpush1.msra.mxu0 0.0
    %4072 = vmatprep.subr.mxu0 0.0
    %4073 = vmatpush1.msra.mxu0 0.0
    %4074 = vmatprep.subr.mxu0 0.0
    %4075 = vmatpush1.msra.mxu0 0.0
    %4076 = vmatprep.subr.mxu0 0.0
    %4077 = vmatpush1.msra.mxu0 0.0
    %4078 = vmatprep.subr.mxu0 0.0
    %4079 = vmatpush1.msra.mxu0 0.0
    %4080 = vmatprep.subr.mxu0 0.0
    %4081 = vmatpush1.msra.mxu0 0.0
    %4082 = vmatprep.subr.mxu0 0.0
    %4083 = vmatpush1.msra.mxu0 0.0
    %4084 = vmatprep.subr.mxu0 0.0
    %4085 = vmatpush1.msra.mxu0 0.0
    %4086 = vmatprep.subr.mxu0 0.0
    %4087 = vmatpush1.msra.mxu0 0.0
    %4088 = vmatprep.subr.mxu0 0.0
    %4089 = vmatpush1.msra.mxu0 0.0
    %4090 = vmatprep.subr.mxu0 0.0
    %4091 = vmatpush1.msra.mxu0 0.0
    %4092 = vmatprep.subr.mxu0 0.0
    %4093 = vmatpush1.msra.mxu0 0.0
    %4094 = vmatprep.subr.mxu0 0.0
    %4095 = vmatpush1.msra.mxu0 0.0
    %4096 = vmatprep.subr.mxu0 0.0
    %4097 = vmatpush1.msra.mxu0 0.0
    %4098 = vmatprep.subr.mxu0 0.0
    %4099 = vmatpush1.msra.mxu0 0.0
    %4100 = vmatprep.subr.mxu0 0.0
    %4101 = vmatpush1.msra.mxu0 0.0
    %4102 = vmatprep.subr.mxu0 0.0
    %4103 = vmatpush1.msra.mxu0 0.0
    %4104 = vmatprep.subr.mxu0 0.0
    %4105 = vmatpush1.msra.mxu0 0.0
    %4106 = vmatprep.subr.mxu0 0.0
    %4107 = vmatpush1.msra.mxu0 0.0
    %4108 = vmatprep.subr.mxu0 0.0
    %4109 = vmatpush1.msra.mxu0 0.0
    %4110 = vmatprep.subr.mxu0 0.0
    %4111 = vmatpush1.msra.mxu0 0.0
    %4112 = vmatprep.subr.mxu0 0.0
    %4113 = vmatpush1.msra.mxu0 0.0
    %4114 = vmatprep.subr.mxu0 0.0
    %4115 = vmatpush1.msra.mxu0 0.0
    %4116 = vmatprep.subr.mxu0 0.0
    %4117 = vmatpush1.msra.mxu0 0.0
    %4118 = vmatprep.subr.mxu0 0.0
    %4119 = vmatpush1.msra.mxu0 0.0
    %4120 = vmatprep.subr.mxu0 0.0
    %4121 = vmatpush1.msra.mxu0 0.0
    %4122 = vmatprep.subr.mxu0 0.0
    %4123 = vmatpush1.msra.mxu0 0.0
    %4124 = vmatprep.subr.mxu0 0.0
    %4125 = vmatpush1.msra.mxu0 0.0
    %4126 = vmatprep.subr.mxu0 0.0
    %4127 = vmatpush1.msra.mxu0 0.0
    %4128 = vmatprep.subr.mxu0 0.0
    %4129 = vmatpush1.msra.mxu0 0.0
    %4130 = vmatprep.mubr.f32.mxu0 0.0
    %4131 = vmatmul.mubr.f32.gmra.mrb[0].mxu0 %v3993
    %v4132 = vpop.f32.mrb[0].mxu0
    %v4133 = vadd.f32 0.0, %v4132
    %v4134 = vpop.f32.mrb[0].mxu0
    %v4135 = vadd.f32 0.0, %v4134
    %4136 = vdwg.mxu0
    %v4137 = vadd.f32 %v3951, %v4062
    %v4138 = vadd.f32 %v3952, %v4064
    %v4139 = vadd.f32 %v3953, %v4133
    %v4140 = vadd.f32 %v3954, %v4135
    %s4141 = scalar_lea.vmem [#allocation4], 32
    %v4142 = vld [vmem:[%s4141] sm:$0xff]
    %4143 = vrot.lane.b32.xlu0 %v3392, 17
    %v4144 = vpop.permute.xlu0 %4143
    %4145 = vrot.lane.b32.xlu0 %v3396, 17
    %v4146 = vpop.permute.xlu0 %4145
    %4149 = vrot.lane.b32.xlu0 %v3389, 17
    %v4150 = vpop.permute.xlu0 %4149
    %4151 = vrot.lane.b32.xlu0 %v3390, 17
    %v4152 = vpop.permute.xlu0 %4151
    %4153 = vrot.lane.b32.xlu0 %v3391, 17
    %v4154 = vpop.permute.xlu0 %4153
    %4155 = vrot.lane.b32.xlu0 %v3393, 17
    %v4156 = vpop.permute.xlu0 %4155
    %4157 = vrot.lane.b32.xlu0 %v3394, 17
    %v4158 = vpop.permute.xlu0 %4157
    %4159 = vrot.lane.b32.xlu0 %v3395, 17
    %v4160 = vpop.permute.xlu0 %4159
    %vm4161 = vcmask 138240
    %v4162 = vsel %vm4161, %v4150, %v4152
    %v4163 = vsel %vm4161, %v4152, %v4154
    %v4164 = vsel %vm4161, %v4154, %v4144
    %v4165 = vsel %vm4161, %v4156, %v4158
    %v4166 = vsel %vm4161, %v4158, %v4160
    %v4167 = vsel %vm4161, %v4160, %v4146
    %v4176 = vsel %vm4161, %v4144, %v4150
    %v4177 = vsel %vm4161, %v4146, %v4156
    %v4179 = vsel %vm3478, %v4142, 0
    %4181 = vmatprep.subr.mxu0 %v4162
    %4182 = vmatpush1.msra.mxu0 %v4176
    %4183 = vmatprep.subr.mxu0 %v4165
    %4184 = vmatpush1.msra.mxu0 %v4177
    %4185 = vmatprep.subr.mxu0 0.0
    %4186 = vmatpush1.msra.mxu0 0.0
    %4187 = vmatprep.subr.mxu0 0.0
    %4188 = vmatpush1.msra.mxu0 0.0
    %4189 = vmatprep.subr.mxu0 0.0
    %4190 = vmatpush1.msra.mxu0 0.0
    %4191 = vmatprep.subr.mxu0 0.0
    %4192 = vmatpush1.msra.mxu0 0.0
    %4193 = vmatprep.subr.mxu0 0.0
    %4194 = vmatpush1.msra.mxu0 0.0
    %4195 = vmatprep.subr.mxu0 0.0
    %4196 = vmatpush1.msra.mxu0 0.0
    %4197 = vmatprep.subr.mxu0 0.0
    %4198 = vmatpush1.msra.mxu0 0.0
    %4199 = vmatprep.subr.mxu0 0.0
    %4200 = vmatpush1.msra.mxu0 0.0
    %4201 = vmatprep.subr.mxu0 0.0
    %4202 = vmatpush1.msra.mxu0 0.0
    %4203 = vmatprep.subr.mxu0 0.0
    %4204 = vmatpush1.msra.mxu0 0.0
    %4205 = vmatprep.subr.mxu0 0.0
    %4206 = vmatpush1.msra.mxu0 0.0
    %4207 = vmatprep.subr.mxu0 0.0
    %4208 = vmatpush1.msra.mxu0 0.0
    %4209 = vmatprep.subr.mxu0 0.0
    %4210 = vmatpush1.msra.mxu0 0.0
    %4211 = vmatprep.subr.mxu0 0.0
    %4212 = vmatpush1.msra.mxu0 0.0
    %4213 = vmatprep.subr.mxu0 0.0
    %4214 = vmatpush1.msra.mxu0 0.0
    %4215 = vmatprep.subr.mxu0 0.0
    %4216 = vmatpush1.msra.mxu0 0.0
    %4217 = vmatprep.subr.mxu0 0.0
    %4218 = vmatpush1.msra.mxu0 0.0
    %4219 = vmatprep.subr.mxu0 0.0
    %4220 = vmatpush1.msra.mxu0 0.0
    %4221 = vmatprep.subr.mxu0 0.0
    %4222 = vmatpush1.msra.mxu0 0.0
    %4223 = vmatprep.subr.mxu0 0.0
    %4224 = vmatpush1.msra.mxu0 0.0
    %4225 = vmatprep.subr.mxu0 0.0
    %4226 = vmatpush1.msra.mxu0 0.0
    %4227 = vmatprep.subr.mxu0 0.0
    %4228 = vmatpush1.msra.mxu0 0.0
    %4229 = vmatprep.subr.mxu0 0.0
    %4230 = vmatpush1.msra.mxu0 0.0
    %4231 = vmatprep.subr.mxu0 0.0
    %4232 = vmatpush1.msra.mxu0 0.0
    %4233 = vmatprep.subr.mxu0 0.0
    %4234 = vmatpush1.msra.mxu0 0.0
    %4235 = vmatprep.subr.mxu0 0.0
    %4236 = vmatpush1.msra.mxu0 0.0
    %4237 = vmatprep.subr.mxu0 0.0
    %4238 = vmatpush1.msra.mxu0 0.0
    %4239 = vmatprep.subr.mxu0 0.0
    %4240 = vmatpush1.msra.mxu0 0.0
    %4241 = vmatprep.subr.mxu0 0.0
    %4242 = vmatpush1.msra.mxu0 0.0
    %4243 = vmatprep.subr.mxu0 0.0
    %4244 = vmatpush1.msra.mxu0 0.0
    %4245 = vmatprep.mubr.f32.mxu0 0.0
    %4246 = vmatmul.mubr.f32.gmra.mrb[0].mxu0 %v4179
    %v4247 = vpop.f32.mrb[0].mxu0
    %v4248 = vadd.f32 0.0, %v4247
    %v4249 = vpop.f32.mrb[0].mxu0
    %v4250 = vadd.f32 0.0, %v4249
    %4251 = vdwg.mxu0
    %4252 = vmatprep.subr.mxu0 %v4164
    %4253 = vmatpush1.msra.mxu0 %v4163
    %4254 = vmatprep.subr.mxu0 %v4167
    %4255 = vmatpush1.msra.mxu0 %v4166
    %4256 = vmatprep.subr.mxu0 0.0
    %4257 = vmatpush1.msra.mxu0 0.0
    %4258 = vmatprep.subr.mxu0 0.0
    %4259 = vmatpush1.msra.mxu0 0.0
    %4260 = vmatprep.subr.mxu0 0.0
    %4261 = vmatpush1.msra.mxu0 0.0
    %4262 = vmatprep.subr.mxu0 0.0
    %4263 = vmatpush1.msra.mxu0 0.0
    %4264 = vmatprep.subr.mxu0 0.0
    %4265 = vmatpush1.msra.mxu0 0.0
    %4266 = vmatprep.subr.mxu0 0.0
    %4267 = vmatpush1.msra.mxu0 0.0
    %4268 = vmatprep.subr.mxu0 0.0
    %4269 = vmatpush1.msra.mxu0 0.0
    %4270 = vmatprep.subr.mxu0 0.0
    %4271 = vmatpush1.msra.mxu0 0.0
    %4272 = vmatprep.subr.mxu0 0.0
    %4273 = vmatpush1.msra.mxu0 0.0
    %4274 = vmatprep.subr.mxu0 0.0
    %4275 = vmatpush1.msra.mxu0 0.0
    %4276 = vmatprep.subr.mxu0 0.0
    %4277 = vmatpush1.msra.mxu0 0.0
    %4278 = vmatprep.subr.mxu0 0.0
    %4279 = vmatpush1.msra.mxu0 0.0
    %4280 = vmatprep.subr.mxu0 0.0
    %4281 = vmatpush1.msra.mxu0 0.0
    %4282 = vmatprep.subr.mxu0 0.0
    %4283 = vmatpush1.msra.mxu0 0.0
    %4284 = vmatprep.subr.mxu0 0.0
    %4285 = vmatpush1.msra.mxu0 0.0
    %4286 = vmatprep.subr.mxu0 0.0
    %4287 = vmatpush1.msra.mxu0 0.0
    %4288 = vmatprep.subr.mxu0 0.0
    %4289 = vmatpush1.msra.mxu0 0.0
    %4290 = vmatprep.subr.mxu0 0.0
    %4291 = vmatpush1.msra.mxu0 0.0
    %4292 = vmatprep.subr.mxu0 0.0
    %4293 = vmatpush1.msra.mxu0 0.0
    %4294 = vmatprep.subr.mxu0 0.0
    %4295 = vmatpush1.msra.mxu0 0.0
    %4296 = vmatprep.subr.mxu0 0.0
    %4297 = vmatpush1.msra.mxu0 0.0
    %4298 = vmatprep.subr.mxu0 0.0
    %4299 = vmatpush1.msra.mxu0 0.0
    %4300 = vmatprep.subr.mxu0 0.0
    %4301 = vmatpush1.msra.mxu0 0.0
    %4302 = vmatprep.subr.mxu0 0.0
    %4303 = vmatpush1.msra.mxu0 0.0
    %4304 = vmatprep.subr.mxu0 0.0
    %4305 = vmatpush1.msra.mxu0 0.0
    %4306 = vmatprep.subr.mxu0 0.0
    %4307 = vmatpush1.msra.mxu0 0.0
    %4308 = vmatprep.subr.mxu0 0.0
    %4309 = vmatpush1.msra.mxu0 0.0
    %4310 = vmatprep.subr.mxu0 0.0
    %4311 = vmatpush1.msra.mxu0 0.0
    %4312 = vmatprep.subr.mxu0 0.0
    %4313 = vmatpush1.msra.mxu0 0.0
    %4314 = vmatprep.subr.mxu0 0.0
    %4315 = vmatpush1.msra.mxu0 0.0
    %4316 = vmatprep.mubr.f32.mxu0 0.0
    %4317 = vmatmul.mubr.f32.gmra.mrb[0].mxu0 %v4179
    %v4318 = vpop.f32.mrb[0].mxu0
    %v4319 = vadd.f32 0.0, %v4318
    %v4320 = vpop.f32.mrb[0].mxu0
    %v4321 = vadd.f32 0.0, %v4320
    %4322 = vdwg.mxu0
    %v4323 = vadd.f32 %v4137, %v4248
    %v4324 = vadd.f32 %v4138, %v4250
    %v4325 = vadd.f32 %v4139, %v4319
    %v4326 = vadd.f32 %v4140, %v4321
    %s4327 = scalar_lea.vmem [#allocation4], 40
    %v4328 = vld [vmem:[%s4327] sm:$0xff]
    %4329 = vrot.lane.b32.xlu0 %v3392, 16
    %v4330 = vpop.permute.xlu0 %4329
    %4331 = vrot.lane.b32.xlu0 %v3396, 16
    %v4332 = vpop.permute.xlu0 %4331
    %4335 = vrot.lane.b32.xlu0 %v3389, 16
    %v4336 = vpop.permute.xlu0 %4335
    %4337 = vrot.lane.b32.xlu0 %v3390, 16
    %v4338 = vpop.permute.xlu0 %4337
    %4339 = vrot.lane.b32.xlu0 %v3391, 16
    %v4340 = vpop.permute.xlu0 %4339
    %4341 = vrot.lane.b32.xlu0 %v3393, 16
    %v4342 = vpop.permute.xlu0 %4341
    %4343 = vrot.lane.b32.xlu0 %v3394, 16
    %v4344 = vpop.permute.xlu0 %4343
    %4345 = vrot.lane.b32.xlu0 %v3395, 16
    %v4346 = vpop.permute.xlu0 %4345
    %v4347 = vsel %vm3478, %v4336, %v4338
    %v4348 = vsel %vm3478, %v4338, %v4340
    %v4349 = vsel %vm3478, %v4340, %v4330
    %v4350 = vsel %vm3478, %v4342, %v4344
    %v4351 = vsel %vm3478, %v4344, %v4346
    %v4352 = vsel %vm3478, %v4346, %v4332
    %v4361 = vsel %vm3478, %v4330, %v4336
    %v4362 = vsel %vm3478, %v4332, %v4342
    %v4364 = vsel %vm3478, %v4328, 0
    %4366 = vmatprep.subr.mxu0 %v4347
    %4367 = vmatpush1.msra.mxu0 %v4361
    %4368 = vmatprep.subr.mxu0 %v4350
    %4369 = vmatpush1.msra.mxu0 %v4362
    %4370 = vmatprep.subr.mxu0 0.0
    %4371 = vmatpush1.msra.mxu0 0.0
    %4372 = vmatprep.subr.mxu0 0.0
    %4373 = vmatpush1.msra.mxu0 0.0
    %4374 = vmatprep.subr.mxu0 0.0
    %4375 = vmatpush1.msra.mxu0 0.0
    %4376 = vmatprep.subr.mxu0 0.0
    %4377 = vmatpush1.msra.mxu0 0.0
    %4378 = vmatprep.subr.mxu0 0.0
    %4379 = vmatpush1.msra.mxu0 0.0
    %4380 = vmatprep.subr.mxu0 0.0
    %4381 = vmatpush1.msra.mxu0 0.0
    %4382 = vmatprep.subr.mxu0 0.0
    %4383 = vmatpush1.msra.mxu0 0.0
    %4384 = vmatprep.subr.mxu0 0.0
    %4385 = vmatpush1.msra.mxu0 0.0
    %4386 = vmatprep.subr.mxu0 0.0
    %4387 = vmatpush1.msra.mxu0 0.0
    %4388 = vmatprep.subr.mxu0 0.0
    %4389 = vmatpush1.msra.mxu0 0.0
    %4390 = vmatprep.subr.mxu0 0.0
    %4391 = vmatpush1.msra.mxu0 0.0
    %4392 = vmatprep.subr.mxu0 0.0
    %4393 = vmatpush1.msra.mxu0 0.0
    %4394 = vmatprep.subr.mxu0 0.0
    %4395 = vmatpush1.msra.mxu0 0.0
    %4396 = vmatprep.subr.mxu0 0.0
    %4397 = vmatpush1.msra.mxu0 0.0
    %4398 = vmatprep.subr.mxu0 0.0
    %4399 = vmatpush1.msra.mxu0 0.0
    %4400 = vmatprep.subr.mxu0 0.0
    %4401 = vmatpush1.msra.mxu0 0.0
    %4402 = vmatprep.subr.mxu0 0.0
    %4403 = vmatpush1.msra.mxu0 0.0
    %4404 = vmatprep.subr.mxu0 0.0
    %4405 = vmatpush1.msra.mxu0 0.0
    %4406 = vmatprep.subr.mxu0 0.0
    %4407 = vmatpush1.msra.mxu0 0.0
    %4408 = vmatprep.subr.mxu0 0.0
    %4409 = vmatpush1.msra.mxu0 0.0
    %4410 = vmatprep.subr.mxu0 0.0
    %4411 = vmatpush1.msra.mxu0 0.0
    %4412 = vmatprep.subr.mxu0 0.0
    %4413 = vmatpush1.msra.mxu0 0.0
    %4414 = vmatprep.subr.mxu0 0.0
    %4415 = vmatpush1.msra.mxu0 0.0
    %4416 = vmatprep.subr.mxu0 0.0
    %4417 = vmatpush1.msra.mxu0 0.0
    %4418 = vmatprep.subr.mxu0 0.0
    %4419 = vmatpush1.msra.mxu0 0.0
    %4420 = vmatprep.subr.mxu0 0.0
    %4421 = vmatpush1.msra.mxu0 0.0
    %4422 = vmatprep.subr.mxu0 0.0
    %4423 = vmatpush1.msra.mxu0 0.0
    %4424 = vmatprep.subr.mxu0 0.0
    %4425 = vmatpush1.msra.mxu0 0.0
    %4426 = vmatprep.subr.mxu0 0.0
    %4427 = vmatpush1.msra.mxu0 0.0
    %4428 = vmatprep.subr.mxu0 0.0
    %4429 = vmatpush1.msra.mxu0 0.0
    %4430 = vmatprep.mubr.f32.mxu0 0.0
    %4431 = vmatmul.mubr.f32.gmra.mrb[0].mxu0 %v4364
    %v4432 = vpop.f32.mrb[0].mxu0
    %v4433 = vadd.f32 0.0, %v4432
    %v4434 = vpop.f32.mrb[0].mxu0
    %v4435 = vadd.f32 0.0, %v4434
    %4436 = vdwg.mxu0
    %4437 = vmatprep.subr.mxu0 %v4349
    %4438 = vmatpush1.msra.mxu0 %v4348
    %4439 = vmatprep.subr.mxu0 %v4352
    %4440 = vmatpush1.msra.mxu0 %v4351
    %4441 = vmatprep.subr.mxu0 0.0
    %4442 = vmatpush1.msra.mxu0 0.0
    %4443 = vmatprep.subr.mxu0 0.0
    %4444 = vmatpush1.msra.mxu0 0.0
    %4445 = vmatprep.subr.mxu0 0.0
    %4446 = vmatpush1.msra.mxu0 0.0
    %4447 = vmatprep.subr.mxu0 0.0
    %4448 = vmatpush1.msra.mxu0 0.0
    %4449 = vmatprep.subr.mxu0 0.0
    %4450 = vmatpush1.msra.mxu0 0.0
    %4451 = vmatprep.subr.mxu0 0.0
    %4452 = vmatpush1.msra.mxu0 0.0
    %4453 = vmatprep.subr.mxu0 0.0
    %4454 = vmatpush1.msra.mxu0 0.0
    %4455 = vmatprep.subr.mxu0 0.0
    %4456 = vmatpush1.msra.mxu0 0.0
    %4457 = vmatprep.subr.mxu0 0.0
    %4458 = vmatpush1.msra.mxu0 0.0
    %4459 = vmatprep.subr.mxu0 0.0
    %4460 = vmatpush1.msra.mxu0 0.0
    %4461 = vmatprep.subr.mxu0 0.0
    %4462 = vmatpush1.msra.mxu0 0.0
    %4463 = vmatprep.subr.mxu0 0.0
    %4464 = vmatpush1.msra.mxu0 0.0
    %4465 = vmatprep.subr.mxu0 0.0
    %4466 = vmatpush1.msra.mxu0 0.0
    %4467 = vmatprep.subr.mxu0 0.0
    %4468 = vmatpush1.msra.mxu0 0.0
    %4469 = vmatprep.subr.mxu0 0.0
    %4470 = vmatpush1.msra.mxu0 0.0
    %4471 = vmatprep.subr.mxu0 0.0
    %4472 = vmatpush1.msra.mxu0 0.0
    %4473 = vmatprep.subr.mxu0 0.0
    %4474 = vmatpush1.msra.mxu0 0.0
    %4475 = vmatprep.subr.mxu0 0.0
    %4476 = vmatpush1.msra.mxu0 0.0
    %4477 = vmatprep.subr.mxu0 0.0
    %4478 = vmatpush1.msra.mxu0 0.0
    %4479 = vmatprep.subr.mxu0 0.0
    %4480 = vmatpush1.msra.mxu0 0.0
    %4481 = vmatprep.subr.mxu0 0.0
    %4482 = vmatpush1.msra.mxu0 0.0
    %4483 = vmatprep.subr.mxu0 0.0
    %4484 = vmatpush1.msra.mxu0 0.0
    %4485 = vmatprep.subr.mxu0 0.0
    %4486 = vmatpush1.msra.mxu0 0.0
    %4487 = vmatprep.subr.mxu0 0.0
    %4488 = vmatpush1.msra.mxu0 0.0
    %4489 = vmatprep.subr.mxu0 0.0
    %4490 = vmatpush1.msra.mxu0 0.0
    %4491 = vmatprep.subr.mxu0 0.0
    %4492 = vmatpush1.msra.mxu0 0.0
    %4493 = vmatprep.subr.mxu0 0.0
    %4494 = vmatpush1.msra.mxu0 0.0
    %4495 = vmatprep.subr.mxu0 0.0
    %4496 = vmatpush1.msra.mxu0 0.0
    %4497 = vmatprep.subr.mxu0 0.0
    %4498 = vmatpush1.msra.mxu0 0.0
    %4499 = vmatprep.subr.mxu0 0.0
    %4500 = vmatpush1.msra.mxu0 0.0
    %4501 = vmatprep.mubr.f32.mxu0 0.0
    %4502 = vmatmul.mubr.f32.gmra.mrb[0].mxu0 %v4364
    %v4503 = vpop.f32.mrb[0].mxu0
    %v4504 = vadd.f32 0.0, %v4503
    %v4505 = vpop.f32.mrb[0].mxu0
    %v4506 = vadd.f32 0.0, %v4505
    %4507 = vdwg.mxu0
    %v4508 = vadd.f32 %v4323, %v4433
    %v4509 = vadd.f32 %v4324, %v4435
    %v4510 = vadd.f32 %v4325, %v4504
    %v4511 = vadd.f32 %v4326, %v4506
    %s4512 = scalar_lea.vmem [#allocation4], 48
    %v4513 = vld [vmem:[%s4512] sm:$0xff]
    %4514 = vrot.lane.b32.xlu0 %v3392, 2
    %v4515 = vpop.permute.xlu0 %4514
    %4516 = vrot.lane.b32.xlu0 %v3396, 2
    %v4517 = vpop.permute.xlu0 %4516
    %4520 = vrot.lane.b32.xlu0 %v3389, 2
    %v4521 = vpop.permute.xlu0 %4520
    %4522 = vrot.lane.b32.xlu0 %v3390, 2
    %v4523 = vpop.permute.xlu0 %4522
    %4524 = vrot.lane.b32.xlu0 %v3391, 2
    %v4525 = vpop.permute.xlu0 %4524
    %4526 = vrot.lane.b32.xlu0 %v3393, 2
    %v4527 = vpop.permute.xlu0 %4526
    %4528 = vrot.lane.b32.xlu0 %v3394, 2
    %v4529 = vpop.permute.xlu0 %4528
    %4530 = vrot.lane.b32.xlu0 %v3395, 2
    %v4531 = vpop.permute.xlu0 %4530
    %vm4532 = vcmask 15360
    %v4533 = vsel %vm4532, %v4521, %v4523
    %v4534 = vsel %vm4532, %v4523, %v4525
    %v4535 = vsel %vm4532, %v4525, %v4515
    %v4536 = vsel %vm4532, %v4527, %v4529
    %v4537 = vsel %vm4532, %v4529, %v4531
    %v4538 = vsel %vm4532, %v4531, %v4517
    %v4547 = vsel %vm4532, %v4515, %v4521
    %v4548 = vsel %vm4532, %v4517, %v4527
    %v4550 = vsel %vm3478, %v4513, 0
    %4552 = vmatprep.subr.mxu0 %v4533
    %4553 = vmatpush1.msra.mxu0 %v4547
    %4554 = vmatprep.subr.mxu0 %v4536
    %4555 = vmatpush1.msra.mxu0 %v4548
    %4556 = vmatprep.subr.mxu0 0.0
    %4557 = vmatpush1.msra.mxu0 0.0
    %4558 = vmatprep.subr.mxu0 0.0
    %4559 = vmatpush1.msra.mxu0 0.0
    %4560 = vmatprep.subr.mxu0 0.0
    %4561 = vmatpush1.msra.mxu0 0.0
    %4562 = vmatprep.subr.mxu0 0.0
    %4563 = vmatpush1.msra.mxu0 0.0
    %4564 = vmatprep.subr.mxu0 0.0
    %4565 = vmatpush1.msra.mxu0 0.0
    %4566 = vmatprep.subr.mxu0 0.0
    %4567 = vmatpush1.msra.mxu0 0.0
    %4568 = vmatprep.subr.mxu0 0.0
    %4569 = vmatpush1.msra.mxu0 0.0
    %4570 = vmatprep.subr.mxu0 0.0
    %4571 = vmatpush1.msra.mxu0 0.0
    %4572 = vmatprep.subr.mxu0 0.0
    %4573 = vmatpush1.msra.mxu0 0.0
    %4574 = vmatprep.subr.mxu0 0.0
    %4575 = vmatpush1.msra.mxu0 0.0
    %4576 = vmatprep.subr.mxu0 0.0
    %4577 = vmatpush1.msra.mxu0 0.0
    %4578 = vmatprep.subr.mxu0 0.0
    %4579 = vmatpush1.msra.mxu0 0.0
    %4580 = vmatprep.subr.mxu0 0.0
    %4581 = vmatpush1.msra.mxu0 0.0
    %4582 = vmatprep.subr.mxu0 0.0
    %4583 = vmatpush1.msra.mxu0 0.0
    %4584 = vmatprep.subr.mxu0 0.0
    %4585 = vmatpush1.msra.mxu0 0.0
    %4586 = vmatprep.subr.mxu0 0.0
    %4587 = vmatpush1.msra.mxu0 0.0
    %4588 = vmatprep.subr.mxu0 0.0
    %4589 = vmatpush1.msra.mxu0 0.0
    %4590 = vmatprep.subr.mxu0 0.0
    %4591 = vmatpush1.msra.mxu0 0.0
    %4592 = vmatprep.subr.mxu0 0.0
    %4593 = vmatpush1.msra.mxu0 0.0
    %4594 = vmatprep.subr.mxu0 0.0
    %4595 = vmatpush1.msra.mxu0 0.0
    %4596 = vmatprep.subr.mxu0 0.0
    %4597 = vmatpush1.msra.mxu0 0.0
    %4598 = vmatprep.subr.mxu0 0.0
    %4599 = vmatpush1.msra.mxu0 0.0
    %4600 = vmatprep.subr.mxu0 0.0
    %4601 = vmatpush1.msra.mxu0 0.0
    %4602 = vmatprep.subr.mxu0 0.0
    %4603 = vmatpush1.msra.mxu0 0.0
    %4604 = vmatprep.subr.mxu0 0.0
    %4605 = vmatpush1.msra.mxu0 0.0
    %4606 = vmatprep.subr.mxu0 0.0
    %4607 = vmatpush1.msra.mxu0 0.0
    %4608 = vmatprep.subr.mxu0 0.0
    %4609 = vmatpush1.msra.mxu0 0.0
    %4610 = vmatprep.subr.mxu0 0.0
    %4611 = vmatpush1.msra.mxu0 0.0
    %4612 = vmatprep.subr.mxu0 0.0
    %4613 = vmatpush1.msra.mxu0 0.0
    %4614 = vmatprep.subr.mxu0 0.0
    %4615 = vmatpush1.msra.mxu0 0.0
    %4616 = vmatprep.mubr.f32.mxu0 0.0
    %4617 = vmatmul.mubr.f32.gmra.mrb[0].mxu0 %v4550
    %v4618 = vpop.f32.mrb[0].mxu0
    %v4619 = vadd.f32 0.0, %v4618
    %v4620 = vpop.f32.mrb[0].mxu0
    %v4621 = vadd.f32 0.0, %v4620
    %4622 = vdwg.mxu0
    %4623 = vmatprep.subr.mxu0 %v4535
    %4624 = vmatpush1.msra.mxu0 %v4534
    %4625 = vmatprep.subr.mxu0 %v4538
    %4626 = vmatpush1.msra.mxu0 %v4537
    %4627 = vmatprep.subr.mxu0 0.0
    %4628 = vmatpush1.msra.mxu0 0.0
    %4629 = vmatprep.subr.mxu0 0.0
    %4630 = vmatpush1.msra.mxu0 0.0
    %4631 = vmatprep.subr.mxu0 0.0
    %4632 = vmatpush1.msra.mxu0 0.0
    %4633 = vmatprep.subr.mxu0 0.0
    %4634 = vmatpush1.msra.mxu0 0.0
    %4635 = vmatprep.subr.mxu0 0.0
    %4636 = vmatpush1.msra.mxu0 0.0
    %4637 = vmatprep.subr.mxu0 0.0
    %4638 = vmatpush1.msra.mxu0 0.0
    %4639 = vmatprep.subr.mxu0 0.0
    %4640 = vmatpush1.msra.mxu0 0.0
    %4641 = vmatprep.subr.mxu0 0.0
    %4642 = vmatpush1.msra.mxu0 0.0
    %4643 = vmatprep.subr.mxu0 0.0
    %4644 = vmatpush1.msra.mxu0 0.0
    %4645 = vmatprep.subr.mxu0 0.0
    %4646 = vmatpush1.msra.mxu0 0.0
    %4647 = vmatprep.subr.mxu0 0.0
    %4648 = vmatpush1.msra.mxu0 0.0
    %4649 = vmatprep.subr.mxu0 0.0
    %4650 = vmatpush1.msra.mxu0 0.0
    %4651 = vmatprep.subr.mxu0 0.0
    %4652 = vmatpush1.msra.mxu0 0.0
    %4653 = vmatprep.subr.mxu0 0.0
    %4654 = vmatpush1.msra.mxu0 0.0
    %4655 = vmatprep.subr.mxu0 0.0
    %4656 = vmatpush1.msra.mxu0 0.0
    %4657 = vmatprep.subr.mxu0 0.0
    %4658 = vmatpush1.msra.mxu0 0.0
    %4659 = vmatprep.subr.mxu0 0.0
    %4660 = vmatpush1.msra.mxu0 0.0
    %4661 = vmatprep.subr.mxu0 0.0
    %4662 = vmatpush1.msra.mxu0 0.0
    %4663 = vmatprep.subr.mxu0 0.0
    %4664 = vmatpush1.msra.mxu0 0.0
    %4665 = vmatprep.subr.mxu0 0.0
    %4666 = vmatpush1.msra.mxu0 0.0
    %4667 = vmatprep.subr.mxu0 0.0
    %4668 = vmatpush1.msra.mxu0 0.0
    %4669 = vmatprep.subr.mxu0 0.0
    %4670 = vmatpush1.msra.mxu0 0.0
    %4671 = vmatprep.subr.mxu0 0.0
    %4672 = vmatpush1.msra.mxu0 0.0
    %4673 = vmatprep.subr.mxu0 0.0
    %4674 = vmatpush1.msra.mxu0 0.0
    %4675 = vmatprep.subr.mxu0 0.0
    %4676 = vmatpush1.msra.mxu0 0.0
    %4677 = vmatprep.subr.mxu0 0.0
    %4678 = vmatpush1.msra.mxu0 0.0
    %4679 = vmatprep.subr.mxu0 0.0
    %4680 = vmatpush1.msra.mxu0 0.0
    %4681 = vmatprep.subr.mxu0 0.0
    %4682 = vmatpush1.msra.mxu0 0.0
    %4683 = vmatprep.subr.mxu0 0.0
    %4684 = vmatpush1.msra.mxu0 0.0
    %4685 = vmatprep.subr.mxu0 0.0
    %4686 = vmatpush1.msra.mxu0 0.0
    %4687 = vmatprep.mubr.f32.mxu0 0.0
    %4688 = vmatmul.mubr.f32.gmra.mrb[0].mxu0 %v4550
    %v4689 = vpop.f32.mrb[0].mxu0
    %v4690 = vadd.f32 0.0, %v4689
    %v4691 = vpop.f32.mrb[0].mxu0
    %v4692 = vadd.f32 0.0, %v4691
    %4693 = vdwg.mxu0
    %v4694 = vadd.f32 %v4508, %v4619
    %v4695 = vadd.f32 %v4509, %v4621
    %v4696 = vadd.f32 %v4510, %v4690
    %v4697 = vadd.f32 %v4511, %v4692
    %s4698 = scalar_lea.vmem [#allocation4], 56
    %v4699 = vld [vmem:[%s4698] sm:$0xff]
    %4700 = vrot.lane.b32.xlu0 %v3392, 1
    %v4701 = vpop.permute.xlu0 %4700
    %4702 = vrot.lane.b32.xlu0 %v3396, 1
    %v4703 = vpop.permute.xlu0 %4702
    %4706 = vrot.lane.b32.xlu0 %v3389, 1
    %v4707 = vpop.permute.xlu0 %4706
    %4708 = vrot.lane.b32.xlu0 %v3390, 1
    %v4709 = vpop.permute.xlu0 %4708
    %4710 = vrot.lane.b32.xlu0 %v3391, 1
    %v4711 = vpop.permute.xlu0 %4710
    %4712 = vrot.lane.b32.xlu0 %v3393, 1
    %v4713 = vpop.permute.xlu0 %4712
    %4714 = vrot.lane.b32.xlu0 %v3394, 1
    %v4715 = vpop.permute.xlu0 %4714
    %4716 = vrot.lane.b32.xlu0 %v3395, 1
    %v4717 = vpop.permute.xlu0 %4716
    %vm4718 = vcmask 7168
    %v4719 = vsel %vm4718, %v4707, %v4709
    %v4720 = vsel %vm4718, %v4709, %v4711
    %v4721 = vsel %vm4718, %v4711, %v4701
    %v4722 = vsel %vm4718, %v4713, %v4715
    %v4723 = vsel %vm4718, %v4715, %v4717
    %v4724 = vsel %vm4718, %v4717, %v4703
    %v4733 = vsel %vm4718, %v4701, %v4707
    %v4734 = vsel %vm4718, %v4703, %v4713
    %v4736 = vsel %vm3478, %v4699, 0
    %4738 = vmatprep.subr.mxu0 %v4719
    %4739 = vmatpush1.msra.mxu0 %v4733
    %4740 = vmatprep.subr.mxu0 %v4722
    %4741 = vmatpush1.msra.mxu0 %v4734
    %4742 = vmatprep.subr.mxu0 0.0
    %4743 = vmatpush1.msra.mxu0 0.0
    %4744 = vmatprep.subr.mxu0 0.0
    %4745 = vmatpush1.msra.mxu0 0.0
    %4746 = vmatprep.subr.mxu0 0.0
    %4747 = vmatpush1.msra.mxu0 0.0
    %4748 = vmatprep.subr.mxu0 0.0
    %4749 = vmatpush1.msra.mxu0 0.0
    %4750 = vmatprep.subr.mxu0 0.0
    %4751 = vmatpush1.msra.mxu0 0.0
    %4752 = vmatprep.subr.mxu0 0.0
    %4753 = vmatpush1.msra.mxu0 0.0
    %4754 = vmatprep.subr.mxu0 0.0
    %4755 = vmatpush1.msra.mxu0 0.0
    %4756 = vmatprep.subr.mxu0 0.0
    %4757 = vmatpush1.msra.mxu0 0.0
    %4758 = vmatprep.subr.mxu0 0.0
    %4759 = vmatpush1.msra.mxu0 0.0
    %4760 = vmatprep.subr.mxu0 0.0
    %4761 = vmatpush1.msra.mxu0 0.0
    %4762 = vmatprep.subr.mxu0 0.0
    %4763 = vmatpush1.msra.mxu0 0.0
    %4764 = vmatprep.subr.mxu0 0.0
    %4765 = vmatpush1.msra.mxu0 0.0
    %4766 = vmatprep.subr.mxu0 0.0
    %4767 = vmatpush1.msra.mxu0 0.0
    %4768 = vmatprep.subr.mxu0 0.0
    %4769 = vmatpush1.msra.mxu0 0.0
    %4770 = vmatprep.subr.mxu0 0.0
    %4771 = vmatpush1.msra.mxu0 0.0
    %4772 = vmatprep.subr.mxu0 0.0
    %4773 = vmatpush1.msra.mxu0 0.0
    %4774 = vmatprep.subr.mxu0 0.0
    %4775 = vmatpush1.msra.mxu0 0.0
    %4776 = vmatprep.subr.mxu0 0.0
    %4777 = vmatpush1.msra.mxu0 0.0
    %4778 = vmatprep.subr.mxu0 0.0
    %4779 = vmatpush1.msra.mxu0 0.0
    %4780 = vmatprep.subr.mxu0 0.0
    %4781 = vmatpush1.msra.mxu0 0.0
    %4782 = vmatprep.subr.mxu0 0.0
    %4783 = vmatpush1.msra.mxu0 0.0
    %4784 = vmatprep.subr.mxu0 0.0
    %4785 = vmatpush1.msra.mxu0 0.0
    %4786 = vmatprep.subr.mxu0 0.0
    %4787 = vmatpush1.msra.mxu0 0.0
    %4788 = vmatprep.subr.mxu0 0.0
    %4789 = vmatpush1.msra.mxu0 0.0
    %4790 = vmatprep.subr.mxu0 0.0
    %4791 = vmatpush1.msra.mxu0 0.0
    %4792 = vmatprep.subr.mxu0 0.0
    %4793 = vmatpush1.msra.mxu0 0.0
    %4794 = vmatprep.subr.mxu0 0.0
    %4795 = vmatpush1.msra.mxu0 0.0
    %4796 = vmatprep.subr.mxu0 0.0
    %4797 = vmatpush1.msra.mxu0 0.0
    %4798 = vmatprep.subr.mxu0 0.0
    %4799 = vmatpush1.msra.mxu0 0.0
    %4800 = vmatprep.subr.mxu0 0.0
    %4801 = vmatpush1.msra.mxu0 0.0
    %4802 = vmatprep.mubr.f32.mxu0 0.0
    %4803 = vmatmul.mubr.f32.gmra.mrb[0].mxu0 %v4736
    %v4804 = vpop.f32.mrb[0].mxu0
    %v4805 = vadd.f32 0.0, %v4804
    %v4806 = vpop.f32.mrb[0].mxu0
    %v4807 = vadd.f32 0.0, %v4806
    %4808 = vdwg.mxu0
    %4809 = vmatprep.subr.mxu0 %v4721
    %4810 = vmatpush1.msra.mxu0 %v4720
    %4811 = vmatprep.subr.mxu0 %v4724
    %4812 = vmatpush1.msra.mxu0 %v4723
    %4813 = vmatprep.subr.mxu0 0.0
    %4814 = vmatpush1.msra.mxu0 0.0
    %4815 = vmatprep.subr.mxu0 0.0
    %4816 = vmatpush1.msra.mxu0 0.0
    %4817 = vmatprep.subr.mxu0 0.0
    %4818 = vmatpush1.msra.mxu0 0.0
    %4819 = vmatprep.subr.mxu0 0.0
    %4820 = vmatpush1.msra.mxu0 0.0
    %4821 = vmatprep.subr.mxu0 0.0
    %4822 = vmatpush1.msra.mxu0 0.0
    %4823 = vmatprep.subr.mxu0 0.0
    %4824 = vmatpush1.msra.mxu0 0.0
    %4825 = vmatprep.subr.mxu0 0.0
    %4826 = vmatpush1.msra.mxu0 0.0
    %4827 = vmatprep.subr.mxu0 0.0
    %4828 = vmatpush1.msra.mxu0 0.0
    %4829 = vmatprep.subr.mxu0 0.0
    %4830 = vmatpush1.msra.mxu0 0.0
    %4831 = vmatprep.subr.mxu0 0.0
    %4832 = vmatpush1.msra.mxu0 0.0
    %4833 = vmatprep.subr.mxu0 0.0
    %4834 = vmatpush1.msra.mxu0 0.0
    %4835 = vmatprep.subr.mxu0 0.0
    %4836 = vmatpush1.msra.mxu0 0.0
    %4837 = vmatprep.subr.mxu0 0.0
    %4838 = vmatpush1.msra.mxu0 0.0
    %4839 = vmatprep.subr.mxu0 0.0
    %4840 = vmatpush1.msra.mxu0 0.0
    %4841 = vmatprep.subr.mxu0 0.0
    %4842 = vmatpush1.msra.mxu0 0.0
    %4843 = vmatprep.subr.mxu0 0.0
    %4844 = vmatpush1.msra.mxu0 0.0
    %4845 = vmatprep.subr.mxu0 0.0
    %4846 = vmatpush1.msra.mxu0 0.0
    %4847 = vmatprep.subr.mxu0 0.0
    %4848 = vmatpush1.msra.mxu0 0.0
    %4849 = vmatprep.subr.mxu0 0.0
    %4850 = vmatpush1.msra.mxu0 0.0
    %4851 = vmatprep.subr.mxu0 0.0
    %4852 = vmatpush1.msra.mxu0 0.0
    %4853 = vmatprep.subr.mxu0 0.0
    %4854 = vmatpush1.msra.mxu0 0.0
    %4855 = vmatprep.subr.mxu0 0.0
    %4856 = vmatpush1.msra.mxu0 0.0
    %4857 = vmatprep.subr.mxu0 0.0
    %4858 = vmatpush1.msra.mxu0 0.0
    %4859 = vmatprep.subr.mxu0 0.0
    %4860 = vmatpush1.msra.mxu0 0.0
    %4861 = vmatprep.subr.mxu0 0.0
    %4862 = vmatpush1.msra.mxu0 0.0
    %4863 = vmatprep.subr.mxu0 0.0
    %4864 = vmatpush1.msra.mxu0 0.0
    %4865 = vmatprep.subr.mxu0 0.0
    %4866 = vmatpush1.msra.mxu0 0.0
    %4867 = vmatprep.subr.mxu0 0.0
    %4868 = vmatpush1.msra.mxu0 0.0
    %4869 = vmatprep.subr.mxu0 0.0
    %4870 = vmatpush1.msra.mxu0 0.0
    %4871 = vmatprep.subr.mxu0 0.0
    %4872 = vmatpush1.msra.mxu0 0.0
    %4873 = vmatprep.mubr.f32.mxu0 0.0
    %4874 = vmatmul.mubr.f32.gmra.mrb[0].mxu0 %v4736
    %v4875 = vpop.f32.mrb[0].mxu0
    %v4876 = vadd.f32 0.0, %v4875
    %v4877 = vpop.f32.mrb[0].mxu0
    %v4878 = vadd.f32 0.0, %v4877
    %4879 = vdwg.mxu0
    %v4880 = vadd.f32 %v4694, %v4805
    %v4881 = vadd.f32 %v4695, %v4807
    %v4882 = vadd.f32 %v4696, %v4876
    %v4883 = vadd.f32 %v4697, %v4878
    %s4884 = scalar_lea.vmem [#allocation4], 64
    %v4885 = vld [vmem:[%s4884] sm:$0xff]
    %v4887 = vsel %vm3478, %v4885, 0
    %4889 = vmatprep.subr.mxu0 %v3390
    %4890 = vmatpush1.msra.mxu0 %v3389
    %4891 = vmatprep.subr.mxu0 %v3394
    %4892 = vmatpush1.msra.mxu0 %v3393
    %4893 = vmatprep.subr.mxu0 0.0
    %4894 = vmatpush1.msra.mxu0 0.0
    %4895 = vmatprep.subr.mxu0 0.0
    %4896 = vmatpush1.msra.mxu0 0.0
    %4897 = vmatprep.subr.mxu0 0.0
    %4898 = vmatpush1.msra.mxu0 0.0
    %4899 = vmatprep.subr.mxu0 0.0
    %4900 = vmatpush1.msra.mxu0 0.0
    %4901 = vmatprep.subr.mxu0 0.0
    %4902 = vmatpush1.msra.mxu0 0.0
    %4903 = vmatprep.subr.mxu0 0.0
    %4904 = vmatpush1.msra.mxu0 0.0
    %4905 = vmatprep.subr.mxu0 0.0
    %4906 = vmatpush1.msra.mxu0 0.0
    %4907 = vmatprep.subr.mxu0 0.0
    %4908 = vmatpush1.msra.mxu0 0.0
    %4909 = vmatprep.subr.mxu0 0.0
    %4910 = vmatpush1.msra.mxu0 0.0
    %4911 = vmatprep.subr.mxu0 0.0
    %4912 = vmatpush1.msra.mxu0 0.0
    %4913 = vmatprep.subr.mxu0 0.0
    %4914 = vmatpush1.msra.mxu0 0.0
    %4915 = vmatprep.subr.mxu0 0.0
    %4916 = vmatpush1.msra.mxu0 0.0
    %4917 = vmatprep.subr.mxu0 0.0
    %4918 = vmatpush1.msra.mxu0 0.0
    %4919 = vmatprep.subr.mxu0 0.0
    %4920 = vmatpush1.msra.mxu0 0.0
    %4921 = vmatprep.subr.mxu0 0.0
    %4922 = vmatpush1.msra.mxu0 0.0
    %4923 = vmatprep.subr.mxu0 0.0
    %4924 = vmatpush1.msra.mxu0 0.0
    %4925 = vmatprep.subr.mxu0 0.0
    %4926 = vmatpush1.msra.mxu0 0.0
    %4927 = vmatprep.subr.mxu0 0.0
    %4928 = vmatpush1.msra.mxu0 0.0
    %4929 = vmatprep.subr.mxu0 0.0
    %4930 = vmatpush1.msra.mxu0 0.0
    %4931 = vmatprep.subr.mxu0 0.0
    %4932 = vmatpush1.msra.mxu0 0.0
    %4933 = vmatprep.subr.mxu0 0.0
    %4934 = vmatpush1.msra.mxu0 0.0
    %4935 = vmatprep.subr.mxu0 0.0
    %4936 = vmatpush1.msra.mxu0 0.0
    %4937 = vmatprep.subr.mxu0 0.0
    %4938 = vmatpush1.msra.mxu0 0.0
    %4939 = vmatprep.subr.mxu0 0.0
    %4940 = vmatpush1.msra.mxu0 0.0
    %4941 = vmatprep.subr.mxu0 0.0
    %4942 = vmatpush1.msra.mxu0 0.0
    %4943 = vmatprep.subr.mxu0 0.0
    %4944 = vmatpush1.msra.mxu0 0.0
    %4945 = vmatprep.subr.mxu0 0.0
    %4946 = vmatpush1.msra.mxu0 0.0
    %4947 = vmatprep.subr.mxu0 0.0
    %4948 = vmatpush1.msra.mxu0 0.0
    %4949 = vmatprep.subr.mxu0 0.0
    %4950 = vmatpush1.msra.mxu0 0.0
    %4951 = vmatprep.subr.mxu0 0.0
    %4952 = vmatpush1.msra.mxu0 0.0
    %4953 = vmatprep.mubr.f32.mxu0 0.0
    %4954 = vmatmul.mubr.f32.gmra.mrb[0].mxu0 %v4887
    %v4955 = vpop.f32.mrb[0].mxu0
    %v4956 = vadd.f32 0.0, %v4955
    %v4957 = vpop.f32.mrb[0].mxu0
    %v4958 = vadd.f32 0.0, %v4957
    %4959 = vdwg.mxu0
    %4960 = vmatprep.subr.mxu0 %v3392
    %4961 = vmatpush1.msra.mxu0 %v3391
    %4962 = vmatprep.subr.mxu0 %v3396
    %4963 = vmatpush1.msra.mxu0 %v3395
    %4964 = vmatprep.subr.mxu0 0.0
    %4965 = vmatpush1.msra.mxu0 0.0
    %4966 = vmatprep.subr.mxu0 0.0
    %4967 = vmatpush1.msra.mxu0 0.0
    %4968 = vmatprep.subr.mxu0 0.0
    %4969 = vmatpush1.msra.mxu0 0.0
    %4970 = vmatprep.subr.mxu0 0.0
    %4971 = vmatpush1.msra.mxu0 0.0
    %4972 = vmatprep.subr.mxu0 0.0
    %4973 = vmatpush1.msra.mxu0 0.0
    %4974 = vmatprep.subr.mxu0 0.0
    %4975 = vmatpush1.msra.mxu0 0.0
    %4976 = vmatprep.subr.mxu0 0.0
    %4977 = vmatpush1.msra.mxu0 0.0
    %4978 = vmatprep.subr.mxu0 0.0
    %4979 = vmatpush1.msra.mxu0 0.0
    %4980 = vmatprep.subr.mxu0 0.0
    %4981 = vmatpush1.msra.mxu0 0.0
    %4982 = vmatprep.subr.mxu0 0.0
    %4983 = vmatpush1.msra.mxu0 0.0
    %4984 = vmatprep.subr.mxu0 0.0
    %4985 = vmatpush1.msra.mxu0 0.0
    %4986 = vmatprep.subr.mxu0 0.0
    %4987 = vmatpush1.msra.mxu0 0.0
    %4988 = vmatprep.subr.mxu0 0.0
    %4989 = vmatpush1.msra.mxu0 0.0
    %4990 = vmatprep.subr.mxu0 0.0
    %4991 = vmatpush1.msra.mxu0 0.0
    %4992 = vmatprep.subr.mxu0 0.0
    %4993 = vmatpush1.msra.mxu0 0.0
    %4994 = vmatprep.subr.mxu0 0.0
    %4995 = vmatpush1.msra.mxu0 0.0
    %4996 = vmatprep.subr.mxu0 0.0
    %4997 = vmatpush1.msra.mxu0 0.0
    %4998 = vmatprep.subr.mxu0 0.0
    %4999 = vmatpush1.msra.mxu0 0.0
    %5000 = vmatprep.subr.mxu0 0.0
    %5001 = vmatpush1.msra.mxu0 0.0
    %5002 = vmatprep.subr.mxu0 0.0
    %5003 = vmatpush1.msra.mxu0 0.0
    %5004 = vmatprep.subr.mxu0 0.0
    %5005 = vmatpush1.msra.mxu0 0.0
    %5006 = vmatprep.subr.mxu0 0.0
    %5007 = vmatpush1.msra.mxu0 0.0
    %5008 = vmatprep.subr.mxu0 0.0
    %5009 = vmatpush1.msra.mxu0 0.0
    %5010 = vmatprep.subr.mxu0 0.0
    %5011 = vmatpush1.msra.mxu0 0.0
    %5012 = vmatprep.subr.mxu0 0.0
    %5013 = vmatpush1.msra.mxu0 0.0
    %5014 = vmatprep.subr.mxu0 0.0
    %5015 = vmatpush1.msra.mxu0 0.0
    %5016 = vmatprep.subr.mxu0 0.0
    %5017 = vmatpush1.msra.mxu0 0.0
    %5018 = vmatprep.subr.mxu0 0.0
    %5019 = vmatpush1.msra.mxu0 0.0
    %5020 = vmatprep.subr.mxu0 0.0
    %5021 = vmatpush1.msra.mxu0 0.0
    %5022 = vmatprep.subr.mxu0 0.0
    %5023 = vmatpush1.msra.mxu0 0.0
    %5024 = vmatprep.mubr.f32.mxu0 0.0
    %5025 = vmatmul.mubr.f32.gmra.mrb[0].mxu0 %v4887
    %v5026 = vpop.f32.mrb[0].mxu0
    %v5027 = vadd.f32 0.0, %v5026
    %v5028 = vpop.f32.mrb[0].mxu0
    %v5029 = vadd.f32 0.0, %v5028
    %5030 = vdwg.mxu0
    %v5031 = vadd.f32 %v4880, %v4956
    %v5032 = vadd.f32 %v4881, %v4958
    %v5033 = vadd.f32 %v4882, %v5027
    %v5034 = vadd.f32 %v4883, %v5029
    %v5035 = vld [vmem:[#allocation6] sm:$0xff]
    %5037 = vset.pattern.permute.xlu0 0
    %5038 = vperm.xlu0 %5037, %v5035
    %v5039 = vpop.permute.xlu0 %5038
    %v5041 = vadd.f32 %v5031, %v5039
    %v5042 = vadd.f32 %v5032, %v5039
    %v5043 = vadd.f32 %v5033, %v5039
    %v5044 = vadd.f32 %v5034, %v5039
    %v5045 = vmax.f32 %v5041, 0.0
    %v5046 = vmax.f32 %v5042, 0.0
    %v5047 = vmax.f32 %v5043, 0.0
    %v5048 = vmax.f32 %v5044, 0.0
    %v5049 = vld [vmem:[%s10] sm:$0xf]
    %vm5050 = vcmp.gt.f32.partialorder %v5049, 0.0
    %v5051 = vsel %vm5050, 1, 0
    %v5052 = vlaneseq
    %v5053 = vshrl.u32 %v5052, 7
    %v5054 = vsub.s32 0, %v5053
    %v5055 = vrot.slane %v5051, %v5054
    %v5056 = vlaneseq
    %v5057 = vshrl.u32 %v5056, 7
    %v5058 = vsub.s32 1, %v5057
    %v5059 = vrot.slane %v5051, %v5058
    %v5060 = vlaneseq
    %v5061 = vshrl.u32 %v5060, 7
    %v5062 = vsub.s32 2, %v5061
    %v5063 = vrot.slane %v5051, %v5062
    %v5064 = vlaneseq
    %v5065 = vshrl.u32 %v5064, 7
    %v5066 = vsub.s32 3, %v5065
    %v5067 = vrot.slane %v5051, %v5066
    %vm5068 = vcmp.eq.s32.totalorder %v5055, 1
    %vm5069 = vcmp.eq.s32.totalorder %v5059, 1
    %vm5070 = vcmp.eq.s32.totalorder %v5063, 1
    %vm5071 = vcmp.eq.s32.totalorder %v5067, 1
    %v5072 = vsel %vm5068, %v5045, 0.0
    %v5073 = vsel %vm5069, %v5046, 0.0
    %v5074 = vsel %vm5070, %v5047, 0.0
    %v5075 = vsel %vm5071, %v5048, 0.0
    %v5076 = vld [vmem:[#allocation7] sm:$0xf]
    %5078 = vrot.lane.b32.xlu0 %v5075, 34
    %v5079 = vpop.permute.xlu0 %5078
    %5084 = vrot.lane.b32.xlu0 %v5072, 34
    %v5085 = vpop.permute.xlu0 %5084
    %5086 = vrot.lane.b32.xlu0 %v5073, 34
    %v5087 = vpop.permute.xlu0 %5086
    %5088 = vrot.lane.b32.xlu0 %v5074, 34
    %v5089 = vpop.permute.xlu0 %5088
    %v5090 = vsel %vm3424, %v5085, %v5087
    %v5091 = vsel %vm3424, %v5087, %v5089
    %v5092 = vsel %vm3424, %v5089, %v5079
    %v5097 = vsel %vm3424, %v5079, %v5085
    %s5098 = scalar_lea.vmem [#allocation7], 4
    %v5099 = vld [vmem:[%s5098] sm:$0xf]
    %5100 = vrot.lane.b32.xlu0 %v5075, 33
    %v5101 = vpop.permute.xlu0 %5100
    %5103 = vrot.lane.b32.xlu0 %v5072, 33
    %v5104 = vpop.permute.xlu0 %5103
    %5105 = vrot.lane.b32.xlu0 %v5073, 33
    %v5106 = vpop.permute.xlu0 %5105
    %5107 = vrot.lane.b32.xlu0 %v5074, 33
    %v5108 = vpop.permute.xlu0 %5107
    %v5109 = vsel %vm3461, %v5104, %v5106
    %v5110 = vsel %vm3461, %v5106, %v5108
    %v5111 = vsel %vm3461, %v5108, %v5101
    %v5116 = vsel %vm3461, %v5101, %v5104
    %v5118 = vsel %vm1701, %v5099, 0
    %5120 = vmatprep.subr.mxu0 %v5109
    %5121 = vmatpush1.msra.mxu0 %v5116
    %5122 = vmatprep.subr.mxu0 0.0
    %5123 = vmatpush1.msra.mxu0 0.0
    %5124 = vmatprep.subr.mxu0 0.0
    %5125 = vmatpush1.msra.mxu0 0.0
    %5126 = vmatprep.subr.mxu0 0.0
    %5127 = vmatpush1.msra.mxu0 0.0
    %5128 = vmatprep.subr.mxu0 0.0
    %5129 = vmatpush1.msra.mxu0 0.0
    %5130 = vmatprep.subr.mxu0 0.0
    %5131 = vmatpush1.msra.mxu0 0.0
    %5132 = vmatprep.subr.mxu0 0.0
    %5133 = vmatpush1.msra.mxu0 0.0
    %5134 = vmatprep.subr.mxu0 0.0
    %5135 = vmatpush1.msra.mxu0 0.0
    %5136 = vmatprep.subr.mxu0 0.0
    %5137 = vmatpush1.msra.mxu0 0.0
    %5138 = vmatprep.subr.mxu0 0.0
    %5139 = vmatpush1.msra.mxu0 0.0
    %5140 = vmatprep.subr.mxu0 0.0
    %5141 = vmatpush1.msra.mxu0 0.0
    %5142 = vmatprep.subr.mxu0 0.0
    %5143 = vmatpush1.msra.mxu0 0.0
    %5144 = vmatprep.subr.mxu0 0.0
    %5145 = vmatpush1.msra.mxu0 0.0
    %5146 = vmatprep.subr.mxu0 0.0
    %5147 = vmatpush1.msra.mxu0 0.0
    %5148 = vmatprep.subr.mxu0 0.0
    %5149 = vmatpush1.msra.mxu0 0.0
    %5150 = vmatprep.subr.mxu0 0.0
    %5151 = vmatpush1.msra.mxu0 0.0
    %5152 = vmatprep.subr.mxu0 0.0
    %5153 = vmatpush1.msra.mxu0 0.0
    %5154 = vmatprep.subr.mxu0 0.0
    %5155 = vmatpush1.msra.mxu0 0.0
    %5156 = vmatprep.subr.mxu0 0.0
    %5157 = vmatpush1.msra.mxu0 0.0
    %5158 = vmatprep.subr.mxu0 0.0
    %5159 = vmatpush1.msra.mxu0 0.0
    %5160 = vmatprep.subr.mxu0 0.0
    %5161 = vmatpush1.msra.mxu0 0.0
    %5162 = vmatprep.subr.mxu0 0.0
    %5163 = vmatpush1.msra.mxu0 0.0
    %5164 = vmatprep.subr.mxu0 0.0
    %5165 = vmatpush1.msra.mxu0 0.0
    %5166 = vmatprep.subr.mxu0 0.0
    %5167 = vmatpush1.msra.mxu0 0.0
    %5168 = vmatprep.subr.mxu0 0.0
    %5169 = vmatpush1.msra.mxu0 0.0
    %5170 = vmatprep.subr.mxu0 0.0
    %5171 = vmatpush1.msra.mxu0 0.0
    %5172 = vmatprep.subr.mxu0 0.0
    %5173 = vmatpush1.msra.mxu0 0.0
    %5174 = vmatprep.subr.mxu0 0.0
    %5175 = vmatpush1.msra.mxu0 0.0
    %5176 = vmatprep.subr.mxu0 0.0
    %5177 = vmatpush1.msra.mxu0 0.0
    %5178 = vmatprep.subr.mxu0 0.0
    %5179 = vmatpush1.msra.mxu0 0.0
    %5180 = vmatprep.subr.mxu0 0.0
    %5181 = vmatpush1.msra.mxu0 0.0
    %5182 = vmatprep.subr.mxu0 0.0
    %5183 = vmatpush1.msra.mxu0 0.0
    %5184 = vmatprep.mubr.f32.mxu0 0.0
    %5185 = vmatmul.mubr.f32.gmra.mrb[0].mxu0 %v5118
    %v5186 = vpop.f32.mrb[0].mxu0
    %v5187 = vadd.f32 0.0, %v5186
    %v5188 = vpop.f32.mrb[0].mxu0
    %v5189 = vadd.f32 0.0, %v5188
    %5190 = vdwg.mxu0
    %5191 = vmatprep.subr.mxu0 %v5111
    %5192 = vmatpush1.msra.mxu0 %v5110
    %5193 = vmatprep.subr.mxu0 0.0
    %5194 = vmatpush1.msra.mxu0 0.0
    %5195 = vmatprep.subr.mxu0 0.0
    %5196 = vmatpush1.msra.mxu0 0.0
    %5197 = vmatprep.subr.mxu0 0.0
    %5198 = vmatpush1.msra.mxu0 0.0
    %5199 = vmatprep.subr.mxu0 0.0
    %5200 = vmatpush1.msra.mxu0 0.0
    %5201 = vmatprep.subr.mxu0 0.0
    %5202 = vmatpush1.msra.mxu0 0.0
    %5203 = vmatprep.subr.mxu0 0.0
    %5204 = vmatpush1.msra.mxu0 0.0
    %5205 = vmatprep.subr.mxu0 0.0
    %5206 = vmatpush1.msra.mxu0 0.0
    %5207 = vmatprep.subr.mxu0 0.0
    %5208 = vmatpush1.msra.mxu0 0.0
    %5209 = vmatprep.subr.mxu0 0.0
    %5210 = vmatpush1.msra.mxu0 0.0
    %5211 = vmatprep.subr.mxu0 0.0
    %5212 = vmatpush1.msra.mxu0 0.0
    %5213 = vmatprep.subr.mxu0 0.0
    %5214 = vmatpush1.msra.mxu0 0.0
    %5215 = vmatprep.subr.mxu0 0.0
    %5216 = vmatpush1.msra.mxu0 0.0
    %5217 = vmatprep.subr.mxu0 0.0
    %5218 = vmatpush1.msra.mxu0 0.0
    %5219 = vmatprep.subr.mxu0 0.0
    %5220 = vmatpush1.msra.mxu0 0.0
    %5221 = vmatprep.subr.mxu0 0.0
    %5222 = vmatpush1.msra.mxu0 0.0
    %5223 = vmatprep.subr.mxu0 0.0
    %5224 = vmatpush1.msra.mxu0 0.0
    %5225 = vmatprep.subr.mxu0 0.0
    %5226 = vmatpush1.msra.mxu0 0.0
    %5227 = vmatprep.subr.mxu0 0.0
    %5228 = vmatpush1.msra.mxu0 0.0
    %5229 = vmatprep.subr.mxu0 0.0
    %5230 = vmatpush1.msra.mxu0 0.0
    %5231 = vmatprep.subr.mxu0 0.0
    %5232 = vmatpush1.msra.mxu0 0.0
    %5233 = vmatprep.subr.mxu0 0.0
    %5234 = vmatpush1.msra.mxu0 0.0
    %5235 = vmatprep.subr.mxu0 0.0
    %5236 = vmatpush1.msra.mxu0 0.0
    %5237 = vmatprep.subr.mxu0 0.0
    %5238 = vmatpush1.msra.mxu0 0.0
    %5239 = vmatprep.subr.mxu0 0.0
    %5240 = vmatpush1.msra.mxu0 0.0
    %5241 = vmatprep.subr.mxu0 0.0
    %5242 = vmatpush1.msra.mxu0 0.0
    %5243 = vmatprep.subr.mxu0 0.0
    %5244 = vmatpush1.msra.mxu0 0.0
    %5245 = vmatprep.subr.mxu0 0.0
    %5246 = vmatpush1.msra.mxu0 0.0
    %5247 = vmatprep.subr.mxu0 0.0
    %5248 = vmatpush1.msra.mxu0 0.0
    %5249 = vmatprep.subr.mxu0 0.0
    %5250 = vmatpush1.msra.mxu0 0.0
    %5251 = vmatprep.subr.mxu0 0.0
    %5252 = vmatpush1.msra.mxu0 0.0
    %5253 = vmatprep.subr.mxu0 0.0
    %5254 = vmatpush1.msra.mxu0 0.0
    %5255 = vmatprep.mubr.f32.mxu0 0.0
    %5256 = vmatmul.mubr.f32.gmra.mrb[0].mxu0 %v5118
    %v5257 = vpop.f32.mrb[0].mxu0
    %v5258 = vadd.f32 0.0, %v5257
    %v5259 = vpop.f32.mrb[0].mxu0
    %v5260 = vadd.f32 0.0, %v5259
    %5261 = vdwg.mxu0
    %v5263 = vsel %vm1701, %v5076, 0
    %5265 = vmatprep.subr.mxu0 %v5090
    %5266 = vmatpush1.msra.mxu0 %v5097
    %5267 = vmatprep.subr.mxu0 0.0
    %5268 = vmatpush1.msra.mxu0 0.0
    %5269 = vmatprep.subr.mxu0 0.0
    %5270 = vmatpush1.msra.mxu0 0.0
    %5271 = vmatprep.subr.mxu0 0.0
    %5272 = vmatpush1.msra.mxu0 0.0
    %5273 = vmatprep.subr.mxu0 0.0
    %5274 = vmatpush1.msra.mxu0 0.0
    %5275 = vmatprep.subr.mxu0 0.0
    %5276 = vmatpush1.msra.mxu0 0.0
    %5277 = vmatprep.subr.mxu0 0.0
    %5278 = vmatpush1.msra.mxu0 0.0
    %5279 = vmatprep.subr.mxu0 0.0
    %5280 = vmatpush1.msra.mxu0 0.0
    %5281 = vmatprep.subr.mxu0 0.0
    %5282 = vmatpush1.msra.mxu0 0.0
    %5283 = vmatprep.subr.mxu0 0.0
    %5284 = vmatpush1.msra.mxu0 0.0
    %5285 = vmatprep.subr.mxu0 0.0
    %5286 = vmatpush1.msra.mxu0 0.0
    %5287 = vmatprep.subr.mxu0 0.0
    %5288 = vmatpush1.msra.mxu0 0.0
    %5289 = vmatprep.subr.mxu0 0.0
    %5290 = vmatpush1.msra.mxu0 0.0
    %5291 = vmatprep.subr.mxu0 0.0
    %5292 = vmatpush1.msra.mxu0 0.0
    %5293 = vmatprep.subr.mxu0 0.0
    %5294 = vmatpush1.msra.mxu0 0.0
    %5295 = vmatprep.subr.mxu0 0.0
    %5296 = vmatpush1.msra.mxu0 0.0
    %5297 = vmatprep.subr.mxu0 0.0
    %5298 = vmatpush1.msra.mxu0 0.0
    %5299 = vmatprep.subr.mxu0 0.0
    %5300 = vmatpush1.msra.mxu0 0.0
    %5301 = vmatprep.subr.mxu0 0.0
    %5302 = vmatpush1.msra.mxu0 0.0
    %5303 = vmatprep.subr.mxu0 0.0
    %5304 = vmatpush1.msra.mxu0 0.0
    %5305 = vmatprep.subr.mxu0 0.0
    %5306 = vmatpush1.msra.mxu0 0.0
    %5307 = vmatprep.subr.mxu0 0.0
    %5308 = vmatpush1.msra.mxu0 0.0
    %5309 = vmatprep.subr.mxu0 0.0
    %5310 = vmatpush1.msra.mxu0 0.0
    %5311 = vmatprep.subr.mxu0 0.0
    %5312 = vmatpush1.msra.mxu0 0.0
    %5313 = vmatprep.subr.mxu0 0.0
    %5314 = vmatpush1.msra.mxu0 0.0
    %5315 = vmatprep.subr.mxu0 0.0
    %5316 = vmatpush1.msra.mxu0 0.0
    %5317 = vmatprep.subr.mxu0 0.0
    %5318 = vmatpush1.msra.mxu0 0.0
    %5319 = vmatprep.subr.mxu0 0.0
    %5320 = vmatpush1.msra.mxu0 0.0
    %5321 = vmatprep.subr.mxu0 0.0
    %5322 = vmatpush1.msra.mxu0 0.0
    %5323 = vmatprep.subr.mxu0 0.0
    %5324 = vmatpush1.msra.mxu0 0.0
    %5325 = vmatprep.subr.mxu0 0.0
    %5326 = vmatpush1.msra.mxu0 0.0
    %5327 = vmatprep.subr.mxu0 0.0
    %5328 = vmatpush1.msra.mxu0 0.0
    %5329 = vmatprep.mubr.f32.mxu0 0.0
    %5330 = vmatmul.mubr.f32.gmra.mrb[0].mxu0 %v5263
    %v5331 = vpop.f32.mrb[0].mxu0
    %v5332 = vadd.f32 %v5187, %v5331
    %v5333 = vpop.f32.mrb[0].mxu0
    %v5334 = vadd.f32 %v5189, %v5333
    %5335 = vdwg.mxu0
    %5336 = vmatprep.subr.mxu0 %v5092
    %5337 = vmatpush1.msra.mxu0 %v5091
    %5338 = vmatprep.subr.mxu0 0.0
    %5339 = vmatpush1.msra.mxu0 0.0
    %5340 = vmatprep.subr.mxu0 0.0
    %5341 = vmatpush1.msra.mxu0 0.0
    %5342 = vmatprep.subr.mxu0 0.0
    %5343 = vmatpush1.msra.mxu0 0.0
    %5344 = vmatprep.subr.mxu0 0.0
    %5345 = vmatpush1.msra.mxu0 0.0
    %5346 = vmatprep.subr.mxu0 0.0
    %5347 = vmatpush1.msra.mxu0 0.0
    %5348 = vmatprep.subr.mxu0 0.0
    %5349 = vmatpush1.msra.mxu0 0.0
    %5350 = vmatprep.subr.mxu0 0.0
    %5351 = vmatpush1.msra.mxu0 0.0
    %5352 = vmatprep.subr.mxu0 0.0
    %5353 = vmatpush1.msra.mxu0 0.0
    %5354 = vmatprep.subr.mxu0 0.0
    %5355 = vmatpush1.msra.mxu0 0.0
    %5356 = vmatprep.subr.mxu0 0.0
    %5357 = vmatpush1.msra.mxu0 0.0
    %5358 = vmatprep.subr.mxu0 0.0
    %5359 = vmatpush1.msra.mxu0 0.0
    %5360 = vmatprep.subr.mxu0 0.0
    %5361 = vmatpush1.msra.mxu0 0.0
    %5362 = vmatprep.subr.mxu0 0.0
    %5363 = vmatpush1.msra.mxu0 0.0
    %5364 = vmatprep.subr.mxu0 0.0
    %5365 = vmatpush1.msra.mxu0 0.0
    %5366 = vmatprep.subr.mxu0 0.0
    %5367 = vmatpush1.msra.mxu0 0.0
    %5368 = vmatprep.subr.mxu0 0.0
    %5369 = vmatpush1.msra.mxu0 0.0
    %5370 = vmatprep.subr.mxu0 0.0
    %5371 = vmatpush1.msra.mxu0 0.0
    %5372 = vmatprep.subr.mxu0 0.0
    %5373 = vmatpush1.msra.mxu0 0.0
    %5374 = vmatprep.subr.mxu0 0.0
    %5375 = vmatpush1.msra.mxu0 0.0
    %5376 = vmatprep.subr.mxu0 0.0
    %5377 = vmatpush1.msra.mxu0 0.0
    %5378 = vmatprep.subr.mxu0 0.0
    %5379 = vmatpush1.msra.mxu0 0.0
    %5380 = vmatprep.subr.mxu0 0.0
    %5381 = vmatpush1.msra.mxu0 0.0
    %5382 = vmatprep.subr.mxu0 0.0
    %5383 = vmatpush1.msra.mxu0 0.0
    %5384 = vmatprep.subr.mxu0 0.0
    %5385 = vmatpush1.msra.mxu0 0.0
    %5386 = vmatprep.subr.mxu0 0.0
    %5387 = vmatpush1.msra.mxu0 0.0
    %5388 = vmatprep.subr.mxu0 0.0
    %5389 = vmatpush1.msra.mxu0 0.0
    %5390 = vmatprep.subr.mxu0 0.0
    %5391 = vmatpush1.msra.mxu0 0.0
    %5392 = vmatprep.subr.mxu0 0.0
    %5393 = vmatpush1.msra.mxu0 0.0
    %5394 = vmatprep.subr.mxu0 0.0
    %5395 = vmatpush1.msra.mxu0 0.0
    %5396 = vmatprep.subr.mxu0 0.0
    %5397 = vmatpush1.msra.mxu0 0.0
    %5398 = vmatprep.subr.mxu0 0.0
    %5399 = vmatpush1.msra.mxu0 0.0
    %5400 = vmatprep.mubr.f32.mxu0 0.0
    %5401 = vmatmul.mubr.f32.gmra.mrb[0].mxu0 %v5263
    %v5402 = vpop.f32.mrb[0].mxu0
    %v5403 = vadd.f32 %v5258, %v5402
    %v5404 = vpop.f32.mrb[0].mxu0
    %v5405 = vadd.f32 %v5260, %v5404
    %5406 = vdwg.mxu0
    %s5407 = scalar_lea.vmem [#allocation7], 8
    %v5408 = vld [vmem:[%s5407] sm:$0xf]
    %5409 = vrot.lane.b32.xlu0 %v5075, 32
    %v5410 = vpop.permute.xlu0 %5409
    %5412 = vrot.lane.b32.xlu0 %v5072, 32
    %v5413 = vpop.permute.xlu0 %5412
    %5414 = vrot.lane.b32.xlu0 %v5073, 32
    %v5415 = vpop.permute.xlu0 %5414
    %5416 = vrot.lane.b32.xlu0 %v5074, 32
    %v5417 = vpop.permute.xlu0 %5416
    %v5418 = vsel %vm3789, %v5413, %v5415
    %v5419 = vsel %vm3789, %v5415, %v5417
    %v5420 = vsel %vm3789, %v5417, %v5410
    %v5425 = vsel %vm3789, %v5410, %v5413
    %v5427 = vsel %vm1701, %v5408, 0
    %5429 = vmatprep.subr.mxu0 %v5418
    %5430 = vmatpush1.msra.mxu0 %v5425
    %5431 = vmatprep.subr.mxu0 0.0
    %5432 = vmatpush1.msra.mxu0 0.0
    %5433 = vmatprep.subr.mxu0 0.0
    %5434 = vmatpush1.msra.mxu0 0.0
    %5435 = vmatprep.subr.mxu0 0.0
    %5436 = vmatpush1.msra.mxu0 0.0
    %5437 = vmatprep.subr.mxu0 0.0
    %5438 = vmatpush1.msra.mxu0 0.0
    %5439 = vmatprep.subr.mxu0 0.0
    %5440 = vmatpush1.msra.mxu0 0.0
    %5441 = vmatprep.subr.mxu0 0.0
    %5442 = vmatpush1.msra.mxu0 0.0
    %5443 = vmatprep.subr.mxu0 0.0
    %5444 = vmatpush1.msra.mxu0 0.0
    %5445 = vmatprep.subr.mxu0 0.0
    %5446 = vmatpush1.msra.mxu0 0.0
    %5447 = vmatprep.subr.mxu0 0.0
    %5448 = vmatpush1.msra.mxu0 0.0
    %5449 = vmatprep.subr.mxu0 0.0
    %5450 = vmatpush1.msra.mxu0 0.0
    %5451 = vmatprep.subr.mxu0 0.0
    %5452 = vmatpush1.msra.mxu0 0.0
    %5453 = vmatprep.subr.mxu0 0.0
    %5454 = vmatpush1.msra.mxu0 0.0
    %5455 = vmatprep.subr.mxu0 0.0
    %5456 = vmatpush1.msra.mxu0 0.0
    %5457 = vmatprep.subr.mxu0 0.0
    %5458 = vmatpush1.msra.mxu0 0.0
    %5459 = vmatprep.subr.mxu0 0.0
    %5460 = vmatpush1.msra.mxu0 0.0
    %5461 = vmatprep.subr.mxu0 0.0
    %5462 = vmatpush1.msra.mxu0 0.0
    %5463 = vmatprep.subr.mxu0 0.0
    %5464 = vmatpush1.msra.mxu0 0.0
    %5465 = vmatprep.subr.mxu0 0.0
    %5466 = vmatpush1.msra.mxu0 0.0
    %5467 = vmatprep.subr.mxu0 0.0
    %5468 = vmatpush1.msra.mxu0 0.0
    %5469 = vmatprep.subr.mxu0 0.0
    %5470 = vmatpush1.msra.mxu0 0.0
    %5471 = vmatprep.subr.mxu0 0.0
    %5472 = vmatpush1.msra.mxu0 0.0
    %5473 = vmatprep.subr.mxu0 0.0
    %5474 = vmatpush1.msra.mxu0 0.0
    %5475 = vmatprep.subr.mxu0 0.0
    %5476 = vmatpush1.msra.mxu0 0.0
    %5477 = vmatprep.subr.mxu0 0.0
    %5478 = vmatpush1.msra.mxu0 0.0
    %5479 = vmatprep.subr.mxu0 0.0
    %5480 = vmatpush1.msra.mxu0 0.0
    %5481 = vmatprep.subr.mxu0 0.0
    %5482 = vmatpush1.msra.mxu0 0.0
    %5483 = vmatprep.subr.mxu0 0.0
    %5484 = vmatpush1.msra.mxu0 0.0
    %5485 = vmatprep.subr.mxu0 0.0
    %5486 = vmatpush1.msra.mxu0 0.0
    %5487 = vmatprep.subr.mxu0 0.0
    %5488 = vmatpush1.msra.mxu0 0.0
    %5489 = vmatprep.subr.mxu0 0.0
    %5490 = vmatpush1.msra.mxu0 0.0
    %5491 = vmatprep.subr.mxu0 0.0
    %5492 = vmatpush1.msra.mxu0 0.0
    %5493 = vmatprep.mubr.f32.mxu0 0.0
    %5494 = vmatmul.mubr.f32.gmra.mrb[0].mxu0 %v5427
    %v5495 = vpop.f32.mrb[0].mxu0
    %v5496 = vadd.f32 0.0, %v5495
    %v5497 = vpop.f32.mrb[0].mxu0
    %v5498 = vadd.f32 0.0, %v5497
    %5499 = vdwg.mxu0
    %5500 = vmatprep.subr.mxu0 %v5420
    %5501 = vmatpush1.msra.mxu0 %v5419
    %5502 = vmatprep.subr.mxu0 0.0
    %5503 = vmatpush1.msra.mxu0 0.0
    %5504 = vmatprep.subr.mxu0 0.0
    %5505 = vmatpush1.msra.mxu0 0.0
    %5506 = vmatprep.subr.mxu0 0.0
    %5507 = vmatpush1.msra.mxu0 0.0
    %5508 = vmatprep.subr.mxu0 0.0
    %5509 = vmatpush1.msra.mxu0 0.0
    %5510 = vmatprep.subr.mxu0 0.0
    %5511 = vmatpush1.msra.mxu0 0.0
    %5512 = vmatprep.subr.mxu0 0.0
    %5513 = vmatpush1.msra.mxu0 0.0
    %5514 = vmatprep.subr.mxu0 0.0
    %5515 = vmatpush1.msra.mxu0 0.0
    %5516 = vmatprep.subr.mxu0 0.0
    %5517 = vmatpush1.msra.mxu0 0.0
    %5518 = vmatprep.subr.mxu0 0.0
    %5519 = vmatpush1.msra.mxu0 0.0
    %5520 = vmatprep.subr.mxu0 0.0
    %5521 = vmatpush1.msra.mxu0 0.0
    %5522 = vmatprep.subr.mxu0 0.0
    %5523 = vmatpush1.msra.mxu0 0.0
    %5524 = vmatprep.subr.mxu0 0.0
    %5525 = vmatpush1.msra.mxu0 0.0
    %5526 = vmatprep.subr.mxu0 0.0
    %5527 = vmatpush1.msra.mxu0 0.0
    %5528 = vmatprep.subr.mxu0 0.0
    %5529 = vmatpush1.msra.mxu0 0.0
    %5530 = vmatprep.subr.mxu0 0.0
    %5531 = vmatpush1.msra.mxu0 0.0
    %5532 = vmatprep.subr.mxu0 0.0
    %5533 = vmatpush1.msra.mxu0 0.0
    %5534 = vmatprep.subr.mxu0 0.0
    %5535 = vmatpush1.msra.mxu0 0.0
    %5536 = vmatprep.subr.mxu0 0.0
    %5537 = vmatpush1.msra.mxu0 0.0
    %5538 = vmatprep.subr.mxu0 0.0
    %5539 = vmatpush1.msra.mxu0 0.0
    %5540 = vmatprep.subr.mxu0 0.0
    %5541 = vmatpush1.msra.mxu0 0.0
    %5542 = vmatprep.subr.mxu0 0.0
    %5543 = vmatpush1.msra.mxu0 0.0
    %5544 = vmatprep.subr.mxu0 0.0
    %5545 = vmatpush1.msra.mxu0 0.0
    %5546 = vmatprep.subr.mxu0 0.0
    %5547 = vmatpush1.msra.mxu0 0.0
    %5548 = vmatprep.subr.mxu0 0.0
    %5549 = vmatpush1.msra.mxu0 0.0
    %5550 = vmatprep.subr.mxu0 0.0
    %5551 = vmatpush1.msra.mxu0 0.0
    %5552 = vmatprep.subr.mxu0 0.0
    %5553 = vmatpush1.msra.mxu0 0.0
    %5554 = vmatprep.subr.mxu0 0.0
    %5555 = vmatpush1.msra.mxu0 0.0
    %5556 = vmatprep.subr.mxu0 0.0
    %5557 = vmatpush1.msra.mxu0 0.0
    %5558 = vmatprep.subr.mxu0 0.0
    %5559 = vmatpush1.msra.mxu0 0.0
    %5560 = vmatprep.subr.mxu0 0.0
    %5561 = vmatpush1.msra.mxu0 0.0
    %5562 = vmatprep.subr.mxu0 0.0
    %5563 = vmatpush1.msra.mxu0 0.0
    %5564 = vmatprep.mubr.f32.mxu0 0.0
    %5565 = vmatmul.mubr.f32.gmra.mrb[0].mxu0 %v5427
    %v5566 = vpop.f32.mrb[0].mxu0
    %v5567 = vadd.f32 0.0, %v5566
    %v5568 = vpop.f32.mrb[0].mxu0
    %v5569 = vadd.f32 0.0, %v5568
    %5570 = vdwg.mxu0
    %v5571 = vadd.f32 %v5332, %v5496
    %v5572 = vadd.f32 %v5334, %v5498
    %v5573 = vadd.f32 %v5403, %v5567
    %v5574 = vadd.f32 %v5405, %v5569
    %s5575 = scalar_lea.vmem [#allocation7], 12
    %v5576 = vld [vmem:[%s5575] sm:$0xf]
    %5577 = vrot.lane.b32.xlu0 %v5075, 18
    %v5578 = vpop.permute.xlu0 %5577
    %5580 = vrot.lane.b32.xlu0 %v5072, 18
    %v5581 = vpop.permute.xlu0 %5580
    %5582 = vrot.lane.b32.xlu0 %v5073, 18
    %v5583 = vpop.permute.xlu0 %5582
    %5584 = vrot.lane.b32.xlu0 %v5074, 18
    %v5585 = vpop.permute.xlu0 %5584
    %v5586 = vsel %vm3975, %v5581, %v5583
    %v5587 = vsel %vm3975, %v5583, %v5585
    %v5588 = vsel %vm3975, %v5585, %v5578
    %v5593 = vsel %vm3975, %v5578, %v5581
    %v5595 = vsel %vm1701, %v5576, 0
    %5597 = vmatprep.subr.mxu0 %v5586
    %5598 = vmatpush1.msra.mxu0 %v5593
    %5599 = vmatprep.subr.mxu0 0.0
    %5600 = vmatpush1.msra.mxu0 0.0
    %5601 = vmatprep.subr.mxu0 0.0
    %5602 = vmatpush1.msra.mxu0 0.0
    %5603 = vmatprep.subr.mxu0 0.0
    %5604 = vmatpush1.msra.mxu0 0.0
    %5605 = vmatprep.subr.mxu0 0.0
    %5606 = vmatpush1.msra.mxu0 0.0
    %5607 = vmatprep.subr.mxu0 0.0
    %5608 = vmatpush1.msra.mxu0 0.0
    %5609 = vmatprep.subr.mxu0 0.0
    %5610 = vmatpush1.msra.mxu0 0.0
    %5611 = vmatprep.subr.mxu0 0.0
    %5612 = vmatpush1.msra.mxu0 0.0
    %5613 = vmatprep.subr.mxu0 0.0
    %5614 = vmatpush1.msra.mxu0 0.0
    %5615 = vmatprep.subr.mxu0 0.0
    %5616 = vmatpush1.msra.mxu0 0.0
    %5617 = vmatprep.subr.mxu0 0.0
    %5618 = vmatpush1.msra.mxu0 0.0
    %5619 = vmatprep.subr.mxu0 0.0
    %5620 = vmatpush1.msra.mxu0 0.0
    %5621 = vmatprep.subr.mxu0 0.0
    %5622 = vmatpush1.msra.mxu0 0.0
    %5623 = vmatprep.subr.mxu0 0.0
    %5624 = vmatpush1.msra.mxu0 0.0
    %5625 = vmatprep.subr.mxu0 0.0
    %5626 = vmatpush1.msra.mxu0 0.0
    %5627 = vmatprep.subr.mxu0 0.0
    %5628 = vmatpush1.msra.mxu0 0.0
    %5629 = vmatprep.subr.mxu0 0.0
    %5630 = vmatpush1.msra.mxu0 0.0
    %5631 = vmatprep.subr.mxu0 0.0
    %5632 = vmatpush1.msra.mxu0 0.0
    %5633 = vmatprep.subr.mxu0 0.0
    %5634 = vmatpush1.msra.mxu0 0.0
    %5635 = vmatprep.subr.mxu0 0.0
    %5636 = vmatpush1.msra.mxu0 0.0
    %5637 = vmatprep.subr.mxu0 0.0
    %5638 = vmatpush1.msra.mxu0 0.0
    %5639 = vmatprep.subr.mxu0 0.0
    %5640 = vmatpush1.msra.mxu0 0.0
    %5641 = vmatprep.subr.mxu0 0.0
    %5642 = vmatpush1.msra.mxu0 0.0
    %5643 = vmatprep.subr.mxu0 0.0
    %5644 = vmatpush1.msra.mxu0 0.0
    %5645 = vmatprep.subr.mxu0 0.0
    %5646 = vmatpush1.msra.mxu0 0.0
    %5647 = vmatprep.subr.mxu0 0.0
    %5648 = vmatpush1.msra.mxu0 0.0
    %5649 = vmatprep.subr.mxu0 0.0
    %5650 = vmatpush1.msra.mxu0 0.0
    %5651 = vmatprep.subr.mxu0 0.0
    %5652 = vmatpush1.msra.mxu0 0.0
    %5653 = vmatprep.subr.mxu0 0.0
    %5654 = vmatpush1.msra.mxu0 0.0
    %5655 = vmatprep.subr.mxu0 0.0
    %5656 = vmatpush1.msra.mxu0 0.0
    %5657 = vmatprep.subr.mxu0 0.0
    %5658 = vmatpush1.msra.mxu0 0.0
    %5659 = vmatprep.subr.mxu0 0.0
    %5660 = vmatpush1.msra.mxu0 0.0
    %5661 = vmatprep.mubr.f32.mxu0 0.0
    %5662 = vmatmul.mubr.f32.gmra.mrb[0].mxu0 %v5595
    %v5663 = vpop.f32.mrb[0].mxu0
    %v5664 = vadd.f32 0.0, %v5663
    %v5665 = vpop.f32.mrb[0].mxu0
    %v5666 = vadd.f32 0.0, %v5665
    %5667 = vdwg.mxu0
    %5668 = vmatprep.subr.mxu0 %v5588
    %5669 = vmatpush1.msra.mxu0 %v5587
    %5670 = vmatprep.subr.mxu0 0.0
    %5671 = vmatpush1.msra.mxu0 0.0
    %5672 = vmatprep.subr.mxu0 0.0
    %5673 = vmatpush1.msra.mxu0 0.0
    %5674 = vmatprep.subr.mxu0 0.0
    %5675 = vmatpush1.msra.mxu0 0.0
    %5676 = vmatprep.subr.mxu0 0.0
    %5677 = vmatpush1.msra.mxu0 0.0
    %5678 = vmatprep.subr.mxu0 0.0
    %5679 = vmatpush1.msra.mxu0 0.0
    %5680 = vmatprep.subr.mxu0 0.0
    %5681 = vmatpush1.msra.mxu0 0.0
    %5682 = vmatprep.subr.mxu0 0.0
    %5683 = vmatpush1.msra.mxu0 0.0
    %5684 = vmatprep.subr.mxu0 0.0
    %5685 = vmatpush1.msra.mxu0 0.0
    %5686 = vmatprep.subr.mxu0 0.0
    %5687 = vmatpush1.msra.mxu0 0.0
    %5688 = vmatprep.subr.mxu0 0.0
    %5689 = vmatpush1.msra.mxu0 0.0
    %5690 = vmatprep.subr.mxu0 0.0
    %5691 = vmatpush1.msra.mxu0 0.0
    %5692 = vmatprep.subr.mxu0 0.0
    %5693 = vmatpush1.msra.mxu0 0.0
    %5694 = vmatprep.subr.mxu0 0.0
    %5695 = vmatpush1.msra.mxu0 0.0
    %5696 = vmatprep.subr.mxu0 0.0
    %5697 = vmatpush1.msra.mxu0 0.0
    %5698 = vmatprep.subr.mxu0 0.0
    %5699 = vmatpush1.msra.mxu0 0.0
    %5700 = vmatprep.subr.mxu0 0.0
    %5701 = vmatpush1.msra.mxu0 0.0
    %5702 = vmatprep.subr.mxu0 0.0
    %5703 = vmatpush1.msra.mxu0 0.0
    %5704 = vmatprep.subr.mxu0 0.0
    %5705 = vmatpush1.msra.mxu0 0.0
    %5706 = vmatprep.subr.mxu0 0.0
    %5707 = vmatpush1.msra.mxu0 0.0
    %5708 = vmatprep.subr.mxu0 0.0
    %5709 = vmatpush1.msra.mxu0 0.0
    %5710 = vmatprep.subr.mxu0 0.0
    %5711 = vmatpush1.msra.mxu0 0.0
    %5712 = vmatprep.subr.mxu0 0.0
    %5713 = vmatpush1.msra.mxu0 0.0
    %5714 = vmatprep.subr.mxu0 0.0
    %5715 = vmatpush1.msra.mxu0 0.0
    %5716 = vmatprep.subr.mxu0 0.0
    %5717 = vmatpush1.msra.mxu0 0.0
    %5718 = vmatprep.subr.mxu0 0.0
    %5719 = vmatpush1.msra.mxu0 0.0
    %5720 = vmatprep.subr.mxu0 0.0
    %5721 = vmatpush1.msra.mxu0 0.0
    %5722 = vmatprep.subr.mxu0 0.0
    %5723 = vmatpush1.msra.mxu0 0.0
    %5724 = vmatprep.subr.mxu0 0.0
    %5725 = vmatpush1.msra.mxu0 0.0
    %5726 = vmatprep.subr.mxu0 0.0
    %5727 = vmatpush1.msra.mxu0 0.0
    %5728 = vmatprep.subr.mxu0 0.0
    %5729 = vmatpush1.msra.mxu0 0.0
    %5730 = vmatprep.subr.mxu0 0.0
    %5731 = vmatpush1.msra.mxu0 0.0
    %5732 = vmatprep.mubr.f32.mxu0 0.0
    %5733 = vmatmul.mubr.f32.gmra.mrb[0].mxu0 %v5595
    %v5734 = vpop.f32.mrb[0].mxu0
    %v5735 = vadd.f32 0.0, %v5734
    %v5736 = vpop.f32.mrb[0].mxu0
    %v5737 = vadd.f32 0.0, %v5736
    %5738 = vdwg.mxu0
    %v5739 = vadd.f32 %v5571, %v5664
    %v5740 = vadd.f32 %v5572, %v5666
    %v5741 = vadd.f32 %v5573, %v5735
    %v5742 = vadd.f32 %v5574, %v5737
    %s5743 = scalar_lea.vmem [#allocation7], 16
    %v5744 = vld [vmem:[%s5743] sm:$0xf]
    %5745 = vrot.lane.b32.xlu0 %v5075, 17
    %v5746 = vpop.permute.xlu0 %5745
    %5748 = vrot.lane.b32.xlu0 %v5072, 17
    %v5749 = vpop.permute.xlu0 %5748
    %5750 = vrot.lane.b32.xlu0 %v5073, 17
    %v5751 = vpop.permute.xlu0 %5750
    %5752 = vrot.lane.b32.xlu0 %v5074, 17
    %v5753 = vpop.permute.xlu0 %5752
    %v5754 = vsel %vm4161, %v5749, %v5751
    %v5755 = vsel %vm4161, %v5751, %v5753
    %v5756 = vsel %vm4161, %v5753, %v5746
    %v5761 = vsel %vm4161, %v5746, %v5749
    %v5763 = vsel %vm1701, %v5744, 0
    %5765 = vmatprep.subr.mxu0 %v5754
    %5766 = vmatpush1.msra.mxu0 %v5761
    %5767 = vmatprep.subr.mxu0 0.0
    %5768 = vmatpush1.msra.mxu0 0.0
    %5769 = vmatprep.subr.mxu0 0.0
    %5770 = vmatpush1.msra.mxu0 0.0
    %5771 = vmatprep.subr.mxu0 0.0
    %5772 = vmatpush1.msra.mxu0 0.0
    %5773 = vmatprep.subr.mxu0 0.0
    %5774 = vmatpush1.msra.mxu0 0.0
    %5775 = vmatprep.subr.mxu0 0.0
    %5776 = vmatpush1.msra.mxu0 0.0
    %5777 = vmatprep.subr.mxu0 0.0
    %5778 = vmatpush1.msra.mxu0 0.0
    %5779 = vmatprep.subr.mxu0 0.0
    %5780 = vmatpush1.msra.mxu0 0.0
    %5781 = vmatprep.subr.mxu0 0.0
    %5782 = vmatpush1.msra.mxu0 0.0
    %5783 = vmatprep.subr.mxu0 0.0
    %5784 = vmatpush1.msra.mxu0 0.0
    %5785 = vmatprep.subr.mxu0 0.0
    %5786 = vmatpush1.msra.mxu0 0.0
    %5787 = vmatprep.subr.mxu0 0.0
    %5788 = vmatpush1.msra.mxu0 0.0
    %5789 = vmatprep.subr.mxu0 0.0
    %5790 = vmatpush1.msra.mxu0 0.0
    %5791 = vmatprep.subr.mxu0 0.0
    %5792 = vmatpush1.msra.mxu0 0.0
    %5793 = vmatprep.subr.mxu0 0.0
    %5794 = vmatpush1.msra.mxu0 0.0
    %5795 = vmatprep.subr.mxu0 0.0
    %5796 = vmatpush1.msra.mxu0 0.0
    %5797 = vmatprep.subr.mxu0 0.0
    %5798 = vmatpush1.msra.mxu0 0.0
    %5799 = vmatprep.subr.mxu0 0.0
    %5800 = vmatpush1.msra.mxu0 0.0
    %5801 = vmatprep.subr.mxu0 0.0
    %5802 = vmatpush1.msra.mxu0 0.0
    %5803 = vmatprep.subr.mxu0 0.0
    %5804 = vmatpush1.msra.mxu0 0.0
    %5805 = vmatprep.subr.mxu0 0.0
    %5806 = vmatpush1.msra.mxu0 0.0
    %5807 = vmatprep.subr.mxu0 0.0
    %5808 = vmatpush1.msra.mxu0 0.0
    %5809 = vmatprep.subr.mxu0 0.0
    %5810 = vmatpush1.msra.mxu0 0.0
    %5811 = vmatprep.subr.mxu0 0.0
    %5812 = vmatpush1.msra.mxu0 0.0
    %5813 = vmatprep.subr.mxu0 0.0
    %5814 = vmatpush1.msra.mxu0 0.0
    %5815 = vmatprep.subr.mxu0 0.0
    %5816 = vmatpush1.msra.mxu0 0.0
    %5817 = vmatprep.subr.mxu0 0.0
    %5818 = vmatpush1.msra.mxu0 0.0
    %5819 = vmatprep.subr.mxu0 0.0
    %5820 = vmatpush1.msra.mxu0 0.0
    %5821 = vmatprep.subr.mxu0 0.0
    %5822 = vmatpush1.msra.mxu0 0.0
    %5823 = vmatprep.subr.mxu0 0.0
    %5824 = vmatpush1.msra.mxu0 0.0
    %5825 = vmatprep.subr.mxu0 0.0
    %5826 = vmatpush1.msra.mxu0 0.0
    %5827 = vmatprep.subr.mxu0 0.0
    %5828 = vmatpush1.msra.mxu0 0.0
    %5829 = vmatprep.mubr.f32.mxu0 0.0
    %5830 = vmatmul.mubr.f32.gmra.mrb[0].mxu0 %v5763
    %v5831 = vpop.f32.mrb[0].mxu0
    %v5832 = vadd.f32 0.0, %v5831
    %v5833 = vpop.f32.mrb[0].mxu0
    %v5834 = vadd.f32 0.0, %v5833
    %5835 = vdwg.mxu0
    %5836 = vmatprep.subr.mxu0 %v5756
    %5837 = vmatpush1.msra.mxu0 %v5755
    %5838 = vmatprep.subr.mxu0 0.0
    %5839 = vmatpush1.msra.mxu0 0.0
    %5840 = vmatprep.subr.mxu0 0.0
    %5841 = vmatpush1.msra.mxu0 0.0
    %5842 = vmatprep.subr.mxu0 0.0
    %5843 = vmatpush1.msra.mxu0 0.0
    %5844 = vmatprep.subr.mxu0 0.0
    %5845 = vmatpush1.msra.mxu0 0.0
    %5846 = vmatprep.subr.mxu0 0.0
    %5847 = vmatpush1.msra.mxu0 0.0
    %5848 = vmatprep.subr.mxu0 0.0
    %5849 = vmatpush1.msra.mxu0 0.0
    %5850 = vmatprep.subr.mxu0 0.0
    %5851 = vmatpush1.msra.mxu0 0.0
    %5852 = vmatprep.subr.mxu0 0.0
    %5853 = vmatpush1.msra.mxu0 0.0
    %5854 = vmatprep.subr.mxu0 0.0
    %5855 = vmatpush1.msra.mxu0 0.0
    %5856 = vmatprep.subr.mxu0 0.0
    %5857 = vmatpush1.msra.mxu0 0.0
    %5858 = vmatprep.subr.mxu0 0.0
    %5859 = vmatpush1.msra.mxu0 0.0
    %5860 = vmatprep.subr.mxu0 0.0
    %5861 = vmatpush1.msra.mxu0 0.0
    %5862 = vmatprep.subr.mxu0 0.0
    %5863 = vmatpush1.msra.mxu0 0.0
    %5864 = vmatprep.subr.mxu0 0.0
    %5865 = vmatpush1.msra.mxu0 0.0
    %5866 = vmatprep.subr.mxu0 0.0
    %5867 = vmatpush1.msra.mxu0 0.0
    %5868 = vmatprep.subr.mxu0 0.0
    %5869 = vmatpush1.msra.mxu0 0.0
    %5870 = vmatprep.subr.mxu0 0.0
    %5871 = vmatpush1.msra.mxu0 0.0
    %5872 = vmatprep.subr.mxu0 0.0
    %5873 = vmatpush1.msra.mxu0 0.0
    %5874 = vmatprep.subr.mxu0 0.0
    %5875 = vmatpush1.msra.mxu0 0.0
    %5876 = vmatprep.subr.mxu0 0.0
    %5877 = vmatpush1.msra.mxu0 0.0
    %5878 = vmatprep.subr.mxu0 0.0
    %5879 = vmatpush1.msra.mxu0 0.0
    %5880 = vmatprep.subr.mxu0 0.0
    %5881 = vmatpush1.msra.mxu0 0.0
    %5882 = vmatprep.subr.mxu0 0.0
    %5883 = vmatpush1.msra.mxu0 0.0
    %5884 = vmatprep.subr.mxu0 0.0
    %5885 = vmatpush1.msra.mxu0 0.0
    %5886 = vmatprep.subr.mxu0 0.0
    %5887 = vmatpush1.msra.mxu0 0.0
    %5888 = vmatprep.subr.mxu0 0.0
    %5889 = vmatpush1.msra.mxu0 0.0
    %5890 = vmatprep.subr.mxu0 0.0
    %5891 = vmatpush1.msra.mxu0 0.0
    %5892 = vmatprep.subr.mxu0 0.0
    %5893 = vmatpush1.msra.mxu0 0.0
    %5894 = vmatprep.subr.mxu0 0.0
    %5895 = vmatpush1.msra.mxu0 0.0
    %5896 = vmatprep.subr.mxu0 0.0
    %5897 = vmatpush1.msra.mxu0 0.0
    %5898 = vmatprep.subr.mxu0 0.0
    %5899 = vmatpush1.msra.mxu0 0.0
    %5900 = vmatprep.mubr.f32.mxu0 0.0
    %5901 = vmatmul.mubr.f32.gmra.mrb[0].mxu0 %v5763
    %v5902 = vpop.f32.mrb[0].mxu0
    %v5903 = vadd.f32 0.0, %v5902
    %v5904 = vpop.f32.mrb[0].mxu0
    %v5905 = vadd.f32 0.0, %v5904
    %5906 = vdwg.mxu0
    %v5907 = vadd.f32 %v5739, %v5832
    %v5908 = vadd.f32 %v5740, %v5834
    %v5909 = vadd.f32 %v5741, %v5903
    %v5910 = vadd.f32 %v5742, %v5905
    %s5911 = scalar_lea.vmem [#allocation7], 20
    %v5912 = vld [vmem:[%s5911] sm:$0xf]
    %5913 = vrot.lane.b32.xlu0 %v5075, 16
    %v5914 = vpop.permute.xlu0 %5913
    %5916 = vrot.lane.b32.xlu0 %v5072, 16
    %v5917 = vpop.permute.xlu0 %5916
    %5918 = vrot.lane.b32.xlu0 %v5073, 16
    %v5919 = vpop.permute.xlu0 %5918
    %5920 = vrot.lane.b32.xlu0 %v5074, 16
    %v5921 = vpop.permute.xlu0 %5920
    %v5922 = vsel %vm3478, %v5917, %v5919
    %v5923 = vsel %vm3478, %v5919, %v5921
    %v5924 = vsel %vm3478, %v5921, %v5914
    %v5929 = vsel %vm3478, %v5914, %v5917
    %v5931 = vsel %vm1701, %v5912, 0
    %5933 = vmatprep.subr.mxu0 %v5922
    %5934 = vmatpush1.msra.mxu0 %v5929
    %5935 = vmatprep.subr.mxu0 0.0
    %5936 = vmatpush1.msra.mxu0 0.0
    %5937 = vmatprep.subr.mxu0 0.0
    %5938 = vmatpush1.msra.mxu0 0.0
    %5939 = vmatprep.subr.mxu0 0.0
    %5940 = vmatpush1.msra.mxu0 0.0
    %5941 = vmatprep.subr.mxu0 0.0
    %5942 = vmatpush1.msra.mxu0 0.0
    %5943 = vmatprep.subr.mxu0 0.0
    %5944 = vmatpush1.msra.mxu0 0.0
    %5945 = vmatprep.subr.mxu0 0.0
    %5946 = vmatpush1.msra.mxu0 0.0
    %5947 = vmatprep.subr.mxu0 0.0
    %5948 = vmatpush1.msra.mxu0 0.0
    %5949 = vmatprep.subr.mxu0 0.0
    %5950 = vmatpush1.msra.mxu0 0.0
    %5951 = vmatprep.subr.mxu0 0.0
    %5952 = vmatpush1.msra.mxu0 0.0
    %5953 = vmatprep.subr.mxu0 0.0
    %5954 = vmatpush1.msra.mxu0 0.0
    %5955 = vmatprep.subr.mxu0 0.0
    %5956 = vmatpush1.msra.mxu0 0.0
    %5957 = vmatprep.subr.mxu0 0.0
    %5958 = vmatpush1.msra.mxu0 0.0
    %5959 = vmatprep.subr.mxu0 0.0
    %5960 = vmatpush1.msra.mxu0 0.0
    %5961 = vmatprep.subr.mxu0 0.0
    %5962 = vmatpush1.msra.mxu0 0.0
    %5963 = vmatprep.subr.mxu0 0.0
    %5964 = vmatpush1.msra.mxu0 0.0
    %5965 = vmatprep.subr.mxu0 0.0
    %5966 = vmatpush1.msra.mxu0 0.0
    %5967 = vmatprep.subr.mxu0 0.0
    %5968 = vmatpush1.msra.mxu0 0.0
    %5969 = vmatprep.subr.mxu0 0.0
    %5970 = vmatpush1.msra.mxu0 0.0
    %5971 = vmatprep.subr.mxu0 0.0
    %5972 = vmatpush1.msra.mxu0 0.0
    %5973 = vmatprep.subr.mxu0 0.0
    %5974 = vmatpush1.msra.mxu0 0.0
    %5975 = vmatprep.subr.mxu0 0.0
    %5976 = vmatpush1.msra.mxu0 0.0
    %5977 = vmatprep.subr.mxu0 0.0
    %5978 = vmatpush1.msra.mxu0 0.0
    %5979 = vmatprep.subr.mxu0 0.0
    %5980 = vmatpush1.msra.mxu0 0.0
    %5981 = vmatprep.subr.mxu0 0.0
    %5982 = vmatpush1.msra.mxu0 0.0
    %5983 = vmatprep.subr.mxu0 0.0
    %5984 = vmatpush1.msra.mxu0 0.0
    %5985 = vmatprep.subr.mxu0 0.0
    %5986 = vmatpush1.msra.mxu0 0.0
    %5987 = vmatprep.subr.mxu0 0.0
    %5988 = vmatpush1.msra.mxu0 0.0
    %5989 = vmatprep.subr.mxu0 0.0
    %5990 = vmatpush1.msra.mxu0 0.0
    %5991 = vmatprep.subr.mxu0 0.0
    %5992 = vmatpush1.msra.mxu0 0.0
    %5993 = vmatprep.subr.mxu0 0.0
    %5994 = vmatpush1.msra.mxu0 0.0
    %5995 = vmatprep.subr.mxu0 0.0
    %5996 = vmatpush1.msra.mxu0 0.0
    %5997 = vmatprep.mubr.f32.mxu0 0.0
    %5998 = vmatmul.mubr.f32.gmra.mrb[0].mxu0 %v5931
    %v5999 = vpop.f32.mrb[0].mxu0
    %v6000 = vadd.f32 0.0, %v5999
    %v6001 = vpop.f32.mrb[0].mxu0
    %v6002 = vadd.f32 0.0, %v6001
    %6003 = vdwg.mxu0
    %6004 = vmatprep.subr.mxu0 %v5924
    %6005 = vmatpush1.msra.mxu0 %v5923
    %6006 = vmatprep.subr.mxu0 0.0
    %6007 = vmatpush1.msra.mxu0 0.0
    %6008 = vmatprep.subr.mxu0 0.0
    %6009 = vmatpush1.msra.mxu0 0.0
    %6010 = vmatprep.subr.mxu0 0.0
    %6011 = vmatpush1.msra.mxu0 0.0
    %6012 = vmatprep.subr.mxu0 0.0
    %6013 = vmatpush1.msra.mxu0 0.0
    %6014 = vmatprep.subr.mxu0 0.0
    %6015 = vmatpush1.msra.mxu0 0.0
    %6016 = vmatprep.subr.mxu0 0.0
    %6017 = vmatpush1.msra.mxu0 0.0
    %6018 = vmatprep.subr.mxu0 0.0
    %6019 = vmatpush1.msra.mxu0 0.0
    %6020 = vmatprep.subr.mxu0 0.0
    %6021 = vmatpush1.msra.mxu0 0.0
    %6022 = vmatprep.subr.mxu0 0.0
    %6023 = vmatpush1.msra.mxu0 0.0
    %6024 = vmatprep.subr.mxu0 0.0
    %6025 = vmatpush1.msra.mxu0 0.0
    %6026 = vmatprep.subr.mxu0 0.0
    %6027 = vmatpush1.msra.mxu0 0.0
    %6028 = vmatprep.subr.mxu0 0.0
    %6029 = vmatpush1.msra.mxu0 0.0
    %6030 = vmatprep.subr.mxu0 0.0
    %6031 = vmatpush1.msra.mxu0 0.0
    %6032 = vmatprep.subr.mxu0 0.0
    %6033 = vmatpush1.msra.mxu0 0.0
    %6034 = vmatprep.subr.mxu0 0.0
    %6035 = vmatpush1.msra.mxu0 0.0
    %6036 = vmatprep.subr.mxu0 0.0
    %6037 = vmatpush1.msra.mxu0 0.0
    %6038 = vmatprep.subr.mxu0 0.0
    %6039 = vmatpush1.msra.mxu0 0.0
    %6040 = vmatprep.subr.mxu0 0.0
    %6041 = vmatpush1.msra.mxu0 0.0
    %6042 = vmatprep.subr.mxu0 0.0
    %6043 = vmatpush1.msra.mxu0 0.0
    %6044 = vmatprep.subr.mxu0 0.0
    %6045 = vmatpush1.msra.mxu0 0.0
    %6046 = vmatprep.subr.mxu0 0.0
    %6047 = vmatpush1.msra.mxu0 0.0
    %6048 = vmatprep.subr.mxu0 0.0
    %6049 = vmatpush1.msra.mxu0 0.0
    %6050 = vmatprep.subr.mxu0 0.0
    %6051 = vmatpush1.msra.mxu0 0.0
    %6052 = vmatprep.subr.mxu0 0.0
    %6053 = vmatpush1.msra.mxu0 0.0
    %6054 = vmatprep.subr.mxu0 0.0
    %6055 = vmatpush1.msra.mxu0 0.0
    %6056 = vmatprep.subr.mxu0 0.0
    %6057 = vmatpush1.msra.mxu0 0.0
    %6058 = vmatprep.subr.mxu0 0.0
    %6059 = vmatpush1.msra.mxu0 0.0
    %6060 = vmatprep.subr.mxu0 0.0
    %6061 = vmatpush1.msra.mxu0 0.0
    %6062 = vmatprep.subr.mxu0 0.0
    %6063 = vmatpush1.msra.mxu0 0.0
    %6064 = vmatprep.subr.mxu0 0.0
    %6065 = vmatpush1.msra.mxu0 0.0
    %6066 = vmatprep.subr.mxu0 0.0
    %6067 = vmatpush1.msra.mxu0 0.0
    %6068 = vmatprep.mubr.f32.mxu0 0.0
    %6069 = vmatmul.mubr.f32.gmra.mrb[0].mxu0 %v5931
    %v6070 = vpop.f32.mrb[0].mxu0
    %v6071 = vadd.f32 0.0, %v6070
    %v6072 = vpop.f32.mrb[0].mxu0
    %v6073 = vadd.f32 0.0, %v6072
    %6074 = vdwg.mxu0
    %v6075 = vadd.f32 %v5907, %v6000
    %v6076 = vadd.f32 %v5908, %v6002
    %v6077 = vadd.f32 %v5909, %v6071
    %v6078 = vadd.f32 %v5910, %v6073
    %s6079 = scalar_lea.vmem [#allocation7], 24
    %v6080 = vld [vmem:[%s6079] sm:$0xf]
    %6081 = vrot.lane.b32.xlu0 %v5075, 2
    %v6082 = vpop.permute.xlu0 %6081
    %6084 = vrot.lane.b32.xlu0 %v5072, 2
    %v6085 = vpop.permute.xlu0 %6084
    %6086 = vrot.lane.b32.xlu0 %v5073, 2
    %v6087 = vpop.permute.xlu0 %6086
    %6088 = vrot.lane.b32.xlu0 %v5074, 2
    %v6089 = vpop.permute.xlu0 %6088
    %v6090 = vsel %vm4532, %v6085, %v6087
    %v6091 = vsel %vm4532, %v6087, %v6089
    %v6092 = vsel %vm4532, %v6089, %v6082
    %v6097 = vsel %vm4532, %v6082, %v6085
    %v6099 = vsel %vm1701, %v6080, 0
    %6101 = vmatprep.subr.mxu0 %v6090
    %6102 = vmatpush1.msra.mxu0 %v6097
    %6103 = vmatprep.subr.mxu0 0.0
    %6104 = vmatpush1.msra.mxu0 0.0
    %6105 = vmatprep.subr.mxu0 0.0
    %6106 = vmatpush1.msra.mxu0 0.0
    %6107 = vmatprep.subr.mxu0 0.0
    %6108 = vmatpush1.msra.mxu0 0.0
    %6109 = vmatprep.subr.mxu0 0.0
    %6110 = vmatpush1.msra.mxu0 0.0
    %6111 = vmatprep.subr.mxu0 0.0
    %6112 = vmatpush1.msra.mxu0 0.0
    %6113 = vmatprep.subr.mxu0 0.0
    %6114 = vmatpush1.msra.mxu0 0.0
    %6115 = vmatprep.subr.mxu0 0.0
    %6116 = vmatpush1.msra.mxu0 0.0
    %6117 = vmatprep.subr.mxu0 0.0
    %6118 = vmatpush1.msra.mxu0 0.0
    %6119 = vmatprep.subr.mxu0 0.0
    %6120 = vmatpush1.msra.mxu0 0.0
    %6121 = vmatprep.subr.mxu0 0.0
    %6122 = vmatpush1.msra.mxu0 0.0
    %6123 = vmatprep.subr.mxu0 0.0
    %6124 = vmatpush1.msra.mxu0 0.0
    %6125 = vmatprep.subr.mxu0 0.0
    %6126 = vmatpush1.msra.mxu0 0.0
    %6127 = vmatprep.subr.mxu0 0.0
    %6128 = vmatpush1.msra.mxu0 0.0
    %6129 = vmatprep.subr.mxu0 0.0
    %6130 = vmatpush1.msra.mxu0 0.0
    %6131 = vmatprep.subr.mxu0 0.0
    %6132 = vmatpush1.msra.mxu0 0.0
    %6133 = vmatprep.subr.mxu0 0.0
    %6134 = vmatpush1.msra.mxu0 0.0
    %6135 = vmatprep.subr.mxu0 0.0
    %6136 = vmatpush1.msra.mxu0 0.0
    %6137 = vmatprep.subr.mxu0 0.0
    %6138 = vmatpush1.msra.mxu0 0.0
    %6139 = vmatprep.subr.mxu0 0.0
    %6140 = vmatpush1.msra.mxu0 0.0
    %6141 = vmatprep.subr.mxu0 0.0
    %6142 = vmatpush1.msra.mxu0 0.0
    %6143 = vmatprep.subr.mxu0 0.0
    %6144 = vmatpush1.msra.mxu0 0.0
    %6145 = vmatprep.subr.mxu0 0.0
    %6146 = vmatpush1.msra.mxu0 0.0
    %6147 = vmatprep.subr.mxu0 0.0
    %6148 = vmatpush1.msra.mxu0 0.0
    %6149 = vmatprep.subr.mxu0 0.0
    %6150 = vmatpush1.msra.mxu0 0.0
    %6151 = vmatprep.subr.mxu0 0.0
    %6152 = vmatpush1.msra.mxu0 0.0
    %6153 = vmatprep.subr.mxu0 0.0
    %6154 = vmatpush1.msra.mxu0 0.0
    %6155 = vmatprep.subr.mxu0 0.0
    %6156 = vmatpush1.msra.mxu0 0.0
    %6157 = vmatprep.subr.mxu0 0.0
    %6158 = vmatpush1.msra.mxu0 0.0
    %6159 = vmatprep.subr.mxu0 0.0
    %6160 = vmatpush1.msra.mxu0 0.0
    %6161 = vmatprep.subr.mxu0 0.0
    %6162 = vmatpush1.msra.mxu0 0.0
    %6163 = vmatprep.subr.mxu0 0.0
    %6164 = vmatpush1.msra.mxu0 0.0
    %6165 = vmatprep.mubr.f32.mxu0 0.0
    %6166 = vmatmul.mubr.f32.gmra.mrb[0].mxu0 %v6099
    %v6167 = vpop.f32.mrb[0].mxu0
    %v6168 = vadd.f32 0.0, %v6167
    %v6169 = vpop.f32.mrb[0].mxu0
    %v6170 = vadd.f32 0.0, %v6169
    %6171 = vdwg.mxu0
    %6172 = vmatprep.subr.mxu0 %v6092
    %6173 = vmatpush1.msra.mxu0 %v6091
    %6174 = vmatprep.subr.mxu0 0.0
    %6175 = vmatpush1.msra.mxu0 0.0
    %6176 = vmatprep.subr.mxu0 0.0
    %6177 = vmatpush1.msra.mxu0 0.0
    %6178 = vmatprep.subr.mxu0 0.0
    %6179 = vmatpush1.msra.mxu0 0.0
    %6180 = vmatprep.subr.mxu0 0.0
    %6181 = vmatpush1.msra.mxu0 0.0
    %6182 = vmatprep.subr.mxu0 0.0
    %6183 = vmatpush1.msra.mxu0 0.0
    %6184 = vmatprep.subr.mxu0 0.0
    %6185 = vmatpush1.msra.mxu0 0.0
    %6186 = vmatprep.subr.mxu0 0.0
    %6187 = vmatpush1.msra.mxu0 0.0
    %6188 = vmatprep.subr.mxu0 0.0
    %6189 = vmatpush1.msra.mxu0 0.0
    %6190 = vmatprep.subr.mxu0 0.0
    %6191 = vmatpush1.msra.mxu0 0.0
    %6192 = vmatprep.subr.mxu0 0.0
    %6193 = vmatpush1.msra.mxu0 0.0
    %6194 = vmatprep.subr.mxu0 0.0
    %6195 = vmatpush1.msra.mxu0 0.0
    %6196 = vmatprep.subr.mxu0 0.0
    %6197 = vmatpush1.msra.mxu0 0.0
    %6198 = vmatprep.subr.mxu0 0.0
    %6199 = vmatpush1.msra.mxu0 0.0
    %6200 = vmatprep.subr.mxu0 0.0
    %6201 = vmatpush1.msra.mxu0 0.0
    %6202 = vmatprep.subr.mxu0 0.0
    %6203 = vmatpush1.msra.mxu0 0.0
    %6204 = vmatprep.subr.mxu0 0.0
    %6205 = vmatpush1.msra.mxu0 0.0
    %6206 = vmatprep.subr.mxu0 0.0
    %6207 = vmatpush1.msra.mxu0 0.0
    %6208 = vmatprep.subr.mxu0 0.0
    %6209 = vmatpush1.msra.mxu0 0.0
    %6210 = vmatprep.subr.mxu0 0.0
    %6211 = vmatpush1.msra.mxu0 0.0
    %6212 = vmatprep.subr.mxu0 0.0
    %6213 = vmatpush1.msra.mxu0 0.0
    %6214 = vmatprep.subr.mxu0 0.0
    %6215 = vmatpush1.msra.mxu0 0.0
    %6216 = vmatprep.subr.mxu0 0.0
    %6217 = vmatpush1.msra.mxu0 0.0
    %6218 = vmatprep.subr.mxu0 0.0
    %6219 = vmatpush1.msra.mxu0 0.0
    %6220 = vmatprep.subr.mxu0 0.0
    %6221 = vmatpush1.msra.mxu0 0.0
    %6222 = vmatprep.subr.mxu0 0.0
    %6223 = vmatpush1.msra.mxu0 0.0
    %6224 = vmatprep.subr.mxu0 0.0
    %6225 = vmatpush1.msra.mxu0 0.0
    %6226 = vmatprep.subr.mxu0 0.0
    %6227 = vmatpush1.msra.mxu0 0.0
    %6228 = vmatprep.subr.mxu0 0.0
    %6229 = vmatpush1.msra.mxu0 0.0
    %6230 = vmatprep.subr.mxu0 0.0
    %6231 = vmatpush1.msra.mxu0 0.0
    %6232 = vmatprep.subr.mxu0 0.0
    %6233 = vmatpush1.msra.mxu0 0.0
    %6234 = vmatprep.subr.mxu0 0.0
    %6235 = vmatpush1.msra.mxu0 0.0
    %6236 = vmatprep.mubr.f32.mxu0 0.0
    %6237 = vmatmul.mubr.f32.gmra.mrb[0].mxu0 %v6099
    %v6238 = vpop.f32.mrb[0].mxu0
    %v6239 = vadd.f32 0.0, %v6238
    %v6240 = vpop.f32.mrb[0].mxu0
    %v6241 = vadd.f32 0.0, %v6240
    %6242 = vdwg.mxu0
    %v6243 = vadd.f32 %v6075, %v6168
    %v6244 = vadd.f32 %v6076, %v6170
    %v6245 = vadd.f32 %v6077, %v6239
    %v6246 = vadd.f32 %v6078, %v6241
    %s6247 = scalar_lea.vmem [#allocation7], 28
    %v6248 = vld [vmem:[%s6247] sm:$0xf]
    %6249 = vrot.lane.b32.xlu0 %v5075, 1
    %v6250 = vpop.permute.xlu0 %6249
    %6252 = vrot.lane.b32.xlu0 %v5072, 1
    %v6253 = vpop.permute.xlu0 %6252
    %6254 = vrot.lane.b32.xlu0 %v5073, 1
    %v6255 = vpop.permute.xlu0 %6254
    %6256 = vrot.lane.b32.xlu0 %v5074, 1
    %v6257 = vpop.permute.xlu0 %6256
    %v6258 = vsel %vm4718, %v6253, %v6255
    %v6259 = vsel %vm4718, %v6255, %v6257
    %v6260 = vsel %vm4718, %v6257, %v6250
    %v6265 = vsel %vm4718, %v6250, %v6253
    %v6267 = vsel %vm1701, %v6248, 0
    %6269 = vmatprep.subr.mxu0 %v6258
    %6270 = vmatpush1.msra.mxu0 %v6265
    %6271 = vmatprep.subr.mxu0 0.0
    %6272 = vmatpush1.msra.mxu0 0.0
    %6273 = vmatprep.subr.mxu0 0.0
    %6274 = vmatpush1.msra.mxu0 0.0
    %6275 = vmatprep.subr.mxu0 0.0
    %6276 = vmatpush1.msra.mxu0 0.0
    %6277 = vmatprep.subr.mxu0 0.0
    %6278 = vmatpush1.msra.mxu0 0.0
    %6279 = vmatprep.subr.mxu0 0.0
    %6280 = vmatpush1.msra.mxu0 0.0
    %6281 = vmatprep.subr.mxu0 0.0
    %6282 = vmatpush1.msra.mxu0 0.0
    %6283 = vmatprep.subr.mxu0 0.0
    %6284 = vmatpush1.msra.mxu0 0.0
    %6285 = vmatprep.subr.mxu0 0.0
    %6286 = vmatpush1.msra.mxu0 0.0
    %6287 = vmatprep.subr.mxu0 0.0
    %6288 = vmatpush1.msra.mxu0 0.0
    %6289 = vmatprep.subr.mxu0 0.0
    %6290 = vmatpush1.msra.mxu0 0.0
    %6291 = vmatprep.subr.mxu0 0.0
    %6292 = vmatpush1.msra.mxu0 0.0
    %6293 = vmatprep.subr.mxu0 0.0
    %6294 = vmatpush1.msra.mxu0 0.0
    %6295 = vmatprep.subr.mxu0 0.0
    %6296 = vmatpush1.msra.mxu0 0.0
    %6297 = vmatprep.subr.mxu0 0.0
    %6298 = vmatpush1.msra.mxu0 0.0
    %6299 = vmatprep.subr.mxu0 0.0
    %6300 = vmatpush1.msra.mxu0 0.0
    %6301 = vmatprep.subr.mxu0 0.0
    %6302 = vmatpush1.msra.mxu0 0.0
    %6303 = vmatprep.subr.mxu0 0.0
    %6304 = vmatpush1.msra.mxu0 0.0
    %6305 = vmatprep.subr.mxu0 0.0
    %6306 = vmatpush1.msra.mxu0 0.0
    %6307 = vmatprep.subr.mxu0 0.0
    %6308 = vmatpush1.msra.mxu0 0.0
    %6309 = vmatprep.subr.mxu0 0.0
    %6310 = vmatpush1.msra.mxu0 0.0
    %6311 = vmatprep.subr.mxu0 0.0
    %6312 = vmatpush1.msra.mxu0 0.0
    %6313 = vmatprep.subr.mxu0 0.0
    %6314 = vmatpush1.msra.mxu0 0.0
    %6315 = vmatprep.subr.mxu0 0.0
    %6316 = vmatpush1.msra.mxu0 0.0
    %6317 = vmatprep.subr.mxu0 0.0
    %6318 = vmatpush1.msra.mxu0 0.0
    %6319 = vmatprep.subr.mxu0 0.0
    %6320 = vmatpush1.msra.mxu0 0.0
    %6321 = vmatprep.subr.mxu0 0.0
    %6322 = vmatpush1.msra.mxu0 0.0
    %6323 = vmatprep.subr.mxu0 0.0
    %6324 = vmatpush1.msra.mxu0 0.0
    %6325 = vmatprep.subr.mxu0 0.0
    %6326 = vmatpush1.msra.mxu0 0.0
    %6327 = vmatprep.subr.mxu0 0.0
    %6328 = vmatpush1.msra.mxu0 0.0
    %6329 = vmatprep.subr.mxu0 0.0
    %6330 = vmatpush1.msra.mxu0 0.0
    %6331 = vmatprep.subr.mxu0 0.0
    %6332 = vmatpush1.msra.mxu0 0.0
    %6333 = vmatprep.mubr.f32.mxu0 0.0
    %6334 = vmatmul.mubr.f32.gmra.mrb[0].mxu0 %v6267
    %v6335 = vpop.f32.mrb[0].mxu0
    %v6336 = vadd.f32 0.0, %v6335
    %v6337 = vpop.f32.mrb[0].mxu0
    %v6338 = vadd.f32 0.0, %v6337
    %6339 = vdwg.mxu0
    %6340 = vmatprep.subr.mxu0 %v6260
    %6341 = vmatpush1.msra.mxu0 %v6259
    %6342 = vmatprep.subr.mxu0 0.0
    %6343 = vmatpush1.msra.mxu0 0.0
    %6344 = vmatprep.subr.mxu0 0.0
    %6345 = vmatpush1.msra.mxu0 0.0
    %6346 = vmatprep.subr.mxu0 0.0
    %6347 = vmatpush1.msra.mxu0 0.0
    %6348 = vmatprep.subr.mxu0 0.0
    %6349 = vmatpush1.msra.mxu0 0.0
    %6350 = vmatprep.subr.mxu0 0.0
    %6351 = vmatpush1.msra.mxu0 0.0
    %6352 = vmatprep.subr.mxu0 0.0
    %6353 = vmatpush1.msra.mxu0 0.0
    %6354 = vmatprep.subr.mxu0 0.0
    %6355 = vmatpush1.msra.mxu0 0.0
    %6356 = vmatprep.subr.mxu0 0.0
    %6357 = vmatpush1.msra.mxu0 0.0
    %6358 = vmatprep.subr.mxu0 0.0
    %6359 = vmatpush1.msra.mxu0 0.0
    %6360 = vmatprep.subr.mxu0 0.0
    %6361 = vmatpush1.msra.mxu0 0.0
    %6362 = vmatprep.subr.mxu0 0.0
    %6363 = vmatpush1.msra.mxu0 0.0
    %6364 = vmatprep.subr.mxu0 0.0
    %6365 = vmatpush1.msra.mxu0 0.0
    %6366 = vmatprep.subr.mxu0 0.0
    %6367 = vmatpush1.msra.mxu0 0.0
    %6368 = vmatprep.subr.mxu0 0.0
    %6369 = vmatpush1.msra.mxu0 0.0
    %6370 = vmatprep.subr.mxu0 0.0
    %6371 = vmatpush1.msra.mxu0 0.0
    %6372 = vmatprep.subr.mxu0 0.0
    %6373 = vmatpush1.msra.mxu0 0.0
    %6374 = vmatprep.subr.mxu0 0.0
    %6375 = vmatpush1.msra.mxu0 0.0
    %6376 = vmatprep.subr.mxu0 0.0
    %6377 = vmatpush1.msra.mxu0 0.0
    %6378 = vmatprep.subr.mxu0 0.0
    %6379 = vmatpush1.msra.mxu0 0.0
    %6380 = vmatprep.subr.mxu0 0.0
    %6381 = vmatpush1.msra.mxu0 0.0
    %6382 = vmatprep.subr.mxu0 0.0
    %6383 = vmatpush1.msra.mxu0 0.0
    %6384 = vmatprep.subr.mxu0 0.0
    %6385 = vmatpush1.msra.mxu0 0.0
    %6386 = vmatprep.subr.mxu0 0.0
    %6387 = vmatpush1.msra.mxu0 0.0
    %6388 = vmatprep.subr.mxu0 0.0
    %6389 = vmatpush1.msra.mxu0 0.0
    %6390 = vmatprep.subr.mxu0 0.0
    %6391 = vmatpush1.msra.mxu0 0.0
    %6392 = vmatprep.subr.mxu0 0.0
    %6393 = vmatpush1.msra.mxu0 0.0
    %6394 = vmatprep.subr.mxu0 0.0
    %6395 = vmatpush1.msra.mxu0 0.0
    %6396 = vmatprep.subr.mxu0 0.0
    %6397 = vmatpush1.msra.mxu0 0.0
    %6398 = vmatprep.subr.mxu0 0.0
    %6399 = vmatpush1.msra.mxu0 0.0
    %6400 = vmatprep.subr.mxu0 0.0
    %6401 = vmatpush1.msra.mxu0 0.0
    %6402 = vmatprep.subr.mxu0 0.0
    %6403 = vmatpush1.msra.mxu0 0.0
    %6404 = vmatprep.mubr.f32.mxu0 0.0
    %6405 = vmatmul.mubr.f32.gmra.mrb[0].mxu0 %v6267
    %v6406 = vpop.f32.mrb[0].mxu0
    %v6407 = vadd.f32 0.0, %v6406
    %v6408 = vpop.f32.mrb[0].mxu0
    %v6409 = vadd.f32 0.0, %v6408
    %6410 = vdwg.mxu0
    %v6411 = vadd.f32 %v6243, %v6336
    %v6412 = vadd.f32 %v6244, %v6338
    %v6413 = vadd.f32 %v6245, %v6407
    %v6414 = vadd.f32 %v6246, %v6409
    %s6415 = scalar_lea.vmem [#allocation7], 32
    %v6416 = vld [vmem:[%s6415] sm:$0xf]
    %v6418 = vsel %vm1701, %v6416, 0
    %6420 = vmatprep.subr.mxu0 %v5073
    %6421 = vmatpush1.msra.mxu0 %v5072
    %6422 = vmatprep.subr.mxu0 0.0
    %6423 = vmatpush1.msra.mxu0 0.0
    %6424 = vmatprep.subr.mxu0 0.0
    %6425 = vmatpush1.msra.mxu0 0.0
    %6426 = vmatprep.subr.mxu0 0.0
    %6427 = vmatpush1.msra.mxu0 0.0
    %6428 = vmatprep.subr.mxu0 0.0
    %6429 = vmatpush1.msra.mxu0 0.0
    %6430 = vmatprep.subr.mxu0 0.0
    %6431 = vmatpush1.msra.mxu0 0.0
    %6432 = vmatprep.subr.mxu0 0.0
    %6433 = vmatpush1.msra.mxu0 0.0
    %6434 = vmatprep.subr.mxu0 0.0
    %6435 = vmatpush1.msra.mxu0 0.0
    %6436 = vmatprep.subr.mxu0 0.0
    %6437 = vmatpush1.msra.mxu0 0.0
    %6438 = vmatprep.subr.mxu0 0.0
    %6439 = vmatpush1.msra.mxu0 0.0
    %6440 = vmatprep.subr.mxu0 0.0
    %6441 = vmatpush1.msra.mxu0 0.0
    %6442 = vmatprep.subr.mxu0 0.0
    %6443 = vmatpush1.msra.mxu0 0.0
    %6444 = vmatprep.subr.mxu0 0.0
    %6445 = vmatpush1.msra.mxu0 0.0
    %6446 = vmatprep.subr.mxu0 0.0
    %6447 = vmatpush1.msra.mxu0 0.0
    %6448 = vmatprep.subr.mxu0 0.0
    %6449 = vmatpush1.msra.mxu0 0.0
    %6450 = vmatprep.subr.mxu0 0.0
    %6451 = vmatpush1.msra.mxu0 0.0
    %6452 = vmatprep.subr.mxu0 0.0
    %6453 = vmatpush1.msra.mxu0 0.0
    %6454 = vmatprep.subr.mxu0 0.0
    %6455 = vmatpush1.msra.mxu0 0.0
    %6456 = vmatprep.subr.mxu0 0.0
    %6457 = vmatpush1.msra.mxu0 0.0
    %6458 = vmatprep.subr.mxu0 0.0
    %6459 = vmatpush1.msra.mxu0 0.0
    %6460 = vmatprep.subr.mxu0 0.0
    %6461 = vmatpush1.msra.mxu0 0.0
    %6462 = vmatprep.subr.mxu0 0.0
    %6463 = vmatpush1.msra.mxu0 0.0
    %6464 = vmatprep.subr.mxu0 0.0
    %6465 = vmatpush1.msra.mxu0 0.0
    %6466 = vmatprep.subr.mxu0 0.0
    %6467 = vmatpush1.msra.mxu0 0.0
    %6468 = vmatprep.subr.mxu0 0.0
    %6469 = vmatpush1.msra.mxu0 0.0
    %6470 = vmatprep.subr.mxu0 0.0
    %6471 = vmatpush1.msra.mxu0 0.0
    %6472 = vmatprep.subr.mxu0 0.0
    %6473 = vmatpush1.msra.mxu0 0.0
    %6474 = vmatprep.subr.mxu0 0.0
    %6475 = vmatpush1.msra.mxu0 0.0
    %6476 = vmatprep.subr.mxu0 0.0
    %6477 = vmatpush1.msra.mxu0 0.0
    %6478 = vmatprep.subr.mxu0 0.0
    %6479 = vmatpush1.msra.mxu0 0.0
    %6480 = vmatprep.subr.mxu0 0.0
    %6481 = vmatpush1.msra.mxu0 0.0
    %6482 = vmatprep.subr.mxu0 0.0
    %6483 = vmatpush1.msra.mxu0 0.0
    %6484 = vmatprep.mubr.f32.mxu0 0.0
    %6485 = vmatmul.mubr.f32.gmra.mrb[0].mxu0 %v6418
    %v6486 = vpop.f32.mrb[0].mxu0
    %v6487 = vadd.f32 0.0, %v6486
    %v6488 = vpop.f32.mrb[0].mxu0
    %v6489 = vadd.f32 0.0, %v6488
    %6490 = vdwg.mxu0
    %6491 = vmatprep.subr.mxu0 %v5075
    %6492 = vmatpush1.msra.mxu0 %v5074
    %6493 = vmatprep.subr.mxu0 0.0
    %6494 = vmatpush1.msra.mxu0 0.0
    %6495 = vmatprep.subr.mxu0 0.0
    %6496 = vmatpush1.msra.mxu0 0.0
    %6497 = vmatprep.subr.mxu0 0.0
    %6498 = vmatpush1.msra.mxu0 0.0
    %6499 = vmatprep.subr.mxu0 0.0
    %6500 = vmatpush1.msra.mxu0 0.0
    %6501 = vmatprep.subr.mxu0 0.0
    %6502 = vmatpush1.msra.mxu0 0.0
    %6503 = vmatprep.subr.mxu0 0.0
    %6504 = vmatpush1.msra.mxu0 0.0
    %6505 = vmatprep.subr.mxu0 0.0
    %6506 = vmatpush1.msra.mxu0 0.0
    %6507 = vmatprep.subr.mxu0 0.0
    %6508 = vmatpush1.msra.mxu0 0.0
    %6509 = vmatprep.subr.mxu0 0.0
    %6510 = vmatpush1.msra.mxu0 0.0
    %6511 = vmatprep.subr.mxu0 0.0
    %6512 = vmatpush1.msra.mxu0 0.0
    %6513 = vmatprep.subr.mxu0 0.0
    %6514 = vmatpush1.msra.mxu0 0.0
    %6515 = vmatprep.subr.mxu0 0.0
    %6516 = vmatpush1.msra.mxu0 0.0
    %6517 = vmatprep.subr.mxu0 0.0
    %6518 = vmatpush1.msra.mxu0 0.0
    %6519 = vmatprep.subr.mxu0 0.0
    %6520 = vmatpush1.msra.mxu0 0.0
    %6521 = vmatprep.subr.mxu0 0.0
    %6522 = vmatpush1.msra.mxu0 0.0
    %6523 = vmatprep.subr.mxu0 0.0
    %6524 = vmatpush1.msra.mxu0 0.0
    %6525 = vmatprep.subr.mxu0 0.0
    %6526 = vmatpush1.msra.mxu0 0.0
    %6527 = vmatprep.subr.mxu0 0.0
    %6528 = vmatpush1.msra.mxu0 0.0
    %6529 = vmatprep.subr.mxu0 0.0
    %6530 = vmatpush1.msra.mxu0 0.0
    %6531 = vmatprep.subr.mxu0 0.0
    %6532 = vmatpush1.msra.mxu0 0.0
    %6533 = vmatprep.subr.mxu0 0.0
    %6534 = vmatpush1.msra.mxu0 0.0
    %6535 = vmatprep.subr.mxu0 0.0
    %6536 = vmatpush1.msra.mxu0 0.0
    %6537 = vmatprep.subr.mxu0 0.0
    %6538 = vmatpush1.msra.mxu0 0.0
    %6539 = vmatprep.subr.mxu0 0.0
    %6540 = vmatpush1.msra.mxu0 0.0
    %6541 = vmatprep.subr.mxu0 0.0
    %6542 = vmatpush1.msra.mxu0 0.0
    %6543 = vmatprep.subr.mxu0 0.0
    %6544 = vmatpush1.msra.mxu0 0.0
    %6545 = vmatprep.subr.mxu0 0.0
    %6546 = vmatpush1.msra.mxu0 0.0
    %6547 = vmatprep.subr.mxu0 0.0
    %6548 = vmatpush1.msra.mxu0 0.0
    %6549 = vmatprep.subr.mxu0 0.0
    %6550 = vmatpush1.msra.mxu0 0.0
    %6551 = vmatprep.subr.mxu0 0.0
    %6552 = vmatpush1.msra.mxu0 0.0
    %6553 = vmatprep.subr.mxu0 0.0
    %6554 = vmatpush1.msra.mxu0 0.0
    %6555 = vmatprep.mubr.f32.mxu0 0.0
    %6556 = vmatmul.mubr.f32.gmra.mrb[0].mxu0 %v6418
    %v6557 = vpop.f32.mrb[0].mxu0
    %v6558 = vadd.f32 0.0, %v6557
    %v6559 = vpop.f32.mrb[0].mxu0
    %v6560 = vadd.f32 0.0, %v6559
    %6561 = vdwg.mxu0
    %v6562 = vadd.f32 %v6411, %v6487
    %v6563 = vadd.f32 %v6412, %v6489
    %v6564 = vadd.f32 %v6413, %v6558
    %v6565 = vadd.f32 %v6414, %v6560
    %v6566 = vld [vmem:[#allocation9] sm:$0xf]
    %6568 = vset.pattern.permute.xlu0 0
    %6569 = vperm.xlu0 %6568, %v6566
    %v6570 = vpop.permute.xlu0 %6569
    %v6572 = vadd.f32 %v6562, %v6570
    %v6573 = vadd.f32 %v6563, %v6570
    %v6574 = vadd.f32 %v6564, %v6570
    %v6575 = vadd.f32 %v6565, %v6570
    %v6578 = vcombine.low %v6572, %v6573
    %6580 = vst [vmem:[%s11] sm:$0xff] %v6578
    %v6583 = vcombine.low %v6574, %v6575
    %s6585 = scalar_lea.vmem %s11, 8
    %6586 = vst [vmem:[%s6585] sm:$0xff] %v6583
    // Predicated region
    $region66: #{_forward_impl.1} parent=1 // pred_check
      _
    $region67: #{_forward_impl.1} parent=1 // pred_check_branch
      %6588 = sbr.rel (0) target = $region69
    $region68: #{_forward_impl.1} parent=1 // pred_region
      _
    $region69: #{_forward_impl.1} parent=1 // pred_fallthru
      _
    // Predicated region
    $region70: #{_forward_impl.1} parent=1 // pred_check
      _
    $region71: #{_forward_impl.1} parent=1 // pred_check_branch
      %6590 = sbr.rel (0) target = $region73
    $region72: #{_forward_impl.1} parent=1 // pred_region
      _
    $region73: #{_forward_impl.1} parent=1 // pred_fallthru
      _
    %6591 = vsyncpa [#allocation3], 1
    %6592 = vsyncpa [#allocation5], 1
    %6593 = vsyncpa [#allocation8], 1

</llo_original>
